<compile_context>
chip_gen: v6e
topology: v6e:2x2x1
jax: 0.10.0
libtpu: 0.0.40
codegen_flags: <defaults>
</compile_context>

<pallas_src>
import functools

import jax
import jax.numpy as jnp
from jax import lax
from jax.experimental import pallas as pl
from jax.experimental.pallas import tpu as pltpu


# ---------------------------------------------------------------------------
# Fused kernel
# ---------------------------------------------------------------------------
def _conv3x3_from_padded(pad_ref, w_ref, b_ref, H, W):
    """3x3 / stride-1 conv over a zero-padded (H+2, W+2, Cin) VMEM scratch.

    Nine shifted-window MXU dots accumulated in f32; folded-BN bias + ReLU epilogue.
    Returns (H*W, Cout) f32.
    """
    cin = pad_ref.shape[2]
    cout = w_ref.shape[3]
    acc = jnp.zeros((H * W, cout), jnp.float32)
    for ki in range(3):
        for kj in range(3):
            win = pad_ref[ki:ki + H, kj:kj + W, :]                 # (H, W, Cin)
            win = win.reshape(H * W, cin).astype(jnp.bfloat16)
            acc = acc + jnp.dot(win, w_ref[ki, kj],
                                preferred_element_type=jnp.float32)
    return jnp.maximum(acc + b_ref[...], 0.0)


def _vae_fused_kernel(x_ref, w1_ref, b1_ref, w2_ref, b2_ref, w3_ref, b3_ref,
                      wp_ref, bp_ref, o_ref, pad1_ref, pad2_ref, *, H, W):
    # ---- self.conv: Conv2dNormActivation(input_dim -> latent, 3x3, BN folded, ReLU)
    pad1_ref[...] = jnp.zeros(pad1_ref.shape, pad1_ref.dtype)        # zero border
    pad1_ref[1:H + 1, 1:W + 1, :] = x_ref[0]                          # interior copy
    act = _conv3x3_from_padded(pad1_ref, w1_ref, b1_ref, H, W)        # (H*W, Cl) f32

    # ---- mean_layers[0]: Conv2dNormActivation(latent -> latent, 3x3, BN folded, ReLU)
    cl = act.shape[1]
    pad2_ref[...] = jnp.zeros(pad2_ref.shape, pad2_ref.dtype)
    pad2_ref[1:H + 1, 1:W + 1, :] = act.reshape(H, W, cl)
    act = _conv3x3_from_padded(pad2_ref, w2_ref, b2_ref, H, W)        # (H*W, Cl) f32

    # ---- mean_layers[1]: Conv2d(latent -> latent, 1x1) + bias
    act = jnp.dot(act.astype(jnp.bfloat16), w3_ref[...],
                  preferred_element_type=jnp.float32) + b3_ref[...]   # (H*W, Cl)

    # ---- self.proj: Conv2d(latent -> out_dim, 1x1) + bias, computed channel-major
    #      so the NCHW output is written directly (lane-dense, no trailing transpose).
    act_t = act.T.astype(jnp.bfloat16)                                # (Cl, H*W) via XLU
    out = jnp.dot(wp_ref[...], act_t,
                  preferred_element_type=jnp.float32) + bp_ref[...]   # (Cout, H*W)
    o_ref[0] = out.astype(o_ref.dtype)


# ---------------------------------------------------------------------------
# Wrapper (single pallas_call for the whole forward pass)
# ---------------------------------------------------------------------------
def vae_sampler_forward(params, x):
    """x: (B, input_dim, H, W) NCHW  ->  (B, out_dim, H, W) NCHW."""
    B, Cin, H, W = x.shape
    w1, b1 = params['conv']['w'], params['conv']['b']
    w2, b2 = params['mean0']['w'], params['mean0']['b']
    w3, b3 = params['mean1']['w'], params['mean1']['b']
    wp, bp = params['proj']['w'], params['proj']['b']
    Cl = w1.shape[3]
    Cout = wp.shape[0]

    assert (H * W) % 8 == 0 and Cout % 128 == 0
    assert H * W * Cout * 4 <= 8 * 1024 * 1024, \
        "per-image proj block too large for the single-block VMEM plan (add halo tiling)"

    # One tiny boundary transpose (8 KB); everything else happens inside the kernel.
    x_nhwc = jnp.transpose(x, (0, 2, 3, 1)).astype(jnp.float32)

    out = pl.pallas_call(
        functools.partial(_vae_fused_kernel, H=H, W=W),
        grid=(B,),
        in_specs=[
            pl.BlockSpec((1, H, W, Cin), lambda b: (b, 0, 0, 0)),     # x (per image)
            pl.BlockSpec((3, 3, Cin, Cl), lambda b: (0, 0, 0, 0)),    # conv w
            pl.BlockSpec((1, Cl), lambda b: (0, 0)),                  # conv b
            pl.BlockSpec((3, 3, Cl, Cl), lambda b: (0, 0, 0, 0)),     # mean0 w
            pl.BlockSpec((1, Cl), lambda b: (0, 0)),                  # mean0 b
            pl.BlockSpec((Cl, Cl), lambda b: (0, 0)),                 # mean1 w
            pl.BlockSpec((1, Cl), lambda b: (0, 0)),                  # mean1 b
            pl.BlockSpec((Cout, Cl), lambda b: (0, 0)),               # proj w (Cout, Cl)
            pl.BlockSpec((Cout, 1), lambda b: (0, 0)),                # proj b (Cout, 1)
        ],
        out_specs=pl.BlockSpec((1, Cout, H * W), lambda b: (b, 0, 0)),
        out_shape=jax.ShapeDtypeStruct((B, Cout, H * W), jnp.float32),
        scratch_shapes=[
            pltpu.VMEM((H + 2, W + 2, Cin), jnp.float32),             # padded input
            pltpu.VMEM((H + 2, W + 2, Cl), jnp.float32),              # padded act1
        ],
        compiler_params=pltpu.CompilerParams(
            dimension_semantics=("parallel",)),
    )(x_nhwc, w1, b1, w2, b2, w3, b3, wp, bp)

    return out.reshape(B, Cout, H, W)     # free reshape of the minor dim, no transpose


# ---------------------------------------------------------------------------
# Deterministic parameter construction (BN folded into convs, eval-mode)
# ---------------------------------------------------------------------------
class _KeyGen:
    def __init__(self, seed):
        self._key = jax.random.PRNGKey(seed)

    def __call__(self):
        self._key, sub = jax.random.split(self._key)
        return sub


def _conv_bn_params(kg, cin, cout):
    # Conv2d(3x3, bias=False) + eval-mode BatchNorm2d folded (running_mean=0, var=1).
    fan_in = cin * 9
    w = jax.random.normal(kg(), (3, 3, cin, cout), jnp.float32) * (2.0 / fan_in) ** 0.5
    gamma = 1.0 + 0.1 * jax.random.normal(kg(), (cout,), jnp.float32)
    beta = 0.1 * jax.random.normal(kg(), (cout,), jnp.float32)
    scale = gamma / jnp.sqrt(1.0 + 1e-5)
    w = w * scale[None, None, None, :]
    return {'w': w.astype(jnp.bfloat16), 'b': beta.reshape(1, cout)}


def _conv1x1_params(kg, cin, cout, transposed=False):
    w = jax.random.normal(kg(), (cin, cout), jnp.float32) * (1.0 / cin) ** 0.5
    b = 0.05 * jax.random.normal(kg(), (cout,), jnp.float32)
    if transposed:   # stored (Cout, Cin) so the kernel emits NCHW output directly
        return {'w': w.T.astype(jnp.bfloat16), 'b': b.reshape(cout, 1)}
    return {'w': w.astype(jnp.bfloat16), 'b': b.reshape(1, cout)}


def init_params(seed=0, input_dim=4, latent_dim=32, out_dim=1024):
    kg = _KeyGen(seed)
    return {
        'conv':  _conv_bn_params(kg, input_dim, latent_dim),    # Conv2dNormActivation
        'mean0': _conv_bn_params(kg, latent_dim, latent_dim),   # mean_layers[0]
        'mean1': _conv1x1_params(kg, latent_dim, latent_dim),   # mean_layers[1]
        'proj':  _conv1x1_params(kg, latent_dim, out_dim, transposed=True),
    }


# ---------------------------------------------------------------------------
# Pure-JAX reference (same folded params) for a correctness check
# ---------------------------------------------------------------------------
def _reference_forward(params, x):
    f32 = jnp.float32
    x = jnp.transpose(x, (0, 2, 3, 1)).astype(f32)

    def conv_bn_relu(y, p):
        y = lax.conv_general_dilated(
            y, p['w'].astype(f32), (1, 1), 'SAME',
            dimension_numbers=('NHWC', 'HWIO', 'NHWC'),
            precision=lax.Precision.HIGHEST)
        return jax.nn.relu(y + p['b'].reshape(1, 1, 1, -1))

    x = conv_bn_relu(x, params['conv'])
    x = conv_bn_relu(x, params['mean0'])
    x = jnp.einsum('bhwc,cd->bhwd', x, params['mean1']['w'].astype(f32),
                   precision=lax.Precision.HIGHEST) + params['mean1']['b'].reshape(1, 1, 1, -1)
    x = jnp.einsum('bhwc,dc->bhwd', x, params['proj']['w'].astype(f32),
                   precision=lax.Precision.HIGHEST) + params['proj']['b'].reshape(1, 1, 1, -1)
    return jnp.transpose(x, (0, 3, 1, 2))


if __name__ == "__main__":
    INPUT_DIM, LATENT_DIM, OUT_DIM = 4, 32, 1024
    B, H, W = 2, 16, 16

    params = init_params(seed=0, input_dim=INPUT_DIM, latent_dim=LATENT_DIM, out_dim=OUT_DIM)
    x = jax.random.normal(jax.random.PRNGKey(0), (B, INPUT_DIM, H, W), jnp.float32)

    fwd = jax.jit(vae_sampler_forward)
    out = fwd(params, x)
    jax.block_until_ready(out)

    assert out.shape == (B, OUT_DIM, H, W), out.shape
    assert bool(jnp.all(jnp.isfinite(out)))

    ref = _reference_forward(params, x)
    max_err = float(jnp.max(jnp.abs(out - ref)))
    assert max_err < 1e-1, f"kernel/reference mismatch: max_abs_err={max_err}"

    print("KERNEL_OK")
</pallas_src>

<mosaic_0001>
module attributes {stable_mosaic.version = 11 : i64} {
  func.func @_vae_fused_kernel(%arg0: i32, %arg1: memref<1x16x16x4xf32, #tpu.memory_space<vmem>>, %arg2: memref<3x3x4x32xbf16, #tpu.memory_space<vmem>>, %arg3: memref<1x32xf32, #tpu.memory_space<vmem>>, %arg4: memref<3x3x32x32xbf16, #tpu.memory_space<vmem>>, %arg5: memref<1x32xf32, #tpu.memory_space<vmem>>, %arg6: memref<32x32xbf16, #tpu.memory_space<vmem>>, %arg7: memref<1x32xf32, #tpu.memory_space<vmem>>, %arg8: memref<1024x32xbf16, #tpu.memory_space<vmem>>, %arg9: memref<1024x1xf32, #tpu.memory_space<vmem>>, %arg10: memref<1x1024x256xf32, #tpu.memory_space<vmem>>, %arg11: memref<18x18x4xf32, #tpu.memory_space<vmem>>, %arg12: memref<18x18x32xf32, #tpu.memory_space<vmem>>) attributes {dimension_semantics = [#tpu.dimension_semantics<parallel>], iteration_bounds = array<i64: 2>, scalar_prefetch = 0 : i64, scratch_operands = 2 : i64, tpu.core_type = #tpu.core_type<tc>, window_params = [{transform_indices = @transform_0, window_bounds = array<i64: 1, 16, 16, 4>}, {pipeline_mode = #tpu.pipeline_mode<synchronous>, transform_indices = @transform_1, window_bounds = array<i64: 3, 3, 4, 32>}, {pipeline_mode = #tpu.pipeline_mode<synchronous>, transform_indices = @transform_2, window_bounds = array<i64: 1, 32>}, {pipeline_mode = #tpu.pipeline_mode<synchronous>, transform_indices = @transform_3, window_bounds = array<i64: 3, 3, 32, 32>}, {pipeline_mode = #tpu.pipeline_mode<synchronous>, transform_indices = @transform_4, window_bounds = array<i64: 1, 32>}, {pipeline_mode = #tpu.pipeline_mode<synchronous>, transform_indices = @transform_5, window_bounds = array<i64: 32, 32>}, {pipeline_mode = #tpu.pipeline_mode<synchronous>, transform_indices = @transform_6, window_bounds = array<i64: 1, 32>}, {pipeline_mode = #tpu.pipeline_mode<synchronous>, transform_indices = @transform_7, window_bounds = array<i64: 1024, 32>}, {pipeline_mode = #tpu.pipeline_mode<synchronous>, transform_indices = @transform_8, window_bounds = array<i64: 1024, 1>}, {transform_indices = @transform_9, window_bounds = array<i64: 1, 1024, 256>}]} {
    %cst = arith.constant 0.000000e+00 : f32
    %0 = vector.broadcast %cst : f32 to vector<18x18x4xf32>
    %c0 = arith.constant 0 : index
    %c0_0 = arith.constant 0 : index
    %c0_1 = arith.constant 0 : index
    %1 = vector.load %arg11[%c0, %c0_0, %c0_1] : memref<18x18x4xf32, #tpu.memory_space<vmem>>, vector<18x18x4xf32>
    tpu.vector_store %arg11[%c0, %c0_0, %c0_1], %0 {strides = array<i32>} : memref<18x18x4xf32, #tpu.memory_space<vmem>>, vector<18x18x4xf32>,
    %c0_2 = arith.constant 0 : index
    %c0_3 = arith.constant 0 : index
    %c0_4 = arith.constant 0 : index
    %c0_5 = arith.constant 0 : index
    %2 = vector.load %arg1[%c0_2, %c0_3, %c0_4, %c0_5] : memref<1x16x16x4xf32, #tpu.memory_space<vmem>>, vector<1x16x16x4xf32>
    %3 = vector.shape_cast %2 : vector<1x16x16x4xf32> to vector<16x16x4xf32>
    %c1 = arith.constant 1 : index
    %c1_6 = arith.constant 1 : index
    %c0_7 = arith.constant 0 : index
    %4 = vector.load %arg11[%c1, %c1_6, %c0_7] : memref<18x18x4xf32, #tpu.memory_space<vmem>>, vector<16x16x4xf32>
    tpu.vector_store %arg11[%c1, %c1_6, %c0_7], %3 {strides = array<i32>} : memref<18x18x4xf32, #tpu.memory_space<vmem>>, vector<16x16x4xf32>,
    %cst_8 = arith.constant 0.000000e+00 : f32
    %5 = vector.broadcast %cst_8 : f32 to vector<256x32xf32>
    %c0_9 = arith.constant 0 : index
    %c0_10 = arith.constant 0 : index
    %c0_11 = arith.constant 0 : index
    %6 = vector.load %arg11[%c0_9, %c0_10, %c0_11] : memref<18x18x4xf32, #tpu.memory_space<vmem>>, vector<16x16x4xf32>
    %7 = vector.shape_cast %6 : vector<16x16x4xf32> to vector<256x4xf32>
    %8 = arith.truncf %7 : vector<256x4xf32> to vector<256x4xbf16>
    %c0_12 = arith.constant 0 : index
    %c0_13 = arith.constant 0 : index
    %c0_14 = arith.constant 0 : index
    %c0_15 = arith.constant 0 : index
    %9 = vector.load %arg2[%c0_12, %c0_13, %c0_14, %c0_15] : memref<3x3x4x32xbf16, #tpu.memory_space<vmem>>, vector<1x1x4x32xbf16>
    %10 = vector.shape_cast %9 : vector<1x1x4x32xbf16> to vector<4x32xbf16>
    %cst_16 = arith.constant dense<0.000000e+00> : vector<256x32xf32>
    %11 = tpu.matmul %8, %10, %cst_16 {dimension_numbers = #tpu.dot_dimension_numbers<[1], [0], [0], [1], [0, 0, 1, 1], [], []>} : vector<256x4xbf16>, vector<4x32xbf16>, vector<256x32xf32> -> vector<256x32xf32>
    %12 = arith.addf %5, %11 : vector<256x32xf32>
    %c0_17 = arith.constant 0 : index
    %c1_18 = arith.constant 1 : index
    %c0_19 = arith.constant 0 : index
    %13 = vector.load %arg11[%c0_17, %c1_18, %c0_19] : memref<18x18x4xf32, #tpu.memory_space<vmem>>, vector<16x16x4xf32>
    %14 = vector.shape_cast %13 : vector<16x16x4xf32> to vector<256x4xf32>
    %15 = arith.truncf %14 : vector<256x4xf32> to vector<256x4xbf16>
    %c0_20 = arith.constant 0 : index
    %c1_21 = arith.constant 1 : index
    %c0_22 = arith.constant 0 : index
    %c0_23 = arith.constant 0 : index
    %16 = vector.load %arg2[%c0_20, %c1_21, %c0_22, %c0_23] : memref<3x3x4x32xbf16, #tpu.memory_space<vmem>>, vector<1x1x4x32xbf16>
    %17 = vector.shape_cast %16 : vector<1x1x4x32xbf16> to vector<4x32xbf16>
    %cst_24 = arith.constant dense<0.000000e+00> : vector<256x32xf32>
    %18 = tpu.matmul %15, %17, %cst_24 {dimension_numbers = #tpu.dot_dimension_numbers<[1], [0], [0], [1], [0, 0, 1, 1], [], []>} : vector<256x4xbf16>, vector<4x32xbf16>, vector<256x32xf32> -> vector<256x32xf32>
    %19 = arith.addf %12, %18 : vector<256x32xf32>
    %c0_25 = arith.constant 0 : index
    %c2 = arith.constant 2 : index
    %c0_26 = arith.constant 0 : index
    %20 = vector.load %arg11[%c0_25, %c2, %c0_26] : memref<18x18x4xf32, #tpu.memory_space<vmem>>, vector<16x16x4xf32>
    %21 = vector.shape_cast %20 : vector<16x16x4xf32> to vector<256x4xf32>
    %22 = arith.truncf %21 : vector<256x4xf32> to vector<256x4xbf16>
    %c0_27 = arith.constant 0 : index
    %c2_28 = arith.constant 2 : index
    %c0_29 = arith.constant 0 : index
    %c0_30 = arith.constant 0 : index
    %23 = vector.load %arg2[%c0_27, %c2_28, %c0_29, %c0_30] : memref<3x3x4x32xbf16, #tpu.memory_space<vmem>>, vector<1x1x4x32xbf16>
    %24 = vector.shape_cast %23 : vector<1x1x4x32xbf16> to vector<4x32xbf16>
    %cst_31 = arith.constant dense<0.000000e+00> : vector<256x32xf32>
    %25 = tpu.matmul %22, %24, %cst_31 {dimension_numbers = #tpu.dot_dimension_numbers<[1], [0], [0], [1], [0, 0, 1, 1], [], []>} : vector<256x4xbf16>, vector<4x32xbf16>, vector<256x32xf32> -> vector<256x32xf32>
    %26 = arith.addf %19, %25 : vector<256x32xf32>
    %c1_32 = arith.constant 1 : index
    %c0_33 = arith.constant 0 : index
    %c0_34 = arith.constant 0 : index
    %27 = vector.load %arg11[%c1_32, %c0_33, %c0_34] : memref<18x18x4xf32, #tpu.memory_space<vmem>>, vector<16x16x4xf32>
    %28 = vector.shape_cast %27 : vector<16x16x4xf32> to vector<256x4xf32>
    %29 = arith.truncf %28 : vector<256x4xf32> to vector<256x4xbf16>
    %c1_35 = arith.constant 1 : index
    %c0_36 = arith.constant 0 : index
    %c0_37 = arith.constant 0 : index
    %c0_38 = arith.constant 0 : index
    %30 = vector.load %arg2[%c1_35, %c0_36, %c0_37, %c0_38] : memref<3x3x4x32xbf16, #tpu.memory_space<vmem>>, vector<1x1x4x32xbf16>
    %31 = vector.shape_cast %30 : vector<1x1x4x32xbf16> to vector<4x32xbf16>
    %cst_39 = arith.constant dense<0.000000e+00> : vector<256x32xf32>
    %32 = tpu.matmul %29, %31, %cst_39 {dimension_numbers = #tpu.dot_dimension_numbers<[1], [0], [0], [1], [0, 0, 1, 1], [], []>} : vector<256x4xbf16>, vector<4x32xbf16>, vector<256x32xf32> -> vector<256x32xf32>
    %33 = arith.addf %26, %32 : vector<256x32xf32>
    %c1_40 = arith.constant 1 : index
    %c1_41 = arith.constant 1 : index
    %c0_42 = arith.constant 0 : index
    %34 = vector.load %arg11[%c1_40, %c1_41, %c0_42] : memref<18x18x4xf32, #tpu.memory_space<vmem>>, vector<16x16x4xf32>
    %35 = vector.shape_cast %34 : vector<16x16x4xf32> to vector<256x4xf32>
    %36 = arith.truncf %35 : vector<256x4xf32> to vector<256x4xbf16>
    %c1_43 = arith.constant 1 : index
    %c1_44 = arith.constant 1 : index
    %c0_45 = arith.constant 0 : index
    %c0_46 = arith.constant 0 : index
    %37 = vector.load %arg2[%c1_43, %c1_44, %c0_45, %c0_46] : memref<3x3x4x32xbf16, #tpu.memory_space<vmem>>, vector<1x1x4x32xbf16>
    %38 = vector.shape_cast %37 : vector<1x1x4x32xbf16> to vector<4x32xbf16>
    %cst_47 = arith.constant dense<0.000000e+00> : vector<256x32xf32>
    %39 = tpu.matmul %36, %38, %cst_47 {dimension_numbers = #tpu.dot_dimension_numbers<[1], [0], [0], [1], [0, 0, 1, 1], [], []>} : vector<256x4xbf16>, vector<4x32xbf16>, vector<256x32xf32> -> vector<256x32xf32>
    %40 = arith.addf %33, %39 : vector<256x32xf32>
    %c1_48 = arith.constant 1 : index
    %c2_49 = arith.constant 2 : index
    %c0_50 = arith.constant 0 : index
    %41 = vector.load %arg11[%c1_48, %c2_49, %c0_50] : memref<18x18x4xf32, #tpu.memory_space<vmem>>, vector<16x16x4xf32>
    %42 = vector.shape_cast %41 : vector<16x16x4xf32> to vector<256x4xf32>
    %43 = arith.truncf %42 : vector<256x4xf32> to vector<256x4xbf16>
    %c1_51 = arith.constant 1 : index
    %c2_52 = arith.constant 2 : index
    %c0_53 = arith.constant 0 : index
    %c0_54 = arith.constant 0 : index
    %44 = vector.load %arg2[%c1_51, %c2_52, %c0_53, %c0_54] : memref<3x3x4x32xbf16, #tpu.memory_space<vmem>>, vector<1x1x4x32xbf16>
    %45 = vector.shape_cast %44 : vector<1x1x4x32xbf16> to vector<4x32xbf16>
    %cst_55 = arith.constant dense<0.000000e+00> : vector<256x32xf32>
    %46 = tpu.matmul %43, %45, %cst_55 {dimension_numbers = #tpu.dot_dimension_numbers<[1], [0], [0], [1], [0, 0, 1, 1], [], []>} : vector<256x4xbf16>, vector<4x32xbf16>, vector<256x32xf32> -> vector<256x32xf32>
    %47 = arith.addf %40, %46 : vector<256x32xf32>
    %c2_56 = arith.constant 2 : index
    %c0_57 = arith.constant 0 : index
    %c0_58 = arith.constant 0 : index
    %48 = vector.load %arg11[%c2_56, %c0_57, %c0_58] : memref<18x18x4xf32, #tpu.memory_space<vmem>>, vector<16x16x4xf32>
    %49 = vector.shape_cast %48 : vector<16x16x4xf32> to vector<256x4xf32>
    %50 = arith.truncf %49 : vector<256x4xf32> to vector<256x4xbf16>
    %c2_59 = arith.constant 2 : index
    %c0_60 = arith.constant 0 : index
    %c0_61 = arith.constant 0 : index
    %c0_62 = arith.constant 0 : index
    %51 = vector.load %arg2[%c2_59, %c0_60, %c0_61, %c0_62] : memref<3x3x4x32xbf16, #tpu.memory_space<vmem>>, vector<1x1x4x32xbf16>
    %52 = vector.shape_cast %51 : vector<1x1x4x32xbf16> to vector<4x32xbf16>
    %cst_63 = arith.constant dense<0.000000e+00> : vector<256x32xf32>
    %53 = tpu.matmul %50, %52, %cst_63 {dimension_numbers = #tpu.dot_dimension_numbers<[1], [0], [0], [1], [0, 0, 1, 1], [], []>} : vector<256x4xbf16>, vector<4x32xbf16>, vector<256x32xf32> -> vector<256x32xf32>
    %54 = arith.addf %47, %53 : vector<256x32xf32>
    %c2_64 = arith.constant 2 : index
    %c1_65 = arith.constant 1 : index
    %c0_66 = arith.constant 0 : index
    %55 = vector.load %arg11[%c2_64, %c1_65, %c0_66] : memref<18x18x4xf32, #tpu.memory_space<vmem>>, vector<16x16x4xf32>
    %56 = vector.shape_cast %55 : vector<16x16x4xf32> to vector<256x4xf32>
    %57 = arith.truncf %56 : vector<256x4xf32> to vector<256x4xbf16>
    %c2_67 = arith.constant 2 : index
    %c1_68 = arith.constant 1 : index
    %c0_69 = arith.constant 0 : index
    %c0_70 = arith.constant 0 : index
    %58 = vector.load %arg2[%c2_67, %c1_68, %c0_69, %c0_70] : memref<3x3x4x32xbf16, #tpu.memory_space<vmem>>, vector<1x1x4x32xbf16>
    %59 = vector.shape_cast %58 : vector<1x1x4x32xbf16> to vector<4x32xbf16>
    %cst_71 = arith.constant dense<0.000000e+00> : vector<256x32xf32>
    %60 = tpu.matmul %57, %59, %cst_71 {dimension_numbers = #tpu.dot_dimension_numbers<[1], [0], [0], [1], [0, 0, 1, 1], [], []>} : vector<256x4xbf16>, vector<4x32xbf16>, vector<256x32xf32> -> vector<256x32xf32>
    %61 = arith.addf %54, %60 : vector<256x32xf32>
    %c2_72 = arith.constant 2 : index
    %c2_73 = arith.constant 2 : index
    %c0_74 = arith.constant 0 : index
    %62 = vector.load %arg11[%c2_72, %c2_73, %c0_74] : memref<18x18x4xf32, #tpu.memory_space<vmem>>, vector<16x16x4xf32>
    %63 = vector.shape_cast %62 : vector<16x16x4xf32> to vector<256x4xf32>
    %64 = arith.truncf %63 : vector<256x4xf32> to vector<256x4xbf16>
    %c2_75 = arith.constant 2 : index
    %c2_76 = arith.constant 2 : index
    %c0_77 = arith.constant 0 : index
    %c0_78 = arith.constant 0 : index
    %65 = vector.load %arg2[%c2_75, %c2_76, %c0_77, %c0_78] : memref<3x3x4x32xbf16, #tpu.memory_space<vmem>>, vector<1x1x4x32xbf16>
    %66 = vector.shape_cast %65 : vector<1x1x4x32xbf16> to vector<4x32xbf16>
    %cst_79 = arith.constant dense<0.000000e+00> : vector<256x32xf32>
    %67 = tpu.matmul %64, %66, %cst_79 {dimension_numbers = #tpu.dot_dimension_numbers<[1], [0], [0], [1], [0, 0, 1, 1], [], []>} : vector<256x4xbf16>, vector<4x32xbf16>, vector<256x32xf32> -> vector<256x32xf32>
    %68 = arith.addf %61, %67 : vector<256x32xf32>
    %c0_80 = arith.constant 0 : index
    %c0_81 = arith.constant 0 : index
    %69 = vector.load %arg3[%c0_80, %c0_81] : memref<1x32xf32, #tpu.memory_space<vmem>>, vector<1x32xf32>
    %70 = vector.broadcast %69 : vector<1x32xf32> to vector<256x32xf32>
    %71 = arith.addf %68, %70 : vector<256x32xf32>
    %cst_82 = arith.constant 0.000000e+00 : f32
    %72 = vector.broadcast %cst_82 : f32 to vector<256x32xf32>
    %73 = arith.maximumf %71, %72 : vector<256x32xf32>
    %cst_83 = arith.constant 0.000000e+00 : f32
    %74 = vector.broadcast %cst_83 : f32 to vector<18x18x32xf32>
    %c0_84 = arith.constant 0 : index
    %c0_85 = arith.constant 0 : index
    %c0_86 = arith.constant 0 : index
    %75 = vector.load %arg12[%c0_84, %c0_85, %c0_86] : memref<18x18x32xf32, #tpu.memory_space<vmem>>, vector<18x18x32xf32>
    tpu.vector_store %arg12[%c0_84, %c0_85, %c0_86], %74 {strides = array<i32>} : memref<18x18x32xf32, #tpu.memory_space<vmem>>, vector<18x18x32xf32>,
    %76 = vector.shape_cast %73 : vector<256x32xf32> to vector<16x16x32xf32>
    %c1_87 = arith.constant 1 : index
    %c1_88 = arith.constant 1 : index
    %c0_89 = arith.constant 0 : index
    %77 = vector.load %arg12[%c1_87, %c1_88, %c0_89] : memref<18x18x32xf32, #tpu.memory_space<vmem>>, vector<16x16x32xf32>
    tpu.vector_store %arg12[%c1_87, %c1_88, %c0_89], %76 {strides = array<i32>} : memref<18x18x32xf32, #tpu.memory_space<vmem>>, vector<16x16x32xf32>,
    %cst_90 = arith.constant 0.000000e+00 : f32
    %78 = vector.broadcast %cst_90 : f32 to vector<256x32xf32>
    %c0_91 = arith.constant 0 : index
    %c0_92 = arith.constant 0 : index
    %c0_93 = arith.constant 0 : index
    %79 = vector.load %arg12[%c0_91, %c0_92, %c0_93] : memref<18x18x32xf32, #tpu.memory_space<vmem>>, vector<16x16x32xf32>
    %80 = vector.shape_cast %79 : vector<16x16x32xf32> to vector<256x32xf32>
    %81 = arith.truncf %80 : vector<256x32xf32> to vector<256x32xbf16>
    %c0_94 = arith.constant 0 : index
    %c0_95 = arith.constant 0 : index
    %c0_96 = arith.constant 0 : index
    %c0_97 = arith.constant 0 : index
    %82 = vector.load %arg4[%c0_94, %c0_95, %c0_96, %c0_97] : memref<3x3x32x32xbf16, #tpu.memory_space<vmem>>, vector<1x1x32x32xbf16>
    %83 = vector.shape_cast %82 : vector<1x1x32x32xbf16> to vector<32x32xbf16>
    %cst_98 = arith.constant dense<0.000000e+00> : vector<256x32xf32>
    %84 = tpu.matmul %81, %83, %cst_98 {dimension_numbers = #tpu.dot_dimension_numbers<[1], [0], [0], [1], [0, 0, 1, 1], [], []>} : vector<256x32xbf16>, vector<32x32xbf16>, vector<256x32xf32> -> vector<256x32xf32>
    %85 = arith.addf %78, %84 : vector<256x32xf32>
    %c0_99 = arith.constant 0 : index
    %c1_100 = arith.constant 1 : index
    %c0_101 = arith.constant 0 : index
    %86 = vector.load %arg12[%c0_99, %c1_100, %c0_101] : memref<18x18x32xf32, #tpu.memory_space<vmem>>, vector<16x16x32xf32>
    %87 = vector.shape_cast %86 : vector<16x16x32xf32> to vector<256x32xf32>
    %88 = arith.truncf %87 : vector<256x32xf32> to vector<256x32xbf16>
    %c0_102 = arith.constant 0 : index
    %c1_103 = arith.constant 1 : index
    %c0_104 = arith.constant 0 : index
    %c0_105 = arith.constant 0 : index
    %89 = vector.load %arg4[%c0_102, %c1_103, %c0_104, %c0_105] : memref<3x3x32x32xbf16, #tpu.memory_space<vmem>>, vector<1x1x32x32xbf16>
    %90 = vector.shape_cast %89 : vector<1x1x32x32xbf16> to vector<32x32xbf16>
    %cst_106 = arith.constant dense<0.000000e+00> : vector<256x32xf32>
    %91 = tpu.matmul %88, %90, %cst_106 {dimension_numbers = #tpu.dot_dimension_numbers<[1], [0], [0], [1], [0, 0, 1, 1], [], []>} : vector<256x32xbf16>, vector<32x32xbf16>, vector<256x32xf32> -> vector<256x32xf32>
    %92 = arith.addf %85, %91 : vector<256x32xf32>
    %c0_107 = arith.constant 0 : index
    %c2_108 = arith.constant 2 : index
    %c0_109 = arith.constant 0 : index
    %93 = vector.load %arg12[%c0_107, %c2_108, %c0_109] : memref<18x18x32xf32, #tpu.memory_space<vmem>>, vector<16x16x32xf32>
    %94 = vector.shape_cast %93 : vector<16x16x32xf32> to vector<256x32xf32>
    %95 = arith.truncf %94 : vector<256x32xf32> to vector<256x32xbf16>
    %c0_110 = arith.constant 0 : index
    %c2_111 = arith.constant 2 : index
    %c0_112 = arith.constant 0 : index
    %c0_113 = arith.constant 0 : index
    %96 = vector.load %arg4[%c0_110, %c2_111, %c0_112, %c0_113] : memref<3x3x32x32xbf16, #tpu.memory_space<vmem>>, vector<1x1x32x32xbf16>
    %97 = vector.shape_cast %96 : vector<1x1x32x32xbf16> to vector<32x32xbf16>
    %cst_114 = arith.constant dense<0.000000e+00> : vector<256x32xf32>
    %98 = tpu.matmul %95, %97, %cst_114 {dimension_numbers = #tpu.dot_dimension_numbers<[1], [0], [0], [1], [0, 0, 1, 1], [], []>} : vector<256x32xbf16>, vector<32x32xbf16>, vector<256x32xf32> -> vector<256x32xf32>
    %99 = arith.addf %92, %98 : vector<256x32xf32>
    %c1_115 = arith.constant 1 : index
    %c0_116 = arith.constant 0 : index
    %c0_117 = arith.constant 0 : index
    %100 = vector.load %arg12[%c1_115, %c0_116, %c0_117] : memref<18x18x32xf32, #tpu.memory_space<vmem>>, vector<16x16x32xf32>
    %101 = vector.shape_cast %100 : vector<16x16x32xf32> to vector<256x32xf32>
    %102 = arith.truncf %101 : vector<256x32xf32> to vector<256x32xbf16>
    %c1_118 = arith.constant 1 : index
    %c0_119 = arith.constant 0 : index
    %c0_120 = arith.constant 0 : index
    %c0_121 = arith.constant 0 : index
    %103 = vector.load %arg4[%c1_118, %c0_119, %c0_120, %c0_121] : memref<3x3x32x32xbf16, #tpu.memory_space<vmem>>, vector<1x1x32x32xbf16>
    %104 = vector.shape_cast %103 : vector<1x1x32x32xbf16> to vector<32x32xbf16>
    %cst_122 = arith.constant dense<0.000000e+00> : vector<256x32xf32>
    %105 = tpu.matmul %102, %104, %cst_122 {dimension_numbers = #tpu.dot_dimension_numbers<[1], [0], [0], [1], [0, 0, 1, 1], [], []>} : vector<256x32xbf16>, vector<32x32xbf16>, vector<256x32xf32> -> vector<256x32xf32>
    %106 = arith.addf %99, %105 : vector<256x32xf32>
    %c1_123 = arith.constant 1 : index
    %c1_124 = arith.constant 1 : index
    %c0_125 = arith.constant 0 : index
    %107 = vector.load %arg12[%c1_123, %c1_124, %c0_125] : memref<18x18x32xf32, #tpu.memory_space<vmem>>, vector<16x16x32xf32>
    %108 = vector.shape_cast %107 : vector<16x16x32xf32> to vector<256x32xf32>
    %109 = arith.truncf %108 : vector<256x32xf32> to vector<256x32xbf16>
    %c1_126 = arith.constant 1 : index
    %c1_127 = arith.constant 1 : index
    %c0_128 = arith.constant 0 : index
    %c0_129 = arith.constant 0 : index
    %110 = vector.load %arg4[%c1_126, %c1_127, %c0_128, %c0_129] : memref<3x3x32x32xbf16, #tpu.memory_space<vmem>>, vector<1x1x32x32xbf16>
    %111 = vector.shape_cast %110 : vector<1x1x32x32xbf16> to vector<32x32xbf16>
    %cst_130 = arith.constant dense<0.000000e+00> : vector<256x32xf32>
    %112 = tpu.matmul %109, %111, %cst_130 {dimension_numbers = #tpu.dot_dimension_numbers<[1], [0], [0], [1], [0, 0, 1, 1], [], []>} : vector<256x32xbf16>, vector<32x32xbf16>, vector<256x32xf32> -> vector<256x32xf32>
    %113 = arith.addf %106, %112 : vector<256x32xf32>
    %c1_131 = arith.constant 1 : index
    %c2_132 = arith.constant 2 : index
    %c0_133 = arith.constant 0 : index
    %114 = vector.load %arg12[%c1_131, %c2_132, %c0_133] : memref<18x18x32xf32, #tpu.memory_space<vmem>>, vector<16x16x32xf32>
    %115 = vector.shape_cast %114 : vector<16x16x32xf32> to vector<256x32xf32>
    %116 = arith.truncf %115 : vector<256x32xf32> to vector<256x32xbf16>
    %c1_134 = arith.constant 1 : index
    %c2_135 = arith.constant 2 : index
    %c0_136 = arith.constant 0 : index
    %c0_137 = arith.constant 0 : index
    %117 = vector.load %arg4[%c1_134, %c2_135, %c0_136, %c0_137] : memref<3x3x32x32xbf16, #tpu.memory_space<vmem>>, vector<1x1x32x32xbf16>
    %118 = vector.shape_cast %117 : vector<1x1x32x32xbf16> to vector<32x32xbf16>
    %cst_138 = arith.constant dense<0.000000e+00> : vector<256x32xf32>
    %119 = tpu.matmul %116, %118, %cst_138 {dimension_numbers = #tpu.dot_dimension_numbers<[1], [0], [0], [1], [0, 0, 1, 1], [], []>} : vector<256x32xbf16>, vector<32x32xbf16>, vector<256x32xf32> -> vector<256x32xf32>
    %120 = arith.addf %113, %119 : vector<256x32xf32>
    %c2_139 = arith.constant 2 : index
    %c0_140 = arith.constant 0 : index
    %c0_141 = arith.constant 0 : index
    %121 = vector.load %arg12[%c2_139, %c0_140, %c0_141] : memref<18x18x32xf32, #tpu.memory_space<vmem>>, vector<16x16x32xf32>
    %122 = vector.shape_cast %121 : vector<16x16x32xf32> to vector<256x32xf32>
    %123 = arith.truncf %122 : vector<256x32xf32> to vector<256x32xbf16>
    %c2_142 = arith.constant 2 : index
    %c0_143 = arith.constant 0 : index
    %c0_144 = arith.constant 0 : index
    %c0_145 = arith.constant 0 : index
    %124 = vector.load %arg4[%c2_142, %c0_143, %c0_144, %c0_145] : memref<3x3x32x32xbf16, #tpu.memory_space<vmem>>, vector<1x1x32x32xbf16>
    %125 = vector.shape_cast %124 : vector<1x1x32x32xbf16> to vector<32x32xbf16>
    %cst_146 = arith.constant dense<0.000000e+00> : vector<256x32xf32>
    %126 = tpu.matmul %123, %125, %cst_146 {dimension_numbers = #tpu.dot_dimension_numbers<[1], [0], [0], [1], [0, 0, 1, 1], [], []>} : vector<256x32xbf16>, vector<32x32xbf16>, vector<256x32xf32> -> vector<256x32xf32>
    %127 = arith.addf %120, %126 : vector<256x32xf32>
    %c2_147 = arith.constant 2 : index
    %c1_148 = arith.constant 1 : index
    %c0_149 = arith.constant 0 : index
    %128 = vector.load %arg12[%c2_147, %c1_148, %c0_149] : memref<18x18x32xf32, #tpu.memory_space<vmem>>, vector<16x16x32xf32>
    %129 = vector.shape_cast %128 : vector<16x16x32xf32> to vector<256x32xf32>
    %130 = arith.truncf %129 : vector<256x32xf32> to vector<256x32xbf16>
    %c2_150 = arith.constant 2 : index
    %c1_151 = arith.constant 1 : index
    %c0_152 = arith.constant 0 : index
    %c0_153 = arith.constant 0 : index
    %131 = vector.load %arg4[%c2_150, %c1_151, %c0_152, %c0_153] : memref<3x3x32x32xbf16, #tpu.memory_space<vmem>>, vector<1x1x32x32xbf16>
    %132 = vector.shape_cast %131 : vector<1x1x32x32xbf16> to vector<32x32xbf16>
    %cst_154 = arith.constant dense<0.000000e+00> : vector<256x32xf32>
    %133 = tpu.matmul %130, %132, %cst_154 {dimension_numbers = #tpu.dot_dimension_numbers<[1], [0], [0], [1], [0, 0, 1, 1], [], []>} : vector<256x32xbf16>, vector<32x32xbf16>, vector<256x32xf32> -> vector<256x32xf32>
    %134 = arith.addf %127, %133 : vector<256x32xf32>
    %c2_155 = arith.constant 2 : index
    %c2_156 = arith.constant 2 : index
    %c0_157 = arith.constant 0 : index
    %135 = vector.load %arg12[%c2_155, %c2_156, %c0_157] : memref<18x18x32xf32, #tpu.memory_space<vmem>>, vector<16x16x32xf32>
    %136 = vector.shape_cast %135 : vector<16x16x32xf32> to vector<256x32xf32>
    %137 = arith.truncf %136 : vector<256x32xf32> to vector<256x32xbf16>
    %c2_158 = arith.constant 2 : index
    %c2_159 = arith.constant 2 : index
    %c0_160 = arith.constant 0 : index
    %c0_161 = arith.constant 0 : index
    %138 = vector.load %arg4[%c2_158, %c2_159, %c0_160, %c0_161] : memref<3x3x32x32xbf16, #tpu.memory_space<vmem>>, vector<1x1x32x32xbf16>
    %139 = vector.shape_cast %138 : vector<1x1x32x32xbf16> to vector<32x32xbf16>
    %cst_162 = arith.constant dense<0.000000e+00> : vector<256x32xf32>
    %140 = tpu.matmul %137, %139, %cst_162 {dimension_numbers = #tpu.dot_dimension_numbers<[1], [0], [0], [1], [0, 0, 1, 1], [], []>} : vector<256x32xbf16>, vector<32x32xbf16>, vector<256x32xf32> -> vector<256x32xf32>
    %141 = arith.addf %134, %140 : vector<256x32xf32>
    %c0_163 = arith.constant 0 : index
    %c0_164 = arith.constant 0 : index
    %142 = vector.load %arg5[%c0_163, %c0_164] : memref<1x32xf32, #tpu.memory_space<vmem>>, vector<1x32xf32>
    %143 = vector.broadcast %142 : vector<1x32xf32> to vector<256x32xf32>
    %144 = arith.addf %141, %143 : vector<256x32xf32>
    %cst_165 = arith.constant 0.000000e+00 : f32
    %145 = vector.broadcast %cst_165 : f32 to vector<256x32xf32>
    %146 = arith.maximumf %144, %145 : vector<256x32xf32>
    %147 = arith.truncf %146 : vector<256x32xf32> to vector<256x32xbf16>
    %c0_166 = arith.constant 0 : index
    %c0_167 = arith.constant 0 : index
    %148 = vector.load %arg6[%c0_166, %c0_167] : memref<32x32xbf16, #tpu.memory_space<vmem>>, vector<32x32xbf16>
    %cst_168 = arith.constant dense<0.000000e+00> : vector<256x32xf32>
    %149 = tpu.matmul %147, %148, %cst_168 {dimension_numbers = #tpu.dot_dimension_numbers<[1], [0], [0], [1], [0, 0, 1, 1], [], []>} : vector<256x32xbf16>, vector<32x32xbf16>, vector<256x32xf32> -> vector<256x32xf32>
    %c0_169 = arith.constant 0 : index
    %c0_170 = arith.constant 0 : index
    %150 = vector.load %arg7[%c0_169, %c0_170] : memref<1x32xf32, #tpu.memory_space<vmem>>, vector<1x32xf32>
    %151 = vector.broadcast %150 : vector<1x32xf32> to vector<256x32xf32>
    %152 = arith.addf %149, %151 : vector<256x32xf32>
    %153 = tpu.transpose %152, [1, 0] : vector<256x32xf32> -> vector<32x256xf32>
    %154 = arith.truncf %153 : vector<32x256xf32> to vector<32x256xbf16>
    %c0_171 = arith.constant 0 : index
    %c0_172 = arith.constant 0 : index
    %155 = vector.load %arg8[%c0_171, %c0_172] : memref<1024x32xbf16, #tpu.memory_space<vmem>>, vector<1024x32xbf16>
    %cst_173 = arith.constant dense<0.000000e+00> : vector<1024x256xf32>
    %156 = tpu.matmul %155, %154, %cst_173 {dimension_numbers = #tpu.dot_dimension_numbers<[1], [0], [0], [1], [0, 0, 1, 1], [], []>} : vector<1024x32xbf16>, vector<32x256xbf16>, vector<1024x256xf32> -> vector<1024x256xf32>
    %c0_174 = arith.constant 0 : index
    %c0_175 = arith.constant 0 : index
    %157 = vector.load %arg9[%c0_174, %c0_175] : memref<1024x1xf32, #tpu.memory_space<vmem>>, vector<1024x1xf32>
    %158 = vector.broadcast %157 : vector<1024x1xf32> to vector<1024x256xf32>
    %159 = arith.addf %156, %158 : vector<1024x256xf32>
    %c0_176 = arith.constant 0 : index
    %c0_177 = arith.constant 0 : index
    %c0_178 = arith.constant 0 : index
    %160 = vector.load %arg10[%c0_176, %c0_177, %c0_178] : memref<1x1024x256xf32, #tpu.memory_space<vmem>>, vector<1x1024x256xf32>
    %161 = vector.shape_cast %160 : vector<1x1024x256xf32> to vector<1024x256xf32>
    %162 = vector.shape_cast %159 : vector<1024x256xf32> to vector<1x1024x256xf32>
    tpu.vector_store %arg10[%c0_176, %c0_177, %c0_178], %162 {strides = array<i32>} : memref<1x1024x256xf32, #tpu.memory_space<vmem>>, vector<1x1024x256xf32>,
    return
  }
  func.func @transform_0(%arg0: i32) -> (i32, i32, i32, i32) {
    %c0_i32 = arith.constant 0 : i32
    %c0_i32_0 = arith.constant 0 : i32
    %c0_i32_1 = arith.constant 0 : i32
    %c0_i32_2 = arith.constant 0 : i32
    return %arg0, %c0_i32, %c0_i32_0, %c0_i32_1 : i32, i32, i32, i32
  }
  func.func @transform_1(%arg0: i32) -> (i32, i32, i32, i32) {
    %c0_i32 = arith.constant 0 : i32
    %c0_i32_0 = arith.constant 0 : i32
    %c0_i32_1 = arith.constant 0 : i32
    %c0_i32_2 = arith.constant 0 : i32
    %c0_i32_3 = arith.constant 0 : i32
    return %c0_i32, %c0_i32_0, %c0_i32_1, %c0_i32_2 : i32, i32, i32, i32
  }
  func.func @transform_2(%arg0: i32) -> (i32, i32) {
    %c0_i32 = arith.constant 0 : i32
    %c0_i32_0 = arith.constant 0 : i32
    %c0_i32_1 = arith.constant 0 : i32
    return %c0_i32, %c0_i32_0 : i32, i32
  }
  func.func @transform_3(%arg0: i32) -> (i32, i32, i32, i32) {
    %c0_i32 = arith.constant 0 : i32
    %c0_i32_0 = arith.constant 0 : i32
    %c0_i32_1 = arith.constant 0 : i32
    %c0_i32_2 = arith.constant 0 : i32
    %c0_i32_3 = arith.constant 0 : i32
    return %c0_i32, %c0_i32_0, %c0_i32_1, %c0_i32_2 : i32, i32, i32, i32
  }
  func.func @transform_4(%arg0: i32) -> (i32, i32) {
    %c0_i32 = arith.constant 0 : i32
    %c0_i32_0 = arith.constant 0 : i32
    %c0_i32_1 = arith.constant 0 : i32
    return %c0_i32, %c0_i32_0 : i32, i32
  }
  func.func @transform_5(%arg0: i32) -> (i32, i32) {
    %c0_i32 = arith.constant 0 : i32
    %c0_i32_0 = arith.constant 0 : i32
    %c0_i32_1 = arith.constant 0 : i32
    return %c0_i32, %c0_i32_0 : i32, i32
  }
  func.func @transform_6(%arg0: i32) -> (i32, i32) {
    %c0_i32 = arith.constant 0 : i32
    %c0_i32_0 = arith.constant 0 : i32
    %c0_i32_1 = arith.constant 0 : i32
    return %c0_i32, %c0_i32_0 : i32, i32
  }
  func.func @transform_7(%arg0: i32) -> (i32, i32) {
    %c0_i32 = arith.constant 0 : i32
    %c0_i32_0 = arith.constant 0 : i32
    %c0_i32_1 = arith.constant 0 : i32
    return %c0_i32, %c0_i32_0 : i32, i32
  }
  func.func @transform_8(%arg0: i32) -> (i32, i32) {
    %c0_i32 = arith.constant 0 : i32
    %c0_i32_0 = arith.constant 0 : i32
    %c0_i32_1 = arith.constant 0 : i32
    return %c0_i32, %c0_i32_0 : i32, i32
  }
  func.func @transform_9(%arg0: i32) -> (i32, i32, i32) {
    %c0_i32 = arith.constant 0 : i32
    %c0_i32_0 = arith.constant 0 : i32
    %c0_i32_1 = arith.constant 0 : i32
    return %arg0, %c0_i32, %c0_i32_0 : i32, i32, i32
  }
}

</mosaic_0001>

<llo_original>
// kernel: vae_sampler_forward.1
$region0: #{vae_sampler_forward.1}
  #allocation0 [shape = 'u32[]', space=smem, size = 0x4, offset = 0x4, fixed_abs, tag = 'smem constant byte address 0x4 - core index']
  #allocation1 [shape = 'u32[144,128]{1,0:T(1,128)}', space=vmem, size = 0x12000, scoped, tag = 'internal scratch']
  #allocation2 [shape = 'f32[18,18,4]{2,1,0:T(8,128)}', space=vmem, size = 0x36000, scoped, tag = 'scratch operand']
  #allocation3 [shape = 'f32[18,18,32]{2,1,0:T(8,128)}', space=vmem, size = 0x36000, scoped, tag = 'scratch operand']
  %s0 = inlined_call_operand.vmem [shape: f32[2,16,16,4], index: 0, kind: input, shape index: {}]
  %s1 = inlined_call_operand.hbm [shape: bf16[3,3,4,32], index: 1, kind: input, shape index: {}]
  %s2 = inlined_call_operand.hbm [shape: f32[1,32], index: 2, kind: input, shape index: {}]
  %s3 = inlined_call_operand.hbm [shape: bf16[3,3,32,32], index: 3, kind: input, shape index: {}]
  %s4 = inlined_call_operand.hbm [shape: f32[1,32], index: 4, kind: input, shape index: {}]
  %s5 = inlined_call_operand.hbm [shape: bf16[32,32], index: 5, kind: input, shape index: {}]
  %s6 = inlined_call_operand.hbm [shape: f32[1,32], index: 6, kind: input, shape index: {}]
  %s7 = inlined_call_operand.vmem [shape: bf16[1024,32], index: 7, kind: input, shape index: {}]
  %s8 = inlined_call_operand.vmem [shape: f32[1024,1], index: 8, kind: input, shape index: {}]
  %s9 = inlined_call_operand.vmem [shape: f32[2,1024,256], index: 9, kind: output, shape index: {}]
  %s10 = sld [smem:[#allocation0]]
  $region93: #{vae_sampler_forward.1} parent=0
    _
  %s12 = ssub.s32 1, %s10
  %s13 = scalar_select 0, %s12, %s10
  $region1: #{vae_sampler_forward.1} parent=0
    #allocation4 [shape = 'u8[9216]{0}', space=vmem, size = 0x2400, scoped, tag = 'input window, operand 1, single buffered']
    #allocation5 [shape = 's32[2]{0}', space=sflag, size = 0x8, scoped, tag = 'scoped memory for vae_sampler_forward.1']
    #allocation6 [shape = 'u8[512]{0}', space=vmem, size = 0x400, scoped, tag = 'input window, operand 2, single buffered']
    #allocation7 [shape = 's32[1]{0}', space=sflag, size = 0x4, scoped, tag = 'scoped memory for vae_sampler_forward.1']
    #allocation8 [shape = 'u8[73728]{0}', space=vmem, size = 0x12000, scoped, tag = 'input window, operand 3, single buffered']
    #allocation9 [shape = 'u8[512]{0}', space=vmem, size = 0x400, scoped, tag = 'input window, operand 4, single buffered']
    #allocation10 [shape = 's32[1]{0}', space=sflag, size = 0x4, scoped, tag = 'scoped memory for vae_sampler_forward.1']
    #allocation11 [shape = 'u8[8192]{0}', space=vmem, size = 0x2000, scoped, tag = 'input window, operand 5, single buffered']
    #allocation12 [shape = 'u8[512]{0}', space=vmem, size = 0x400, scoped, tag = 'input window, operand 6, single buffered']
    #allocation13 [shape = 's32[1]{0}', space=sflag, size = 0x4, scoped, tag = 'scoped memory for vae_sampler_forward.1']
    %14 = vsyncpa [#allocation5], 0
    %15 = vsyncpa [#allocation7], 0
    %16 = vsyncpa [#allocation10], 0
    %17 = vsyncpa [#allocation13], 0
    loop: start=0, step=1, limit=4
    $region2: #{vae_sampler_forward.1} parent=1 // loop_pre_header
      _
    $region3: #{vae_sampler_forward.1} parent=1 // loop_header
      %s19 = sphi 0, %s23
      %p20 = scmp.ge.s32.totalorder %s19, 4
      %s29 = sphi 0, %s31
      %s32 = sphi 0, %s29
      %s33 = sphi 0, %s32
      %s49 = sphi 0, %s33
      %s53 = sphi 0, %s53
      %s55 = sphi 0, %s53
      %s56 = sphi 0, %s55
      %s70 = sphi 0, %s56
      %s74 = sphi 0, %s74
      %s76 = sphi 0, %s74
      %s77 = sphi 0, %s76
      %s91 = sphi 0, %s77
      %s95 = sphi 0, %s95
      %s97 = sphi 0, %s95
      %s98 = sphi 0, %s97
      %s112 = sphi 0, %s98
      %s116 = sphi 0, %s116
      %s118 = sphi 0, %s116
      %s119 = sphi 0, %s118
      %s133 = sphi 0, %s119
      %s137 = sphi 0, %s137
      %s139 = sphi 0, %s137
      %s140 = sphi 0, %s139
      %s154 = sphi 0, %s140
      %s158 = sphi 0, %s158
      %s160 = sphi 0, %s158
      %s161 = sphi 0, %s160
      %s175 = sphi 0, %s161
      %s179 = sphi 0, %s179
      %s181 = sphi 0, %s179
      %s182 = sphi 0, %s181
      %s196 = sphi 0, %s182
      %s200 = sphi 0, %s200
      %s202 = sphi 0, %s200
      %s203 = sphi 0, %s202
      %s217 = sphi 0, %s203
      %s223 = sphi 0, %s225
      %s226 = sphi 0, %s223
      %s227 = sphi 0, %s226
      %s243 = sphi 0, %s227
    $region4: #{vae_sampler_forward.1} parent=1 // loop_header_branch
      %22 = sbr.rel (%p20) target = $region8
    $region5: #{vae_sampler_forward.1} parent=1 // loop_body
      %s24 = ssub.s32 %s19, 1
      %s25 = ssub.s32 %s19, 2
      %s26 = sadd.s32 %s19, 1
      %s27 = ssub.s32 %s19, %s26
      %p28 = scmp.eq.s32.totalorder %s27, 0
      %s30 = sadd.s32 %s29, 1
      %s31 = scalar_select %p28, %s29, %s30
      %p34 = pneg %p28
      %p35 = scmp.eq.s32.totalorder %s19, 1
      %p36 = por %p34, %p35
      %p37 = scmp.ne.s32.totalorder %s29, %s32
      %p38 = scmp.eq.s32.totalorder %s19, 0
      %p39 = por %p37, %p38
      %p40 = scmp.ne.s32.totalorder %s29, %s32
      %p41 = scmp.eq.s32.totalorder %s24, 1
      %p42 = por %p40, %p41
      %p43 = scmp.ne.s32.totalorder %s32, %s33
      %p44 = scmp.eq.s32.totalorder %s24, 0
      %p45 = por %p43, %p44
      %p46 = scmp.ne.s32.totalorder %s32, %s33
      %p47 = scmp.eq.s32.totalorder %s25, 1
      %p48 = por %p46, %p47
      %p50 = scmp.ne.s32.totalorder %s33, %s49
      %p51 = scmp.eq.s32.totalorder %s25, 0
      %p52 = por %p50, %p51
      %s54 = sadd.s32 %s53, 1
      %p57 = scmp.eq.s32.totalorder %s19, 1
      %p58 = scmp.ne.s32.totalorder %s53, %s55
      %p59 = scmp.eq.s32.totalorder %s19, 0
      %p60 = por %p58, %p59
      %p61 = scmp.ne.s32.totalorder %s53, %s55
      %p62 = scmp.eq.s32.totalorder %s24, 1
      %p63 = por %p61, %p62
      %p64 = scmp.ne.s32.totalorder %s55, %s56
      %p65 = scmp.eq.s32.totalorder %s24, 0
      %p66 = por %p64, %p65
      %p67 = scmp.ne.s32.totalorder %s55, %s56
      %p68 = scmp.eq.s32.totalorder %s25, 1
      %p69 = por %p67, %p68
      %p71 = scmp.ne.s32.totalorder %s56, %s70
      %p72 = scmp.eq.s32.totalorder %s25, 0
      %p73 = por %p71, %p72
      %s75 = sadd.s32 %s74, 1
      %p78 = scmp.eq.s32.totalorder %s19, 1
      %p79 = scmp.ne.s32.totalorder %s74, %s76
      %p80 = scmp.eq.s32.totalorder %s19, 0
      %p81 = por %p79, %p80
      %p82 = scmp.ne.s32.totalorder %s74, %s76
      %p83 = scmp.eq.s32.totalorder %s24, 1
      %p84 = por %p82, %p83
      %p85 = scmp.ne.s32.totalorder %s76, %s77
      %p86 = scmp.eq.s32.totalorder %s24, 0
      %p87 = por %p85, %p86
      %p88 = scmp.ne.s32.totalorder %s76, %s77
      %p89 = scmp.eq.s32.totalorder %s25, 1
      %p90 = por %p88, %p89
      %p92 = scmp.ne.s32.totalorder %s77, %s91
      %p93 = scmp.eq.s32.totalorder %s25, 0
      %p94 = por %p92, %p93
      %s96 = sadd.s32 %s95, 1
      %p99 = scmp.eq.s32.totalorder %s19, 1
      %p100 = scmp.ne.s32.totalorder %s95, %s97
      %p101 = scmp.eq.s32.totalorder %s19, 0
      %p102 = por %p100, %p101
      %p103 = scmp.ne.s32.totalorder %s95, %s97
      %p104 = scmp.eq.s32.totalorder %s24, 1
      %p105 = por %p103, %p104
      %p106 = scmp.ne.s32.totalorder %s97, %s98
      %p107 = scmp.eq.s32.totalorder %s24, 0
      %p108 = por %p106, %p107
      %p109 = scmp.ne.s32.totalorder %s97, %s98
      %p110 = scmp.eq.s32.totalorder %s25, 1
      %p111 = por %p109, %p110
      %p113 = scmp.ne.s32.totalorder %s98, %s112
      %p114 = scmp.eq.s32.totalorder %s25, 0
      %p115 = por %p113, %p114
      %s117 = sadd.s32 %s116, 1
      %p120 = scmp.eq.s32.totalorder %s19, 1
      %p121 = scmp.ne.s32.totalorder %s116, %s118
      %p122 = scmp.eq.s32.totalorder %s19, 0
      %p123 = por %p121, %p122
      %p124 = scmp.ne.s32.totalorder %s116, %s118
      %p125 = scmp.eq.s32.totalorder %s24, 1
      %p126 = por %p124, %p125
      %p127 = scmp.ne.s32.totalorder %s118, %s119
      %p128 = scmp.eq.s32.totalorder %s24, 0
      %p129 = por %p127, %p128
      %p130 = scmp.ne.s32.totalorder %s118, %s119
      %p131 = scmp.eq.s32.totalorder %s25, 1
      %p132 = por %p130, %p131
      %p134 = scmp.ne.s32.totalorder %s119, %s133
      %p135 = scmp.eq.s32.totalorder %s25, 0
      %p136 = por %p134, %p135
      %s138 = sadd.s32 %s137, 1
      %p141 = scmp.eq.s32.totalorder %s19, 1
      %p142 = scmp.ne.s32.totalorder %s137, %s139
      %p143 = scmp.eq.s32.totalorder %s19, 0
      %p144 = por %p142, %p143
      %p145 = scmp.ne.s32.totalorder %s137, %s139
      %p146 = scmp.eq.s32.totalorder %s24, 1
      %p147 = por %p145, %p146
      %p148 = scmp.ne.s32.totalorder %s139, %s140
      %p149 = scmp.eq.s32.totalorder %s24, 0
      %p150 = por %p148, %p149
      %p151 = scmp.ne.s32.totalorder %s139, %s140
      %p152 = scmp.eq.s32.totalorder %s25, 1
      %p153 = por %p151, %p152
      %p155 = scmp.ne.s32.totalorder %s140, %s154
      %p156 = scmp.eq.s32.totalorder %s25, 0
      %p157 = por %p155, %p156
      %s159 = sadd.s32 %s158, 1
      %p162 = scmp.eq.s32.totalorder %s19, 1
      %p163 = scmp.ne.s32.totalorder %s158, %s160
      %p164 = scmp.eq.s32.totalorder %s19, 0
      %p165 = por %p163, %p164
      %p166 = scmp.ne.s32.totalorder %s158, %s160
      %p167 = scmp.eq.s32.totalorder %s24, 1
      %p168 = por %p166, %p167
      %p169 = scmp.ne.s32.totalorder %s160, %s161
      %p170 = scmp.eq.s32.totalorder %s24, 0
      %p171 = por %p169, %p170
      %p172 = scmp.ne.s32.totalorder %s160, %s161
      %p173 = scmp.eq.s32.totalorder %s25, 1
      %p174 = por %p172, %p173
      %p176 = scmp.ne.s32.totalorder %s161, %s175
      %p177 = scmp.eq.s32.totalorder %s25, 0
      %p178 = por %p176, %p177
      %s180 = sadd.s32 %s179, 1
      %p183 = scmp.eq.s32.totalorder %s19, 1
      %p184 = scmp.ne.s32.totalorder %s179, %s181
      %p185 = scmp.eq.s32.totalorder %s19, 0
      %p186 = por %p184, %p185
      %p187 = scmp.ne.s32.totalorder %s179, %s181
      %p188 = scmp.eq.s32.totalorder %s24, 1
      %p189 = por %p187, %p188
      %p190 = scmp.ne.s32.totalorder %s181, %s182
      %p191 = scmp.eq.s32.totalorder %s24, 0
      %p192 = por %p190, %p191
      %p193 = scmp.ne.s32.totalorder %s181, %s182
      %p194 = scmp.eq.s32.totalorder %s25, 1
      %p195 = por %p193, %p194
      %p197 = scmp.ne.s32.totalorder %s182, %s196
      %p198 = scmp.eq.s32.totalorder %s25, 0
      %p199 = por %p197, %p198
      %s201 = sadd.s32 %s200, 1
      %p204 = scmp.eq.s32.totalorder %s19, 1
      %p205 = scmp.ne.s32.totalorder %s200, %s202
      %p206 = scmp.eq.s32.totalorder %s19, 0
      %p207 = por %p205, %p206
      %p208 = scmp.ne.s32.totalorder %s200, %s202
      %p209 = scmp.eq.s32.totalorder %s24, 1
      %p210 = por %p208, %p209
      %p211 = scmp.ne.s32.totalorder %s202, %s203
      %p212 = scmp.eq.s32.totalorder %s24, 0
      %p213 = por %p211, %p212
      %p214 = scmp.ne.s32.totalorder %s202, %s203
      %p215 = scmp.eq.s32.totalorder %s25, 1
      %p216 = por %p214, %p215
      %p218 = scmp.ne.s32.totalorder %s203, %s217
      %p219 = scmp.eq.s32.totalorder %s25, 0
      %p220 = por %p218, %p219
      %s221 = ssub.s32 %s19, %s26
      %p222 = scmp.eq.s32.totalorder %s221, 0
      %s224 = sadd.s32 %s223, 1
      %s225 = scalar_select %p222, %s223, %s224
      %p228 = pneg %p222
      %p229 = scmp.eq.s32.totalorder %s19, 1
      %p230 = por %p228, %p229
      %p231 = scmp.ne.s32.totalorder %s223, %s226
      %p232 = scmp.eq.s32.totalorder %s19, 0
      %p233 = por %p231, %p232
      %p234 = scmp.ne.s32.totalorder %s223, %s226
      %p235 = scmp.eq.s32.totalorder %s24, 1
      %p236 = por %p234, %p235
      %p237 = scmp.ne.s32.totalorder %s226, %s227
      %p238 = scmp.eq.s32.totalorder %s24, 0
      %p239 = por %p237, %p238
      %p240 = scmp.ne.s32.totalorder %s226, %s227
      %p241 = scmp.eq.s32.totalorder %s25, 1
      %p242 = por %p240, %p241
      %p244 = scmp.ne.s32.totalorder %s227, %s243
      %p245 = scmp.eq.s32.totalorder %s25, 0
      %p246 = por %p244, %p245
      %p247 = scmp.le.s32.totalorder 1, %s19
      %p248 = scmp.lt.s32.totalorder %s19, 3
      %p249 = pnand %p247, %p248
      %p250 = pneg %p249
      // Predicated region
      $region9: #{vae_sampler_forward.1} parent=5 // pred_check
        _
      $region10: #{vae_sampler_forward.1} parent=5 // pred_check_branch
        %252 = sbr.rel (%p249) target = $region12
      $region11: #{vae_sampler_forward.1} parent=5 // pred_region
        %s253 = ssub.s32 %s19, 1
        // Predicated region
        $region13: #{vae_sampler_forward.1} parent=11 // pred_check
          %p254 = pneg %p66
        $region14: #{vae_sampler_forward.1} parent=11 // pred_check_branch
          %256 = sbr.rel (%p254) target = $region16
        $region15: #{vae_sampler_forward.1} parent=11 // pred_region
          %s258 = ssub.s32 288, 288
          %259 = vsyncadd [#allocation5], %s258
          %s260 = sshll.u32 [#allocation4], 4
          %s261 = int_to_ptr.vmem [resolvable:$true] %s260
          %266 = dma.hbm_to_vmem [thread:$0]  %s1, 288, %s261, [#allocation5], 32, 32, 2
        $region16: #{vae_sampler_forward.1} parent=11 // pred_fallthru
          _
        // Predicated region
        $region17: #{vae_sampler_forward.1} parent=11 // pred_check
          %p267 = pneg %p87
        $region18: #{vae_sampler_forward.1} parent=11 // pred_check_branch
          %269 = sbr.rel (%p267) target = $region20
        $region19: #{vae_sampler_forward.1} parent=11 // pred_region
          %s271 = ssub.s32 16, 16
          %272 = vsyncadd [#allocation7], %s271
          %s274 = sshll.u32 [#allocation6], 4
          %s275 = int_to_ptr.vmem [resolvable:$true] %s274
          %277 = dma.hbm_to_vmem [thread:$0]  %s2, 16, %s275, [#allocation7]
        $region20: #{vae_sampler_forward.1} parent=11 // pred_fallthru
          _
        // Predicated region
        $region21: #{vae_sampler_forward.1} parent=11 // pred_check
          %p278 = pneg %p108
        $region22: #{vae_sampler_forward.1} parent=11 // pred_check_branch
          %280 = sbr.rel (%p278) target = $region24
        $region23: #{vae_sampler_forward.1} parent=11 // pred_region
          %s282 = ssub.s32 2304, 2304
          %283 = vsyncadd [#allocation7], %s282
          %s284 = sshll.u32 [#allocation8], 4
          %s285 = int_to_ptr.vmem [resolvable:$true] %s284
          %290 = dma.hbm_to_vmem [thread:$0]  %s3, 2304, %s285, [#allocation7], 64, 64, 4
        $region24: #{vae_sampler_forward.1} parent=11 // pred_fallthru
          _
        // Predicated region
        $region25: #{vae_sampler_forward.1} parent=11 // pred_check
          %p291 = pneg %p129
        $region26: #{vae_sampler_forward.1} parent=11 // pred_check_branch
          %293 = sbr.rel (%p291) target = $region28
        $region27: #{vae_sampler_forward.1} parent=11 // pred_region
          %s295 = ssub.s32 16, 16
          %296 = vsyncadd [#allocation10], %s295
          %s298 = sshll.u32 [#allocation9], 4
          %s299 = int_to_ptr.vmem [resolvable:$true] %s298
          %301 = dma.hbm_to_vmem [thread:$0]  %s4, 16, %s299, [#allocation10]
        $region28: #{vae_sampler_forward.1} parent=11 // pred_fallthru
          _
        // Predicated region
        $region29: #{vae_sampler_forward.1} parent=11 // pred_check
          %p302 = pneg %p150
        $region30: #{vae_sampler_forward.1} parent=11 // pred_check_branch
          %304 = sbr.rel (%p302) target = $region32
        $region31: #{vae_sampler_forward.1} parent=11 // pred_region
          %s306 = ssub.s32 256, 256
          %307 = vsyncadd [#allocation10], %s306
          %s308 = sshll.u32 [#allocation11], 4
          %s309 = int_to_ptr.vmem [resolvable:$true] %s308
          %314 = dma.hbm_to_vmem [thread:$0]  %s5, 256, %s309, [#allocation10], 64, 64, 4
        $region32: #{vae_sampler_forward.1} parent=11 // pred_fallthru
          _
        // Predicated region
        $region33: #{vae_sampler_forward.1} parent=11 // pred_check
          %p315 = pneg %p171
        $region34: #{vae_sampler_forward.1} parent=11 // pred_check_branch
          %317 = sbr.rel (%p315) target = $region36
        $region35: #{vae_sampler_forward.1} parent=11 // pred_region
          %s319 = ssub.s32 16, 16
          %320 = vsyncadd [#allocation13], %s319
          %s322 = sshll.u32 [#allocation12], 4
          %s323 = int_to_ptr.vmem [resolvable:$true] %s322
          %325 = dma.hbm_to_vmem [thread:$0]  %s6, 16, %s323, [#allocation13]
        $region36: #{vae_sampler_forward.1} parent=11 // pred_fallthru
          _
        // Predicated region
        $region37: #{vae_sampler_forward.1} parent=11 // pred_check
          %p326 = pneg %p192
        $region38: #{vae_sampler_forward.1} parent=11 // pred_check_branch
          %328 = sbr.rel (%p326) target = $region40
        $region39: #{vae_sampler_forward.1} parent=11 // pred_region
          _
        $region40: #{vae_sampler_forward.1} parent=11 // pred_fallthru
          _
        // Predicated region
        $region41: #{vae_sampler_forward.1} parent=11 // pred_check
          %p329 = pneg %p213
        $region42: #{vae_sampler_forward.1} parent=11 // pred_check_branch
          %331 = sbr.rel (%p329) target = $region44
        $region43: #{vae_sampler_forward.1} parent=11 // pred_region
          _
        $region44: #{vae_sampler_forward.1} parent=11 // pred_fallthru
          _
      $region12: #{vae_sampler_forward.1} parent=5 // pred_fallthru
        _
      %p332 = scmp.lt.s32.totalorder %s19, 2
      // Predicated region
      $region45: #{vae_sampler_forward.1} parent=5 // pred_check
        %p333 = pneg %p332
      $region46: #{vae_sampler_forward.1} parent=5 // pred_check_branch
        %335 = sbr.rel (%p333) target = $region48
      $region47: #{vae_sampler_forward.1} parent=5 // pred_region
        // Predicated region
        $region49: #{vae_sampler_forward.1} parent=47 // pred_check
          %p336 = pneg %p39
        $region50: #{vae_sampler_forward.1} parent=47 // pred_check_branch
          %338 = sbr.rel (%p336) target = $region52
        $region51: #{vae_sampler_forward.1} parent=47 // pred_region
          %p339 = scmp.lt.s32.totalorder %s19, 1
          %s340 = scalar_select %p339, %s19, 1
          %s341 = smul.addr %s340, 32
          %s342 = smul.addr %s341, 8
          %s343 = scalar_lea.vmem %s0, %s342
        $region52: #{vae_sampler_forward.1} parent=47 // pred_fallthru
          _
      $region48: #{vae_sampler_forward.1} parent=5 // pred_fallthru
        _
      %p344 = scmp.le.s32.totalorder 1, %s19
      %p345 = scmp.lt.s32.totalorder %s19, 3
      %p346 = pnand %p344, %p345
      %p347 = pneg %p346
      // Predicated region
      $region53: #{vae_sampler_forward.1} parent=5 // pred_check
        _
      $region54: #{vae_sampler_forward.1} parent=5 // pred_check_branch
        %349 = sbr.rel (%p346) target = $region56
      $region55: #{vae_sampler_forward.1} parent=5 // pred_region
        %s350 = ssub.s32 %s19, 1
        // Predicated region
        $region57: #{vae_sampler_forward.1} parent=55 // pred_check
          %p351 = pneg %p66
        $region58: #{vae_sampler_forward.1} parent=55 // pred_check_branch
          %353 = sbr.rel (%p351) target = $region60
        $region59: #{vae_sampler_forward.1} parent=55 // pred_region
          %354 = dma.done [#allocation5], 288
        $region60: #{vae_sampler_forward.1} parent=55 // pred_fallthru
          _
        // Predicated region
        $region61: #{vae_sampler_forward.1} parent=55 // pred_check
          %p355 = pneg %p87
        $region62: #{vae_sampler_forward.1} parent=55 // pred_check_branch
          %357 = sbr.rel (%p355) target = $region64
        $region63: #{vae_sampler_forward.1} parent=55 // pred_region
          %358 = dma.done [#allocation7], 16
        $region64: #{vae_sampler_forward.1} parent=55 // pred_fallthru
          _
        // Predicated region
        $region65: #{vae_sampler_forward.1} parent=55 // pred_check
          %p359 = pneg %p108
        $region66: #{vae_sampler_forward.1} parent=55 // pred_check_branch
          %361 = sbr.rel (%p359) target = $region68
        $region67: #{vae_sampler_forward.1} parent=55 // pred_region
          %362 = dma.done [#allocation7], 2304
        $region68: #{vae_sampler_forward.1} parent=55 // pred_fallthru
          _
        // Predicated region
        $region69: #{vae_sampler_forward.1} parent=55 // pred_check
          %p363 = pneg %p129
        $region70: #{vae_sampler_forward.1} parent=55 // pred_check_branch
          %365 = sbr.rel (%p363) target = $region72
        $region71: #{vae_sampler_forward.1} parent=55 // pred_region
          %366 = dma.done [#allocation10], 16
        $region72: #{vae_sampler_forward.1} parent=55 // pred_fallthru
          _
        // Predicated region
        $region73: #{vae_sampler_forward.1} parent=55 // pred_check
          %p367 = pneg %p150
        $region74: #{vae_sampler_forward.1} parent=55 // pred_check_branch
          %369 = sbr.rel (%p367) target = $region76
        $region75: #{vae_sampler_forward.1} parent=55 // pred_region
          %370 = dma.done [#allocation10], 256
        $region76: #{vae_sampler_forward.1} parent=55 // pred_fallthru
          _
        // Predicated region
        $region77: #{vae_sampler_forward.1} parent=55 // pred_check
          %p371 = pneg %p171
        $region78: #{vae_sampler_forward.1} parent=55 // pred_check_branch
          %373 = sbr.rel (%p371) target = $region80
        $region79: #{vae_sampler_forward.1} parent=55 // pred_region
          %374 = dma.done [#allocation13], 16
        $region80: #{vae_sampler_forward.1} parent=55 // pred_fallthru
          _
        %p375 = scmp.lt.s32.totalorder %s24, 1
        %s376 = scalar_select %p375, %s24, 1
        %s377 = smul.addr %s376, 32
        %s378 = smul.addr %s377, 8
        %s379 = scalar_lea.vmem %s0, %s378
        %p380 = pneg %p45
        %p381 = pneg %p42
        %p382 = pneg %p66
        %p383 = pneg %p63
        %p384 = pneg %p87
        %p385 = pneg %p84
        %p386 = pneg %p108
        %p387 = pneg %p105
        %p388 = pneg %p129
        %p389 = pneg %p126
        %p390 = pneg %p150
        %p391 = pneg %p147
        %p392 = pneg %p171
        %p393 = pneg %p168
        %p394 = pneg %p192
        %p395 = pneg %p189
        %p396 = pneg %p213
        %p397 = pneg %p210
        %p398 = pneg %p239
        %p399 = pneg %p236
        %p400 = scmp.lt.s32.totalorder %s24, 1
        %s401 = scalar_select %p400, %s24, 1
        %s402 = smul.addr %s401, 256
        %s403 = smul.addr %s402, 8
        %s404 = scalar_lea.vmem %s9, %s403
        %p405 = scmp.lt.s32.totalorder %s24, 1
        %s406 = scalar_select %p405, %s24, 1
        %s407 = smul.addr %s406, 32
        %s408 = smul.addr %s407, 8
        %s409 = scalar_lea.vmem %s0, %s408
        %p410 = scmp.lt.s32.totalorder %s24, 1
        %s411 = scalar_select %p410, %s24, 1
        %s412 = smul.addr %s411, 256
        %s413 = smul.addr %s412, 8
        %s414 = scalar_lea.vmem %s9, %s413
        %vm416 = vcmask 31744
        %417 = vst.msk [vmem:[#allocation2] sm:$0xff] %vm416, 0.0
        %418 = vst.msk [vmem:[#allocation2 + $0x8] sm:$0xff] %vm416, 0.0
        %vm419 = vcmask 25600
        %420 = vst.msk [vmem:[#allocation2 + $0x10] sm:$0x3] %vm419, 0.0
        %421 = vst.msk [vmem:[#allocation2 + $0x18] sm:$0xff] %vm416, 0.0
        %422 = vst.msk [vmem:[#allocation2 + $0x20] sm:$0xff] %vm416, 0.0
        %423 = vst.msk [vmem:[#allocation2 + $0x28] sm:$0x3] %vm419, 0.0
        %424 = vst.msk [vmem:[#allocation2 + $0x30] sm:$0xff] %vm416, 0.0
        %425 = vst.msk [vmem:[#allocation2 + $0x38] sm:$0xff] %vm416, 0.0
        %426 = vst.msk [vmem:[#allocation2 + $0x40] sm:$0x3] %vm419, 0.0
        %427 = vst.msk [vmem:[#allocation2 + $0x48] sm:$0xff] %vm416, 0.0
        %428 = vst.msk [vmem:[#allocation2 + $0x50] sm:$0xff] %vm416, 0.0
        %429 = vst.msk [vmem:[#allocation2 + $0x58] sm:$0x3] %vm419, 0.0
        %430 = vst.msk [vmem:[#allocation2 + $0x60] sm:$0xff] %vm416, 0.0
        %431 = vst.msk [vmem:[#allocation2 + $0x68] sm:$0xff] %vm416, 0.0
        %432 = vst.msk [vmem:[#allocation2 + $0x70] sm:$0x3] %vm419, 0.0
        %433 = vst.msk [vmem:[#allocation2 + $0x78] sm:$0xff] %vm416, 0.0
        %434 = vst.msk [vmem:[#allocation2 + $0x80] sm:$0xff] %vm416, 0.0
        %435 = vst.msk [vmem:[#allocation2 + $0x88] sm:$0x3] %vm419, 0.0
        %436 = vst.msk [vmem:[#allocation2 + $0x90] sm:$0xff] %vm416, 0.0
        %437 = vst.msk [vmem:[#allocation2 + $0x98] sm:$0xff] %vm416, 0.0
        %438 = vst.msk [vmem:[#allocation2 + $0xa0] sm:$0x3] %vm419, 0.0
        %439 = vst.msk [vmem:[#allocation2 + $0xa8] sm:$0xff] %vm416, 0.0
        %440 = vst.msk [vmem:[#allocation2 + $0xb0] sm:$0xff] %vm416, 0.0
        %441 = vst.msk [vmem:[#allocation2 + $0xb8] sm:$0x3] %vm419, 0.0
        %442 = vst.msk [vmem:[#allocation2 + $0xc0] sm:$0xff] %vm416, 0.0
        %443 = vst.msk [vmem:[#allocation2 + $0xc8] sm:$0xff] %vm416, 0.0
        %444 = vst.msk [vmem:[#allocation2 + $0xd0] sm:$0x3] %vm419, 0.0
        %445 = vst.msk [vmem:[#allocation2 + $0xd8] sm:$0xff] %vm416, 0.0
        %446 = vst.msk [vmem:[#allocation2 + $0xe0] sm:$0xff] %vm416, 0.0
        %447 = vst.msk [vmem:[#allocation2 + $0xe8] sm:$0x3] %vm419, 0.0
        %448 = vst.msk [vmem:[#allocation2 + $0xf0] sm:$0xff] %vm416, 0.0
        %449 = vst.msk [vmem:[#allocation2 + $0xf8] sm:$0xff] %vm416, 0.0
        %450 = vst.msk [vmem:[#allocation2 + $0x100] sm:$0x3] %vm419, 0.0
        %451 = vst.msk [vmem:[#allocation2 + $0x108] sm:$0xff] %vm416, 0.0
        %452 = vst.msk [vmem:[#allocation2 + $0x110] sm:$0xff] %vm416, 0.0
        %453 = vst.msk [vmem:[#allocation2 + $0x118] sm:$0x3] %vm419, 0.0
        %454 = vst.msk [vmem:[#allocation2 + $0x120] sm:$0xff] %vm416, 0.0
        %455 = vst.msk [vmem:[#allocation2 + $0x128] sm:$0xff] %vm416, 0.0
        %456 = vst.msk [vmem:[#allocation2 + $0x130] sm:$0x3] %vm419, 0.0
        %457 = vst.msk [vmem:[#allocation2 + $0x138] sm:$0xff] %vm416, 0.0
        %458 = vst.msk [vmem:[#allocation2 + $0x140] sm:$0xff] %vm416, 0.0
        %459 = vst.msk [vmem:[#allocation2 + $0x148] sm:$0x3] %vm419, 0.0
        %460 = vst.msk [vmem:[#allocation2 + $0x150] sm:$0xff] %vm416, 0.0
        %461 = vst.msk [vmem:[#allocation2 + $0x158] sm:$0xff] %vm416, 0.0
        %462 = vst.msk [vmem:[#allocation2 + $0x160] sm:$0x3] %vm419, 0.0
        %463 = vst.msk [vmem:[#allocation2 + $0x168] sm:$0xff] %vm416, 0.0
        %464 = vst.msk [vmem:[#allocation2 + $0x170] sm:$0xff] %vm416, 0.0
        %465 = vst.msk [vmem:[#allocation2 + $0x178] sm:$0x3] %vm419, 0.0
        %466 = vst.msk [vmem:[#allocation2 + $0x180] sm:$0xff] %vm416, 0.0
        %467 = vst.msk [vmem:[#allocation2 + $0x188] sm:$0xff] %vm416, 0.0
        %468 = vst.msk [vmem:[#allocation2 + $0x190] sm:$0x3] %vm419, 0.0
        %469 = vst.msk [vmem:[#allocation2 + $0x198] sm:$0xff] %vm416, 0.0
        %470 = vst.msk [vmem:[#allocation2 + $0x1a0] sm:$0xff] %vm416, 0.0
        %471 = vst.msk [vmem:[#allocation2 + $0x1a8] sm:$0x3] %vm419, 0.0
        %v472 = vld [vmem:[%s409] sm:$0xff]
        %v473 = vld [vmem:[%s409 + $0x8] sm:$0xff]
        %v474 = vld [vmem:[%s409 + $0x10] sm:$0xff]
        %v475 = vld [vmem:[%s409 + $0x18] sm:$0xff]
        %v476 = vld [vmem:[%s409 + $0x20] sm:$0xff]
        %v477 = vld [vmem:[%s409 + $0x28] sm:$0xff]
        %v478 = vld [vmem:[%s409 + $0x30] sm:$0xff]
        %v479 = vld [vmem:[%s409 + $0x38] sm:$0xff]
        %v480 = vld [vmem:[%s409 + $0x40] sm:$0xff]
        %v481 = vld [vmem:[%s409 + $0x48] sm:$0xff]
        %v482 = vld [vmem:[%s409 + $0x50] sm:$0xff]
        %v483 = vld [vmem:[%s409 + $0x58] sm:$0xff]
        %v484 = vld [vmem:[%s409 + $0x60] sm:$0xff]
        %v485 = vld [vmem:[%s409 + $0x68] sm:$0xff]
        %v486 = vld [vmem:[%s409 + $0x70] sm:$0xff]
        %v487 = vld [vmem:[%s409 + $0x78] sm:$0xff]
        %v488 = vld [vmem:[%s409 + $0x80] sm:$0xff]
        %v489 = vld [vmem:[%s409 + $0x88] sm:$0xff]
        %v490 = vld [vmem:[%s409 + $0x90] sm:$0xff]
        %v491 = vld [vmem:[%s409 + $0x98] sm:$0xff]
        %v492 = vld [vmem:[%s409 + $0xa0] sm:$0xff]
        %v493 = vld [vmem:[%s409 + $0xa8] sm:$0xff]
        %v494 = vld [vmem:[%s409 + $0xb0] sm:$0xff]
        %v495 = vld [vmem:[%s409 + $0xb8] sm:$0xff]
        %v496 = vld [vmem:[%s409 + $0xc0] sm:$0xff]
        %v497 = vld [vmem:[%s409 + $0xc8] sm:$0xff]
        %v498 = vld [vmem:[%s409 + $0xd0] sm:$0xff]
        %v499 = vld [vmem:[%s409 + $0xd8] sm:$0xff]
        %v500 = vld [vmem:[%s409 + $0xe0] sm:$0xff]
        %v501 = vld [vmem:[%s409 + $0xe8] sm:$0xff]
        %v502 = vld [vmem:[%s409 + $0xf0] sm:$0xff]
        %v503 = vld [vmem:[%s409 + $0xf8] sm:$0xff]
        %s504 = scalar_lea.vmem [#allocation2], 24
        %505 = vst.msk [vmem:[%s504 + $0x1] sm:$0xff] %vm416, %v472
        %506 = vst.msk [vmem:[%s504 + $0x9] sm:$0xff] %vm416, %v473
        %507 = vst.msk [vmem:[%s504 + $0x19] sm:$0xff] %vm416, %v474
        %508 = vst.msk [vmem:[%s504 + $0x21] sm:$0xff] %vm416, %v475
        %509 = vst.msk [vmem:[%s504 + $0x31] sm:$0xff] %vm416, %v476
        %510 = vst.msk [vmem:[%s504 + $0x39] sm:$0xff] %vm416, %v477
        %511 = vst.msk [vmem:[%s504 + $0x49] sm:$0xff] %vm416, %v478
        %512 = vst.msk [vmem:[%s504 + $0x51] sm:$0xff] %vm416, %v479
        %513 = vst.msk [vmem:[%s504 + $0x61] sm:$0xff] %vm416, %v480
        %514 = vst.msk [vmem:[%s504 + $0x69] sm:$0xff] %vm416, %v481
        %515 = vst.msk [vmem:[%s504 + $0x79] sm:$0xff] %vm416, %v482
        %516 = vst.msk [vmem:[%s504 + $0x81] sm:$0xff] %vm416, %v483
        %517 = vst.msk [vmem:[%s504 + $0x91] sm:$0xff] %vm416, %v484
        %518 = vst.msk [vmem:[%s504 + $0x99] sm:$0xff] %vm416, %v485
        %519 = vst.msk [vmem:[%s504 + $0xa9] sm:$0xff] %vm416, %v486
        %520 = vst.msk [vmem:[%s504 + $0xb1] sm:$0xff] %vm416, %v487
        %521 = vst.msk [vmem:[%s504 + $0xc1] sm:$0xff] %vm416, %v488
        %522 = vst.msk [vmem:[%s504 + $0xc9] sm:$0xff] %vm416, %v489
        %523 = vst.msk [vmem:[%s504 + $0xd9] sm:$0xff] %vm416, %v490
        %524 = vst.msk [vmem:[%s504 + $0xe1] sm:$0xff] %vm416, %v491
        %525 = vst.msk [vmem:[%s504 + $0xf1] sm:$0xff] %vm416, %v492
        %526 = vst.msk [vmem:[%s504 + $0xf9] sm:$0xff] %vm416, %v493
        %527 = vst.msk [vmem:[%s504 + $0x109] sm:$0xff] %vm416, %v494
        %528 = vst.msk [vmem:[%s504 + $0x111] sm:$0xff] %vm416, %v495
        %529 = vst.msk [vmem:[%s504 + $0x121] sm:$0xff] %vm416, %v496
        %530 = vst.msk [vmem:[%s504 + $0x129] sm:$0xff] %vm416, %v497
        %531 = vst.msk [vmem:[%s504 + $0x139] sm:$0xff] %vm416, %v498
        %532 = vst.msk [vmem:[%s504 + $0x141] sm:$0xff] %vm416, %v499
        %533 = vst.msk [vmem:[%s504 + $0x151] sm:$0xff] %vm416, %v500
        %534 = vst.msk [vmem:[%s504 + $0x159] sm:$0xff] %vm416, %v501
        %535 = vst.msk [vmem:[%s504 + $0x169] sm:$0xff] %vm416, %v502
        %536 = vst.msk [vmem:[%s504 + $0x171] sm:$0xff] %vm416, %v503
        %v537 = vld [vmem:[#allocation2] sm:$0xff]
        %v538 = vld [vmem:[#allocation2 + $0x8] sm:$0xff]
        %v539 = vld [vmem:[#allocation2 + $0x18] sm:$0xff]
        %v540 = vld [vmem:[#allocation2 + $0x20] sm:$0xff]
        %v541 = vld [vmem:[#allocation2 + $0x30] sm:$0xff]
        %v542 = vld [vmem:[#allocation2 + $0x38] sm:$0xff]
        %v543 = vld [vmem:[#allocation2 + $0x48] sm:$0xff]
        %v544 = vld [vmem:[#allocation2 + $0x50] sm:$0xff]
        %v545 = vld [vmem:[#allocation2 + $0x60] sm:$0xff]
        %v546 = vld [vmem:[#allocation2 + $0x68] sm:$0xff]
        %v547 = vld [vmem:[#allocation2 + $0x78] sm:$0xff]
        %v548 = vld [vmem:[#allocation2 + $0x80] sm:$0xff]
        %v549 = vld [vmem:[#allocation2 + $0x90] sm:$0xff]
        %v550 = vld [vmem:[#allocation2 + $0x98] sm:$0xff]
        %v551 = vld [vmem:[#allocation2 + $0xa8] sm:$0xff]
        %v552 = vld [vmem:[#allocation2 + $0xb0] sm:$0xff]
        %v553 = vld [vmem:[#allocation2 + $0xc0] sm:$0xff]
        %v554 = vld [vmem:[#allocation2 + $0xc8] sm:$0xff]
        %v555 = vld [vmem:[#allocation2 + $0xd8] sm:$0xff]
        %v556 = vld [vmem:[#allocation2 + $0xe0] sm:$0xff]
        %v557 = vld [vmem:[#allocation2 + $0xf0] sm:$0xff]
        %v558 = vld [vmem:[#allocation2 + $0xf8] sm:$0xff]
        %v559 = vld [vmem:[#allocation2 + $0x108] sm:$0xff]
        %v560 = vld [vmem:[#allocation2 + $0x110] sm:$0xff]
        %v561 = vld [vmem:[#allocation2 + $0x120] sm:$0xff]
        %v562 = vld [vmem:[#allocation2 + $0x128] sm:$0xff]
        %v563 = vld [vmem:[#allocation2 + $0x138] sm:$0xff]
        %v564 = vld [vmem:[#allocation2 + $0x140] sm:$0xff]
        %v565 = vld [vmem:[#allocation2 + $0x150] sm:$0xff]
        %v566 = vld [vmem:[#allocation2 + $0x158] sm:$0xff]
        %v567 = vld [vmem:[#allocation2 + $0x168] sm:$0xff]
        %v568 = vld [vmem:[#allocation2 + $0x170] sm:$0xff]
        %v569 = vpack.c.bf16 %v538, %v537
        %v570 = vpack.c.bf16 %v540, %v539
        %v571 = vpack.c.bf16 %v542, %v541
        %v572 = vpack.c.bf16 %v544, %v543
        %v573 = vpack.c.bf16 %v546, %v545
        %v574 = vpack.c.bf16 %v548, %v547
        %v575 = vpack.c.bf16 %v550, %v549
        %v576 = vpack.c.bf16 %v552, %v551
        %v577 = vpack.c.bf16 %v554, %v553
        %v578 = vpack.c.bf16 %v556, %v555
        %v579 = vpack.c.bf16 %v558, %v557
        %v580 = vpack.c.bf16 %v560, %v559
        %v581 = vpack.c.bf16 %v562, %v561
        %v582 = vpack.c.bf16 %v564, %v563
        %v583 = vpack.c.bf16 %v566, %v565
        %v584 = vpack.c.bf16 %v568, %v567
        %v585 = vld [vmem:[#allocation4] sm:$0x3]
        %v586 = vld [vmem:[#allocation2 + $0x1] sm:$0xff]
        %v587 = vld [vmem:[#allocation2 + $0x9] sm:$0xff]
        %v588 = vld [vmem:[#allocation2 + $0x19] sm:$0xff]
        %v589 = vld [vmem:[#allocation2 + $0x21] sm:$0xff]
        %v590 = vld [vmem:[#allocation2 + $0x31] sm:$0xff]
        %v591 = vld [vmem:[#allocation2 + $0x39] sm:$0xff]
        %v592 = vld [vmem:[#allocation2 + $0x49] sm:$0xff]
        %v593 = vld [vmem:[#allocation2 + $0x51] sm:$0xff]
        %v594 = vld [vmem:[#allocation2 + $0x61] sm:$0xff]
        %v595 = vld [vmem:[#allocation2 + $0x69] sm:$0xff]
        %v596 = vld [vmem:[#allocation2 + $0x79] sm:$0xff]
        %v597 = vld [vmem:[#allocation2 + $0x81] sm:$0xff]
        %v598 = vld [vmem:[#allocation2 + $0x91] sm:$0xff]
        %v599 = vld [vmem:[#allocation2 + $0x99] sm:$0xff]
        %v600 = vld [vmem:[#allocation2 + $0xa9] sm:$0xff]
        %v601 = vld [vmem:[#allocation2 + $0xb1] sm:$0xff]
        %v602 = vld [vmem:[#allocation2 + $0xc1] sm:$0xff]
        %v603 = vld [vmem:[#allocation2 + $0xc9] sm:$0xff]
        %v604 = vld [vmem:[#allocation2 + $0xd9] sm:$0xff]
        %v605 = vld [vmem:[#allocation2 + $0xe1] sm:$0xff]
        %v606 = vld [vmem:[#allocation2 + $0xf1] sm:$0xff]
        %v607 = vld [vmem:[#allocation2 + $0xf9] sm:$0xff]
        %v608 = vld [vmem:[#allocation2 + $0x109] sm:$0xff]
        %v609 = vld [vmem:[#allocation2 + $0x111] sm:$0xff]
        %v610 = vld [vmem:[#allocation2 + $0x121] sm:$0xff]
        %v611 = vld [vmem:[#allocation2 + $0x129] sm:$0xff]
        %v612 = vld [vmem:[#allocation2 + $0x139] sm:$0xff]
        %v613 = vld [vmem:[#allocation2 + $0x141] sm:$0xff]
        %v614 = vld [vmem:[#allocation2 + $0x151] sm:$0xff]
        %v615 = vld [vmem:[#allocation2 + $0x159] sm:$0xff]
        %v616 = vld [vmem:[#allocation2 + $0x169] sm:$0xff]
        %v617 = vld [vmem:[#allocation2 + $0x171] sm:$0xff]
        %v618 = vpack.c.bf16 %v587, %v586
        %v619 = vpack.c.bf16 %v589, %v588
        %v620 = vpack.c.bf16 %v591, %v590
        %v621 = vpack.c.bf16 %v593, %v592
        %v622 = vpack.c.bf16 %v595, %v594
        %v623 = vpack.c.bf16 %v597, %v596
        %v624 = vpack.c.bf16 %v599, %v598
        %v625 = vpack.c.bf16 %v601, %v600
        %v626 = vpack.c.bf16 %v603, %v602
        %v627 = vpack.c.bf16 %v605, %v604
        %v628 = vpack.c.bf16 %v607, %v606
        %v629 = vpack.c.bf16 %v609, %v608
        %v630 = vpack.c.bf16 %v611, %v610
        %v631 = vpack.c.bf16 %v613, %v612
        %v632 = vpack.c.bf16 %v615, %v614
        %v633 = vpack.c.bf16 %v617, %v616
        %s634 = scalar_lea.vmem [#allocation4], 2
        %v635 = vld [vmem:[%s634] sm:$0x3]
        %v637 = vsel %vm416, %v618, 0
        %v640 = vsel %vm416, %v619, 0
        %v643 = vsel %vm416, %v620, 0
        %v646 = vsel %vm416, %v621, 0
        %v649 = vsel %vm416, %v622, 0
        %v652 = vsel %vm416, %v623, 0
        %v655 = vsel %vm416, %v624, 0
        %v658 = vsel %vm416, %v625, 0
        %v661 = vsel %vm416, %v626, 0
        %v664 = vsel %vm416, %v627, 0
        %v667 = vsel %vm416, %v628, 0
        %v670 = vsel %vm416, %v629, 0
        %v673 = vsel %vm416, %v630, 0
        %v676 = vsel %vm416, %v631, 0
        %v679 = vsel %vm416, %v632, 0
        %v682 = vsel %vm416, %v633, 0
        %vm684 = vcmask 1041408
        %v686 = vsel %vm684, %v635, 0
        %688 = vmatprep.subr.bf16.mxu0 0
        %689 = vmatpush1.bf16.msra.mxu0 0
        %690 = vmatprep.subr.bf16.mxu0 0
        %691 = vmatpush1.bf16.msra.mxu0 0
        %692 = vmatprep.subr.bf16.mxu0 0
        %693 = vmatpush1.bf16.msra.mxu0 0
        %694 = vmatprep.subr.bf16.mxu0 0
        %695 = vmatpush1.bf16.msra.mxu0 0
        %696 = vmatprep.subr.bf16.mxu0 0
        %697 = vmatpush1.bf16.msra.mxu0 0
        %698 = vmatprep.subr.bf16.mxu0 0
        %699 = vmatpush1.bf16.msra.mxu0 0
        %700 = vmatprep.subr.bf16.mxu0 0
        %701 = vmatpush1.bf16.msra.mxu0 0
        %702 = vmatprep.subr.bf16.mxu0 0
        %703 = vmatpush1.bf16.msra.mxu0 %v686
        %704 = vmatprep.subr.bf16.mxu0 0
        %705 = vmatpush2.bf16.msra.mxu0 0
        %706 = vmatprep.subr.bf16.mxu0 0
        %707 = vmatpush2.bf16.msra.mxu0 0
        %708 = vmatprep.subr.bf16.mxu0 0
        %709 = vmatpush2.bf16.msra.mxu0 0
        %710 = vmatprep.subr.bf16.mxu0 0
        %711 = vmatpush2.bf16.msra.mxu0 0
        %712 = vmatprep.subr.bf16.mxu0 0
        %713 = vmatpush2.bf16.msra.mxu0 0
        %714 = vmatprep.subr.bf16.mxu0 0
        %715 = vmatpush2.bf16.msra.mxu0 0
        %716 = vmatprep.subr.bf16.mxu0 0
        %717 = vmatpush2.bf16.msra.mxu0 0
        %718 = vmatprep.subr.bf16.mxu0 0
        %719 = vmatpush2.bf16.msra.mxu0 0
        %720 = vmatprep.mubr.bf16.mxu0 0
        %721 = vmatmul.mubr.bf16.gmra.mxu0 %v637
        %v722 = vpop.f32.mrf.mxu0
        %v723 = vadd.f32 0.0, %v722
        %v724 = vpop.f32.mrf.mxu0
        %v725 = vpop.f32.mrf.mxu0
        %v726 = vadd.f32 0.0, %v725
        %v727 = vpop.f32.mrf.mxu0
        %728 = vmatprep.mubr.bf16.mxu0 0
        %729 = vmatmul.mubr.bf16.gmra.mxu0 %v640
        %v730 = vpop.f32.mrf.mxu0
        %v731 = vadd.f32 0.0, %v730
        %v732 = vpop.f32.mrf.mxu0
        %v733 = vpop.f32.mrf.mxu0
        %v734 = vadd.f32 0.0, %v733
        %v735 = vpop.f32.mrf.mxu0
        %736 = vmatprep.mubr.bf16.mxu0 0
        %737 = vmatmul.mubr.bf16.gmra.mxu0 %v643
        %v738 = vpop.f32.mrf.mxu0
        %v739 = vadd.f32 0.0, %v738
        %v740 = vpop.f32.mrf.mxu0
        %v741 = vpop.f32.mrf.mxu0
        %v742 = vadd.f32 0.0, %v741
        %v743 = vpop.f32.mrf.mxu0
        %744 = vmatprep.mubr.bf16.mxu0 0
        %745 = vmatmul.mubr.bf16.gmra.mxu0 %v646
        %v746 = vpop.f32.mrf.mxu0
        %v747 = vadd.f32 0.0, %v746
        %v748 = vpop.f32.mrf.mxu0
        %v749 = vpop.f32.mrf.mxu0
        %v750 = vadd.f32 0.0, %v749
        %v751 = vpop.f32.mrf.mxu0
        %752 = vmatprep.mubr.bf16.mxu0 0
        %753 = vmatmul.mubr.bf16.gmra.mxu0 %v649
        %v754 = vpop.f32.mrf.mxu0
        %v755 = vadd.f32 0.0, %v754
        %v756 = vpop.f32.mrf.mxu0
        %v757 = vpop.f32.mrf.mxu0
        %v758 = vadd.f32 0.0, %v757
        %v759 = vpop.f32.mrf.mxu0
        %760 = vmatprep.mubr.bf16.mxu0 0
        %761 = vmatmul.mubr.bf16.gmra.mxu0 %v652
        %v762 = vpop.f32.mrf.mxu0
        %v763 = vadd.f32 0.0, %v762
        %v764 = vpop.f32.mrf.mxu0
        %v765 = vpop.f32.mrf.mxu0
        %v766 = vadd.f32 0.0, %v765
        %v767 = vpop.f32.mrf.mxu0
        %768 = vmatprep.mubr.bf16.mxu0 0
        %769 = vmatmul.mubr.bf16.gmra.mxu0 %v655
        %v770 = vpop.f32.mrf.mxu0
        %v771 = vadd.f32 0.0, %v770
        %v772 = vpop.f32.mrf.mxu0
        %v773 = vpop.f32.mrf.mxu0
        %v774 = vadd.f32 0.0, %v773
        %v775 = vpop.f32.mrf.mxu0
        %776 = vmatprep.mubr.bf16.mxu0 0
        %777 = vmatmul.mubr.bf16.gmra.mxu0 %v658
        %v778 = vpop.f32.mrf.mxu0
        %v779 = vadd.f32 0.0, %v778
        %v780 = vpop.f32.mrf.mxu0
        %v781 = vpop.f32.mrf.mxu0
        %v782 = vadd.f32 0.0, %v781
        %v783 = vpop.f32.mrf.mxu0
        %784 = vmatprep.mubr.bf16.mxu0 0
        %785 = vmatmul.mubr.bf16.gmra.mxu0 %v661
        %v786 = vpop.f32.mrf.mxu0
        %v787 = vadd.f32 0.0, %v786
        %v788 = vpop.f32.mrf.mxu0
        %v789 = vpop.f32.mrf.mxu0
        %v790 = vadd.f32 0.0, %v789
        %v791 = vpop.f32.mrf.mxu0
        %792 = vmatprep.mubr.bf16.mxu0 0
        %793 = vmatmul.mubr.bf16.gmra.mxu0 %v664
        %v794 = vpop.f32.mrf.mxu0
        %v795 = vadd.f32 0.0, %v794
        %v796 = vpop.f32.mrf.mxu0
        %v797 = vpop.f32.mrf.mxu0
        %v798 = vadd.f32 0.0, %v797
        %v799 = vpop.f32.mrf.mxu0
        %800 = vmatprep.mubr.bf16.mxu0 0
        %801 = vmatmul.mubr.bf16.gmra.mxu0 %v667
        %v802 = vpop.f32.mrf.mxu0
        %v803 = vadd.f32 0.0, %v802
        %v804 = vpop.f32.mrf.mxu0
        %v805 = vpop.f32.mrf.mxu0
        %v806 = vadd.f32 0.0, %v805
        %v807 = vpop.f32.mrf.mxu0
        %808 = vmatprep.mubr.bf16.mxu0 0
        %809 = vmatmul.mubr.bf16.gmra.mxu0 %v670
        %v810 = vpop.f32.mrf.mxu0
        %v811 = vadd.f32 0.0, %v810
        %v812 = vpop.f32.mrf.mxu0
        %v813 = vpop.f32.mrf.mxu0
        %v814 = vadd.f32 0.0, %v813
        %v815 = vpop.f32.mrf.mxu0
        %816 = vmatprep.mubr.bf16.mxu0 0
        %817 = vmatmul.mubr.bf16.gmra.mxu0 %v673
        %v818 = vpop.f32.mrf.mxu0
        %v819 = vadd.f32 0.0, %v818
        %v820 = vpop.f32.mrf.mxu0
        %v821 = vpop.f32.mrf.mxu0
        %v822 = vadd.f32 0.0, %v821
        %v823 = vpop.f32.mrf.mxu0
        %824 = vmatprep.mubr.bf16.mxu0 0
        %825 = vmatmul.mubr.bf16.gmra.mxu0 %v676
        %v826 = vpop.f32.mrf.mxu0
        %v827 = vadd.f32 0.0, %v826
        %v828 = vpop.f32.mrf.mxu0
        %v829 = vpop.f32.mrf.mxu0
        %v830 = vadd.f32 0.0, %v829
        %v831 = vpop.f32.mrf.mxu0
        %832 = vmatprep.mubr.bf16.mxu0 0
        %833 = vmatmul.mubr.bf16.gmra.mxu0 %v679
        %v834 = vpop.f32.mrf.mxu0
        %v835 = vadd.f32 0.0, %v834
        %v836 = vpop.f32.mrf.mxu0
        %v837 = vpop.f32.mrf.mxu0
        %v838 = vadd.f32 0.0, %v837
        %v839 = vpop.f32.mrf.mxu0
        %840 = vmatprep.mubr.bf16.mxu0 0
        %841 = vmatmul.mubr.bf16.gmra.mxu0 %v682
        %v842 = vpop.f32.mrf.mxu0
        %v843 = vadd.f32 0.0, %v842
        %v844 = vpop.f32.mrf.mxu0
        %v845 = vpop.f32.mrf.mxu0
        %v846 = vadd.f32 0.0, %v845
        %v847 = vpop.f32.mrf.mxu0
        %848 = vdwg.mxu0
        %v850 = vsel %vm416, %v569, 0
        %v853 = vsel %vm416, %v570, 0
        %v856 = vsel %vm416, %v571, 0
        %v859 = vsel %vm416, %v572, 0
        %v862 = vsel %vm416, %v573, 0
        %v865 = vsel %vm416, %v574, 0
        %v868 = vsel %vm416, %v575, 0
        %v871 = vsel %vm416, %v576, 0
        %v874 = vsel %vm416, %v577, 0
        %v877 = vsel %vm416, %v578, 0
        %v880 = vsel %vm416, %v579, 0
        %v883 = vsel %vm416, %v580, 0
        %v886 = vsel %vm416, %v581, 0
        %v889 = vsel %vm416, %v582, 0
        %v892 = vsel %vm416, %v583, 0
        %v895 = vsel %vm416, %v584, 0
        %v898 = vsel %vm684, %v585, 0
        %900 = vmatprep.subr.bf16.mxu0 0
        %901 = vmatpush1.bf16.msra.mxu0 0
        %902 = vmatprep.subr.bf16.mxu0 0
        %903 = vmatpush1.bf16.msra.mxu0 0
        %904 = vmatprep.subr.bf16.mxu0 0
        %905 = vmatpush1.bf16.msra.mxu0 0
        %906 = vmatprep.subr.bf16.mxu0 0
        %907 = vmatpush1.bf16.msra.mxu0 0
        %908 = vmatprep.subr.bf16.mxu0 0
        %909 = vmatpush1.bf16.msra.mxu0 0
        %910 = vmatprep.subr.bf16.mxu0 0
        %911 = vmatpush1.bf16.msra.mxu0 0
        %912 = vmatprep.subr.bf16.mxu0 0
        %913 = vmatpush1.bf16.msra.mxu0 0
        %914 = vmatprep.subr.bf16.mxu0 0
        %915 = vmatpush1.bf16.msra.mxu0 %v898
        %916 = vmatprep.subr.bf16.mxu0 0
        %917 = vmatpush2.bf16.msra.mxu0 0
        %918 = vmatprep.subr.bf16.mxu0 0
        %919 = vmatpush2.bf16.msra.mxu0 0
        %920 = vmatprep.subr.bf16.mxu0 0
        %921 = vmatpush2.bf16.msra.mxu0 0
        %922 = vmatprep.subr.bf16.mxu0 0
        %923 = vmatpush2.bf16.msra.mxu0 0
        %924 = vmatprep.subr.bf16.mxu0 0
        %925 = vmatpush2.bf16.msra.mxu0 0
        %926 = vmatprep.subr.bf16.mxu0 0
        %927 = vmatpush2.bf16.msra.mxu0 0
        %928 = vmatprep.subr.bf16.mxu0 0
        %929 = vmatpush2.bf16.msra.mxu0 0
        %930 = vmatprep.subr.bf16.mxu0 0
        %931 = vmatpush2.bf16.msra.mxu0 0
        %932 = vmatprep.mubr.bf16.mxu0 0
        %933 = vmatmul.mubr.bf16.gmra.mxu0 %v850
        %v934 = vpop.f32.mrf.mxu0
        %v935 = vadd.f32 %v723, %v934
        %v936 = vpop.f32.mrf.mxu0
        %v937 = vpop.f32.mrf.mxu0
        %v938 = vadd.f32 %v726, %v937
        %v939 = vpop.f32.mrf.mxu0
        %940 = vmatprep.mubr.bf16.mxu0 0
        %941 = vmatmul.mubr.bf16.gmra.mxu0 %v853
        %v942 = vpop.f32.mrf.mxu0
        %v943 = vadd.f32 %v731, %v942
        %v944 = vpop.f32.mrf.mxu0
        %v945 = vpop.f32.mrf.mxu0
        %v946 = vadd.f32 %v734, %v945
        %v947 = vpop.f32.mrf.mxu0
        %948 = vmatprep.mubr.bf16.mxu0 0
        %949 = vmatmul.mubr.bf16.gmra.mxu0 %v856
        %v950 = vpop.f32.mrf.mxu0
        %v951 = vadd.f32 %v739, %v950
        %v952 = vpop.f32.mrf.mxu0
        %v953 = vpop.f32.mrf.mxu0
        %v954 = vadd.f32 %v742, %v953
        %v955 = vpop.f32.mrf.mxu0
        %956 = vmatprep.mubr.bf16.mxu0 0
        %957 = vmatmul.mubr.bf16.gmra.mxu0 %v859
        %v958 = vpop.f32.mrf.mxu0
        %v959 = vadd.f32 %v747, %v958
        %v960 = vpop.f32.mrf.mxu0
        %v961 = vpop.f32.mrf.mxu0
        %v962 = vadd.f32 %v750, %v961
        %v963 = vpop.f32.mrf.mxu0
        %964 = vmatprep.mubr.bf16.mxu0 0
        %965 = vmatmul.mubr.bf16.gmra.mxu0 %v862
        %v966 = vpop.f32.mrf.mxu0
        %v967 = vadd.f32 %v755, %v966
        %v968 = vpop.f32.mrf.mxu0
        %v969 = vpop.f32.mrf.mxu0
        %v970 = vadd.f32 %v758, %v969
        %v971 = vpop.f32.mrf.mxu0
        %972 = vmatprep.mubr.bf16.mxu0 0
        %973 = vmatmul.mubr.bf16.gmra.mxu0 %v865
        %v974 = vpop.f32.mrf.mxu0
        %v975 = vadd.f32 %v763, %v974
        %v976 = vpop.f32.mrf.mxu0
        %v977 = vpop.f32.mrf.mxu0
        %v978 = vadd.f32 %v766, %v977
        %v979 = vpop.f32.mrf.mxu0
        %980 = vmatprep.mubr.bf16.mxu0 0
        %981 = vmatmul.mubr.bf16.gmra.mxu0 %v868
        %v982 = vpop.f32.mrf.mxu0
        %v983 = vadd.f32 %v771, %v982
        %v984 = vpop.f32.mrf.mxu0
        %v985 = vpop.f32.mrf.mxu0
        %v986 = vadd.f32 %v774, %v985
        %v987 = vpop.f32.mrf.mxu0
        %988 = vmatprep.mubr.bf16.mxu0 0
        %989 = vmatmul.mubr.bf16.gmra.mxu0 %v871
        %v990 = vpop.f32.mrf.mxu0
        %v991 = vadd.f32 %v779, %v990
        %v992 = vpop.f32.mrf.mxu0
        %v993 = vpop.f32.mrf.mxu0
        %v994 = vadd.f32 %v782, %v993
        %v995 = vpop.f32.mrf.mxu0
        %996 = vmatprep.mubr.bf16.mxu0 0
        %997 = vmatmul.mubr.bf16.gmra.mxu0 %v874
        %v998 = vpop.f32.mrf.mxu0
        %v999 = vadd.f32 %v787, %v998
        %v1000 = vpop.f32.mrf.mxu0
        %v1001 = vpop.f32.mrf.mxu0
        %v1002 = vadd.f32 %v790, %v1001
        %v1003 = vpop.f32.mrf.mxu0
        %1004 = vmatprep.mubr.bf16.mxu0 0
        %1005 = vmatmul.mubr.bf16.gmra.mxu0 %v877
        %v1006 = vpop.f32.mrf.mxu0
        %v1007 = vadd.f32 %v795, %v1006
        %v1008 = vpop.f32.mrf.mxu0
        %v1009 = vpop.f32.mrf.mxu0
        %v1010 = vadd.f32 %v798, %v1009
        %v1011 = vpop.f32.mrf.mxu0
        %1012 = vmatprep.mubr.bf16.mxu0 0
        %1013 = vmatmul.mubr.bf16.gmra.mxu0 %v880
        %v1014 = vpop.f32.mrf.mxu0
        %v1015 = vadd.f32 %v803, %v1014
        %v1016 = vpop.f32.mrf.mxu0
        %v1017 = vpop.f32.mrf.mxu0
        %v1018 = vadd.f32 %v806, %v1017
        %v1019 = vpop.f32.mrf.mxu0
        %1020 = vmatprep.mubr.bf16.mxu0 0
        %1021 = vmatmul.mubr.bf16.gmra.mxu0 %v883
        %v1022 = vpop.f32.mrf.mxu0
        %v1023 = vadd.f32 %v811, %v1022
        %v1024 = vpop.f32.mrf.mxu0
        %v1025 = vpop.f32.mrf.mxu0
        %v1026 = vadd.f32 %v814, %v1025
        %v1027 = vpop.f32.mrf.mxu0
        %1028 = vmatprep.mubr.bf16.mxu0 0
        %1029 = vmatmul.mubr.bf16.gmra.mxu0 %v886
        %v1030 = vpop.f32.mrf.mxu0
        %v1031 = vadd.f32 %v819, %v1030
        %v1032 = vpop.f32.mrf.mxu0
        %v1033 = vpop.f32.mrf.mxu0
        %v1034 = vadd.f32 %v822, %v1033
        %v1035 = vpop.f32.mrf.mxu0
        %1036 = vmatprep.mubr.bf16.mxu0 0
        %1037 = vmatmul.mubr.bf16.gmra.mxu0 %v889
        %v1038 = vpop.f32.mrf.mxu0
        %v1039 = vadd.f32 %v827, %v1038
        %v1040 = vpop.f32.mrf.mxu0
        %v1041 = vpop.f32.mrf.mxu0
        %v1042 = vadd.f32 %v830, %v1041
        %v1043 = vpop.f32.mrf.mxu0
        %1044 = vmatprep.mubr.bf16.mxu0 0
        %1045 = vmatmul.mubr.bf16.gmra.mxu0 %v892
        %v1046 = vpop.f32.mrf.mxu0
        %v1047 = vadd.f32 %v835, %v1046
        %v1048 = vpop.f32.mrf.mxu0
        %v1049 = vpop.f32.mrf.mxu0
        %v1050 = vadd.f32 %v838, %v1049
        %v1051 = vpop.f32.mrf.mxu0
        %1052 = vmatprep.mubr.bf16.mxu0 0
        %1053 = vmatmul.mubr.bf16.gmra.mxu0 %v895
        %v1054 = vpop.f32.mrf.mxu0
        %v1055 = vadd.f32 %v843, %v1054
        %v1056 = vpop.f32.mrf.mxu0
        %v1057 = vpop.f32.mrf.mxu0
        %v1058 = vadd.f32 %v846, %v1057
        %v1059 = vpop.f32.mrf.mxu0
        %1060 = vdwg.mxu0
        %v1061 = vld [vmem:[#allocation2 + $0x2] sm:$0xff]
        %v1062 = vld [vmem:[#allocation2 + $0xa] sm:$0xff]
        %v1063 = vld [vmem:[#allocation2 + $0x1a] sm:$0xff]
        %v1064 = vld [vmem:[#allocation2 + $0x22] sm:$0xff]
        %v1065 = vld [vmem:[#allocation2 + $0x32] sm:$0xff]
        %v1066 = vld [vmem:[#allocation2 + $0x3a] sm:$0xff]
        %v1067 = vld [vmem:[#allocation2 + $0x4a] sm:$0xff]
        %v1068 = vld [vmem:[#allocation2 + $0x52] sm:$0xff]
        %v1069 = vld [vmem:[#allocation2 + $0x62] sm:$0xff]
        %v1070 = vld [vmem:[#allocation2 + $0x6a] sm:$0xff]
        %v1071 = vld [vmem:[#allocation2 + $0x7a] sm:$0xff]
        %v1072 = vld [vmem:[#allocation2 + $0x82] sm:$0xff]
        %v1073 = vld [vmem:[#allocation2 + $0x92] sm:$0xff]
        %v1074 = vld [vmem:[#allocation2 + $0x9a] sm:$0xff]
        %v1075 = vld [vmem:[#allocation2 + $0xaa] sm:$0xff]
        %v1076 = vld [vmem:[#allocation2 + $0xb2] sm:$0xff]
        %v1077 = vld [vmem:[#allocation2 + $0xc2] sm:$0xff]
        %v1078 = vld [vmem:[#allocation2 + $0xca] sm:$0xff]
        %v1079 = vld [vmem:[#allocation2 + $0xda] sm:$0xff]
        %v1080 = vld [vmem:[#allocation2 + $0xe2] sm:$0xff]
        %v1081 = vld [vmem:[#allocation2 + $0xf2] sm:$0xff]
        %v1082 = vld [vmem:[#allocation2 + $0xfa] sm:$0xff]
        %v1083 = vld [vmem:[#allocation2 + $0x10a] sm:$0xff]
        %v1084 = vld [vmem:[#allocation2 + $0x112] sm:$0xff]
        %v1085 = vld [vmem:[#allocation2 + $0x122] sm:$0xff]
        %v1086 = vld [vmem:[#allocation2 + $0x12a] sm:$0xff]
        %v1087 = vld [vmem:[#allocation2 + $0x13a] sm:$0xff]
        %v1088 = vld [vmem:[#allocation2 + $0x142] sm:$0xff]
        %v1089 = vld [vmem:[#allocation2 + $0x152] sm:$0xff]
        %v1090 = vld [vmem:[#allocation2 + $0x15a] sm:$0xff]
        %v1091 = vld [vmem:[#allocation2 + $0x16a] sm:$0xff]
        %v1092 = vld [vmem:[#allocation2 + $0x172] sm:$0xff]
        %v1093 = vpack.c.bf16 %v1062, %v1061
        %v1094 = vpack.c.bf16 %v1064, %v1063
        %v1095 = vpack.c.bf16 %v1066, %v1065
        %v1096 = vpack.c.bf16 %v1068, %v1067
        %v1097 = vpack.c.bf16 %v1070, %v1069
        %v1098 = vpack.c.bf16 %v1072, %v1071
        %v1099 = vpack.c.bf16 %v1074, %v1073
        %v1100 = vpack.c.bf16 %v1076, %v1075
        %v1101 = vpack.c.bf16 %v1078, %v1077
        %v1102 = vpack.c.bf16 %v1080, %v1079
        %v1103 = vpack.c.bf16 %v1082, %v1081
        %v1104 = vpack.c.bf16 %v1084, %v1083
        %v1105 = vpack.c.bf16 %v1086, %v1085
        %v1106 = vpack.c.bf16 %v1088, %v1087
        %v1107 = vpack.c.bf16 %v1090, %v1089
        %v1108 = vpack.c.bf16 %v1092, %v1091
        %s1109 = scalar_lea.vmem [#allocation4], 4
        %v1110 = vld [vmem:[%s1109] sm:$0x3]
        %v1112 = vsel %vm416, %v1093, 0
        %v1115 = vsel %vm416, %v1094, 0
        %v1118 = vsel %vm416, %v1095, 0
        %v1121 = vsel %vm416, %v1096, 0
        %v1124 = vsel %vm416, %v1097, 0
        %v1127 = vsel %vm416, %v1098, 0
        %v1130 = vsel %vm416, %v1099, 0
        %v1133 = vsel %vm416, %v1100, 0
        %v1136 = vsel %vm416, %v1101, 0
        %v1139 = vsel %vm416, %v1102, 0
        %v1142 = vsel %vm416, %v1103, 0
        %v1145 = vsel %vm416, %v1104, 0
        %v1148 = vsel %vm416, %v1105, 0
        %v1151 = vsel %vm416, %v1106, 0
        %v1154 = vsel %vm416, %v1107, 0
        %v1157 = vsel %vm416, %v1108, 0
        %v1160 = vsel %vm684, %v1110, 0
        %1162 = vmatprep.subr.bf16.mxu0 0
        %1163 = vmatpush1.bf16.msra.mxu0 0
        %1164 = vmatprep.subr.bf16.mxu0 0
        %1165 = vmatpush1.bf16.msra.mxu0 0
        %1166 = vmatprep.subr.bf16.mxu0 0
        %1167 = vmatpush1.bf16.msra.mxu0 0
        %1168 = vmatprep.subr.bf16.mxu0 0
        %1169 = vmatpush1.bf16.msra.mxu0 0
        %1170 = vmatprep.subr.bf16.mxu0 0
        %1171 = vmatpush1.bf16.msra.mxu0 0
        %1172 = vmatprep.subr.bf16.mxu0 0
        %1173 = vmatpush1.bf16.msra.mxu0 0
        %1174 = vmatprep.subr.bf16.mxu0 0
        %1175 = vmatpush1.bf16.msra.mxu0 0
        %1176 = vmatprep.subr.bf16.mxu0 0
        %1177 = vmatpush1.bf16.msra.mxu0 %v1160
        %1178 = vmatprep.subr.bf16.mxu0 0
        %1179 = vmatpush2.bf16.msra.mxu0 0
        %1180 = vmatprep.subr.bf16.mxu0 0
        %1181 = vmatpush2.bf16.msra.mxu0 0
        %1182 = vmatprep.subr.bf16.mxu0 0
        %1183 = vmatpush2.bf16.msra.mxu0 0
        %1184 = vmatprep.subr.bf16.mxu0 0
        %1185 = vmatpush2.bf16.msra.mxu0 0
        %1186 = vmatprep.subr.bf16.mxu0 0
        %1187 = vmatpush2.bf16.msra.mxu0 0
        %1188 = vmatprep.subr.bf16.mxu0 0
        %1189 = vmatpush2.bf16.msra.mxu0 0
        %1190 = vmatprep.subr.bf16.mxu0 0
        %1191 = vmatpush2.bf16.msra.mxu0 0
        %1192 = vmatprep.subr.bf16.mxu0 0
        %1193 = vmatpush2.bf16.msra.mxu0 0
        %1194 = vmatprep.mubr.bf16.mxu0 0
        %1195 = vmatmul.mubr.bf16.gmra.mxu0 %v1112
        %v1196 = vpop.f32.mrf.mxu0
        %v1197 = vadd.f32 0.0, %v1196
        %v1198 = vpop.f32.mrf.mxu0
        %v1199 = vpop.f32.mrf.mxu0
        %v1200 = vadd.f32 0.0, %v1199
        %v1201 = vpop.f32.mrf.mxu0
        %1202 = vmatprep.mubr.bf16.mxu0 0
        %1203 = vmatmul.mubr.bf16.gmra.mxu0 %v1115
        %v1204 = vpop.f32.mrf.mxu0
        %v1205 = vadd.f32 0.0, %v1204
        %v1206 = vpop.f32.mrf.mxu0
        %v1207 = vpop.f32.mrf.mxu0
        %v1208 = vadd.f32 0.0, %v1207
        %v1209 = vpop.f32.mrf.mxu0
        %1210 = vmatprep.mubr.bf16.mxu0 0
        %1211 = vmatmul.mubr.bf16.gmra.mxu0 %v1118
        %v1212 = vpop.f32.mrf.mxu0
        %v1213 = vadd.f32 0.0, %v1212
        %v1214 = vpop.f32.mrf.mxu0
        %v1215 = vpop.f32.mrf.mxu0
        %v1216 = vadd.f32 0.0, %v1215
        %v1217 = vpop.f32.mrf.mxu0
        %1218 = vmatprep.mubr.bf16.mxu0 0
        %1219 = vmatmul.mubr.bf16.gmra.mxu0 %v1121
        %v1220 = vpop.f32.mrf.mxu0
        %v1221 = vadd.f32 0.0, %v1220
        %v1222 = vpop.f32.mrf.mxu0
        %v1223 = vpop.f32.mrf.mxu0
        %v1224 = vadd.f32 0.0, %v1223
        %v1225 = vpop.f32.mrf.mxu0
        %1226 = vmatprep.mubr.bf16.mxu0 0
        %1227 = vmatmul.mubr.bf16.gmra.mxu0 %v1124
        %v1228 = vpop.f32.mrf.mxu0
        %v1229 = vadd.f32 0.0, %v1228
        %v1230 = vpop.f32.mrf.mxu0
        %v1231 = vpop.f32.mrf.mxu0
        %v1232 = vadd.f32 0.0, %v1231
        %v1233 = vpop.f32.mrf.mxu0
        %1234 = vmatprep.mubr.bf16.mxu0 0
        %1235 = vmatmul.mubr.bf16.gmra.mxu0 %v1127
        %v1236 = vpop.f32.mrf.mxu0
        %v1237 = vadd.f32 0.0, %v1236
        %v1238 = vpop.f32.mrf.mxu0
        %v1239 = vpop.f32.mrf.mxu0
        %v1240 = vadd.f32 0.0, %v1239
        %v1241 = vpop.f32.mrf.mxu0
        %1242 = vmatprep.mubr.bf16.mxu0 0
        %1243 = vmatmul.mubr.bf16.gmra.mxu0 %v1130
        %v1244 = vpop.f32.mrf.mxu0
        %v1245 = vadd.f32 0.0, %v1244
        %v1246 = vpop.f32.mrf.mxu0
        %v1247 = vpop.f32.mrf.mxu0
        %v1248 = vadd.f32 0.0, %v1247
        %v1249 = vpop.f32.mrf.mxu0
        %1250 = vmatprep.mubr.bf16.mxu0 0
        %1251 = vmatmul.mubr.bf16.gmra.mxu0 %v1133
        %v1252 = vpop.f32.mrf.mxu0
        %v1253 = vadd.f32 0.0, %v1252
        %v1254 = vpop.f32.mrf.mxu0
        %v1255 = vpop.f32.mrf.mxu0
        %v1256 = vadd.f32 0.0, %v1255
        %v1257 = vpop.f32.mrf.mxu0
        %1258 = vmatprep.mubr.bf16.mxu0 0
        %1259 = vmatmul.mubr.bf16.gmra.mxu0 %v1136
        %v1260 = vpop.f32.mrf.mxu0
        %v1261 = vadd.f32 0.0, %v1260
        %v1262 = vpop.f32.mrf.mxu0
        %v1263 = vpop.f32.mrf.mxu0
        %v1264 = vadd.f32 0.0, %v1263
        %v1265 = vpop.f32.mrf.mxu0
        %1266 = vmatprep.mubr.bf16.mxu0 0
        %1267 = vmatmul.mubr.bf16.gmra.mxu0 %v1139
        %v1268 = vpop.f32.mrf.mxu0
        %v1269 = vadd.f32 0.0, %v1268
        %v1270 = vpop.f32.mrf.mxu0
        %v1271 = vpop.f32.mrf.mxu0
        %v1272 = vadd.f32 0.0, %v1271
        %v1273 = vpop.f32.mrf.mxu0
        %1274 = vmatprep.mubr.bf16.mxu0 0
        %1275 = vmatmul.mubr.bf16.gmra.mxu0 %v1142
        %v1276 = vpop.f32.mrf.mxu0
        %v1277 = vadd.f32 0.0, %v1276
        %v1278 = vpop.f32.mrf.mxu0
        %v1279 = vpop.f32.mrf.mxu0
        %v1280 = vadd.f32 0.0, %v1279
        %v1281 = vpop.f32.mrf.mxu0
        %1282 = vmatprep.mubr.bf16.mxu0 0
        %1283 = vmatmul.mubr.bf16.gmra.mxu0 %v1145
        %v1284 = vpop.f32.mrf.mxu0
        %v1285 = vadd.f32 0.0, %v1284
        %v1286 = vpop.f32.mrf.mxu0
        %v1287 = vpop.f32.mrf.mxu0
        %v1288 = vadd.f32 0.0, %v1287
        %v1289 = vpop.f32.mrf.mxu0
        %1290 = vmatprep.mubr.bf16.mxu0 0
        %1291 = vmatmul.mubr.bf16.gmra.mxu0 %v1148
        %v1292 = vpop.f32.mrf.mxu0
        %v1293 = vadd.f32 0.0, %v1292
        %v1294 = vpop.f32.mrf.mxu0
        %v1295 = vpop.f32.mrf.mxu0
        %v1296 = vadd.f32 0.0, %v1295
        %v1297 = vpop.f32.mrf.mxu0
        %1298 = vmatprep.mubr.bf16.mxu0 0
        %1299 = vmatmul.mubr.bf16.gmra.mxu0 %v1151
        %v1300 = vpop.f32.mrf.mxu0
        %v1301 = vadd.f32 0.0, %v1300
        %v1302 = vpop.f32.mrf.mxu0
        %v1303 = vpop.f32.mrf.mxu0
        %v1304 = vadd.f32 0.0, %v1303
        %v1305 = vpop.f32.mrf.mxu0
        %1306 = vmatprep.mubr.bf16.mxu0 0
        %1307 = vmatmul.mubr.bf16.gmra.mxu0 %v1154
        %v1308 = vpop.f32.mrf.mxu0
        %v1309 = vadd.f32 0.0, %v1308
        %v1310 = vpop.f32.mrf.mxu0
        %v1311 = vpop.f32.mrf.mxu0
        %v1312 = vadd.f32 0.0, %v1311
        %v1313 = vpop.f32.mrf.mxu0
        %1314 = vmatprep.mubr.bf16.mxu0 0
        %1315 = vmatmul.mubr.bf16.gmra.mxu0 %v1157
        %v1316 = vpop.f32.mrf.mxu0
        %v1317 = vadd.f32 0.0, %v1316
        %v1318 = vpop.f32.mrf.mxu0
        %v1319 = vpop.f32.mrf.mxu0
        %v1320 = vadd.f32 0.0, %v1319
        %v1321 = vpop.f32.mrf.mxu0
        %1322 = vdwg.mxu0
        %v1323 = vadd.f32 %v935, %v1197
        %v1324 = vadd.f32 %v938, %v1200
        %v1325 = vadd.f32 %v943, %v1205
        %v1326 = vadd.f32 %v946, %v1208
        %v1327 = vadd.f32 %v951, %v1213
        %v1328 = vadd.f32 %v954, %v1216
        %v1329 = vadd.f32 %v959, %v1221
        %v1330 = vadd.f32 %v962, %v1224
        %v1331 = vadd.f32 %v967, %v1229
        %v1332 = vadd.f32 %v970, %v1232
        %v1333 = vadd.f32 %v975, %v1237
        %v1334 = vadd.f32 %v978, %v1240
        %v1335 = vadd.f32 %v983, %v1245
        %v1336 = vadd.f32 %v986, %v1248
        %v1337 = vadd.f32 %v991, %v1253
        %v1338 = vadd.f32 %v994, %v1256
        %v1339 = vadd.f32 %v999, %v1261
        %v1340 = vadd.f32 %v1002, %v1264
        %v1341 = vadd.f32 %v1007, %v1269
        %v1342 = vadd.f32 %v1010, %v1272
        %v1343 = vadd.f32 %v1015, %v1277
        %v1344 = vadd.f32 %v1018, %v1280
        %v1345 = vadd.f32 %v1023, %v1285
        %v1346 = vadd.f32 %v1026, %v1288
        %v1347 = vadd.f32 %v1031, %v1293
        %v1348 = vadd.f32 %v1034, %v1296
        %v1349 = vadd.f32 %v1039, %v1301
        %v1350 = vadd.f32 %v1042, %v1304
        %v1351 = vadd.f32 %v1047, %v1309
        %v1352 = vadd.f32 %v1050, %v1312
        %v1353 = vadd.f32 %v1055, %v1317
        %v1354 = vadd.f32 %v1058, %v1320
        %v1355 = vld [vmem:[%s504] sm:$0xff]
        %v1356 = vld [vmem:[%s504 + $0x8] sm:$0xff]
        %v1357 = vld [vmem:[%s504 + $0x18] sm:$0xff]
        %v1358 = vld [vmem:[%s504 + $0x20] sm:$0xff]
        %v1359 = vld [vmem:[%s504 + $0x30] sm:$0xff]
        %v1360 = vld [vmem:[%s504 + $0x38] sm:$0xff]
        %v1361 = vld [vmem:[%s504 + $0x48] sm:$0xff]
        %v1362 = vld [vmem:[%s504 + $0x50] sm:$0xff]
        %v1363 = vld [vmem:[%s504 + $0x60] sm:$0xff]
        %v1364 = vld [vmem:[%s504 + $0x68] sm:$0xff]
        %v1365 = vld [vmem:[%s504 + $0x78] sm:$0xff]
        %v1366 = vld [vmem:[%s504 + $0x80] sm:$0xff]
        %v1367 = vld [vmem:[%s504 + $0x90] sm:$0xff]
        %v1368 = vld [vmem:[%s504 + $0x98] sm:$0xff]
        %v1369 = vld [vmem:[%s504 + $0xa8] sm:$0xff]
        %v1370 = vld [vmem:[%s504 + $0xb0] sm:$0xff]
        %v1371 = vld [vmem:[%s504 + $0xc0] sm:$0xff]
        %v1372 = vld [vmem:[%s504 + $0xc8] sm:$0xff]
        %v1373 = vld [vmem:[%s504 + $0xd8] sm:$0xff]
        %v1374 = vld [vmem:[%s504 + $0xe0] sm:$0xff]
        %v1375 = vld [vmem:[%s504 + $0xf0] sm:$0xff]
        %v1376 = vld [vmem:[%s504 + $0xf8] sm:$0xff]
        %v1377 = vld [vmem:[%s504 + $0x108] sm:$0xff]
        %v1378 = vld [vmem:[%s504 + $0x110] sm:$0xff]
        %v1379 = vld [vmem:[%s504 + $0x120] sm:$0xff]
        %v1380 = vld [vmem:[%s504 + $0x128] sm:$0xff]
        %v1381 = vld [vmem:[%s504 + $0x138] sm:$0xff]
        %v1382 = vld [vmem:[%s504 + $0x140] sm:$0xff]
        %v1383 = vld [vmem:[%s504 + $0x150] sm:$0xff]
        %v1384 = vld [vmem:[%s504 + $0x158] sm:$0xff]
        %v1385 = vld [vmem:[%s504 + $0x168] sm:$0xff]
        %v1386 = vld [vmem:[%s504 + $0x170] sm:$0xff]
        %v1387 = vpack.c.bf16 %v1356, %v1355
        %v1388 = vpack.c.bf16 %v1358, %v1357
        %v1389 = vpack.c.bf16 %v1360, %v1359
        %v1390 = vpack.c.bf16 %v1362, %v1361
        %v1391 = vpack.c.bf16 %v1364, %v1363
        %v1392 = vpack.c.bf16 %v1366, %v1365
        %v1393 = vpack.c.bf16 %v1368, %v1367
        %v1394 = vpack.c.bf16 %v1370, %v1369
        %v1395 = vpack.c.bf16 %v1372, %v1371
        %v1396 = vpack.c.bf16 %v1374, %v1373
        %v1397 = vpack.c.bf16 %v1376, %v1375
        %v1398 = vpack.c.bf16 %v1378, %v1377
        %v1399 = vpack.c.bf16 %v1380, %v1379
        %v1400 = vpack.c.bf16 %v1382, %v1381
        %v1401 = vpack.c.bf16 %v1384, %v1383
        %v1402 = vpack.c.bf16 %v1386, %v1385
        %s1403 = scalar_lea.vmem [#allocation4], 6
        %v1404 = vld [vmem:[%s1403] sm:$0x3]
        %v1406 = vsel %vm416, %v1387, 0
        %v1409 = vsel %vm416, %v1388, 0
        %v1412 = vsel %vm416, %v1389, 0
        %v1415 = vsel %vm416, %v1390, 0
        %v1418 = vsel %vm416, %v1391, 0
        %v1421 = vsel %vm416, %v1392, 0
        %v1424 = vsel %vm416, %v1393, 0
        %v1427 = vsel %vm416, %v1394, 0
        %v1430 = vsel %vm416, %v1395, 0
        %v1433 = vsel %vm416, %v1396, 0
        %v1436 = vsel %vm416, %v1397, 0
        %v1439 = vsel %vm416, %v1398, 0
        %v1442 = vsel %vm416, %v1399, 0
        %v1445 = vsel %vm416, %v1400, 0
        %v1448 = vsel %vm416, %v1401, 0
        %v1451 = vsel %vm416, %v1402, 0
        %v1454 = vsel %vm684, %v1404, 0
        %1456 = vmatprep.subr.bf16.mxu0 0
        %1457 = vmatpush1.bf16.msra.mxu0 0
        %1458 = vmatprep.subr.bf16.mxu0 0
        %1459 = vmatpush1.bf16.msra.mxu0 0
        %1460 = vmatprep.subr.bf16.mxu0 0
        %1461 = vmatpush1.bf16.msra.mxu0 0
        %1462 = vmatprep.subr.bf16.mxu0 0
        %1463 = vmatpush1.bf16.msra.mxu0 0
        %1464 = vmatprep.subr.bf16.mxu0 0
        %1465 = vmatpush1.bf16.msra.mxu0 0
        %1466 = vmatprep.subr.bf16.mxu0 0
        %1467 = vmatpush1.bf16.msra.mxu0 0
        %1468 = vmatprep.subr.bf16.mxu0 0
        %1469 = vmatpush1.bf16.msra.mxu0 0
        %1470 = vmatprep.subr.bf16.mxu0 0
        %1471 = vmatpush1.bf16.msra.mxu0 %v1454
        %1472 = vmatprep.subr.bf16.mxu0 0
        %1473 = vmatpush2.bf16.msra.mxu0 0
        %1474 = vmatprep.subr.bf16.mxu0 0
        %1475 = vmatpush2.bf16.msra.mxu0 0
        %1476 = vmatprep.subr.bf16.mxu0 0
        %1477 = vmatpush2.bf16.msra.mxu0 0
        %1478 = vmatprep.subr.bf16.mxu0 0
        %1479 = vmatpush2.bf16.msra.mxu0 0
        %1480 = vmatprep.subr.bf16.mxu0 0
        %1481 = vmatpush2.bf16.msra.mxu0 0
        %1482 = vmatprep.subr.bf16.mxu0 0
        %1483 = vmatpush2.bf16.msra.mxu0 0
        %1484 = vmatprep.subr.bf16.mxu0 0
        %1485 = vmatpush2.bf16.msra.mxu0 0
        %1486 = vmatprep.subr.bf16.mxu0 0
        %1487 = vmatpush2.bf16.msra.mxu0 0
        %1488 = vmatprep.mubr.bf16.mxu0 0
        %1489 = vmatmul.mubr.bf16.gmra.mxu0 %v1406
        %v1490 = vpop.f32.mrf.mxu0
        %v1491 = vadd.f32 0.0, %v1490
        %v1492 = vpop.f32.mrf.mxu0
        %v1493 = vpop.f32.mrf.mxu0
        %v1494 = vadd.f32 0.0, %v1493
        %v1495 = vpop.f32.mrf.mxu0
        %1496 = vmatprep.mubr.bf16.mxu0 0
        %1497 = vmatmul.mubr.bf16.gmra.mxu0 %v1409
        %v1498 = vpop.f32.mrf.mxu0
        %v1499 = vadd.f32 0.0, %v1498
        %v1500 = vpop.f32.mrf.mxu0
        %v1501 = vpop.f32.mrf.mxu0
        %v1502 = vadd.f32 0.0, %v1501
        %v1503 = vpop.f32.mrf.mxu0
        %1504 = vmatprep.mubr.bf16.mxu0 0
        %1505 = vmatmul.mubr.bf16.gmra.mxu0 %v1412
        %v1506 = vpop.f32.mrf.mxu0
        %v1507 = vadd.f32 0.0, %v1506
        %v1508 = vpop.f32.mrf.mxu0
        %v1509 = vpop.f32.mrf.mxu0
        %v1510 = vadd.f32 0.0, %v1509
        %v1511 = vpop.f32.mrf.mxu0
        %1512 = vmatprep.mubr.bf16.mxu0 0
        %1513 = vmatmul.mubr.bf16.gmra.mxu0 %v1415
        %v1514 = vpop.f32.mrf.mxu0
        %v1515 = vadd.f32 0.0, %v1514
        %v1516 = vpop.f32.mrf.mxu0
        %v1517 = vpop.f32.mrf.mxu0
        %v1518 = vadd.f32 0.0, %v1517
        %v1519 = vpop.f32.mrf.mxu0
        %1520 = vmatprep.mubr.bf16.mxu0 0
        %1521 = vmatmul.mubr.bf16.gmra.mxu0 %v1418
        %v1522 = vpop.f32.mrf.mxu0
        %v1523 = vadd.f32 0.0, %v1522
        %v1524 = vpop.f32.mrf.mxu0
        %v1525 = vpop.f32.mrf.mxu0
        %v1526 = vadd.f32 0.0, %v1525
        %v1527 = vpop.f32.mrf.mxu0
        %1528 = vmatprep.mubr.bf16.mxu0 0
        %1529 = vmatmul.mubr.bf16.gmra.mxu0 %v1421
        %v1530 = vpop.f32.mrf.mxu0
        %v1531 = vadd.f32 0.0, %v1530
        %v1532 = vpop.f32.mrf.mxu0
        %v1533 = vpop.f32.mrf.mxu0
        %v1534 = vadd.f32 0.0, %v1533
        %v1535 = vpop.f32.mrf.mxu0
        %1536 = vmatprep.mubr.bf16.mxu0 0
        %1537 = vmatmul.mubr.bf16.gmra.mxu0 %v1424
        %v1538 = vpop.f32.mrf.mxu0
        %v1539 = vadd.f32 0.0, %v1538
        %v1540 = vpop.f32.mrf.mxu0
        %v1541 = vpop.f32.mrf.mxu0
        %v1542 = vadd.f32 0.0, %v1541
        %v1543 = vpop.f32.mrf.mxu0
        %1544 = vmatprep.mubr.bf16.mxu0 0
        %1545 = vmatmul.mubr.bf16.gmra.mxu0 %v1427
        %v1546 = vpop.f32.mrf.mxu0
        %v1547 = vadd.f32 0.0, %v1546
        %v1548 = vpop.f32.mrf.mxu0
        %v1549 = vpop.f32.mrf.mxu0
        %v1550 = vadd.f32 0.0, %v1549
        %v1551 = vpop.f32.mrf.mxu0
        %1552 = vmatprep.mubr.bf16.mxu0 0
        %1553 = vmatmul.mubr.bf16.gmra.mxu0 %v1430
        %v1554 = vpop.f32.mrf.mxu0
        %v1555 = vadd.f32 0.0, %v1554
        %v1556 = vpop.f32.mrf.mxu0
        %v1557 = vpop.f32.mrf.mxu0
        %v1558 = vadd.f32 0.0, %v1557
        %v1559 = vpop.f32.mrf.mxu0
        %1560 = vmatprep.mubr.bf16.mxu0 0
        %1561 = vmatmul.mubr.bf16.gmra.mxu0 %v1433
        %v1562 = vpop.f32.mrf.mxu0
        %v1563 = vadd.f32 0.0, %v1562
        %v1564 = vpop.f32.mrf.mxu0
        %v1565 = vpop.f32.mrf.mxu0
        %v1566 = vadd.f32 0.0, %v1565
        %v1567 = vpop.f32.mrf.mxu0
        %1568 = vmatprep.mubr.bf16.mxu0 0
        %1569 = vmatmul.mubr.bf16.gmra.mxu0 %v1436
        %v1570 = vpop.f32.mrf.mxu0
        %v1571 = vadd.f32 0.0, %v1570
        %v1572 = vpop.f32.mrf.mxu0
        %v1573 = vpop.f32.mrf.mxu0
        %v1574 = vadd.f32 0.0, %v1573
        %v1575 = vpop.f32.mrf.mxu0
        %1576 = vmatprep.mubr.bf16.mxu0 0
        %1577 = vmatmul.mubr.bf16.gmra.mxu0 %v1439
        %v1578 = vpop.f32.mrf.mxu0
        %v1579 = vadd.f32 0.0, %v1578
        %v1580 = vpop.f32.mrf.mxu0
        %v1581 = vpop.f32.mrf.mxu0
        %v1582 = vadd.f32 0.0, %v1581
        %v1583 = vpop.f32.mrf.mxu0
        %1584 = vmatprep.mubr.bf16.mxu0 0
        %1585 = vmatmul.mubr.bf16.gmra.mxu0 %v1442
        %v1586 = vpop.f32.mrf.mxu0
        %v1587 = vadd.f32 0.0, %v1586
        %v1588 = vpop.f32.mrf.mxu0
        %v1589 = vpop.f32.mrf.mxu0
        %v1590 = vadd.f32 0.0, %v1589
        %v1591 = vpop.f32.mrf.mxu0
        %1592 = vmatprep.mubr.bf16.mxu0 0
        %1593 = vmatmul.mubr.bf16.gmra.mxu0 %v1445
        %v1594 = vpop.f32.mrf.mxu0
        %v1595 = vadd.f32 0.0, %v1594
        %v1596 = vpop.f32.mrf.mxu0
        %v1597 = vpop.f32.mrf.mxu0
        %v1598 = vadd.f32 0.0, %v1597
        %v1599 = vpop.f32.mrf.mxu0
        %1600 = vmatprep.mubr.bf16.mxu0 0
        %1601 = vmatmul.mubr.bf16.gmra.mxu0 %v1448
        %v1602 = vpop.f32.mrf.mxu0
        %v1603 = vadd.f32 0.0, %v1602
        %v1604 = vpop.f32.mrf.mxu0
        %v1605 = vpop.f32.mrf.mxu0
        %v1606 = vadd.f32 0.0, %v1605
        %v1607 = vpop.f32.mrf.mxu0
        %1608 = vmatprep.mubr.bf16.mxu0 0
        %1609 = vmatmul.mubr.bf16.gmra.mxu0 %v1451
        %v1610 = vpop.f32.mrf.mxu0
        %v1611 = vadd.f32 0.0, %v1610
        %v1612 = vpop.f32.mrf.mxu0
        %v1613 = vpop.f32.mrf.mxu0
        %v1614 = vadd.f32 0.0, %v1613
        %v1615 = vpop.f32.mrf.mxu0
        %1616 = vdwg.mxu0
        %v1617 = vadd.f32 %v1323, %v1491
        %v1618 = vadd.f32 %v1324, %v1494
        %v1619 = vadd.f32 %v1325, %v1499
        %v1620 = vadd.f32 %v1326, %v1502
        %v1621 = vadd.f32 %v1327, %v1507
        %v1622 = vadd.f32 %v1328, %v1510
        %v1623 = vadd.f32 %v1329, %v1515
        %v1624 = vadd.f32 %v1330, %v1518
        %v1625 = vadd.f32 %v1331, %v1523
        %v1626 = vadd.f32 %v1332, %v1526
        %v1627 = vadd.f32 %v1333, %v1531
        %v1628 = vadd.f32 %v1334, %v1534
        %v1629 = vadd.f32 %v1335, %v1539
        %v1630 = vadd.f32 %v1336, %v1542
        %v1631 = vadd.f32 %v1337, %v1547
        %v1632 = vadd.f32 %v1338, %v1550
        %v1633 = vadd.f32 %v1339, %v1555
        %v1634 = vadd.f32 %v1340, %v1558
        %v1635 = vadd.f32 %v1341, %v1563
        %v1636 = vadd.f32 %v1342, %v1566
        %v1637 = vadd.f32 %v1343, %v1571
        %v1638 = vadd.f32 %v1344, %v1574
        %v1639 = vadd.f32 %v1345, %v1579
        %v1640 = vadd.f32 %v1346, %v1582
        %v1641 = vadd.f32 %v1347, %v1587
        %v1642 = vadd.f32 %v1348, %v1590
        %v1643 = vadd.f32 %v1349, %v1595
        %v1644 = vadd.f32 %v1350, %v1598
        %v1645 = vadd.f32 %v1351, %v1603
        %v1646 = vadd.f32 %v1352, %v1606
        %v1647 = vadd.f32 %v1353, %v1611
        %v1648 = vadd.f32 %v1354, %v1614
        %v1649 = vld [vmem:[%s504 + $0x1] sm:$0xff]
        %v1650 = vld [vmem:[%s504 + $0x9] sm:$0xff]
        %v1651 = vld [vmem:[%s504 + $0x19] sm:$0xff]
        %v1652 = vld [vmem:[%s504 + $0x21] sm:$0xff]
        %v1653 = vld [vmem:[%s504 + $0x31] sm:$0xff]
        %v1654 = vld [vmem:[%s504 + $0x39] sm:$0xff]
        %v1655 = vld [vmem:[%s504 + $0x49] sm:$0xff]
        %v1656 = vld [vmem:[%s504 + $0x51] sm:$0xff]
        %v1657 = vld [vmem:[%s504 + $0x61] sm:$0xff]
        %v1658 = vld [vmem:[%s504 + $0x69] sm:$0xff]
        %v1659 = vld [vmem:[%s504 + $0x79] sm:$0xff]
        %v1660 = vld [vmem:[%s504 + $0x81] sm:$0xff]
        %v1661 = vld [vmem:[%s504 + $0x91] sm:$0xff]
        %v1662 = vld [vmem:[%s504 + $0x99] sm:$0xff]
        %v1663 = vld [vmem:[%s504 + $0xa9] sm:$0xff]
        %v1664 = vld [vmem:[%s504 + $0xb1] sm:$0xff]
        %v1665 = vld [vmem:[%s504 + $0xc1] sm:$0xff]
        %v1666 = vld [vmem:[%s504 + $0xc9] sm:$0xff]
        %v1667 = vld [vmem:[%s504 + $0xd9] sm:$0xff]
        %v1668 = vld [vmem:[%s504 + $0xe1] sm:$0xff]
        %v1669 = vld [vmem:[%s504 + $0xf1] sm:$0xff]
        %v1670 = vld [vmem:[%s504 + $0xf9] sm:$0xff]
        %v1671 = vld [vmem:[%s504 + $0x109] sm:$0xff]
        %v1672 = vld [vmem:[%s504 + $0x111] sm:$0xff]
        %v1673 = vld [vmem:[%s504 + $0x121] sm:$0xff]
        %v1674 = vld [vmem:[%s504 + $0x129] sm:$0xff]
        %v1675 = vld [vmem:[%s504 + $0x139] sm:$0xff]
        %v1676 = vld [vmem:[%s504 + $0x141] sm:$0xff]
        %v1677 = vld [vmem:[%s504 + $0x151] sm:$0xff]
        %v1678 = vld [vmem:[%s504 + $0x159] sm:$0xff]
        %v1679 = vld [vmem:[%s504 + $0x169] sm:$0xff]
        %v1680 = vld [vmem:[%s504 + $0x171] sm:$0xff]
        %v1681 = vpack.c.bf16 %v1650, %v1649
        %v1682 = vpack.c.bf16 %v1652, %v1651
        %v1683 = vpack.c.bf16 %v1654, %v1653
        %v1684 = vpack.c.bf16 %v1656, %v1655
        %v1685 = vpack.c.bf16 %v1658, %v1657
        %v1686 = vpack.c.bf16 %v1660, %v1659
        %v1687 = vpack.c.bf16 %v1662, %v1661
        %v1688 = vpack.c.bf16 %v1664, %v1663
        %v1689 = vpack.c.bf16 %v1666, %v1665
        %v1690 = vpack.c.bf16 %v1668, %v1667
        %v1691 = vpack.c.bf16 %v1670, %v1669
        %v1692 = vpack.c.bf16 %v1672, %v1671
        %v1693 = vpack.c.bf16 %v1674, %v1673
        %v1694 = vpack.c.bf16 %v1676, %v1675
        %v1695 = vpack.c.bf16 %v1678, %v1677
        %v1696 = vpack.c.bf16 %v1680, %v1679
        %s1697 = scalar_lea.vmem [#allocation4], 8
        %v1698 = vld [vmem:[%s1697] sm:$0x3]
        %v1700 = vsel %vm416, %v1681, 0
        %v1703 = vsel %vm416, %v1682, 0
        %v1706 = vsel %vm416, %v1683, 0
        %v1709 = vsel %vm416, %v1684, 0
        %v1712 = vsel %vm416, %v1685, 0
        %v1715 = vsel %vm416, %v1686, 0
        %v1718 = vsel %vm416, %v1687, 0
        %v1721 = vsel %vm416, %v1688, 0
        %v1724 = vsel %vm416, %v1689, 0
        %v1727 = vsel %vm416, %v1690, 0
        %v1730 = vsel %vm416, %v1691, 0
        %v1733 = vsel %vm416, %v1692, 0
        %v1736 = vsel %vm416, %v1693, 0
        %v1739 = vsel %vm416, %v1694, 0
        %v1742 = vsel %vm416, %v1695, 0
        %v1745 = vsel %vm416, %v1696, 0
        %v1748 = vsel %vm684, %v1698, 0
        %1750 = vmatprep.subr.bf16.mxu0 0
        %1751 = vmatpush1.bf16.msra.mxu0 0
        %1752 = vmatprep.subr.bf16.mxu0 0
        %1753 = vmatpush1.bf16.msra.mxu0 0
        %1754 = vmatprep.subr.bf16.mxu0 0
        %1755 = vmatpush1.bf16.msra.mxu0 0
        %1756 = vmatprep.subr.bf16.mxu0 0
        %1757 = vmatpush1.bf16.msra.mxu0 0
        %1758 = vmatprep.subr.bf16.mxu0 0
        %1759 = vmatpush1.bf16.msra.mxu0 0
        %1760 = vmatprep.subr.bf16.mxu0 0
        %1761 = vmatpush1.bf16.msra.mxu0 0
        %1762 = vmatprep.subr.bf16.mxu0 0
        %1763 = vmatpush1.bf16.msra.mxu0 0
        %1764 = vmatprep.subr.bf16.mxu0 0
        %1765 = vmatpush1.bf16.msra.mxu0 %v1748
        %1766 = vmatprep.subr.bf16.mxu0 0
        %1767 = vmatpush2.bf16.msra.mxu0 0
        %1768 = vmatprep.subr.bf16.mxu0 0
        %1769 = vmatpush2.bf16.msra.mxu0 0
        %1770 = vmatprep.subr.bf16.mxu0 0
        %1771 = vmatpush2.bf16.msra.mxu0 0
        %1772 = vmatprep.subr.bf16.mxu0 0
        %1773 = vmatpush2.bf16.msra.mxu0 0
        %1774 = vmatprep.subr.bf16.mxu0 0
        %1775 = vmatpush2.bf16.msra.mxu0 0
        %1776 = vmatprep.subr.bf16.mxu0 0
        %1777 = vmatpush2.bf16.msra.mxu0 0
        %1778 = vmatprep.subr.bf16.mxu0 0
        %1779 = vmatpush2.bf16.msra.mxu0 0
        %1780 = vmatprep.subr.bf16.mxu0 0
        %1781 = vmatpush2.bf16.msra.mxu0 0
        %1782 = vmatprep.mubr.bf16.mxu0 0
        %1783 = vmatmul.mubr.bf16.gmra.mxu0 %v1700
        %v1784 = vpop.f32.mrf.mxu0
        %v1785 = vadd.f32 0.0, %v1784
        %v1786 = vpop.f32.mrf.mxu0
        %v1787 = vpop.f32.mrf.mxu0
        %v1788 = vadd.f32 0.0, %v1787
        %v1789 = vpop.f32.mrf.mxu0
        %1790 = vmatprep.mubr.bf16.mxu0 0
        %1791 = vmatmul.mubr.bf16.gmra.mxu0 %v1703
        %v1792 = vpop.f32.mrf.mxu0
        %v1793 = vadd.f32 0.0, %v1792
        %v1794 = vpop.f32.mrf.mxu0
        %v1795 = vpop.f32.mrf.mxu0
        %v1796 = vadd.f32 0.0, %v1795
        %v1797 = vpop.f32.mrf.mxu0
        %1798 = vmatprep.mubr.bf16.mxu0 0
        %1799 = vmatmul.mubr.bf16.gmra.mxu0 %v1706
        %v1800 = vpop.f32.mrf.mxu0
        %v1801 = vadd.f32 0.0, %v1800
        %v1802 = vpop.f32.mrf.mxu0
        %v1803 = vpop.f32.mrf.mxu0
        %v1804 = vadd.f32 0.0, %v1803
        %v1805 = vpop.f32.mrf.mxu0
        %1806 = vmatprep.mubr.bf16.mxu0 0
        %1807 = vmatmul.mubr.bf16.gmra.mxu0 %v1709
        %v1808 = vpop.f32.mrf.mxu0
        %v1809 = vadd.f32 0.0, %v1808
        %v1810 = vpop.f32.mrf.mxu0
        %v1811 = vpop.f32.mrf.mxu0
        %v1812 = vadd.f32 0.0, %v1811
        %v1813 = vpop.f32.mrf.mxu0
        %1814 = vmatprep.mubr.bf16.mxu0 0
        %1815 = vmatmul.mubr.bf16.gmra.mxu0 %v1712
        %v1816 = vpop.f32.mrf.mxu0
        %v1817 = vadd.f32 0.0, %v1816
        %v1818 = vpop.f32.mrf.mxu0
        %v1819 = vpop.f32.mrf.mxu0
        %v1820 = vadd.f32 0.0, %v1819
        %v1821 = vpop.f32.mrf.mxu0
        %1822 = vmatprep.mubr.bf16.mxu0 0
        %1823 = vmatmul.mubr.bf16.gmra.mxu0 %v1715
        %v1824 = vpop.f32.mrf.mxu0
        %v1825 = vadd.f32 0.0, %v1824
        %v1826 = vpop.f32.mrf.mxu0
        %v1827 = vpop.f32.mrf.mxu0
        %v1828 = vadd.f32 0.0, %v1827
        %v1829 = vpop.f32.mrf.mxu0
        %1830 = vmatprep.mubr.bf16.mxu0 0
        %1831 = vmatmul.mubr.bf16.gmra.mxu0 %v1718
        %v1832 = vpop.f32.mrf.mxu0
        %v1833 = vadd.f32 0.0, %v1832
        %v1834 = vpop.f32.mrf.mxu0
        %v1835 = vpop.f32.mrf.mxu0
        %v1836 = vadd.f32 0.0, %v1835
        %v1837 = vpop.f32.mrf.mxu0
        %1838 = vmatprep.mubr.bf16.mxu0 0
        %1839 = vmatmul.mubr.bf16.gmra.mxu0 %v1721
        %v1840 = vpop.f32.mrf.mxu0
        %v1841 = vadd.f32 0.0, %v1840
        %v1842 = vpop.f32.mrf.mxu0
        %v1843 = vpop.f32.mrf.mxu0
        %v1844 = vadd.f32 0.0, %v1843
        %v1845 = vpop.f32.mrf.mxu0
        %1846 = vmatprep.mubr.bf16.mxu0 0
        %1847 = vmatmul.mubr.bf16.gmra.mxu0 %v1724
        %v1848 = vpop.f32.mrf.mxu0
        %v1849 = vadd.f32 0.0, %v1848
        %v1850 = vpop.f32.mrf.mxu0
        %v1851 = vpop.f32.mrf.mxu0
        %v1852 = vadd.f32 0.0, %v1851
        %v1853 = vpop.f32.mrf.mxu0
        %1854 = vmatprep.mubr.bf16.mxu0 0
        %1855 = vmatmul.mubr.bf16.gmra.mxu0 %v1727
        %v1856 = vpop.f32.mrf.mxu0
        %v1857 = vadd.f32 0.0, %v1856
        %v1858 = vpop.f32.mrf.mxu0
        %v1859 = vpop.f32.mrf.mxu0
        %v1860 = vadd.f32 0.0, %v1859
        %v1861 = vpop.f32.mrf.mxu0
        %1862 = vmatprep.mubr.bf16.mxu0 0
        %1863 = vmatmul.mubr.bf16.gmra.mxu0 %v1730
        %v1864 = vpop.f32.mrf.mxu0
        %v1865 = vadd.f32 0.0, %v1864
        %v1866 = vpop.f32.mrf.mxu0
        %v1867 = vpop.f32.mrf.mxu0
        %v1868 = vadd.f32 0.0, %v1867
        %v1869 = vpop.f32.mrf.mxu0
        %1870 = vmatprep.mubr.bf16.mxu0 0
        %1871 = vmatmul.mubr.bf16.gmra.mxu0 %v1733
        %v1872 = vpop.f32.mrf.mxu0
        %v1873 = vadd.f32 0.0, %v1872
        %v1874 = vpop.f32.mrf.mxu0
        %v1875 = vpop.f32.mrf.mxu0
        %v1876 = vadd.f32 0.0, %v1875
        %v1877 = vpop.f32.mrf.mxu0
        %1878 = vmatprep.mubr.bf16.mxu0 0
        %1879 = vmatmul.mubr.bf16.gmra.mxu0 %v1736
        %v1880 = vpop.f32.mrf.mxu0
        %v1881 = vadd.f32 0.0, %v1880
        %v1882 = vpop.f32.mrf.mxu0
        %v1883 = vpop.f32.mrf.mxu0
        %v1884 = vadd.f32 0.0, %v1883
        %v1885 = vpop.f32.mrf.mxu0
        %1886 = vmatprep.mubr.bf16.mxu0 0
        %1887 = vmatmul.mubr.bf16.gmra.mxu0 %v1739
        %v1888 = vpop.f32.mrf.mxu0
        %v1889 = vadd.f32 0.0, %v1888
        %v1890 = vpop.f32.mrf.mxu0
        %v1891 = vpop.f32.mrf.mxu0
        %v1892 = vadd.f32 0.0, %v1891
        %v1893 = vpop.f32.mrf.mxu0
        %1894 = vmatprep.mubr.bf16.mxu0 0
        %1895 = vmatmul.mubr.bf16.gmra.mxu0 %v1742
        %v1896 = vpop.f32.mrf.mxu0
        %v1897 = vadd.f32 0.0, %v1896
        %v1898 = vpop.f32.mrf.mxu0
        %v1899 = vpop.f32.mrf.mxu0
        %v1900 = vadd.f32 0.0, %v1899
        %v1901 = vpop.f32.mrf.mxu0
        %1902 = vmatprep.mubr.bf16.mxu0 0
        %1903 = vmatmul.mubr.bf16.gmra.mxu0 %v1745
        %v1904 = vpop.f32.mrf.mxu0
        %v1905 = vadd.f32 0.0, %v1904
        %v1906 = vpop.f32.mrf.mxu0
        %v1907 = vpop.f32.mrf.mxu0
        %v1908 = vadd.f32 0.0, %v1907
        %v1909 = vpop.f32.mrf.mxu0
        %1910 = vdwg.mxu0
        %v1911 = vadd.f32 %v1617, %v1785
        %v1912 = vadd.f32 %v1618, %v1788
        %v1913 = vadd.f32 %v1619, %v1793
        %v1914 = vadd.f32 %v1620, %v1796
        %v1915 = vadd.f32 %v1621, %v1801
        %v1916 = vadd.f32 %v1622, %v1804
        %v1917 = vadd.f32 %v1623, %v1809
        %v1918 = vadd.f32 %v1624, %v1812
        %v1919 = vadd.f32 %v1625, %v1817
        %v1920 = vadd.f32 %v1626, %v1820
        %v1921 = vadd.f32 %v1627, %v1825
        %v1922 = vadd.f32 %v1628, %v1828
        %v1923 = vadd.f32 %v1629, %v1833
        %v1924 = vadd.f32 %v1630, %v1836
        %v1925 = vadd.f32 %v1631, %v1841
        %v1926 = vadd.f32 %v1632, %v1844
        %v1927 = vadd.f32 %v1633, %v1849
        %v1928 = vadd.f32 %v1634, %v1852
        %v1929 = vadd.f32 %v1635, %v1857
        %v1930 = vadd.f32 %v1636, %v1860
        %v1931 = vadd.f32 %v1637, %v1865
        %v1932 = vadd.f32 %v1638, %v1868
        %v1933 = vadd.f32 %v1639, %v1873
        %v1934 = vadd.f32 %v1640, %v1876
        %v1935 = vadd.f32 %v1641, %v1881
        %v1936 = vadd.f32 %v1642, %v1884
        %v1937 = vadd.f32 %v1643, %v1889
        %v1938 = vadd.f32 %v1644, %v1892
        %v1939 = vadd.f32 %v1645, %v1897
        %v1940 = vadd.f32 %v1646, %v1900
        %v1941 = vadd.f32 %v1647, %v1905
        %v1942 = vadd.f32 %v1648, %v1908
        %v1943 = vld [vmem:[%s504 + $0x2] sm:$0xff]
        %v1944 = vld [vmem:[%s504 + $0xa] sm:$0xff]
        %v1945 = vld [vmem:[%s504 + $0x1a] sm:$0xff]
        %v1946 = vld [vmem:[%s504 + $0x22] sm:$0xff]
        %v1947 = vld [vmem:[%s504 + $0x32] sm:$0xff]
        %v1948 = vld [vmem:[%s504 + $0x3a] sm:$0xff]
        %v1949 = vld [vmem:[%s504 + $0x4a] sm:$0xff]
        %v1950 = vld [vmem:[%s504 + $0x52] sm:$0xff]
        %v1951 = vld [vmem:[%s504 + $0x62] sm:$0xff]
        %v1952 = vld [vmem:[%s504 + $0x6a] sm:$0xff]
        %v1953 = vld [vmem:[%s504 + $0x7a] sm:$0xff]
        %v1954 = vld [vmem:[%s504 + $0x82] sm:$0xff]
        %v1955 = vld [vmem:[%s504 + $0x92] sm:$0xff]
        %v1956 = vld [vmem:[%s504 + $0x9a] sm:$0xff]
        %v1957 = vld [vmem:[%s504 + $0xaa] sm:$0xff]
        %v1958 = vld [vmem:[%s504 + $0xb2] sm:$0xff]
        %v1959 = vld [vmem:[%s504 + $0xc2] sm:$0xff]
        %v1960 = vld [vmem:[%s504 + $0xca] sm:$0xff]
        %v1961 = vld [vmem:[%s504 + $0xda] sm:$0xff]
        %v1962 = vld [vmem:[%s504 + $0xe2] sm:$0xff]
        %v1963 = vld [vmem:[%s504 + $0xf2] sm:$0xff]
        %v1964 = vld [vmem:[%s504 + $0xfa] sm:$0xff]
        %v1965 = vld [vmem:[%s504 + $0x10a] sm:$0xff]
        %v1966 = vld [vmem:[%s504 + $0x112] sm:$0xff]
        %v1967 = vld [vmem:[%s504 + $0x122] sm:$0xff]
        %v1968 = vld [vmem:[%s504 + $0x12a] sm:$0xff]
        %v1969 = vld [vmem:[%s504 + $0x13a] sm:$0xff]
        %v1970 = vld [vmem:[%s504 + $0x142] sm:$0xff]
        %v1971 = vld [vmem:[%s504 + $0x152] sm:$0xff]
        %v1972 = vld [vmem:[%s504 + $0x15a] sm:$0xff]
        %v1973 = vld [vmem:[%s504 + $0x16a] sm:$0xff]
        %v1974 = vld [vmem:[%s504 + $0x172] sm:$0xff]
        %v1975 = vpack.c.bf16 %v1944, %v1943
        %v1976 = vpack.c.bf16 %v1946, %v1945
        %v1977 = vpack.c.bf16 %v1948, %v1947
        %v1978 = vpack.c.bf16 %v1950, %v1949
        %v1979 = vpack.c.bf16 %v1952, %v1951
        %v1980 = vpack.c.bf16 %v1954, %v1953
        %v1981 = vpack.c.bf16 %v1956, %v1955
        %v1982 = vpack.c.bf16 %v1958, %v1957
        %v1983 = vpack.c.bf16 %v1960, %v1959
        %v1984 = vpack.c.bf16 %v1962, %v1961
        %v1985 = vpack.c.bf16 %v1964, %v1963
        %v1986 = vpack.c.bf16 %v1966, %v1965
        %v1987 = vpack.c.bf16 %v1968, %v1967
        %v1988 = vpack.c.bf16 %v1970, %v1969
        %v1989 = vpack.c.bf16 %v1972, %v1971
        %v1990 = vpack.c.bf16 %v1974, %v1973
        %s1991 = scalar_lea.vmem [#allocation4], 10
        %v1992 = vld [vmem:[%s1991] sm:$0x3]
        %v1994 = vsel %vm416, %v1975, 0
        %v1997 = vsel %vm416, %v1976, 0
        %v2000 = vsel %vm416, %v1977, 0
        %v2003 = vsel %vm416, %v1978, 0
        %v2006 = vsel %vm416, %v1979, 0
        %v2009 = vsel %vm416, %v1980, 0
        %v2012 = vsel %vm416, %v1981, 0
        %v2015 = vsel %vm416, %v1982, 0
        %v2018 = vsel %vm416, %v1983, 0
        %v2021 = vsel %vm416, %v1984, 0
        %v2024 = vsel %vm416, %v1985, 0
        %v2027 = vsel %vm416, %v1986, 0
        %v2030 = vsel %vm416, %v1987, 0
        %v2033 = vsel %vm416, %v1988, 0
        %v2036 = vsel %vm416, %v1989, 0
        %v2039 = vsel %vm416, %v1990, 0
        %v2042 = vsel %vm684, %v1992, 0
        %2044 = vmatprep.subr.bf16.mxu0 0
        %2045 = vmatpush1.bf16.msra.mxu0 0
        %2046 = vmatprep.subr.bf16.mxu0 0
        %2047 = vmatpush1.bf16.msra.mxu0 0
        %2048 = vmatprep.subr.bf16.mxu0 0
        %2049 = vmatpush1.bf16.msra.mxu0 0
        %2050 = vmatprep.subr.bf16.mxu0 0
        %2051 = vmatpush1.bf16.msra.mxu0 0
        %2052 = vmatprep.subr.bf16.mxu0 0
        %2053 = vmatpush1.bf16.msra.mxu0 0
        %2054 = vmatprep.subr.bf16.mxu0 0
        %2055 = vmatpush1.bf16.msra.mxu0 0
        %2056 = vmatprep.subr.bf16.mxu0 0
        %2057 = vmatpush1.bf16.msra.mxu0 0
        %2058 = vmatprep.subr.bf16.mxu0 0
        %2059 = vmatpush1.bf16.msra.mxu0 %v2042
        %2060 = vmatprep.subr.bf16.mxu0 0
        %2061 = vmatpush2.bf16.msra.mxu0 0
        %2062 = vmatprep.subr.bf16.mxu0 0
        %2063 = vmatpush2.bf16.msra.mxu0 0
        %2064 = vmatprep.subr.bf16.mxu0 0
        %2065 = vmatpush2.bf16.msra.mxu0 0
        %2066 = vmatprep.subr.bf16.mxu0 0
        %2067 = vmatpush2.bf16.msra.mxu0 0
        %2068 = vmatprep.subr.bf16.mxu0 0
        %2069 = vmatpush2.bf16.msra.mxu0 0
        %2070 = vmatprep.subr.bf16.mxu0 0
        %2071 = vmatpush2.bf16.msra.mxu0 0
        %2072 = vmatprep.subr.bf16.mxu0 0
        %2073 = vmatpush2.bf16.msra.mxu0 0
        %2074 = vmatprep.subr.bf16.mxu0 0
        %2075 = vmatpush2.bf16.msra.mxu0 0
        %2076 = vmatprep.mubr.bf16.mxu0 0
        %2077 = vmatmul.mubr.bf16.gmra.mxu0 %v1994
        %v2078 = vpop.f32.mrf.mxu0
        %v2079 = vadd.f32 0.0, %v2078
        %v2080 = vpop.f32.mrf.mxu0
        %v2081 = vpop.f32.mrf.mxu0
        %v2082 = vadd.f32 0.0, %v2081
        %v2083 = vpop.f32.mrf.mxu0
        %2084 = vmatprep.mubr.bf16.mxu0 0
        %2085 = vmatmul.mubr.bf16.gmra.mxu0 %v1997
        %v2086 = vpop.f32.mrf.mxu0
        %v2087 = vadd.f32 0.0, %v2086
        %v2088 = vpop.f32.mrf.mxu0
        %v2089 = vpop.f32.mrf.mxu0
        %v2090 = vadd.f32 0.0, %v2089
        %v2091 = vpop.f32.mrf.mxu0
        %2092 = vmatprep.mubr.bf16.mxu0 0
        %2093 = vmatmul.mubr.bf16.gmra.mxu0 %v2000
        %v2094 = vpop.f32.mrf.mxu0
        %v2095 = vadd.f32 0.0, %v2094
        %v2096 = vpop.f32.mrf.mxu0
        %v2097 = vpop.f32.mrf.mxu0
        %v2098 = vadd.f32 0.0, %v2097
        %v2099 = vpop.f32.mrf.mxu0
        %2100 = vmatprep.mubr.bf16.mxu0 0
        %2101 = vmatmul.mubr.bf16.gmra.mxu0 %v2003
        %v2102 = vpop.f32.mrf.mxu0
        %v2103 = vadd.f32 0.0, %v2102
        %v2104 = vpop.f32.mrf.mxu0
        %v2105 = vpop.f32.mrf.mxu0
        %v2106 = vadd.f32 0.0, %v2105
        %v2107 = vpop.f32.mrf.mxu0
        %2108 = vmatprep.mubr.bf16.mxu0 0
        %2109 = vmatmul.mubr.bf16.gmra.mxu0 %v2006
        %v2110 = vpop.f32.mrf.mxu0
        %v2111 = vadd.f32 0.0, %v2110
        %v2112 = vpop.f32.mrf.mxu0
        %v2113 = vpop.f32.mrf.mxu0
        %v2114 = vadd.f32 0.0, %v2113
        %v2115 = vpop.f32.mrf.mxu0
        %2116 = vmatprep.mubr.bf16.mxu0 0
        %2117 = vmatmul.mubr.bf16.gmra.mxu0 %v2009
        %v2118 = vpop.f32.mrf.mxu0
        %v2119 = vadd.f32 0.0, %v2118
        %v2120 = vpop.f32.mrf.mxu0
        %v2121 = vpop.f32.mrf.mxu0
        %v2122 = vadd.f32 0.0, %v2121
        %v2123 = vpop.f32.mrf.mxu0
        %2124 = vmatprep.mubr.bf16.mxu0 0
        %2125 = vmatmul.mubr.bf16.gmra.mxu0 %v2012
        %v2126 = vpop.f32.mrf.mxu0
        %v2127 = vadd.f32 0.0, %v2126
        %v2128 = vpop.f32.mrf.mxu0
        %v2129 = vpop.f32.mrf.mxu0
        %v2130 = vadd.f32 0.0, %v2129
        %v2131 = vpop.f32.mrf.mxu0
        %2132 = vmatprep.mubr.bf16.mxu0 0
        %2133 = vmatmul.mubr.bf16.gmra.mxu0 %v2015
        %v2134 = vpop.f32.mrf.mxu0
        %v2135 = vadd.f32 0.0, %v2134
        %v2136 = vpop.f32.mrf.mxu0
        %v2137 = vpop.f32.mrf.mxu0
        %v2138 = vadd.f32 0.0, %v2137
        %v2139 = vpop.f32.mrf.mxu0
        %2140 = vmatprep.mubr.bf16.mxu0 0
        %2141 = vmatmul.mubr.bf16.gmra.mxu0 %v2018
        %v2142 = vpop.f32.mrf.mxu0
        %v2143 = vadd.f32 0.0, %v2142
        %v2144 = vpop.f32.mrf.mxu0
        %v2145 = vpop.f32.mrf.mxu0
        %v2146 = vadd.f32 0.0, %v2145
        %v2147 = vpop.f32.mrf.mxu0
        %2148 = vmatprep.mubr.bf16.mxu0 0
        %2149 = vmatmul.mubr.bf16.gmra.mxu0 %v2021
        %v2150 = vpop.f32.mrf.mxu0
        %v2151 = vadd.f32 0.0, %v2150
        %v2152 = vpop.f32.mrf.mxu0
        %v2153 = vpop.f32.mrf.mxu0
        %v2154 = vadd.f32 0.0, %v2153
        %v2155 = vpop.f32.mrf.mxu0
        %2156 = vmatprep.mubr.bf16.mxu0 0
        %2157 = vmatmul.mubr.bf16.gmra.mxu0 %v2024
        %v2158 = vpop.f32.mrf.mxu0
        %v2159 = vadd.f32 0.0, %v2158
        %v2160 = vpop.f32.mrf.mxu0
        %v2161 = vpop.f32.mrf.mxu0
        %v2162 = vadd.f32 0.0, %v2161
        %v2163 = vpop.f32.mrf.mxu0
        %2164 = vmatprep.mubr.bf16.mxu0 0
        %2165 = vmatmul.mubr.bf16.gmra.mxu0 %v2027
        %v2166 = vpop.f32.mrf.mxu0
        %v2167 = vadd.f32 0.0, %v2166
        %v2168 = vpop.f32.mrf.mxu0
        %v2169 = vpop.f32.mrf.mxu0
        %v2170 = vadd.f32 0.0, %v2169
        %v2171 = vpop.f32.mrf.mxu0
        %2172 = vmatprep.mubr.bf16.mxu0 0
        %2173 = vmatmul.mubr.bf16.gmra.mxu0 %v2030
        %v2174 = vpop.f32.mrf.mxu0
        %v2175 = vadd.f32 0.0, %v2174
        %v2176 = vpop.f32.mrf.mxu0
        %v2177 = vpop.f32.mrf.mxu0
        %v2178 = vadd.f32 0.0, %v2177
        %v2179 = vpop.f32.mrf.mxu0
        %2180 = vmatprep.mubr.bf16.mxu0 0
        %2181 = vmatmul.mubr.bf16.gmra.mxu0 %v2033
        %v2182 = vpop.f32.mrf.mxu0
        %v2183 = vadd.f32 0.0, %v2182
        %v2184 = vpop.f32.mrf.mxu0
        %v2185 = vpop.f32.mrf.mxu0
        %v2186 = vadd.f32 0.0, %v2185
        %v2187 = vpop.f32.mrf.mxu0
        %2188 = vmatprep.mubr.bf16.mxu0 0
        %2189 = vmatmul.mubr.bf16.gmra.mxu0 %v2036
        %v2190 = vpop.f32.mrf.mxu0
        %v2191 = vadd.f32 0.0, %v2190
        %v2192 = vpop.f32.mrf.mxu0
        %v2193 = vpop.f32.mrf.mxu0
        %v2194 = vadd.f32 0.0, %v2193
        %v2195 = vpop.f32.mrf.mxu0
        %2196 = vmatprep.mubr.bf16.mxu0 0
        %2197 = vmatmul.mubr.bf16.gmra.mxu0 %v2039
        %v2198 = vpop.f32.mrf.mxu0
        %v2199 = vadd.f32 0.0, %v2198
        %v2200 = vpop.f32.mrf.mxu0
        %v2201 = vpop.f32.mrf.mxu0
        %v2202 = vadd.f32 0.0, %v2201
        %v2203 = vpop.f32.mrf.mxu0
        %2204 = vdwg.mxu0
        %v2205 = vadd.f32 %v1911, %v2079
        %v2206 = vadd.f32 %v1912, %v2082
        %v2207 = vadd.f32 %v1913, %v2087
        %v2208 = vadd.f32 %v1914, %v2090
        %v2209 = vadd.f32 %v1915, %v2095
        %v2210 = vadd.f32 %v1916, %v2098
        %v2211 = vadd.f32 %v1917, %v2103
        %v2212 = vadd.f32 %v1918, %v2106
        %v2213 = vadd.f32 %v1919, %v2111
        %v2214 = vadd.f32 %v1920, %v2114
        %v2215 = vadd.f32 %v1921, %v2119
        %v2216 = vadd.f32 %v1922, %v2122
        %v2217 = vadd.f32 %v1923, %v2127
        %v2218 = vadd.f32 %v1924, %v2130
        %v2219 = vadd.f32 %v1925, %v2135
        %v2220 = vadd.f32 %v1926, %v2138
        %v2221 = vadd.f32 %v1927, %v2143
        %v2222 = vadd.f32 %v1928, %v2146
        %v2223 = vadd.f32 %v1929, %v2151
        %v2224 = vadd.f32 %v1930, %v2154
        %v2225 = vadd.f32 %v1931, %v2159
        %v2226 = vadd.f32 %v1932, %v2162
        %v2227 = vadd.f32 %v1933, %v2167
        %v2228 = vadd.f32 %v1934, %v2170
        %v2229 = vadd.f32 %v1935, %v2175
        %v2230 = vadd.f32 %v1936, %v2178
        %v2231 = vadd.f32 %v1937, %v2183
        %v2232 = vadd.f32 %v1938, %v2186
        %v2233 = vadd.f32 %v1939, %v2191
        %v2234 = vadd.f32 %v1940, %v2194
        %v2235 = vadd.f32 %v1941, %v2199
        %v2236 = vadd.f32 %v1942, %v2202
        %s2237 = scalar_lea.vmem [#allocation2], 48
        %v2238 = vld [vmem:[%s2237] sm:$0xff]
        %v2239 = vld [vmem:[%s2237 + $0x8] sm:$0xff]
        %v2240 = vld [vmem:[%s2237 + $0x18] sm:$0xff]
        %v2241 = vld [vmem:[%s2237 + $0x20] sm:$0xff]
        %v2242 = vld [vmem:[%s2237 + $0x30] sm:$0xff]
        %v2243 = vld [vmem:[%s2237 + $0x38] sm:$0xff]
        %v2244 = vld [vmem:[%s2237 + $0x48] sm:$0xff]
        %v2245 = vld [vmem:[%s2237 + $0x50] sm:$0xff]
        %v2246 = vld [vmem:[%s2237 + $0x60] sm:$0xff]
        %v2247 = vld [vmem:[%s2237 + $0x68] sm:$0xff]
        %v2248 = vld [vmem:[%s2237 + $0x78] sm:$0xff]
        %v2249 = vld [vmem:[%s2237 + $0x80] sm:$0xff]
        %v2250 = vld [vmem:[%s2237 + $0x90] sm:$0xff]
        %v2251 = vld [vmem:[%s2237 + $0x98] sm:$0xff]
        %v2252 = vld [vmem:[%s2237 + $0xa8] sm:$0xff]
        %v2253 = vld [vmem:[%s2237 + $0xb0] sm:$0xff]
        %v2254 = vld [vmem:[%s2237 + $0xc0] sm:$0xff]
        %v2255 = vld [vmem:[%s2237 + $0xc8] sm:$0xff]
        %v2256 = vld [vmem:[%s2237 + $0xd8] sm:$0xff]
        %v2257 = vld [vmem:[%s2237 + $0xe0] sm:$0xff]
        %v2258 = vld [vmem:[%s2237 + $0xf0] sm:$0xff]
        %v2259 = vld [vmem:[%s2237 + $0xf8] sm:$0xff]
        %v2260 = vld [vmem:[%s2237 + $0x108] sm:$0xff]
        %v2261 = vld [vmem:[%s2237 + $0x110] sm:$0xff]
        %v2262 = vld [vmem:[%s2237 + $0x120] sm:$0xff]
        %v2263 = vld [vmem:[%s2237 + $0x128] sm:$0xff]
        %v2264 = vld [vmem:[%s2237 + $0x138] sm:$0xff]
        %v2265 = vld [vmem:[%s2237 + $0x140] sm:$0xff]
        %v2266 = vld [vmem:[%s2237 + $0x150] sm:$0xff]
        %v2267 = vld [vmem:[%s2237 + $0x158] sm:$0xff]
        %v2268 = vld [vmem:[%s2237 + $0x168] sm:$0xff]
        %v2269 = vld [vmem:[%s2237 + $0x170] sm:$0xff]
        %v2270 = vpack.c.bf16 %v2239, %v2238
        %v2271 = vpack.c.bf16 %v2241, %v2240
        %v2272 = vpack.c.bf16 %v2243, %v2242
        %v2273 = vpack.c.bf16 %v2245, %v2244
        %v2274 = vpack.c.bf16 %v2247, %v2246
        %v2275 = vpack.c.bf16 %v2249, %v2248
        %v2276 = vpack.c.bf16 %v2251, %v2250
        %v2277 = vpack.c.bf16 %v2253, %v2252
        %v2278 = vpack.c.bf16 %v2255, %v2254
        %v2279 = vpack.c.bf16 %v2257, %v2256
        %v2280 = vpack.c.bf16 %v2259, %v2258
        %v2281 = vpack.c.bf16 %v2261, %v2260
        %v2282 = vpack.c.bf16 %v2263, %v2262
        %v2283 = vpack.c.bf16 %v2265, %v2264
        %v2284 = vpack.c.bf16 %v2267, %v2266
        %v2285 = vpack.c.bf16 %v2269, %v2268
        %s2286 = scalar_lea.vmem [#allocation4], 12
        %v2287 = vld [vmem:[%s2286] sm:$0x3]
        %v2289 = vsel %vm416, %v2270, 0
        %v2292 = vsel %vm416, %v2271, 0
        %v2295 = vsel %vm416, %v2272, 0
        %v2298 = vsel %vm416, %v2273, 0
        %v2301 = vsel %vm416, %v2274, 0
        %v2304 = vsel %vm416, %v2275, 0
        %v2307 = vsel %vm416, %v2276, 0
        %v2310 = vsel %vm416, %v2277, 0
        %v2313 = vsel %vm416, %v2278, 0
        %v2316 = vsel %vm416, %v2279, 0
        %v2319 = vsel %vm416, %v2280, 0
        %v2322 = vsel %vm416, %v2281, 0
        %v2325 = vsel %vm416, %v2282, 0
        %v2328 = vsel %vm416, %v2283, 0
        %v2331 = vsel %vm416, %v2284, 0
        %v2334 = vsel %vm416, %v2285, 0
        %v2337 = vsel %vm684, %v2287, 0
        %2339 = vmatprep.subr.bf16.mxu0 0
        %2340 = vmatpush1.bf16.msra.mxu0 0
        %2341 = vmatprep.subr.bf16.mxu0 0
        %2342 = vmatpush1.bf16.msra.mxu0 0
        %2343 = vmatprep.subr.bf16.mxu0 0
        %2344 = vmatpush1.bf16.msra.mxu0 0
        %2345 = vmatprep.subr.bf16.mxu0 0
        %2346 = vmatpush1.bf16.msra.mxu0 0
        %2347 = vmatprep.subr.bf16.mxu0 0
        %2348 = vmatpush1.bf16.msra.mxu0 0
        %2349 = vmatprep.subr.bf16.mxu0 0
        %2350 = vmatpush1.bf16.msra.mxu0 0
        %2351 = vmatprep.subr.bf16.mxu0 0
        %2352 = vmatpush1.bf16.msra.mxu0 0
        %2353 = vmatprep.subr.bf16.mxu0 0
        %2354 = vmatpush1.bf16.msra.mxu0 %v2337
        %2355 = vmatprep.subr.bf16.mxu0 0
        %2356 = vmatpush2.bf16.msra.mxu0 0
        %2357 = vmatprep.subr.bf16.mxu0 0
        %2358 = vmatpush2.bf16.msra.mxu0 0
        %2359 = vmatprep.subr.bf16.mxu0 0
        %2360 = vmatpush2.bf16.msra.mxu0 0
        %2361 = vmatprep.subr.bf16.mxu0 0
        %2362 = vmatpush2.bf16.msra.mxu0 0
        %2363 = vmatprep.subr.bf16.mxu0 0
        %2364 = vmatpush2.bf16.msra.mxu0 0
        %2365 = vmatprep.subr.bf16.mxu0 0
        %2366 = vmatpush2.bf16.msra.mxu0 0
        %2367 = vmatprep.subr.bf16.mxu0 0
        %2368 = vmatpush2.bf16.msra.mxu0 0
        %2369 = vmatprep.subr.bf16.mxu0 0
        %2370 = vmatpush2.bf16.msra.mxu0 0
        %2371 = vmatprep.mubr.bf16.mxu0 0
        %2372 = vmatmul.mubr.bf16.gmra.mxu0 %v2289
        %v2373 = vpop.f32.mrf.mxu0
        %v2374 = vadd.f32 0.0, %v2373
        %v2375 = vpop.f32.mrf.mxu0
        %v2376 = vpop.f32.mrf.mxu0
        %v2377 = vadd.f32 0.0, %v2376
        %v2378 = vpop.f32.mrf.mxu0
        %2379 = vmatprep.mubr.bf16.mxu0 0
        %2380 = vmatmul.mubr.bf16.gmra.mxu0 %v2292
        %v2381 = vpop.f32.mrf.mxu0
        %v2382 = vadd.f32 0.0, %v2381
        %v2383 = vpop.f32.mrf.mxu0
        %v2384 = vpop.f32.mrf.mxu0
        %v2385 = vadd.f32 0.0, %v2384
        %v2386 = vpop.f32.mrf.mxu0
        %2387 = vmatprep.mubr.bf16.mxu0 0
        %2388 = vmatmul.mubr.bf16.gmra.mxu0 %v2295
        %v2389 = vpop.f32.mrf.mxu0
        %v2390 = vadd.f32 0.0, %v2389
        %v2391 = vpop.f32.mrf.mxu0
        %v2392 = vpop.f32.mrf.mxu0
        %v2393 = vadd.f32 0.0, %v2392
        %v2394 = vpop.f32.mrf.mxu0
        %2395 = vmatprep.mubr.bf16.mxu0 0
        %2396 = vmatmul.mubr.bf16.gmra.mxu0 %v2298
        %v2397 = vpop.f32.mrf.mxu0
        %v2398 = vadd.f32 0.0, %v2397
        %v2399 = vpop.f32.mrf.mxu0
        %v2400 = vpop.f32.mrf.mxu0
        %v2401 = vadd.f32 0.0, %v2400
        %v2402 = vpop.f32.mrf.mxu0
        %2403 = vmatprep.mubr.bf16.mxu0 0
        %2404 = vmatmul.mubr.bf16.gmra.mxu0 %v2301
        %v2405 = vpop.f32.mrf.mxu0
        %v2406 = vadd.f32 0.0, %v2405
        %v2407 = vpop.f32.mrf.mxu0
        %v2408 = vpop.f32.mrf.mxu0
        %v2409 = vadd.f32 0.0, %v2408
        %v2410 = vpop.f32.mrf.mxu0
        %2411 = vmatprep.mubr.bf16.mxu0 0
        %2412 = vmatmul.mubr.bf16.gmra.mxu0 %v2304
        %v2413 = vpop.f32.mrf.mxu0
        %v2414 = vadd.f32 0.0, %v2413
        %v2415 = vpop.f32.mrf.mxu0
        %v2416 = vpop.f32.mrf.mxu0
        %v2417 = vadd.f32 0.0, %v2416
        %v2418 = vpop.f32.mrf.mxu0
        %2419 = vmatprep.mubr.bf16.mxu0 0
        %2420 = vmatmul.mubr.bf16.gmra.mxu0 %v2307
        %v2421 = vpop.f32.mrf.mxu0
        %v2422 = vadd.f32 0.0, %v2421
        %v2423 = vpop.f32.mrf.mxu0
        %v2424 = vpop.f32.mrf.mxu0
        %v2425 = vadd.f32 0.0, %v2424
        %v2426 = vpop.f32.mrf.mxu0
        %2427 = vmatprep.mubr.bf16.mxu0 0
        %2428 = vmatmul.mubr.bf16.gmra.mxu0 %v2310
        %v2429 = vpop.f32.mrf.mxu0
        %v2430 = vadd.f32 0.0, %v2429
        %v2431 = vpop.f32.mrf.mxu0
        %v2432 = vpop.f32.mrf.mxu0
        %v2433 = vadd.f32 0.0, %v2432
        %v2434 = vpop.f32.mrf.mxu0
        %2435 = vmatprep.mubr.bf16.mxu0 0
        %2436 = vmatmul.mubr.bf16.gmra.mxu0 %v2313
        %v2437 = vpop.f32.mrf.mxu0
        %v2438 = vadd.f32 0.0, %v2437
        %v2439 = vpop.f32.mrf.mxu0
        %v2440 = vpop.f32.mrf.mxu0
        %v2441 = vadd.f32 0.0, %v2440
        %v2442 = vpop.f32.mrf.mxu0
        %2443 = vmatprep.mubr.bf16.mxu0 0
        %2444 = vmatmul.mubr.bf16.gmra.mxu0 %v2316
        %v2445 = vpop.f32.mrf.mxu0
        %v2446 = vadd.f32 0.0, %v2445
        %v2447 = vpop.f32.mrf.mxu0
        %v2448 = vpop.f32.mrf.mxu0
        %v2449 = vadd.f32 0.0, %v2448
        %v2450 = vpop.f32.mrf.mxu0
        %2451 = vmatprep.mubr.bf16.mxu0 0
        %2452 = vmatmul.mubr.bf16.gmra.mxu0 %v2319
        %v2453 = vpop.f32.mrf.mxu0
        %v2454 = vadd.f32 0.0, %v2453
        %v2455 = vpop.f32.mrf.mxu0
        %v2456 = vpop.f32.mrf.mxu0
        %v2457 = vadd.f32 0.0, %v2456
        %v2458 = vpop.f32.mrf.mxu0
        %2459 = vmatprep.mubr.bf16.mxu0 0
        %2460 = vmatmul.mubr.bf16.gmra.mxu0 %v2322
        %v2461 = vpop.f32.mrf.mxu0
        %v2462 = vadd.f32 0.0, %v2461
        %v2463 = vpop.f32.mrf.mxu0
        %v2464 = vpop.f32.mrf.mxu0
        %v2465 = vadd.f32 0.0, %v2464
        %v2466 = vpop.f32.mrf.mxu0
        %2467 = vmatprep.mubr.bf16.mxu0 0
        %2468 = vmatmul.mubr.bf16.gmra.mxu0 %v2325
        %v2469 = vpop.f32.mrf.mxu0
        %v2470 = vadd.f32 0.0, %v2469
        %v2471 = vpop.f32.mrf.mxu0
        %v2472 = vpop.f32.mrf.mxu0
        %v2473 = vadd.f32 0.0, %v2472
        %v2474 = vpop.f32.mrf.mxu0
        %2475 = vmatprep.mubr.bf16.mxu0 0
        %2476 = vmatmul.mubr.bf16.gmra.mxu0 %v2328
        %v2477 = vpop.f32.mrf.mxu0
        %v2478 = vadd.f32 0.0, %v2477
        %v2479 = vpop.f32.mrf.mxu0
        %v2480 = vpop.f32.mrf.mxu0
        %v2481 = vadd.f32 0.0, %v2480
        %v2482 = vpop.f32.mrf.mxu0
        %2483 = vmatprep.mubr.bf16.mxu0 0
        %2484 = vmatmul.mubr.bf16.gmra.mxu0 %v2331
        %v2485 = vpop.f32.mrf.mxu0
        %v2486 = vadd.f32 0.0, %v2485
        %v2487 = vpop.f32.mrf.mxu0
        %v2488 = vpop.f32.mrf.mxu0
        %v2489 = vadd.f32 0.0, %v2488
        %v2490 = vpop.f32.mrf.mxu0
        %2491 = vmatprep.mubr.bf16.mxu0 0
        %2492 = vmatmul.mubr.bf16.gmra.mxu0 %v2334
        %v2493 = vpop.f32.mrf.mxu0
        %v2494 = vadd.f32 0.0, %v2493
        %v2495 = vpop.f32.mrf.mxu0
        %v2496 = vpop.f32.mrf.mxu0
        %v2497 = vadd.f32 0.0, %v2496
        %v2498 = vpop.f32.mrf.mxu0
        %2499 = vdwg.mxu0
        %v2500 = vadd.f32 %v2205, %v2374
        %v2501 = vadd.f32 %v2206, %v2377
        %v2502 = vadd.f32 %v2207, %v2382
        %v2503 = vadd.f32 %v2208, %v2385
        %v2504 = vadd.f32 %v2209, %v2390
        %v2505 = vadd.f32 %v2210, %v2393
        %v2506 = vadd.f32 %v2211, %v2398
        %v2507 = vadd.f32 %v2212, %v2401
        %v2508 = vadd.f32 %v2213, %v2406
        %v2509 = vadd.f32 %v2214, %v2409
        %v2510 = vadd.f32 %v2215, %v2414
        %v2511 = vadd.f32 %v2216, %v2417
        %v2512 = vadd.f32 %v2217, %v2422
        %v2513 = vadd.f32 %v2218, %v2425
        %v2514 = vadd.f32 %v2219, %v2430
        %v2515 = vadd.f32 %v2220, %v2433
        %v2516 = vadd.f32 %v2221, %v2438
        %v2517 = vadd.f32 %v2222, %v2441
        %v2518 = vadd.f32 %v2223, %v2446
        %v2519 = vadd.f32 %v2224, %v2449
        %v2520 = vadd.f32 %v2225, %v2454
        %v2521 = vadd.f32 %v2226, %v2457
        %v2522 = vadd.f32 %v2227, %v2462
        %v2523 = vadd.f32 %v2228, %v2465
        %v2524 = vadd.f32 %v2229, %v2470
        %v2525 = vadd.f32 %v2230, %v2473
        %v2526 = vadd.f32 %v2231, %v2478
        %v2527 = vadd.f32 %v2232, %v2481
        %v2528 = vadd.f32 %v2233, %v2486
        %v2529 = vadd.f32 %v2234, %v2489
        %v2530 = vadd.f32 %v2235, %v2494
        %v2531 = vadd.f32 %v2236, %v2497
        %v2532 = vld [vmem:[%s2237 + $0x1] sm:$0xff]
        %v2533 = vld [vmem:[%s2237 + $0x9] sm:$0xff]
        %v2534 = vld [vmem:[%s2237 + $0x19] sm:$0xff]
        %v2535 = vld [vmem:[%s2237 + $0x21] sm:$0xff]
        %v2536 = vld [vmem:[%s2237 + $0x31] sm:$0xff]
        %v2537 = vld [vmem:[%s2237 + $0x39] sm:$0xff]
        %v2538 = vld [vmem:[%s2237 + $0x49] sm:$0xff]
        %v2539 = vld [vmem:[%s2237 + $0x51] sm:$0xff]
        %v2540 = vld [vmem:[%s2237 + $0x61] sm:$0xff]
        %v2541 = vld [vmem:[%s2237 + $0x69] sm:$0xff]
        %v2542 = vld [vmem:[%s2237 + $0x79] sm:$0xff]
        %v2543 = vld [vmem:[%s2237 + $0x81] sm:$0xff]
        %v2544 = vld [vmem:[%s2237 + $0x91] sm:$0xff]
        %v2545 = vld [vmem:[%s2237 + $0x99] sm:$0xff]
        %v2546 = vld [vmem:[%s2237 + $0xa9] sm:$0xff]
        %v2547 = vld [vmem:[%s2237 + $0xb1] sm:$0xff]
        %v2548 = vld [vmem:[%s2237 + $0xc1] sm:$0xff]
        %v2549 = vld [vmem:[%s2237 + $0xc9] sm:$0xff]
        %v2550 = vld [vmem:[%s2237 + $0xd9] sm:$0xff]
        %v2551 = vld [vmem:[%s2237 + $0xe1] sm:$0xff]
        %v2552 = vld [vmem:[%s2237 + $0xf1] sm:$0xff]
        %v2553 = vld [vmem:[%s2237 + $0xf9] sm:$0xff]
        %v2554 = vld [vmem:[%s2237 + $0x109] sm:$0xff]
        %v2555 = vld [vmem:[%s2237 + $0x111] sm:$0xff]
        %v2556 = vld [vmem:[%s2237 + $0x121] sm:$0xff]
        %v2557 = vld [vmem:[%s2237 + $0x129] sm:$0xff]
        %v2558 = vld [vmem:[%s2237 + $0x139] sm:$0xff]
        %v2559 = vld [vmem:[%s2237 + $0x141] sm:$0xff]
        %v2560 = vld [vmem:[%s2237 + $0x151] sm:$0xff]
        %v2561 = vld [vmem:[%s2237 + $0x159] sm:$0xff]
        %v2562 = vld [vmem:[%s2237 + $0x169] sm:$0xff]
        %v2563 = vld [vmem:[%s2237 + $0x171] sm:$0xff]
        %v2564 = vpack.c.bf16 %v2533, %v2532
        %v2565 = vpack.c.bf16 %v2535, %v2534
        %v2566 = vpack.c.bf16 %v2537, %v2536
        %v2567 = vpack.c.bf16 %v2539, %v2538
        %v2568 = vpack.c.bf16 %v2541, %v2540
        %v2569 = vpack.c.bf16 %v2543, %v2542
        %v2570 = vpack.c.bf16 %v2545, %v2544
        %v2571 = vpack.c.bf16 %v2547, %v2546
        %v2572 = vpack.c.bf16 %v2549, %v2548
        %v2573 = vpack.c.bf16 %v2551, %v2550
        %v2574 = vpack.c.bf16 %v2553, %v2552
        %v2575 = vpack.c.bf16 %v2555, %v2554
        %v2576 = vpack.c.bf16 %v2557, %v2556
        %v2577 = vpack.c.bf16 %v2559, %v2558
        %v2578 = vpack.c.bf16 %v2561, %v2560
        %v2579 = vpack.c.bf16 %v2563, %v2562
        %s2580 = scalar_lea.vmem [#allocation4], 14
        %v2581 = vld [vmem:[%s2580] sm:$0x3]
        %v2583 = vsel %vm416, %v2564, 0
        %v2586 = vsel %vm416, %v2565, 0
        %v2589 = vsel %vm416, %v2566, 0
        %v2592 = vsel %vm416, %v2567, 0
        %v2595 = vsel %vm416, %v2568, 0
        %v2598 = vsel %vm416, %v2569, 0
        %v2601 = vsel %vm416, %v2570, 0
        %v2604 = vsel %vm416, %v2571, 0
        %v2607 = vsel %vm416, %v2572, 0
        %v2610 = vsel %vm416, %v2573, 0
        %v2613 = vsel %vm416, %v2574, 0
        %v2616 = vsel %vm416, %v2575, 0
        %v2619 = vsel %vm416, %v2576, 0
        %v2622 = vsel %vm416, %v2577, 0
        %v2625 = vsel %vm416, %v2578, 0
        %v2628 = vsel %vm416, %v2579, 0
        %v2631 = vsel %vm684, %v2581, 0
        %2633 = vmatprep.subr.bf16.mxu0 0
        %2634 = vmatpush1.bf16.msra.mxu0 0
        %2635 = vmatprep.subr.bf16.mxu0 0
        %2636 = vmatpush1.bf16.msra.mxu0 0
        %2637 = vmatprep.subr.bf16.mxu0 0
        %2638 = vmatpush1.bf16.msra.mxu0 0
        %2639 = vmatprep.subr.bf16.mxu0 0
        %2640 = vmatpush1.bf16.msra.mxu0 0
        %2641 = vmatprep.subr.bf16.mxu0 0
        %2642 = vmatpush1.bf16.msra.mxu0 0
        %2643 = vmatprep.subr.bf16.mxu0 0
        %2644 = vmatpush1.bf16.msra.mxu0 0
        %2645 = vmatprep.subr.bf16.mxu0 0
        %2646 = vmatpush1.bf16.msra.mxu0 0
        %2647 = vmatprep.subr.bf16.mxu0 0
        %2648 = vmatpush1.bf16.msra.mxu0 %v2631
        %2649 = vmatprep.subr.bf16.mxu0 0
        %2650 = vmatpush2.bf16.msra.mxu0 0
        %2651 = vmatprep.subr.bf16.mxu0 0
        %2652 = vmatpush2.bf16.msra.mxu0 0
        %2653 = vmatprep.subr.bf16.mxu0 0
        %2654 = vmatpush2.bf16.msra.mxu0 0
        %2655 = vmatprep.subr.bf16.mxu0 0
        %2656 = vmatpush2.bf16.msra.mxu0 0
        %2657 = vmatprep.subr.bf16.mxu0 0
        %2658 = vmatpush2.bf16.msra.mxu0 0
        %2659 = vmatprep.subr.bf16.mxu0 0
        %2660 = vmatpush2.bf16.msra.mxu0 0
        %2661 = vmatprep.subr.bf16.mxu0 0
        %2662 = vmatpush2.bf16.msra.mxu0 0
        %2663 = vmatprep.subr.bf16.mxu0 0
        %2664 = vmatpush2.bf16.msra.mxu0 0
        %2665 = vmatprep.mubr.bf16.mxu0 0
        %2666 = vmatmul.mubr.bf16.gmra.mxu0 %v2583
        %v2667 = vpop.f32.mrf.mxu0
        %v2668 = vadd.f32 0.0, %v2667
        %v2669 = vpop.f32.mrf.mxu0
        %v2670 = vpop.f32.mrf.mxu0
        %v2671 = vadd.f32 0.0, %v2670
        %v2672 = vpop.f32.mrf.mxu0
        %2673 = vmatprep.mubr.bf16.mxu0 0
        %2674 = vmatmul.mubr.bf16.gmra.mxu0 %v2586
        %v2675 = vpop.f32.mrf.mxu0
        %v2676 = vadd.f32 0.0, %v2675
        %v2677 = vpop.f32.mrf.mxu0
        %v2678 = vpop.f32.mrf.mxu0
        %v2679 = vadd.f32 0.0, %v2678
        %v2680 = vpop.f32.mrf.mxu0
        %2681 = vmatprep.mubr.bf16.mxu0 0
        %2682 = vmatmul.mubr.bf16.gmra.mxu0 %v2589
        %v2683 = vpop.f32.mrf.mxu0
        %v2684 = vadd.f32 0.0, %v2683
        %v2685 = vpop.f32.mrf.mxu0
        %v2686 = vpop.f32.mrf.mxu0
        %v2687 = vadd.f32 0.0, %v2686
        %v2688 = vpop.f32.mrf.mxu0
        %2689 = vmatprep.mubr.bf16.mxu0 0
        %2690 = vmatmul.mubr.bf16.gmra.mxu0 %v2592
        %v2691 = vpop.f32.mrf.mxu0
        %v2692 = vadd.f32 0.0, %v2691
        %v2693 = vpop.f32.mrf.mxu0
        %v2694 = vpop.f32.mrf.mxu0
        %v2695 = vadd.f32 0.0, %v2694
        %v2696 = vpop.f32.mrf.mxu0
        %2697 = vmatprep.mubr.bf16.mxu0 0
        %2698 = vmatmul.mubr.bf16.gmra.mxu0 %v2595
        %v2699 = vpop.f32.mrf.mxu0
        %v2700 = vadd.f32 0.0, %v2699
        %v2701 = vpop.f32.mrf.mxu0
        %v2702 = vpop.f32.mrf.mxu0
        %v2703 = vadd.f32 0.0, %v2702
        %v2704 = vpop.f32.mrf.mxu0
        %2705 = vmatprep.mubr.bf16.mxu0 0
        %2706 = vmatmul.mubr.bf16.gmra.mxu0 %v2598
        %v2707 = vpop.f32.mrf.mxu0
        %v2708 = vadd.f32 0.0, %v2707
        %v2709 = vpop.f32.mrf.mxu0
        %v2710 = vpop.f32.mrf.mxu0
        %v2711 = vadd.f32 0.0, %v2710
        %v2712 = vpop.f32.mrf.mxu0
        %2713 = vmatprep.mubr.bf16.mxu0 0
        %2714 = vmatmul.mubr.bf16.gmra.mxu0 %v2601
        %v2715 = vpop.f32.mrf.mxu0
        %v2716 = vadd.f32 0.0, %v2715
        %v2717 = vpop.f32.mrf.mxu0
        %v2718 = vpop.f32.mrf.mxu0
        %v2719 = vadd.f32 0.0, %v2718
        %v2720 = vpop.f32.mrf.mxu0
        %2721 = vmatprep.mubr.bf16.mxu0 0
        %2722 = vmatmul.mubr.bf16.gmra.mxu0 %v2604
        %v2723 = vpop.f32.mrf.mxu0
        %v2724 = vadd.f32 0.0, %v2723
        %v2725 = vpop.f32.mrf.mxu0
        %v2726 = vpop.f32.mrf.mxu0
        %v2727 = vadd.f32 0.0, %v2726
        %v2728 = vpop.f32.mrf.mxu0
        %2729 = vmatprep.mubr.bf16.mxu0 0
        %2730 = vmatmul.mubr.bf16.gmra.mxu0 %v2607
        %v2731 = vpop.f32.mrf.mxu0
        %v2732 = vadd.f32 0.0, %v2731
        %v2733 = vpop.f32.mrf.mxu0
        %v2734 = vpop.f32.mrf.mxu0
        %v2735 = vadd.f32 0.0, %v2734
        %v2736 = vpop.f32.mrf.mxu0
        %2737 = vmatprep.mubr.bf16.mxu0 0
        %2738 = vmatmul.mubr.bf16.gmra.mxu0 %v2610
        %v2739 = vpop.f32.mrf.mxu0
        %v2740 = vadd.f32 0.0, %v2739
        %v2741 = vpop.f32.mrf.mxu0
        %v2742 = vpop.f32.mrf.mxu0
        %v2743 = vadd.f32 0.0, %v2742
        %v2744 = vpop.f32.mrf.mxu0
        %2745 = vmatprep.mubr.bf16.mxu0 0
        %2746 = vmatmul.mubr.bf16.gmra.mxu0 %v2613
        %v2747 = vpop.f32.mrf.mxu0
        %v2748 = vadd.f32 0.0, %v2747
        %v2749 = vpop.f32.mrf.mxu0
        %v2750 = vpop.f32.mrf.mxu0
        %v2751 = vadd.f32 0.0, %v2750
        %v2752 = vpop.f32.mrf.mxu0
        %2753 = vmatprep.mubr.bf16.mxu0 0
        %2754 = vmatmul.mubr.bf16.gmra.mxu0 %v2616
        %v2755 = vpop.f32.mrf.mxu0
        %v2756 = vadd.f32 0.0, %v2755
        %v2757 = vpop.f32.mrf.mxu0
        %v2758 = vpop.f32.mrf.mxu0
        %v2759 = vadd.f32 0.0, %v2758
        %v2760 = vpop.f32.mrf.mxu0
        %2761 = vmatprep.mubr.bf16.mxu0 0
        %2762 = vmatmul.mubr.bf16.gmra.mxu0 %v2619
        %v2763 = vpop.f32.mrf.mxu0
        %v2764 = vadd.f32 0.0, %v2763
        %v2765 = vpop.f32.mrf.mxu0
        %v2766 = vpop.f32.mrf.mxu0
        %v2767 = vadd.f32 0.0, %v2766
        %v2768 = vpop.f32.mrf.mxu0
        %2769 = vmatprep.mubr.bf16.mxu0 0
        %2770 = vmatmul.mubr.bf16.gmra.mxu0 %v2622
        %v2771 = vpop.f32.mrf.mxu0
        %v2772 = vadd.f32 0.0, %v2771
        %v2773 = vpop.f32.mrf.mxu0
        %v2774 = vpop.f32.mrf.mxu0
        %v2775 = vadd.f32 0.0, %v2774
        %v2776 = vpop.f32.mrf.mxu0
        %2777 = vmatprep.mubr.bf16.mxu0 0
        %2778 = vmatmul.mubr.bf16.gmra.mxu0 %v2625
        %v2779 = vpop.f32.mrf.mxu0
        %v2780 = vadd.f32 0.0, %v2779
        %v2781 = vpop.f32.mrf.mxu0
        %v2782 = vpop.f32.mrf.mxu0
        %v2783 = vadd.f32 0.0, %v2782
        %v2784 = vpop.f32.mrf.mxu0
        %2785 = vmatprep.mubr.bf16.mxu0 0
        %2786 = vmatmul.mubr.bf16.gmra.mxu0 %v2628
        %v2787 = vpop.f32.mrf.mxu0
        %v2788 = vadd.f32 0.0, %v2787
        %v2789 = vpop.f32.mrf.mxu0
        %v2790 = vpop.f32.mrf.mxu0
        %v2791 = vadd.f32 0.0, %v2790
        %v2792 = vpop.f32.mrf.mxu0
        %2793 = vdwg.mxu0
        %v2794 = vadd.f32 %v2500, %v2668
        %v2795 = vadd.f32 %v2501, %v2671
        %v2796 = vadd.f32 %v2502, %v2676
        %v2797 = vadd.f32 %v2503, %v2679
        %v2798 = vadd.f32 %v2504, %v2684
        %v2799 = vadd.f32 %v2505, %v2687
        %v2800 = vadd.f32 %v2506, %v2692
        %v2801 = vadd.f32 %v2507, %v2695
        %v2802 = vadd.f32 %v2508, %v2700
        %v2803 = vadd.f32 %v2509, %v2703
        %v2804 = vadd.f32 %v2510, %v2708
        %v2805 = vadd.f32 %v2511, %v2711
        %v2806 = vadd.f32 %v2512, %v2716
        %v2807 = vadd.f32 %v2513, %v2719
        %v2808 = vadd.f32 %v2514, %v2724
        %v2809 = vadd.f32 %v2515, %v2727
        %v2810 = vadd.f32 %v2516, %v2732
        %v2811 = vadd.f32 %v2517, %v2735
        %v2812 = vadd.f32 %v2518, %v2740
        %v2813 = vadd.f32 %v2519, %v2743
        %v2814 = vadd.f32 %v2520, %v2748
        %v2815 = vadd.f32 %v2521, %v2751
        %v2816 = vadd.f32 %v2522, %v2756
        %v2817 = vadd.f32 %v2523, %v2759
        %v2818 = vadd.f32 %v2524, %v2764
        %v2819 = vadd.f32 %v2525, %v2767
        %v2820 = vadd.f32 %v2526, %v2772
        %v2821 = vadd.f32 %v2527, %v2775
        %v2822 = vadd.f32 %v2528, %v2780
        %v2823 = vadd.f32 %v2529, %v2783
        %v2824 = vadd.f32 %v2530, %v2788
        %v2825 = vadd.f32 %v2531, %v2791
        %v2826 = vld [vmem:[%s2237 + $0x2] sm:$0xff]
        %v2827 = vld [vmem:[%s2237 + $0xa] sm:$0xff]
        %v2828 = vld [vmem:[%s2237 + $0x1a] sm:$0xff]
        %v2829 = vld [vmem:[%s2237 + $0x22] sm:$0xff]
        %v2830 = vld [vmem:[%s2237 + $0x32] sm:$0xff]
        %v2831 = vld [vmem:[%s2237 + $0x3a] sm:$0xff]
        %v2832 = vld [vmem:[%s2237 + $0x4a] sm:$0xff]
        %v2833 = vld [vmem:[%s2237 + $0x52] sm:$0xff]
        %v2834 = vld [vmem:[%s2237 + $0x62] sm:$0xff]
        %v2835 = vld [vmem:[%s2237 + $0x6a] sm:$0xff]
        %v2836 = vld [vmem:[%s2237 + $0x7a] sm:$0xff]
        %v2837 = vld [vmem:[%s2237 + $0x82] sm:$0xff]
        %v2838 = vld [vmem:[%s2237 + $0x92] sm:$0xff]
        %v2839 = vld [vmem:[%s2237 + $0x9a] sm:$0xff]
        %v2840 = vld [vmem:[%s2237 + $0xaa] sm:$0xff]
        %v2841 = vld [vmem:[%s2237 + $0xb2] sm:$0xff]
        %v2842 = vld [vmem:[%s2237 + $0xc2] sm:$0xff]
        %v2843 = vld [vmem:[%s2237 + $0xca] sm:$0xff]
        %v2844 = vld [vmem:[%s2237 + $0xda] sm:$0xff]
        %v2845 = vld [vmem:[%s2237 + $0xe2] sm:$0xff]
        %v2846 = vld [vmem:[%s2237 + $0xf2] sm:$0xff]
        %v2847 = vld [vmem:[%s2237 + $0xfa] sm:$0xff]
        %v2848 = vld [vmem:[%s2237 + $0x10a] sm:$0xff]
        %v2849 = vld [vmem:[%s2237 + $0x112] sm:$0xff]
        %v2850 = vld [vmem:[%s2237 + $0x122] sm:$0xff]
        %v2851 = vld [vmem:[%s2237 + $0x12a] sm:$0xff]
        %v2852 = vld [vmem:[%s2237 + $0x13a] sm:$0xff]
        %v2853 = vld [vmem:[%s2237 + $0x142] sm:$0xff]
        %v2854 = vld [vmem:[%s2237 + $0x152] sm:$0xff]
        %v2855 = vld [vmem:[%s2237 + $0x15a] sm:$0xff]
        %v2856 = vld [vmem:[%s2237 + $0x16a] sm:$0xff]
        %v2857 = vld [vmem:[%s2237 + $0x172] sm:$0xff]
        %v2858 = vpack.c.bf16 %v2827, %v2826
        %v2859 = vpack.c.bf16 %v2829, %v2828
        %v2860 = vpack.c.bf16 %v2831, %v2830
        %v2861 = vpack.c.bf16 %v2833, %v2832
        %v2862 = vpack.c.bf16 %v2835, %v2834
        %v2863 = vpack.c.bf16 %v2837, %v2836
        %v2864 = vpack.c.bf16 %v2839, %v2838
        %v2865 = vpack.c.bf16 %v2841, %v2840
        %v2866 = vpack.c.bf16 %v2843, %v2842
        %v2867 = vpack.c.bf16 %v2845, %v2844
        %v2868 = vpack.c.bf16 %v2847, %v2846
        %v2869 = vpack.c.bf16 %v2849, %v2848
        %v2870 = vpack.c.bf16 %v2851, %v2850
        %v2871 = vpack.c.bf16 %v2853, %v2852
        %v2872 = vpack.c.bf16 %v2855, %v2854
        %v2873 = vpack.c.bf16 %v2857, %v2856
        %s2874 = scalar_lea.vmem [#allocation4], 16
        %v2875 = vld [vmem:[%s2874] sm:$0x3]
        %v2877 = vsel %vm416, %v2858, 0
        %v2880 = vsel %vm416, %v2859, 0
        %v2883 = vsel %vm416, %v2860, 0
        %v2886 = vsel %vm416, %v2861, 0
        %v2889 = vsel %vm416, %v2862, 0
        %v2892 = vsel %vm416, %v2863, 0
        %v2895 = vsel %vm416, %v2864, 0
        %v2898 = vsel %vm416, %v2865, 0
        %v2901 = vsel %vm416, %v2866, 0
        %v2904 = vsel %vm416, %v2867, 0
        %v2907 = vsel %vm416, %v2868, 0
        %v2910 = vsel %vm416, %v2869, 0
        %v2913 = vsel %vm416, %v2870, 0
        %v2916 = vsel %vm416, %v2871, 0
        %v2919 = vsel %vm416, %v2872, 0
        %v2922 = vsel %vm416, %v2873, 0
        %v2925 = vsel %vm684, %v2875, 0
        %2927 = vmatprep.subr.bf16.mxu0 0
        %2928 = vmatpush1.bf16.msra.mxu0 0
        %2929 = vmatprep.subr.bf16.mxu0 0
        %2930 = vmatpush1.bf16.msra.mxu0 0
        %2931 = vmatprep.subr.bf16.mxu0 0
        %2932 = vmatpush1.bf16.msra.mxu0 0
        %2933 = vmatprep.subr.bf16.mxu0 0
        %2934 = vmatpush1.bf16.msra.mxu0 0
        %2935 = vmatprep.subr.bf16.mxu0 0
        %2936 = vmatpush1.bf16.msra.mxu0 0
        %2937 = vmatprep.subr.bf16.mxu0 0
        %2938 = vmatpush1.bf16.msra.mxu0 0
        %2939 = vmatprep.subr.bf16.mxu0 0
        %2940 = vmatpush1.bf16.msra.mxu0 0
        %2941 = vmatprep.subr.bf16.mxu0 0
        %2942 = vmatpush1.bf16.msra.mxu0 %v2925
        %2943 = vmatprep.subr.bf16.mxu0 0
        %2944 = vmatpush2.bf16.msra.mxu0 0
        %2945 = vmatprep.subr.bf16.mxu0 0
        %2946 = vmatpush2.bf16.msra.mxu0 0
        %2947 = vmatprep.subr.bf16.mxu0 0
        %2948 = vmatpush2.bf16.msra.mxu0 0
        %2949 = vmatprep.subr.bf16.mxu0 0
        %2950 = vmatpush2.bf16.msra.mxu0 0
        %2951 = vmatprep.subr.bf16.mxu0 0
        %2952 = vmatpush2.bf16.msra.mxu0 0
        %2953 = vmatprep.subr.bf16.mxu0 0
        %2954 = vmatpush2.bf16.msra.mxu0 0
        %2955 = vmatprep.subr.bf16.mxu0 0
        %2956 = vmatpush2.bf16.msra.mxu0 0
        %2957 = vmatprep.subr.bf16.mxu0 0
        %2958 = vmatpush2.bf16.msra.mxu0 0
        %2959 = vmatprep.mubr.bf16.mxu0 0
        %2960 = vmatmul.mubr.bf16.gmra.mxu0 %v2877
        %v2961 = vpop.f32.mrf.mxu0
        %v2962 = vadd.f32 0.0, %v2961
        %v2963 = vpop.f32.mrf.mxu0
        %v2964 = vpop.f32.mrf.mxu0
        %v2965 = vadd.f32 0.0, %v2964
        %v2966 = vpop.f32.mrf.mxu0
        %2967 = vmatprep.mubr.bf16.mxu0 0
        %2968 = vmatmul.mubr.bf16.gmra.mxu0 %v2880
        %v2969 = vpop.f32.mrf.mxu0
        %v2970 = vadd.f32 0.0, %v2969
        %v2971 = vpop.f32.mrf.mxu0
        %v2972 = vpop.f32.mrf.mxu0
        %v2973 = vadd.f32 0.0, %v2972
        %v2974 = vpop.f32.mrf.mxu0
        %2975 = vmatprep.mubr.bf16.mxu0 0
        %2976 = vmatmul.mubr.bf16.gmra.mxu0 %v2883
        %v2977 = vpop.f32.mrf.mxu0
        %v2978 = vadd.f32 0.0, %v2977
        %v2979 = vpop.f32.mrf.mxu0
        %v2980 = vpop.f32.mrf.mxu0
        %v2981 = vadd.f32 0.0, %v2980
        %v2982 = vpop.f32.mrf.mxu0
        %2983 = vmatprep.mubr.bf16.mxu0 0
        %2984 = vmatmul.mubr.bf16.gmra.mxu0 %v2886
        %v2985 = vpop.f32.mrf.mxu0
        %v2986 = vadd.f32 0.0, %v2985
        %v2987 = vpop.f32.mrf.mxu0
        %v2988 = vpop.f32.mrf.mxu0
        %v2989 = vadd.f32 0.0, %v2988
        %v2990 = vpop.f32.mrf.mxu0
        %2991 = vmatprep.mubr.bf16.mxu0 0
        %2992 = vmatmul.mubr.bf16.gmra.mxu0 %v2889
        %v2993 = vpop.f32.mrf.mxu0
        %v2994 = vadd.f32 0.0, %v2993
        %v2995 = vpop.f32.mrf.mxu0
        %v2996 = vpop.f32.mrf.mxu0
        %v2997 = vadd.f32 0.0, %v2996
        %v2998 = vpop.f32.mrf.mxu0
        %2999 = vmatprep.mubr.bf16.mxu0 0
        %3000 = vmatmul.mubr.bf16.gmra.mxu0 %v2892
        %v3001 = vpop.f32.mrf.mxu0
        %v3002 = vadd.f32 0.0, %v3001
        %v3003 = vpop.f32.mrf.mxu0
        %v3004 = vpop.f32.mrf.mxu0
        %v3005 = vadd.f32 0.0, %v3004
        %v3006 = vpop.f32.mrf.mxu0
        %3007 = vmatprep.mubr.bf16.mxu0 0
        %3008 = vmatmul.mubr.bf16.gmra.mxu0 %v2895
        %v3009 = vpop.f32.mrf.mxu0
        %v3010 = vadd.f32 0.0, %v3009
        %v3011 = vpop.f32.mrf.mxu0
        %v3012 = vpop.f32.mrf.mxu0
        %v3013 = vadd.f32 0.0, %v3012
        %v3014 = vpop.f32.mrf.mxu0
        %3015 = vmatprep.mubr.bf16.mxu0 0
        %3016 = vmatmul.mubr.bf16.gmra.mxu0 %v2898
        %v3017 = vpop.f32.mrf.mxu0
        %v3018 = vadd.f32 0.0, %v3017
        %v3019 = vpop.f32.mrf.mxu0
        %v3020 = vpop.f32.mrf.mxu0
        %v3021 = vadd.f32 0.0, %v3020
        %v3022 = vpop.f32.mrf.mxu0
        %3023 = vmatprep.mubr.bf16.mxu0 0
        %3024 = vmatmul.mubr.bf16.gmra.mxu0 %v2901
        %v3025 = vpop.f32.mrf.mxu0
        %v3026 = vadd.f32 0.0, %v3025
        %v3027 = vpop.f32.mrf.mxu0
        %v3028 = vpop.f32.mrf.mxu0
        %v3029 = vadd.f32 0.0, %v3028
        %v3030 = vpop.f32.mrf.mxu0
        %3031 = vmatprep.mubr.bf16.mxu0 0
        %3032 = vmatmul.mubr.bf16.gmra.mxu0 %v2904
        %v3033 = vpop.f32.mrf.mxu0
        %v3034 = vadd.f32 0.0, %v3033
        %v3035 = vpop.f32.mrf.mxu0
        %v3036 = vpop.f32.mrf.mxu0
        %v3037 = vadd.f32 0.0, %v3036
        %v3038 = vpop.f32.mrf.mxu0
        %3039 = vmatprep.mubr.bf16.mxu0 0
        %3040 = vmatmul.mubr.bf16.gmra.mxu0 %v2907
        %v3041 = vpop.f32.mrf.mxu0
        %v3042 = vadd.f32 0.0, %v3041
        %v3043 = vpop.f32.mrf.mxu0
        %v3044 = vpop.f32.mrf.mxu0
        %v3045 = vadd.f32 0.0, %v3044
        %v3046 = vpop.f32.mrf.mxu0
        %3047 = vmatprep.mubr.bf16.mxu0 0
        %3048 = vmatmul.mubr.bf16.gmra.mxu0 %v2910
        %v3049 = vpop.f32.mrf.mxu0
        %v3050 = vadd.f32 0.0, %v3049
        %v3051 = vpop.f32.mrf.mxu0
        %v3052 = vpop.f32.mrf.mxu0
        %v3053 = vadd.f32 0.0, %v3052
        %v3054 = vpop.f32.mrf.mxu0
        %3055 = vmatprep.mubr.bf16.mxu0 0
        %3056 = vmatmul.mubr.bf16.gmra.mxu0 %v2913
        %v3057 = vpop.f32.mrf.mxu0
        %v3058 = vadd.f32 0.0, %v3057
        %v3059 = vpop.f32.mrf.mxu0
        %v3060 = vpop.f32.mrf.mxu0
        %v3061 = vadd.f32 0.0, %v3060
        %v3062 = vpop.f32.mrf.mxu0
        %3063 = vmatprep.mubr.bf16.mxu0 0
        %3064 = vmatmul.mubr.bf16.gmra.mxu0 %v2916
        %v3065 = vpop.f32.mrf.mxu0
        %v3066 = vadd.f32 0.0, %v3065
        %v3067 = vpop.f32.mrf.mxu0
        %v3068 = vpop.f32.mrf.mxu0
        %v3069 = vadd.f32 0.0, %v3068
        %v3070 = vpop.f32.mrf.mxu0
        %3071 = vmatprep.mubr.bf16.mxu0 0
        %3072 = vmatmul.mubr.bf16.gmra.mxu0 %v2919
        %v3073 = vpop.f32.mrf.mxu0
        %v3074 = vadd.f32 0.0, %v3073
        %v3075 = vpop.f32.mrf.mxu0
        %v3076 = vpop.f32.mrf.mxu0
        %v3077 = vadd.f32 0.0, %v3076
        %v3078 = vpop.f32.mrf.mxu0
        %3079 = vmatprep.mubr.bf16.mxu0 0
        %3080 = vmatmul.mubr.bf16.gmra.mxu0 %v2922
        %v3081 = vpop.f32.mrf.mxu0
        %v3082 = vadd.f32 0.0, %v3081
        %v3083 = vpop.f32.mrf.mxu0
        %v3084 = vpop.f32.mrf.mxu0
        %v3085 = vadd.f32 0.0, %v3084
        %v3086 = vpop.f32.mrf.mxu0
        %3087 = vdwg.mxu0
        %v3088 = vadd.f32 %v2794, %v2962
        %v3089 = vadd.f32 %v2795, %v2965
        %v3090 = vadd.f32 %v2796, %v2970
        %v3091 = vadd.f32 %v2797, %v2973
        %v3092 = vadd.f32 %v2798, %v2978
        %v3093 = vadd.f32 %v2799, %v2981
        %v3094 = vadd.f32 %v2800, %v2986
        %v3095 = vadd.f32 %v2801, %v2989
        %v3096 = vadd.f32 %v2802, %v2994
        %v3097 = vadd.f32 %v2803, %v2997
        %v3098 = vadd.f32 %v2804, %v3002
        %v3099 = vadd.f32 %v2805, %v3005
        %v3100 = vadd.f32 %v2806, %v3010
        %v3101 = vadd.f32 %v2807, %v3013
        %v3102 = vadd.f32 %v2808, %v3018
        %v3103 = vadd.f32 %v2809, %v3021
        %v3104 = vadd.f32 %v2810, %v3026
        %v3105 = vadd.f32 %v2811, %v3029
        %v3106 = vadd.f32 %v2812, %v3034
        %v3107 = vadd.f32 %v2813, %v3037
        %v3108 = vadd.f32 %v2814, %v3042
        %v3109 = vadd.f32 %v2815, %v3045
        %v3110 = vadd.f32 %v2816, %v3050
        %v3111 = vadd.f32 %v2817, %v3053
        %v3112 = vadd.f32 %v2818, %v3058
        %v3113 = vadd.f32 %v2819, %v3061
        %v3114 = vadd.f32 %v2820, %v3066
        %v3115 = vadd.f32 %v2821, %v3069
        %v3116 = vadd.f32 %v2822, %v3074
        %v3117 = vadd.f32 %v2823, %v3077
        %v3118 = vadd.f32 %v2824, %v3082
        %v3119 = vadd.f32 %v2825, %v3085
        %v3120 = vld [vmem:[#allocation6] sm:$0x1]
        %v3122 = vlaneseq
        %v3123 = vshrl.u32 %v3122, 7
        %v3124 = vsub.s32 0, %v3123
        %v3125 = vrot.slane %v3120, %v3124
        %v3127 = vadd.f32 %v3088, %v3125
        %v3128 = vadd.f32 %v3089, %v3125
        %v3129 = vadd.f32 %v3090, %v3125
        %v3130 = vadd.f32 %v3091, %v3125
        %v3131 = vadd.f32 %v3092, %v3125
        %v3132 = vadd.f32 %v3093, %v3125
        %v3133 = vadd.f32 %v3094, %v3125
        %v3134 = vadd.f32 %v3095, %v3125
        %v3135 = vadd.f32 %v3096, %v3125
        %v3136 = vadd.f32 %v3097, %v3125
        %v3137 = vadd.f32 %v3098, %v3125
        %v3138 = vadd.f32 %v3099, %v3125
        %v3139 = vadd.f32 %v3100, %v3125
        %v3140 = vadd.f32 %v3101, %v3125
        %v3141 = vadd.f32 %v3102, %v3125
        %v3142 = vadd.f32 %v3103, %v3125
        %v3143 = vadd.f32 %v3104, %v3125
        %v3144 = vadd.f32 %v3105, %v3125
        %v3145 = vadd.f32 %v3106, %v3125
        %v3146 = vadd.f32 %v3107, %v3125
        %v3147 = vadd.f32 %v3108, %v3125
        %v3148 = vadd.f32 %v3109, %v3125
        %v3149 = vadd.f32 %v3110, %v3125
        %v3150 = vadd.f32 %v3111, %v3125
        %v3151 = vadd.f32 %v3112, %v3125
        %v3152 = vadd.f32 %v3113, %v3125
        %v3153 = vadd.f32 %v3114, %v3125
        %v3154 = vadd.f32 %v3115, %v3125
        %v3155 = vadd.f32 %v3116, %v3125
        %v3156 = vadd.f32 %v3117, %v3125
        %v3157 = vadd.f32 %v3118, %v3125
        %v3158 = vadd.f32 %v3119, %v3125
        %v3159 = vmax.f32 %v3127, 0.0
        %v3160 = vmax.f32 %v3128, 0.0
        %v3161 = vmax.f32 %v3129, 0.0
        %v3162 = vmax.f32 %v3130, 0.0
        %v3163 = vmax.f32 %v3131, 0.0
        %v3164 = vmax.f32 %v3132, 0.0
        %v3165 = vmax.f32 %v3133, 0.0
        %v3166 = vmax.f32 %v3134, 0.0
        %v3167 = vmax.f32 %v3135, 0.0
        %v3168 = vmax.f32 %v3136, 0.0
        %v3169 = vmax.f32 %v3137, 0.0
        %v3170 = vmax.f32 %v3138, 0.0
        %v3171 = vmax.f32 %v3139, 0.0
        %v3172 = vmax.f32 %v3140, 0.0
        %v3173 = vmax.f32 %v3141, 0.0
        %v3174 = vmax.f32 %v3142, 0.0
        %v3175 = vmax.f32 %v3143, 0.0
        %v3176 = vmax.f32 %v3144, 0.0
        %v3177 = vmax.f32 %v3145, 0.0
        %v3178 = vmax.f32 %v3146, 0.0
        %v3179 = vmax.f32 %v3147, 0.0
        %v3180 = vmax.f32 %v3148, 0.0
        %v3181 = vmax.f32 %v3149, 0.0
        %v3182 = vmax.f32 %v3150, 0.0
        %v3183 = vmax.f32 %v3151, 0.0
        %v3184 = vmax.f32 %v3152, 0.0
        %v3185 = vmax.f32 %v3153, 0.0
        %v3186 = vmax.f32 %v3154, 0.0
        %v3187 = vmax.f32 %v3155, 0.0
        %v3188 = vmax.f32 %v3156, 0.0
        %v3189 = vmax.f32 %v3157, 0.0
        %v3190 = vmax.f32 %v3158, 0.0
        %vm3191 = vcmask 261120
        %3192 = vst.msk [vmem:[#allocation3] sm:$0xff] %vm3191, 0.0
        %3193 = vst.msk [vmem:[#allocation3 + $0x8] sm:$0xff] %vm3191, 0.0
        %vm3194 = vcmask 254976
        %3195 = vst.msk [vmem:[#allocation3 + $0x10] sm:$0x3] %vm3194, 0.0
        %3196 = vst.msk [vmem:[#allocation3 + $0x18] sm:$0xff] %vm3191, 0.0
        %3197 = vst.msk [vmem:[#allocation3 + $0x20] sm:$0xff] %vm3191, 0.0
        %3198 = vst.msk [vmem:[#allocation3 + $0x28] sm:$0x3] %vm3194, 0.0
        %3199 = vst.msk [vmem:[#allocation3 + $0x30] sm:$0xff] %vm3191, 0.0
        %3200 = vst.msk [vmem:[#allocation3 + $0x38] sm:$0xff] %vm3191, 0.0
        %3201 = vst.msk [vmem:[#allocation3 + $0x40] sm:$0x3] %vm3194, 0.0
        %3202 = vst.msk [vmem:[#allocation3 + $0x48] sm:$0xff] %vm3191, 0.0
        %3203 = vst.msk [vmem:[#allocation3 + $0x50] sm:$0xff] %vm3191, 0.0
        %3204 = vst.msk [vmem:[#allocation3 + $0x58] sm:$0x3] %vm3194, 0.0
        %3205 = vst.msk [vmem:[#allocation3 + $0x60] sm:$0xff] %vm3191, 0.0
        %3206 = vst.msk [vmem:[#allocation3 + $0x68] sm:$0xff] %vm3191, 0.0
        %3207 = vst.msk [vmem:[#allocation3 + $0x70] sm:$0x3] %vm3194, 0.0
        %3208 = vst.msk [vmem:[#allocation3 + $0x78] sm:$0xff] %vm3191, 0.0
        %3209 = vst.msk [vmem:[#allocation3 + $0x80] sm:$0xff] %vm3191, 0.0
        %3210 = vst.msk [vmem:[#allocation3 + $0x88] sm:$0x3] %vm3194, 0.0
        %3211 = vst.msk [vmem:[#allocation3 + $0x90] sm:$0xff] %vm3191, 0.0
        %3212 = vst.msk [vmem:[#allocation3 + $0x98] sm:$0xff] %vm3191, 0.0
        %3213 = vst.msk [vmem:[#allocation3 + $0xa0] sm:$0x3] %vm3194, 0.0
        %3214 = vst.msk [vmem:[#allocation3 + $0xa8] sm:$0xff] %vm3191, 0.0
        %3215 = vst.msk [vmem:[#allocation3 + $0xb0] sm:$0xff] %vm3191, 0.0
        %3216 = vst.msk [vmem:[#allocation3 + $0xb8] sm:$0x3] %vm3194, 0.0
        %3217 = vst.msk [vmem:[#allocation3 + $0xc0] sm:$0xff] %vm3191, 0.0
        %3218 = vst.msk [vmem:[#allocation3 + $0xc8] sm:$0xff] %vm3191, 0.0
        %3219 = vst.msk [vmem:[#allocation3 + $0xd0] sm:$0x3] %vm3194, 0.0
        %3220 = vst.msk [vmem:[#allocation3 + $0xd8] sm:$0xff] %vm3191, 0.0
        %3221 = vst.msk [vmem:[#allocation3 + $0xe0] sm:$0xff] %vm3191, 0.0
        %3222 = vst.msk [vmem:[#allocation3 + $0xe8] sm:$0x3] %vm3194, 0.0
        %3223 = vst.msk [vmem:[#allocation3 + $0xf0] sm:$0xff] %vm3191, 0.0
        %3224 = vst.msk [vmem:[#allocation3 + $0xf8] sm:$0xff] %vm3191, 0.0
        %3225 = vst.msk [vmem:[#allocation3 + $0x100] sm:$0x3] %vm3194, 0.0
        %3226 = vst.msk [vmem:[#allocation3 + $0x108] sm:$0xff] %vm3191, 0.0
        %3227 = vst.msk [vmem:[#allocation3 + $0x110] sm:$0xff] %vm3191, 0.0
        %3228 = vst.msk [vmem:[#allocation3 + $0x118] sm:$0x3] %vm3194, 0.0
        %3229 = vst.msk [vmem:[#allocation3 + $0x120] sm:$0xff] %vm3191, 0.0
        %3230 = vst.msk [vmem:[#allocation3 + $0x128] sm:$0xff] %vm3191, 0.0
        %3231 = vst.msk [vmem:[#allocation3 + $0x130] sm:$0x3] %vm3194, 0.0
        %3232 = vst.msk [vmem:[#allocation3 + $0x138] sm:$0xff] %vm3191, 0.0
        %3233 = vst.msk [vmem:[#allocation3 + $0x140] sm:$0xff] %vm3191, 0.0
        %3234 = vst.msk [vmem:[#allocation3 + $0x148] sm:$0x3] %vm3194, 0.0
        %3235 = vst.msk [vmem:[#allocation3 + $0x150] sm:$0xff] %vm3191, 0.0
        %3236 = vst.msk [vmem:[#allocation3 + $0x158] sm:$0xff] %vm3191, 0.0
        %3237 = vst.msk [vmem:[#allocation3 + $0x160] sm:$0x3] %vm3194, 0.0
        %3238 = vst.msk [vmem:[#allocation3 + $0x168] sm:$0xff] %vm3191, 0.0
        %3239 = vst.msk [vmem:[#allocation3 + $0x170] sm:$0xff] %vm3191, 0.0
        %3240 = vst.msk [vmem:[#allocation3 + $0x178] sm:$0x3] %vm3194, 0.0
        %3241 = vst.msk [vmem:[#allocation3 + $0x180] sm:$0xff] %vm3191, 0.0
        %3242 = vst.msk [vmem:[#allocation3 + $0x188] sm:$0xff] %vm3191, 0.0
        %3243 = vst.msk [vmem:[#allocation3 + $0x190] sm:$0x3] %vm3194, 0.0
        %3244 = vst.msk [vmem:[#allocation3 + $0x198] sm:$0xff] %vm3191, 0.0
        %3245 = vst.msk [vmem:[#allocation3 + $0x1a0] sm:$0xff] %vm3191, 0.0
        %3246 = vst.msk [vmem:[#allocation3 + $0x1a8] sm:$0x3] %vm3194, 0.0
        %s3247 = scalar_lea.vmem [#allocation3], 24
        %3248 = vst.msk [vmem:[%s3247 + $0x1] sm:$0xff] %vm3191, %v3159
        %3249 = vst.msk [vmem:[%s3247 + $0x9] sm:$0xff] %vm3191, %v3160
        %3250 = vst.msk [vmem:[%s3247 + $0x19] sm:$0xff] %vm3191, %v3161
        %3251 = vst.msk [vmem:[%s3247 + $0x21] sm:$0xff] %vm3191, %v3162
        %3252 = vst.msk [vmem:[%s3247 + $0x31] sm:$0xff] %vm3191, %v3163
        %3253 = vst.msk [vmem:[%s3247 + $0x39] sm:$0xff] %vm3191, %v3164
        %3254 = vst.msk [vmem:[%s3247 + $0x49] sm:$0xff] %vm3191, %v3165
        %3255 = vst.msk [vmem:[%s3247 + $0x51] sm:$0xff] %vm3191, %v3166
        %3256 = vst.msk [vmem:[%s3247 + $0x61] sm:$0xff] %vm3191, %v3167
        %3257 = vst.msk [vmem:[%s3247 + $0x69] sm:$0xff] %vm3191, %v3168
        %3258 = vst.msk [vmem:[%s3247 + $0x79] sm:$0xff] %vm3191, %v3169
        %3259 = vst.msk [vmem:[%s3247 + $0x81] sm:$0xff] %vm3191, %v3170
        %3260 = vst.msk [vmem:[%s3247 + $0x91] sm:$0xff] %vm3191, %v3171
        %3261 = vst.msk [vmem:[%s3247 + $0x99] sm:$0xff] %vm3191, %v3172
        %3262 = vst.msk [vmem:[%s3247 + $0xa9] sm:$0xff] %vm3191, %v3173
        %3263 = vst.msk [vmem:[%s3247 + $0xb1] sm:$0xff] %vm3191, %v3174
        %3264 = vst.msk [vmem:[%s3247 + $0xc1] sm:$0xff] %vm3191, %v3175
        %3265 = vst.msk [vmem:[%s3247 + $0xc9] sm:$0xff] %vm3191, %v3176
        %3266 = vst.msk [vmem:[%s3247 + $0xd9] sm:$0xff] %vm3191, %v3177
        %3267 = vst.msk [vmem:[%s3247 + $0xe1] sm:$0xff] %vm3191, %v3178
        %3268 = vst.msk [vmem:[%s3247 + $0xf1] sm:$0xff] %vm3191, %v3179
        %3269 = vst.msk [vmem:[%s3247 + $0xf9] sm:$0xff] %vm3191, %v3180
        %3270 = vst.msk [vmem:[%s3247 + $0x109] sm:$0xff] %vm3191, %v3181
        %3271 = vst.msk [vmem:[%s3247 + $0x111] sm:$0xff] %vm3191, %v3182
        %3272 = vst.msk [vmem:[%s3247 + $0x121] sm:$0xff] %vm3191, %v3183
        %3273 = vst.msk [vmem:[%s3247 + $0x129] sm:$0xff] %vm3191, %v3184
        %3274 = vst.msk [vmem:[%s3247 + $0x139] sm:$0xff] %vm3191, %v3185
        %3275 = vst.msk [vmem:[%s3247 + $0x141] sm:$0xff] %vm3191, %v3186
        %3276 = vst.msk [vmem:[%s3247 + $0x151] sm:$0xff] %vm3191, %v3187
        %3277 = vst.msk [vmem:[%s3247 + $0x159] sm:$0xff] %vm3191, %v3188
        %3278 = vst.msk [vmem:[%s3247 + $0x169] sm:$0xff] %vm3191, %v3189
        %3279 = vst.msk [vmem:[%s3247 + $0x171] sm:$0xff] %vm3191, %v3190
        %v3280 = vld [vmem:[#allocation3] sm:$0xff]
        %v3281 = vld [vmem:[#allocation3 + $0x8] sm:$0xff]
        %v3282 = vld [vmem:[#allocation3 + $0x18] sm:$0xff]
        %v3283 = vld [vmem:[#allocation3 + $0x20] sm:$0xff]
        %v3284 = vld [vmem:[#allocation3 + $0x30] sm:$0xff]
        %v3285 = vld [vmem:[#allocation3 + $0x38] sm:$0xff]
        %v3286 = vld [vmem:[#allocation3 + $0x48] sm:$0xff]
        %v3287 = vld [vmem:[#allocation3 + $0x50] sm:$0xff]
        %v3288 = vld [vmem:[#allocation3 + $0x60] sm:$0xff]
        %v3289 = vld [vmem:[#allocation3 + $0x68] sm:$0xff]
        %v3290 = vld [vmem:[#allocation3 + $0x78] sm:$0xff]
        %v3291 = vld [vmem:[#allocation3 + $0x80] sm:$0xff]
        %v3292 = vld [vmem:[#allocation3 + $0x90] sm:$0xff]
        %v3293 = vld [vmem:[#allocation3 + $0x98] sm:$0xff]
        %v3294 = vld [vmem:[#allocation3 + $0xa8] sm:$0xff]
        %v3295 = vld [vmem:[#allocation3 + $0xb0] sm:$0xff]
        %v3296 = vld [vmem:[#allocation3 + $0xc0] sm:$0xff]
        %v3297 = vld [vmem:[#allocation3 + $0xc8] sm:$0xff]
        %v3298 = vld [vmem:[#allocation3 + $0xd8] sm:$0xff]
        %v3299 = vld [vmem:[#allocation3 + $0xe0] sm:$0xff]
        %v3300 = vld [vmem:[#allocation3 + $0xf0] sm:$0xff]
        %v3301 = vld [vmem:[#allocation3 + $0xf8] sm:$0xff]
        %v3302 = vld [vmem:[#allocation3 + $0x108] sm:$0xff]
        %v3303 = vld [vmem:[#allocation3 + $0x110] sm:$0xff]
        %v3304 = vld [vmem:[#allocation3 + $0x120] sm:$0xff]
        %v3305 = vld [vmem:[#allocation3 + $0x128] sm:$0xff]
        %v3306 = vld [vmem:[#allocation3 + $0x138] sm:$0xff]
        %v3307 = vld [vmem:[#allocation3 + $0x140] sm:$0xff]
        %v3308 = vld [vmem:[#allocation3 + $0x150] sm:$0xff]
        %v3309 = vld [vmem:[#allocation3 + $0x158] sm:$0xff]
        %v3310 = vld [vmem:[#allocation3 + $0x168] sm:$0xff]
        %v3311 = vld [vmem:[#allocation3 + $0x170] sm:$0xff]
        %v3312 = vpack.c.bf16 %v3281, %v3280
        %v3313 = vpack.c.bf16 %v3283, %v3282
        %v3314 = vpack.c.bf16 %v3285, %v3284
        %v3315 = vpack.c.bf16 %v3287, %v3286
        %v3316 = vpack.c.bf16 %v3289, %v3288
        %v3317 = vpack.c.bf16 %v3291, %v3290
        %v3318 = vpack.c.bf16 %v3293, %v3292
        %v3319 = vpack.c.bf16 %v3295, %v3294
        %v3320 = vpack.c.bf16 %v3297, %v3296
        %v3321 = vpack.c.bf16 %v3299, %v3298
        %v3322 = vpack.c.bf16 %v3301, %v3300
        %v3323 = vpack.c.bf16 %v3303, %v3302
        %v3324 = vpack.c.bf16 %v3305, %v3304
        %v3325 = vpack.c.bf16 %v3307, %v3306
        %v3326 = vpack.c.bf16 %v3309, %v3308
        %v3327 = vpack.c.bf16 %v3311, %v3310
        %v3328 = vld [vmem:[#allocation8] sm:$0xf]
        %v3329 = vld [vmem:[#allocation8 + $0x4] sm:$0xf]
        %v3330 = vld [vmem:[#allocation8 + $0x8] sm:$0xf]
        %v3331 = vld [vmem:[#allocation8 + $0xc] sm:$0xf]
        %v3332 = vld [vmem:[#allocation3 + $0x1] sm:$0xff]
        %v3333 = vld [vmem:[#allocation3 + $0x9] sm:$0xff]
        %v3334 = vld [vmem:[#allocation3 + $0x19] sm:$0xff]
        %v3335 = vld [vmem:[#allocation3 + $0x21] sm:$0xff]
        %v3336 = vld [vmem:[#allocation3 + $0x31] sm:$0xff]
        %v3337 = vld [vmem:[#allocation3 + $0x39] sm:$0xff]
        %v3338 = vld [vmem:[#allocation3 + $0x49] sm:$0xff]
        %v3339 = vld [vmem:[#allocation3 + $0x51] sm:$0xff]
        %v3340 = vld [vmem:[#allocation3 + $0x61] sm:$0xff]
        %v3341 = vld [vmem:[#allocation3 + $0x69] sm:$0xff]
        %v3342 = vld [vmem:[#allocation3 + $0x79] sm:$0xff]
        %v3343 = vld [vmem:[#allocation3 + $0x81] sm:$0xff]
        %v3344 = vld [vmem:[#allocation3 + $0x91] sm:$0xff]
        %v3345 = vld [vmem:[#allocation3 + $0x99] sm:$0xff]
        %v3346 = vld [vmem:[#allocation3 + $0xa9] sm:$0xff]
        %v3347 = vld [vmem:[#allocation3 + $0xb1] sm:$0xff]
        %v3348 = vld [vmem:[#allocation3 + $0xc1] sm:$0xff]
        %v3349 = vld [vmem:[#allocation3 + $0xc9] sm:$0xff]
        %v3350 = vld [vmem:[#allocation3 + $0xd9] sm:$0xff]
        %v3351 = vld [vmem:[#allocation3 + $0xe1] sm:$0xff]
        %v3352 = vld [vmem:[#allocation3 + $0xf1] sm:$0xff]
        %v3353 = vld [vmem:[#allocation3 + $0xf9] sm:$0xff]
        %v3354 = vld [vmem:[#allocation3 + $0x109] sm:$0xff]
        %v3355 = vld [vmem:[#allocation3 + $0x111] sm:$0xff]
        %v3356 = vld [vmem:[#allocation3 + $0x121] sm:$0xff]
        %v3357 = vld [vmem:[#allocation3 + $0x129] sm:$0xff]
        %v3358 = vld [vmem:[#allocation3 + $0x139] sm:$0xff]
        %v3359 = vld [vmem:[#allocation3 + $0x141] sm:$0xff]
        %v3360 = vld [vmem:[#allocation3 + $0x151] sm:$0xff]
        %v3361 = vld [vmem:[#allocation3 + $0x159] sm:$0xff]
        %v3362 = vld [vmem:[#allocation3 + $0x169] sm:$0xff]
        %v3363 = vld [vmem:[#allocation3 + $0x171] sm:$0xff]
        %v3364 = vpack.c.bf16 %v3333, %v3332
        %v3365 = vpack.c.bf16 %v3335, %v3334
        %v3366 = vpack.c.bf16 %v3337, %v3336
        %v3367 = vpack.c.bf16 %v3339, %v3338
        %v3368 = vpack.c.bf16 %v3341, %v3340
        %v3369 = vpack.c.bf16 %v3343, %v3342
        %v3370 = vpack.c.bf16 %v3345, %v3344
        %v3371 = vpack.c.bf16 %v3347, %v3346
        %v3372 = vpack.c.bf16 %v3349, %v3348
        %v3373 = vpack.c.bf16 %v3351, %v3350
        %v3374 = vpack.c.bf16 %v3353, %v3352
        %v3375 = vpack.c.bf16 %v3355, %v3354
        %v3376 = vpack.c.bf16 %v3357, %v3356
        %v3377 = vpack.c.bf16 %v3359, %v3358
        %v3378 = vpack.c.bf16 %v3361, %v3360
        %v3379 = vpack.c.bf16 %v3363, %v3362
        %s3380 = scalar_lea.vmem [#allocation8], 16
        %v3381 = vld [vmem:[%s3380] sm:$0xf]
        %v3382 = vld [vmem:[%s3380 + $0x4] sm:$0xf]
        %v3383 = vld [vmem:[%s3380 + $0x8] sm:$0xf]
        %v3384 = vld [vmem:[%s3380 + $0xc] sm:$0xf]
        %v3389 = vunpack.c.l.b16 %v3381
        %v3390 = vunpack.c.l.b16 %v3382
        %v3391 = vunpack.c.l.b16 %v3383
        %v3392 = vunpack.c.l.b16 %v3384
        %v3393 = vpack.c.b16 %v3390, %v3389
        %v3394 = vpack.c.b16 %v3392, %v3391
        %v3398 = vsel %vm3191, %v3364, 0
        %v3401 = vsel %vm3191, %v3365, 0
        %v3404 = vsel %vm3191, %v3366, 0
        %v3407 = vsel %vm3191, %v3367, 0
        %v3410 = vsel %vm3191, %v3368, 0
        %v3413 = vsel %vm3191, %v3369, 0
        %v3416 = vsel %vm3191, %v3370, 0
        %v3419 = vsel %vm3191, %v3371, 0
        %v3422 = vsel %vm3191, %v3372, 0
        %v3425 = vsel %vm3191, %v3373, 0
        %v3428 = vsel %vm3191, %v3374, 0
        %v3431 = vsel %vm3191, %v3375, 0
        %v3434 = vsel %vm3191, %v3376, 0
        %v3437 = vsel %vm3191, %v3377, 0
        %v3440 = vsel %vm3191, %v3378, 0
        %v3443 = vsel %vm3191, %v3379, 0
        %3445 = vmatprep.subr.bf16.mxu0 0
        %3446 = vmatpush1.bf16.msra.mxu0 0
        %3447 = vmatprep.subr.bf16.mxu0 0
        %3448 = vmatpush1.bf16.msra.mxu0 0
        %3449 = vmatprep.subr.bf16.mxu0 0
        %3450 = vmatpush1.bf16.msra.mxu0 0
        %3451 = vmatprep.subr.bf16.mxu0 0
        %3452 = vmatpush1.bf16.msra.mxu0 0
        %3453 = vmatprep.subr.bf16.mxu0 0
        %3454 = vmatpush1.bf16.msra.mxu0 0
        %3455 = vmatprep.subr.bf16.mxu0 0
        %3456 = vmatpush1.bf16.msra.mxu0 0
        %3457 = vmatprep.subr.bf16.mxu0 0
        %3458 = vmatpush1.bf16.msra.mxu0 %v3394
        %3459 = vmatprep.subr.bf16.mxu0 0
        %3460 = vmatpush1.bf16.msra.mxu0 %v3393
        %3461 = vmatprep.subr.bf16.mxu0 0
        %3462 = vmatpush2.bf16.msra.mxu0 0
        %3463 = vmatprep.subr.bf16.mxu0 0
        %3464 = vmatpush2.bf16.msra.mxu0 0
        %3465 = vmatprep.subr.bf16.mxu0 0
        %3466 = vmatpush2.bf16.msra.mxu0 0
        %3467 = vmatprep.subr.bf16.mxu0 0
        %3468 = vmatpush2.bf16.msra.mxu0 0
        %3469 = vmatprep.subr.bf16.mxu0 0
        %3470 = vmatpush2.bf16.msra.mxu0 0
        %3471 = vmatprep.subr.bf16.mxu0 0
        %3472 = vmatpush2.bf16.msra.mxu0 0
        %3473 = vmatprep.subr.bf16.mxu0 0
        %3474 = vmatpush2.bf16.msra.mxu0 0
        %3475 = vmatprep.subr.bf16.mxu0 0
        %3476 = vmatpush2.bf16.msra.mxu0 0
        %3477 = vmatprep.mubr.bf16.mxu0 0
        %3478 = vmatmul.mubr.bf16.gmra.mxu0 %v3398
        %v3479 = vpop.f32.mrf.mxu0
        %v3480 = vadd.f32 0.0, %v3479
        %v3481 = vpop.f32.mrf.mxu0
        %v3482 = vpop.f32.mrf.mxu0
        %v3483 = vadd.f32 0.0, %v3482
        %v3484 = vpop.f32.mrf.mxu0
        %3485 = vmatprep.mubr.bf16.mxu0 0
        %3486 = vmatmul.mubr.bf16.gmra.mxu0 %v3401
        %v3487 = vpop.f32.mrf.mxu0
        %v3488 = vadd.f32 0.0, %v3487
        %v3489 = vpop.f32.mrf.mxu0
        %v3490 = vpop.f32.mrf.mxu0
        %v3491 = vadd.f32 0.0, %v3490
        %v3492 = vpop.f32.mrf.mxu0
        %3493 = vmatprep.mubr.bf16.mxu0 0
        %3494 = vmatmul.mubr.bf16.gmra.mxu0 %v3404
        %v3495 = vpop.f32.mrf.mxu0
        %v3496 = vadd.f32 0.0, %v3495
        %v3497 = vpop.f32.mrf.mxu0
        %v3498 = vpop.f32.mrf.mxu0
        %v3499 = vadd.f32 0.0, %v3498
        %v3500 = vpop.f32.mrf.mxu0
        %3501 = vmatprep.mubr.bf16.mxu0 0
        %3502 = vmatmul.mubr.bf16.gmra.mxu0 %v3407
        %v3503 = vpop.f32.mrf.mxu0
        %v3504 = vadd.f32 0.0, %v3503
        %v3505 = vpop.f32.mrf.mxu0
        %v3506 = vpop.f32.mrf.mxu0
        %v3507 = vadd.f32 0.0, %v3506
        %v3508 = vpop.f32.mrf.mxu0
        %3509 = vmatprep.mubr.bf16.mxu0 0
        %3510 = vmatmul.mubr.bf16.gmra.mxu0 %v3410
        %v3511 = vpop.f32.mrf.mxu0
        %v3512 = vadd.f32 0.0, %v3511
        %v3513 = vpop.f32.mrf.mxu0
        %v3514 = vpop.f32.mrf.mxu0
        %v3515 = vadd.f32 0.0, %v3514
        %v3516 = vpop.f32.mrf.mxu0
        %3517 = vmatprep.mubr.bf16.mxu0 0
        %3518 = vmatmul.mubr.bf16.gmra.mxu0 %v3413
        %v3519 = vpop.f32.mrf.mxu0
        %v3520 = vadd.f32 0.0, %v3519
        %v3521 = vpop.f32.mrf.mxu0
        %v3522 = vpop.f32.mrf.mxu0
        %v3523 = vadd.f32 0.0, %v3522
        %v3524 = vpop.f32.mrf.mxu0
        %3525 = vmatprep.mubr.bf16.mxu0 0
        %3526 = vmatmul.mubr.bf16.gmra.mxu0 %v3416
        %v3527 = vpop.f32.mrf.mxu0
        %v3528 = vadd.f32 0.0, %v3527
        %v3529 = vpop.f32.mrf.mxu0
        %v3530 = vpop.f32.mrf.mxu0
        %v3531 = vadd.f32 0.0, %v3530
        %v3532 = vpop.f32.mrf.mxu0
        %3533 = vmatprep.mubr.bf16.mxu0 0
        %3534 = vmatmul.mubr.bf16.gmra.mxu0 %v3419
        %v3535 = vpop.f32.mrf.mxu0
        %v3536 = vadd.f32 0.0, %v3535
        %v3537 = vpop.f32.mrf.mxu0
        %v3538 = vpop.f32.mrf.mxu0
        %v3539 = vadd.f32 0.0, %v3538
        %v3540 = vpop.f32.mrf.mxu0
        %3541 = vmatprep.mubr.bf16.mxu0 0
        %3542 = vmatmul.mubr.bf16.gmra.mxu0 %v3422
        %v3543 = vpop.f32.mrf.mxu0
        %v3544 = vadd.f32 0.0, %v3543
        %v3545 = vpop.f32.mrf.mxu0
        %v3546 = vpop.f32.mrf.mxu0
        %v3547 = vadd.f32 0.0, %v3546
        %v3548 = vpop.f32.mrf.mxu0
        %3549 = vmatprep.mubr.bf16.mxu0 0
        %3550 = vmatmul.mubr.bf16.gmra.mxu0 %v3425
        %v3551 = vpop.f32.mrf.mxu0
        %v3552 = vadd.f32 0.0, %v3551
        %v3553 = vpop.f32.mrf.mxu0
        %v3554 = vpop.f32.mrf.mxu0
        %v3555 = vadd.f32 0.0, %v3554
        %v3556 = vpop.f32.mrf.mxu0
        %3557 = vmatprep.mubr.bf16.mxu0 0
        %3558 = vmatmul.mubr.bf16.gmra.mxu0 %v3428
        %v3559 = vpop.f32.mrf.mxu0
        %v3560 = vadd.f32 0.0, %v3559
        %v3561 = vpop.f32.mrf.mxu0
        %v3562 = vpop.f32.mrf.mxu0
        %v3563 = vadd.f32 0.0, %v3562
        %v3564 = vpop.f32.mrf.mxu0
        %3565 = vmatprep.mubr.bf16.mxu0 0
        %3566 = vmatmul.mubr.bf16.gmra.mxu0 %v3431
        %v3567 = vpop.f32.mrf.mxu0
        %v3568 = vadd.f32 0.0, %v3567
        %v3569 = vpop.f32.mrf.mxu0
        %v3570 = vpop.f32.mrf.mxu0
        %v3571 = vadd.f32 0.0, %v3570
        %v3572 = vpop.f32.mrf.mxu0
        %3573 = vmatprep.mubr.bf16.mxu0 0
        %3574 = vmatmul.mubr.bf16.gmra.mxu0 %v3434
        %v3575 = vpop.f32.mrf.mxu0
        %v3576 = vadd.f32 0.0, %v3575
        %v3577 = vpop.f32.mrf.mxu0
        %v3578 = vpop.f32.mrf.mxu0
        %v3579 = vadd.f32 0.0, %v3578
        %v3580 = vpop.f32.mrf.mxu0
        %3581 = vmatprep.mubr.bf16.mxu0 0
        %3582 = vmatmul.mubr.bf16.gmra.mxu0 %v3437
        %v3583 = vpop.f32.mrf.mxu0
        %v3584 = vadd.f32 0.0, %v3583
        %v3585 = vpop.f32.mrf.mxu0
        %v3586 = vpop.f32.mrf.mxu0
        %v3587 = vadd.f32 0.0, %v3586
        %v3588 = vpop.f32.mrf.mxu0
        %3589 = vmatprep.mubr.bf16.mxu0 0
        %3590 = vmatmul.mubr.bf16.gmra.mxu0 %v3440
        %v3591 = vpop.f32.mrf.mxu0
        %v3592 = vadd.f32 0.0, %v3591
        %v3593 = vpop.f32.mrf.mxu0
        %v3594 = vpop.f32.mrf.mxu0
        %v3595 = vadd.f32 0.0, %v3594
        %v3596 = vpop.f32.mrf.mxu0
        %3597 = vmatprep.mubr.bf16.mxu0 0
        %3598 = vmatmul.mubr.bf16.gmra.mxu0 %v3443
        %v3599 = vpop.f32.mrf.mxu0
        %v3600 = vadd.f32 0.0, %v3599
        %v3601 = vpop.f32.mrf.mxu0
        %v3602 = vpop.f32.mrf.mxu0
        %v3603 = vadd.f32 0.0, %v3602
        %v3604 = vpop.f32.mrf.mxu0
        %3605 = vdwg.mxu0
        %v3610 = vunpack.c.l.b16 %v3328
        %v3611 = vunpack.c.l.b16 %v3329
        %v3612 = vunpack.c.l.b16 %v3330
        %v3613 = vunpack.c.l.b16 %v3331
        %v3614 = vpack.c.b16 %v3611, %v3610
        %v3615 = vpack.c.b16 %v3613, %v3612
        %v3619 = vsel %vm3191, %v3312, 0
        %v3622 = vsel %vm3191, %v3313, 0
        %v3625 = vsel %vm3191, %v3314, 0
        %v3628 = vsel %vm3191, %v3315, 0
        %v3631 = vsel %vm3191, %v3316, 0
        %v3634 = vsel %vm3191, %v3317, 0
        %v3637 = vsel %vm3191, %v3318, 0
        %v3640 = vsel %vm3191, %v3319, 0
        %v3643 = vsel %vm3191, %v3320, 0
        %v3646 = vsel %vm3191, %v3321, 0
        %v3649 = vsel %vm3191, %v3322, 0
        %v3652 = vsel %vm3191, %v3323, 0
        %v3655 = vsel %vm3191, %v3324, 0
        %v3658 = vsel %vm3191, %v3325, 0
        %v3661 = vsel %vm3191, %v3326, 0
        %v3664 = vsel %vm3191, %v3327, 0
        %3666 = vmatprep.subr.bf16.mxu0 0
        %3667 = vmatpush1.bf16.msra.mxu0 0
        %3668 = vmatprep.subr.bf16.mxu0 0
        %3669 = vmatpush1.bf16.msra.mxu0 0
        %3670 = vmatprep.subr.bf16.mxu0 0
        %3671 = vmatpush1.bf16.msra.mxu0 0
        %3672 = vmatprep.subr.bf16.mxu0 0
        %3673 = vmatpush1.bf16.msra.mxu0 0
        %3674 = vmatprep.subr.bf16.mxu0 0
        %3675 = vmatpush1.bf16.msra.mxu0 0
        %3676 = vmatprep.subr.bf16.mxu0 0
        %3677 = vmatpush1.bf16.msra.mxu0 0
        %3678 = vmatprep.subr.bf16.mxu0 0
        %3679 = vmatpush1.bf16.msra.mxu0 %v3615
        %3680 = vmatprep.subr.bf16.mxu0 0
        %3681 = vmatpush1.bf16.msra.mxu0 %v3614
        %3682 = vmatprep.subr.bf16.mxu0 0
        %3683 = vmatpush2.bf16.msra.mxu0 0
        %3684 = vmatprep.subr.bf16.mxu0 0
        %3685 = vmatpush2.bf16.msra.mxu0 0
        %3686 = vmatprep.subr.bf16.mxu0 0
        %3687 = vmatpush2.bf16.msra.mxu0 0
        %3688 = vmatprep.subr.bf16.mxu0 0
        %3689 = vmatpush2.bf16.msra.mxu0 0
        %3690 = vmatprep.subr.bf16.mxu0 0
        %3691 = vmatpush2.bf16.msra.mxu0 0
        %3692 = vmatprep.subr.bf16.mxu0 0
        %3693 = vmatpush2.bf16.msra.mxu0 0
        %3694 = vmatprep.subr.bf16.mxu0 0
        %3695 = vmatpush2.bf16.msra.mxu0 0
        %3696 = vmatprep.subr.bf16.mxu0 0
        %3697 = vmatpush2.bf16.msra.mxu0 0
        %3698 = vmatprep.mubr.bf16.mxu0 0
        %3699 = vmatmul.mubr.bf16.gmra.mxu0 %v3619
        %v3700 = vpop.f32.mrf.mxu0
        %v3701 = vadd.f32 %v3480, %v3700
        %v3702 = vpop.f32.mrf.mxu0
        %v3703 = vpop.f32.mrf.mxu0
        %v3704 = vadd.f32 %v3483, %v3703
        %v3705 = vpop.f32.mrf.mxu0
        %3706 = vmatprep.mubr.bf16.mxu0 0
        %3707 = vmatmul.mubr.bf16.gmra.mxu0 %v3622
        %v3708 = vpop.f32.mrf.mxu0
        %v3709 = vadd.f32 %v3488, %v3708
        %v3710 = vpop.f32.mrf.mxu0
        %v3711 = vpop.f32.mrf.mxu0
        %v3712 = vadd.f32 %v3491, %v3711
        %v3713 = vpop.f32.mrf.mxu0
        %3714 = vmatprep.mubr.bf16.mxu0 0
        %3715 = vmatmul.mubr.bf16.gmra.mxu0 %v3625
        %v3716 = vpop.f32.mrf.mxu0
        %v3717 = vadd.f32 %v3496, %v3716
        %v3718 = vpop.f32.mrf.mxu0
        %v3719 = vpop.f32.mrf.mxu0
        %v3720 = vadd.f32 %v3499, %v3719
        %v3721 = vpop.f32.mrf.mxu0
        %3722 = vmatprep.mubr.bf16.mxu0 0
        %3723 = vmatmul.mubr.bf16.gmra.mxu0 %v3628
        %v3724 = vpop.f32.mrf.mxu0
        %v3725 = vadd.f32 %v3504, %v3724
        %v3726 = vpop.f32.mrf.mxu0
        %v3727 = vpop.f32.mrf.mxu0
        %v3728 = vadd.f32 %v3507, %v3727
        %v3729 = vpop.f32.mrf.mxu0
        %3730 = vmatprep.mubr.bf16.mxu0 0
        %3731 = vmatmul.mubr.bf16.gmra.mxu0 %v3631
        %v3732 = vpop.f32.mrf.mxu0
        %v3733 = vadd.f32 %v3512, %v3732
        %v3734 = vpop.f32.mrf.mxu0
        %v3735 = vpop.f32.mrf.mxu0
        %v3736 = vadd.f32 %v3515, %v3735
        %v3737 = vpop.f32.mrf.mxu0
        %3738 = vmatprep.mubr.bf16.mxu0 0
        %3739 = vmatmul.mubr.bf16.gmra.mxu0 %v3634
        %v3740 = vpop.f32.mrf.mxu0
        %v3741 = vadd.f32 %v3520, %v3740
        %v3742 = vpop.f32.mrf.mxu0
        %v3743 = vpop.f32.mrf.mxu0
        %v3744 = vadd.f32 %v3523, %v3743
        %v3745 = vpop.f32.mrf.mxu0
        %3746 = vmatprep.mubr.bf16.mxu0 0
        %3747 = vmatmul.mubr.bf16.gmra.mxu0 %v3637
        %v3748 = vpop.f32.mrf.mxu0
        %v3749 = vadd.f32 %v3528, %v3748
        %v3750 = vpop.f32.mrf.mxu0
        %v3751 = vpop.f32.mrf.mxu0
        %v3752 = vadd.f32 %v3531, %v3751
        %v3753 = vpop.f32.mrf.mxu0
        %3754 = vmatprep.mubr.bf16.mxu0 0
        %3755 = vmatmul.mubr.bf16.gmra.mxu0 %v3640
        %v3756 = vpop.f32.mrf.mxu0
        %v3757 = vadd.f32 %v3536, %v3756
        %v3758 = vpop.f32.mrf.mxu0
        %v3759 = vpop.f32.mrf.mxu0
        %v3760 = vadd.f32 %v3539, %v3759
        %v3761 = vpop.f32.mrf.mxu0
        %3762 = vmatprep.mubr.bf16.mxu0 0
        %3763 = vmatmul.mubr.bf16.gmra.mxu0 %v3643
        %v3764 = vpop.f32.mrf.mxu0
        %v3765 = vadd.f32 %v3544, %v3764
        %v3766 = vpop.f32.mrf.mxu0
        %v3767 = vpop.f32.mrf.mxu0
        %v3768 = vadd.f32 %v3547, %v3767
        %v3769 = vpop.f32.mrf.mxu0
        %3770 = vmatprep.mubr.bf16.mxu0 0
        %3771 = vmatmul.mubr.bf16.gmra.mxu0 %v3646
        %v3772 = vpop.f32.mrf.mxu0
        %v3773 = vadd.f32 %v3552, %v3772
        %v3774 = vpop.f32.mrf.mxu0
        %v3775 = vpop.f32.mrf.mxu0
        %v3776 = vadd.f32 %v3555, %v3775
        %v3777 = vpop.f32.mrf.mxu0
        %3778 = vmatprep.mubr.bf16.mxu0 0
        %3779 = vmatmul.mubr.bf16.gmra.mxu0 %v3649
        %v3780 = vpop.f32.mrf.mxu0
        %v3781 = vadd.f32 %v3560, %v3780
        %v3782 = vpop.f32.mrf.mxu0
        %v3783 = vpop.f32.mrf.mxu0
        %v3784 = vadd.f32 %v3563, %v3783
        %v3785 = vpop.f32.mrf.mxu0
        %3786 = vmatprep.mubr.bf16.mxu0 0
        %3787 = vmatmul.mubr.bf16.gmra.mxu0 %v3652
        %v3788 = vpop.f32.mrf.mxu0
        %v3789 = vadd.f32 %v3568, %v3788
        %v3790 = vpop.f32.mrf.mxu0
        %v3791 = vpop.f32.mrf.mxu0
        %v3792 = vadd.f32 %v3571, %v3791
        %v3793 = vpop.f32.mrf.mxu0
        %3794 = vmatprep.mubr.bf16.mxu0 0
        %3795 = vmatmul.mubr.bf16.gmra.mxu0 %v3655
        %v3796 = vpop.f32.mrf.mxu0
        %v3797 = vadd.f32 %v3576, %v3796
        %v3798 = vpop.f32.mrf.mxu0
        %v3799 = vpop.f32.mrf.mxu0
        %v3800 = vadd.f32 %v3579, %v3799
        %v3801 = vpop.f32.mrf.mxu0
        %3802 = vmatprep.mubr.bf16.mxu0 0
        %3803 = vmatmul.mubr.bf16.gmra.mxu0 %v3658
        %v3804 = vpop.f32.mrf.mxu0
        %v3805 = vadd.f32 %v3584, %v3804
        %v3806 = vpop.f32.mrf.mxu0
        %v3807 = vpop.f32.mrf.mxu0
        %v3808 = vadd.f32 %v3587, %v3807
        %v3809 = vpop.f32.mrf.mxu0
        %3810 = vmatprep.mubr.bf16.mxu0 0
        %3811 = vmatmul.mubr.bf16.gmra.mxu0 %v3661
        %v3812 = vpop.f32.mrf.mxu0
        %v3813 = vadd.f32 %v3592, %v3812
        %v3814 = vpop.f32.mrf.mxu0
        %v3815 = vpop.f32.mrf.mxu0
        %v3816 = vadd.f32 %v3595, %v3815
        %v3817 = vpop.f32.mrf.mxu0
        %3818 = vmatprep.mubr.bf16.mxu0 0
        %3819 = vmatmul.mubr.bf16.gmra.mxu0 %v3664
        %v3820 = vpop.f32.mrf.mxu0
        %v3821 = vadd.f32 %v3600, %v3820
        %v3822 = vpop.f32.mrf.mxu0
        %v3823 = vpop.f32.mrf.mxu0
        %v3824 = vadd.f32 %v3603, %v3823
        %v3825 = vpop.f32.mrf.mxu0
        %3826 = vdwg.mxu0
        %v3827 = vld [vmem:[#allocation3 + $0x2] sm:$0xff]
        %v3828 = vld [vmem:[#allocation3 + $0xa] sm:$0xff]
        %v3829 = vld [vmem:[#allocation3 + $0x1a] sm:$0xff]
        %v3830 = vld [vmem:[#allocation3 + $0x22] sm:$0xff]
        %v3831 = vld [vmem:[#allocation3 + $0x32] sm:$0xff]
        %v3832 = vld [vmem:[#allocation3 + $0x3a] sm:$0xff]
        %v3833 = vld [vmem:[#allocation3 + $0x4a] sm:$0xff]
        %v3834 = vld [vmem:[#allocation3 + $0x52] sm:$0xff]
        %v3835 = vld [vmem:[#allocation3 + $0x62] sm:$0xff]
        %v3836 = vld [vmem:[#allocation3 + $0x6a] sm:$0xff]
        %v3837 = vld [vmem:[#allocation3 + $0x7a] sm:$0xff]
        %v3838 = vld [vmem:[#allocation3 + $0x82] sm:$0xff]
        %v3839 = vld [vmem:[#allocation3 + $0x92] sm:$0xff]
        %v3840 = vld [vmem:[#allocation3 + $0x9a] sm:$0xff]
        %v3841 = vld [vmem:[#allocation3 + $0xaa] sm:$0xff]
        %v3842 = vld [vmem:[#allocation3 + $0xb2] sm:$0xff]
        %v3843 = vld [vmem:[#allocation3 + $0xc2] sm:$0xff]
        %v3844 = vld [vmem:[#allocation3 + $0xca] sm:$0xff]
        %v3845 = vld [vmem:[#allocation3 + $0xda] sm:$0xff]
        %v3846 = vld [vmem:[#allocation3 + $0xe2] sm:$0xff]
        %v3847 = vld [vmem:[#allocation3 + $0xf2] sm:$0xff]
        %v3848 = vld [vmem:[#allocation3 + $0xfa] sm:$0xff]
        %v3849 = vld [vmem:[#allocation3 + $0x10a] sm:$0xff]
        %v3850 = vld [vmem:[#allocation3 + $0x112] sm:$0xff]
        %v3851 = vld [vmem:[#allocation3 + $0x122] sm:$0xff]
        %v3852 = vld [vmem:[#allocation3 + $0x12a] sm:$0xff]
        %v3853 = vld [vmem:[#allocation3 + $0x13a] sm:$0xff]
        %v3854 = vld [vmem:[#allocation3 + $0x142] sm:$0xff]
        %v3855 = vld [vmem:[#allocation3 + $0x152] sm:$0xff]
        %v3856 = vld [vmem:[#allocation3 + $0x15a] sm:$0xff]
        %v3857 = vld [vmem:[#allocation3 + $0x16a] sm:$0xff]
        %v3858 = vld [vmem:[#allocation3 + $0x172] sm:$0xff]
        %v3859 = vpack.c.bf16 %v3828, %v3827
        %v3860 = vpack.c.bf16 %v3830, %v3829
        %v3861 = vpack.c.bf16 %v3832, %v3831
        %v3862 = vpack.c.bf16 %v3834, %v3833
        %v3863 = vpack.c.bf16 %v3836, %v3835
        %v3864 = vpack.c.bf16 %v3838, %v3837
        %v3865 = vpack.c.bf16 %v3840, %v3839
        %v3866 = vpack.c.bf16 %v3842, %v3841
        %v3867 = vpack.c.bf16 %v3844, %v3843
        %v3868 = vpack.c.bf16 %v3846, %v3845
        %v3869 = vpack.c.bf16 %v3848, %v3847
        %v3870 = vpack.c.bf16 %v3850, %v3849
        %v3871 = vpack.c.bf16 %v3852, %v3851
        %v3872 = vpack.c.bf16 %v3854, %v3853
        %v3873 = vpack.c.bf16 %v3856, %v3855
        %v3874 = vpack.c.bf16 %v3858, %v3857
        %s3875 = scalar_lea.vmem [#allocation8], 32
        %v3876 = vld [vmem:[%s3875] sm:$0xf]
        %v3877 = vld [vmem:[%s3875 + $0x4] sm:$0xf]
        %v3878 = vld [vmem:[%s3875 + $0x8] sm:$0xf]
        %v3879 = vld [vmem:[%s3875 + $0xc] sm:$0xf]
        %v3884 = vunpack.c.l.b16 %v3876
        %v3885 = vunpack.c.l.b16 %v3877
        %v3886 = vunpack.c.l.b16 %v3878
        %v3887 = vunpack.c.l.b16 %v3879
        %v3888 = vpack.c.b16 %v3885, %v3884
        %v3889 = vpack.c.b16 %v3887, %v3886
        %v3893 = vsel %vm3191, %v3859, 0
        %v3896 = vsel %vm3191, %v3860, 0
        %v3899 = vsel %vm3191, %v3861, 0
        %v3902 = vsel %vm3191, %v3862, 0
        %v3905 = vsel %vm3191, %v3863, 0
        %v3908 = vsel %vm3191, %v3864, 0
        %v3911 = vsel %vm3191, %v3865, 0
        %v3914 = vsel %vm3191, %v3866, 0
        %v3917 = vsel %vm3191, %v3867, 0
        %v3920 = vsel %vm3191, %v3868, 0
        %v3923 = vsel %vm3191, %v3869, 0
        %v3926 = vsel %vm3191, %v3870, 0
        %v3929 = vsel %vm3191, %v3871, 0
        %v3932 = vsel %vm3191, %v3872, 0
        %v3935 = vsel %vm3191, %v3873, 0
        %v3938 = vsel %vm3191, %v3874, 0
        %3940 = vmatprep.subr.bf16.mxu0 0
        %3941 = vmatpush1.bf16.msra.mxu0 0
        %3942 = vmatprep.subr.bf16.mxu0 0
        %3943 = vmatpush1.bf16.msra.mxu0 0
        %3944 = vmatprep.subr.bf16.mxu0 0
        %3945 = vmatpush1.bf16.msra.mxu0 0
        %3946 = vmatprep.subr.bf16.mxu0 0
        %3947 = vmatpush1.bf16.msra.mxu0 0
        %3948 = vmatprep.subr.bf16.mxu0 0
        %3949 = vmatpush1.bf16.msra.mxu0 0
        %3950 = vmatprep.subr.bf16.mxu0 0
        %3951 = vmatpush1.bf16.msra.mxu0 0
        %3952 = vmatprep.subr.bf16.mxu0 0
        %3953 = vmatpush1.bf16.msra.mxu0 %v3889
        %3954 = vmatprep.subr.bf16.mxu0 0
        %3955 = vmatpush1.bf16.msra.mxu0 %v3888
        %3956 = vmatprep.subr.bf16.mxu0 0
        %3957 = vmatpush2.bf16.msra.mxu0 0
        %3958 = vmatprep.subr.bf16.mxu0 0
        %3959 = vmatpush2.bf16.msra.mxu0 0
        %3960 = vmatprep.subr.bf16.mxu0 0
        %3961 = vmatpush2.bf16.msra.mxu0 0
        %3962 = vmatprep.subr.bf16.mxu0 0
        %3963 = vmatpush2.bf16.msra.mxu0 0
        %3964 = vmatprep.subr.bf16.mxu0 0
        %3965 = vmatpush2.bf16.msra.mxu0 0
        %3966 = vmatprep.subr.bf16.mxu0 0
        %3967 = vmatpush2.bf16.msra.mxu0 0
        %3968 = vmatprep.subr.bf16.mxu0 0
        %3969 = vmatpush2.bf16.msra.mxu0 0
        %3970 = vmatprep.subr.bf16.mxu0 0
        %3971 = vmatpush2.bf16.msra.mxu0 0
        %3972 = vmatprep.mubr.bf16.mxu0 0
        %3973 = vmatmul.mubr.bf16.gmra.mxu0 %v3893
        %v3974 = vpop.f32.mrf.mxu0
        %v3975 = vadd.f32 0.0, %v3974
        %v3976 = vpop.f32.mrf.mxu0
        %v3977 = vpop.f32.mrf.mxu0
        %v3978 = vadd.f32 0.0, %v3977
        %v3979 = vpop.f32.mrf.mxu0
        %3980 = vmatprep.mubr.bf16.mxu0 0
        %3981 = vmatmul.mubr.bf16.gmra.mxu0 %v3896
        %v3982 = vpop.f32.mrf.mxu0
        %v3983 = vadd.f32 0.0, %v3982
        %v3984 = vpop.f32.mrf.mxu0
        %v3985 = vpop.f32.mrf.mxu0
        %v3986 = vadd.f32 0.0, %v3985
        %v3987 = vpop.f32.mrf.mxu0
        %3988 = vmatprep.mubr.bf16.mxu0 0
        %3989 = vmatmul.mubr.bf16.gmra.mxu0 %v3899
        %v3990 = vpop.f32.mrf.mxu0
        %v3991 = vadd.f32 0.0, %v3990
        %v3992 = vpop.f32.mrf.mxu0
        %v3993 = vpop.f32.mrf.mxu0
        %v3994 = vadd.f32 0.0, %v3993
        %v3995 = vpop.f32.mrf.mxu0
        %3996 = vmatprep.mubr.bf16.mxu0 0
        %3997 = vmatmul.mubr.bf16.gmra.mxu0 %v3902
        %v3998 = vpop.f32.mrf.mxu0
        %v3999 = vadd.f32 0.0, %v3998
        %v4000 = vpop.f32.mrf.mxu0
        %v4001 = vpop.f32.mrf.mxu0
        %v4002 = vadd.f32 0.0, %v4001
        %v4003 = vpop.f32.mrf.mxu0
        %4004 = vmatprep.mubr.bf16.mxu0 0
        %4005 = vmatmul.mubr.bf16.gmra.mxu0 %v3905
        %v4006 = vpop.f32.mrf.mxu0
        %v4007 = vadd.f32 0.0, %v4006
        %v4008 = vpop.f32.mrf.mxu0
        %v4009 = vpop.f32.mrf.mxu0
        %v4010 = vadd.f32 0.0, %v4009
        %v4011 = vpop.f32.mrf.mxu0
        %4012 = vmatprep.mubr.bf16.mxu0 0
        %4013 = vmatmul.mubr.bf16.gmra.mxu0 %v3908
        %v4014 = vpop.f32.mrf.mxu0
        %v4015 = vadd.f32 0.0, %v4014
        %v4016 = vpop.f32.mrf.mxu0
        %v4017 = vpop.f32.mrf.mxu0
        %v4018 = vadd.f32 0.0, %v4017
        %v4019 = vpop.f32.mrf.mxu0
        %4020 = vmatprep.mubr.bf16.mxu0 0
        %4021 = vmatmul.mubr.bf16.gmra.mxu0 %v3911
        %v4022 = vpop.f32.mrf.mxu0
        %v4023 = vadd.f32 0.0, %v4022
        %v4024 = vpop.f32.mrf.mxu0
        %v4025 = vpop.f32.mrf.mxu0
        %v4026 = vadd.f32 0.0, %v4025
        %v4027 = vpop.f32.mrf.mxu0
        %4028 = vmatprep.mubr.bf16.mxu0 0
        %4029 = vmatmul.mubr.bf16.gmra.mxu0 %v3914
        %v4030 = vpop.f32.mrf.mxu0
        %v4031 = vadd.f32 0.0, %v4030
        %v4032 = vpop.f32.mrf.mxu0
        %v4033 = vpop.f32.mrf.mxu0
        %v4034 = vadd.f32 0.0, %v4033
        %v4035 = vpop.f32.mrf.mxu0
        %4036 = vmatprep.mubr.bf16.mxu0 0
        %4037 = vmatmul.mubr.bf16.gmra.mxu0 %v3917
        %v4038 = vpop.f32.mrf.mxu0
        %v4039 = vadd.f32 0.0, %v4038
        %v4040 = vpop.f32.mrf.mxu0
        %v4041 = vpop.f32.mrf.mxu0
        %v4042 = vadd.f32 0.0, %v4041
        %v4043 = vpop.f32.mrf.mxu0
        %4044 = vmatprep.mubr.bf16.mxu0 0
        %4045 = vmatmul.mubr.bf16.gmra.mxu0 %v3920
        %v4046 = vpop.f32.mrf.mxu0
        %v4047 = vadd.f32 0.0, %v4046
        %v4048 = vpop.f32.mrf.mxu0
        %v4049 = vpop.f32.mrf.mxu0
        %v4050 = vadd.f32 0.0, %v4049
        %v4051 = vpop.f32.mrf.mxu0
        %4052 = vmatprep.mubr.bf16.mxu0 0
        %4053 = vmatmul.mubr.bf16.gmra.mxu0 %v3923
        %v4054 = vpop.f32.mrf.mxu0
        %v4055 = vadd.f32 0.0, %v4054
        %v4056 = vpop.f32.mrf.mxu0
        %v4057 = vpop.f32.mrf.mxu0
        %v4058 = vadd.f32 0.0, %v4057
        %v4059 = vpop.f32.mrf.mxu0
        %4060 = vmatprep.mubr.bf16.mxu0 0
        %4061 = vmatmul.mubr.bf16.gmra.mxu0 %v3926
        %v4062 = vpop.f32.mrf.mxu0
        %v4063 = vadd.f32 0.0, %v4062
        %v4064 = vpop.f32.mrf.mxu0
        %v4065 = vpop.f32.mrf.mxu0
        %v4066 = vadd.f32 0.0, %v4065
        %v4067 = vpop.f32.mrf.mxu0
        %4068 = vmatprep.mubr.bf16.mxu0 0
        %4069 = vmatmul.mubr.bf16.gmra.mxu0 %v3929
        %v4070 = vpop.f32.mrf.mxu0
        %v4071 = vadd.f32 0.0, %v4070
        %v4072 = vpop.f32.mrf.mxu0
        %v4073 = vpop.f32.mrf.mxu0
        %v4074 = vadd.f32 0.0, %v4073
        %v4075 = vpop.f32.mrf.mxu0
        %4076 = vmatprep.mubr.bf16.mxu0 0
        %4077 = vmatmul.mubr.bf16.gmra.mxu0 %v3932
        %v4078 = vpop.f32.mrf.mxu0
        %v4079 = vadd.f32 0.0, %v4078
        %v4080 = vpop.f32.mrf.mxu0
        %v4081 = vpop.f32.mrf.mxu0
        %v4082 = vadd.f32 0.0, %v4081
        %v4083 = vpop.f32.mrf.mxu0
        %4084 = vmatprep.mubr.bf16.mxu0 0
        %4085 = vmatmul.mubr.bf16.gmra.mxu0 %v3935
        %v4086 = vpop.f32.mrf.mxu0
        %v4087 = vadd.f32 0.0, %v4086
        %v4088 = vpop.f32.mrf.mxu0
        %v4089 = vpop.f32.mrf.mxu0
        %v4090 = vadd.f32 0.0, %v4089
        %v4091 = vpop.f32.mrf.mxu0
        %4092 = vmatprep.mubr.bf16.mxu0 0
        %4093 = vmatmul.mubr.bf16.gmra.mxu0 %v3938
        %v4094 = vpop.f32.mrf.mxu0
        %v4095 = vadd.f32 0.0, %v4094
        %v4096 = vpop.f32.mrf.mxu0
        %v4097 = vpop.f32.mrf.mxu0
        %v4098 = vadd.f32 0.0, %v4097
        %v4099 = vpop.f32.mrf.mxu0
        %4100 = vdwg.mxu0
        %v4101 = vadd.f32 %v3701, %v3975
        %v4102 = vadd.f32 %v3704, %v3978
        %v4103 = vadd.f32 %v3709, %v3983
        %v4104 = vadd.f32 %v3712, %v3986
        %v4105 = vadd.f32 %v3717, %v3991
        %v4106 = vadd.f32 %v3720, %v3994
        %v4107 = vadd.f32 %v3725, %v3999
        %v4108 = vadd.f32 %v3728, %v4002
        %v4109 = vadd.f32 %v3733, %v4007
        %v4110 = vadd.f32 %v3736, %v4010
        %v4111 = vadd.f32 %v3741, %v4015
        %v4112 = vadd.f32 %v3744, %v4018
        %v4113 = vadd.f32 %v3749, %v4023
        %v4114 = vadd.f32 %v3752, %v4026
        %v4115 = vadd.f32 %v3757, %v4031
        %v4116 = vadd.f32 %v3760, %v4034
        %v4117 = vadd.f32 %v3765, %v4039
        %v4118 = vadd.f32 %v3768, %v4042
        %v4119 = vadd.f32 %v3773, %v4047
        %v4120 = vadd.f32 %v3776, %v4050
        %v4121 = vadd.f32 %v3781, %v4055
        %v4122 = vadd.f32 %v3784, %v4058
        %v4123 = vadd.f32 %v3789, %v4063
        %v4124 = vadd.f32 %v3792, %v4066
        %v4125 = vadd.f32 %v3797, %v4071
        %v4126 = vadd.f32 %v3800, %v4074
        %v4127 = vadd.f32 %v3805, %v4079
        %v4128 = vadd.f32 %v3808, %v4082
        %v4129 = vadd.f32 %v3813, %v4087
        %v4130 = vadd.f32 %v3816, %v4090
        %v4131 = vadd.f32 %v3821, %v4095
        %v4132 = vadd.f32 %v3824, %v4098
        %v4133 = vld [vmem:[%s3247] sm:$0xff]
        %v4134 = vld [vmem:[%s3247 + $0x8] sm:$0xff]
        %v4135 = vld [vmem:[%s3247 + $0x18] sm:$0xff]
        %v4136 = vld [vmem:[%s3247 + $0x20] sm:$0xff]
        %v4137 = vld [vmem:[%s3247 + $0x30] sm:$0xff]
        %v4138 = vld [vmem:[%s3247 + $0x38] sm:$0xff]
        %v4139 = vld [vmem:[%s3247 + $0x48] sm:$0xff]
        %v4140 = vld [vmem:[%s3247 + $0x50] sm:$0xff]
        %v4141 = vld [vmem:[%s3247 + $0x60] sm:$0xff]
        %v4142 = vld [vmem:[%s3247 + $0x68] sm:$0xff]
        %v4143 = vld [vmem:[%s3247 + $0x78] sm:$0xff]
        %v4144 = vld [vmem:[%s3247 + $0x80] sm:$0xff]
        %v4145 = vld [vmem:[%s3247 + $0x90] sm:$0xff]
        %v4146 = vld [vmem:[%s3247 + $0x98] sm:$0xff]
        %v4147 = vld [vmem:[%s3247 + $0xa8] sm:$0xff]
        %v4148 = vld [vmem:[%s3247 + $0xb0] sm:$0xff]
        %v4149 = vld [vmem:[%s3247 + $0xc0] sm:$0xff]
        %v4150 = vld [vmem:[%s3247 + $0xc8] sm:$0xff]
        %v4151 = vld [vmem:[%s3247 + $0xd8] sm:$0xff]
        %v4152 = vld [vmem:[%s3247 + $0xe0] sm:$0xff]
        %v4153 = vld [vmem:[%s3247 + $0xf0] sm:$0xff]
        %v4154 = vld [vmem:[%s3247 + $0xf8] sm:$0xff]
        %v4155 = vld [vmem:[%s3247 + $0x108] sm:$0xff]
        %v4156 = vld [vmem:[%s3247 + $0x110] sm:$0xff]
        %v4157 = vld [vmem:[%s3247 + $0x120] sm:$0xff]
        %v4158 = vld [vmem:[%s3247 + $0x128] sm:$0xff]
        %v4159 = vld [vmem:[%s3247 + $0x138] sm:$0xff]
        %v4160 = vld [vmem:[%s3247 + $0x140] sm:$0xff]
        %v4161 = vld [vmem:[%s3247 + $0x150] sm:$0xff]
        %v4162 = vld [vmem:[%s3247 + $0x158] sm:$0xff]
        %v4163 = vld [vmem:[%s3247 + $0x168] sm:$0xff]
        %v4164 = vld [vmem:[%s3247 + $0x170] sm:$0xff]
        %v4165 = vpack.c.bf16 %v4134, %v4133
        %v4166 = vpack.c.bf16 %v4136, %v4135
        %v4167 = vpack.c.bf16 %v4138, %v4137
        %v4168 = vpack.c.bf16 %v4140, %v4139
        %v4169 = vpack.c.bf16 %v4142, %v4141
        %v4170 = vpack.c.bf16 %v4144, %v4143
        %v4171 = vpack.c.bf16 %v4146, %v4145
        %v4172 = vpack.c.bf16 %v4148, %v4147
        %v4173 = vpack.c.bf16 %v4150, %v4149
        %v4174 = vpack.c.bf16 %v4152, %v4151
        %v4175 = vpack.c.bf16 %v4154, %v4153
        %v4176 = vpack.c.bf16 %v4156, %v4155
        %v4177 = vpack.c.bf16 %v4158, %v4157
        %v4178 = vpack.c.bf16 %v4160, %v4159
        %v4179 = vpack.c.bf16 %v4162, %v4161
        %v4180 = vpack.c.bf16 %v4164, %v4163
        %s4181 = scalar_lea.vmem [#allocation8], 48
        %v4182 = vld [vmem:[%s4181] sm:$0xf]
        %v4183 = vld [vmem:[%s4181 + $0x4] sm:$0xf]
        %v4184 = vld [vmem:[%s4181 + $0x8] sm:$0xf]
        %v4185 = vld [vmem:[%s4181 + $0xc] sm:$0xf]
        %v4190 = vunpack.c.l.b16 %v4182
        %v4191 = vunpack.c.l.b16 %v4183
        %v4192 = vunpack.c.l.b16 %v4184
        %v4193 = vunpack.c.l.b16 %v4185
        %v4194 = vpack.c.b16 %v4191, %v4190
        %v4195 = vpack.c.b16 %v4193, %v4192
        %v4199 = vsel %vm3191, %v4165, 0
        %v4202 = vsel %vm3191, %v4166, 0
        %v4205 = vsel %vm3191, %v4167, 0
        %v4208 = vsel %vm3191, %v4168, 0
        %v4211 = vsel %vm3191, %v4169, 0
        %v4214 = vsel %vm3191, %v4170, 0
        %v4217 = vsel %vm3191, %v4171, 0
        %v4220 = vsel %vm3191, %v4172, 0
        %v4223 = vsel %vm3191, %v4173, 0
        %v4226 = vsel %vm3191, %v4174, 0
        %v4229 = vsel %vm3191, %v4175, 0
        %v4232 = vsel %vm3191, %v4176, 0
        %v4235 = vsel %vm3191, %v4177, 0
        %v4238 = vsel %vm3191, %v4178, 0
        %v4241 = vsel %vm3191, %v4179, 0
        %v4244 = vsel %vm3191, %v4180, 0
        %4246 = vmatprep.subr.bf16.mxu0 0
        %4247 = vmatpush1.bf16.msra.mxu0 0
        %4248 = vmatprep.subr.bf16.mxu0 0
        %4249 = vmatpush1.bf16.msra.mxu0 0
        %4250 = vmatprep.subr.bf16.mxu0 0
        %4251 = vmatpush1.bf16.msra.mxu0 0
        %4252 = vmatprep.subr.bf16.mxu0 0
        %4253 = vmatpush1.bf16.msra.mxu0 0
        %4254 = vmatprep.subr.bf16.mxu0 0
        %4255 = vmatpush1.bf16.msra.mxu0 0
        %4256 = vmatprep.subr.bf16.mxu0 0
        %4257 = vmatpush1.bf16.msra.mxu0 0
        %4258 = vmatprep.subr.bf16.mxu0 0
        %4259 = vmatpush1.bf16.msra.mxu0 %v4195
        %4260 = vmatprep.subr.bf16.mxu0 0
        %4261 = vmatpush1.bf16.msra.mxu0 %v4194
        %4262 = vmatprep.subr.bf16.mxu0 0
        %4263 = vmatpush2.bf16.msra.mxu0 0
        %4264 = vmatprep.subr.bf16.mxu0 0
        %4265 = vmatpush2.bf16.msra.mxu0 0
        %4266 = vmatprep.subr.bf16.mxu0 0
        %4267 = vmatpush2.bf16.msra.mxu0 0
        %4268 = vmatprep.subr.bf16.mxu0 0
        %4269 = vmatpush2.bf16.msra.mxu0 0
        %4270 = vmatprep.subr.bf16.mxu0 0
        %4271 = vmatpush2.bf16.msra.mxu0 0
        %4272 = vmatprep.subr.bf16.mxu0 0
        %4273 = vmatpush2.bf16.msra.mxu0 0
        %4274 = vmatprep.subr.bf16.mxu0 0
        %4275 = vmatpush2.bf16.msra.mxu0 0
        %4276 = vmatprep.subr.bf16.mxu0 0
        %4277 = vmatpush2.bf16.msra.mxu0 0
        %4278 = vmatprep.mubr.bf16.mxu0 0
        %4279 = vmatmul.mubr.bf16.gmra.mxu0 %v4199
        %v4280 = vpop.f32.mrf.mxu0
        %v4281 = vadd.f32 0.0, %v4280
        %v4282 = vpop.f32.mrf.mxu0
        %v4283 = vpop.f32.mrf.mxu0
        %v4284 = vadd.f32 0.0, %v4283
        %v4285 = vpop.f32.mrf.mxu0
        %4286 = vmatprep.mubr.bf16.mxu0 0
        %4287 = vmatmul.mubr.bf16.gmra.mxu0 %v4202
        %v4288 = vpop.f32.mrf.mxu0
        %v4289 = vadd.f32 0.0, %v4288
        %v4290 = vpop.f32.mrf.mxu0
        %v4291 = vpop.f32.mrf.mxu0
        %v4292 = vadd.f32 0.0, %v4291
        %v4293 = vpop.f32.mrf.mxu0
        %4294 = vmatprep.mubr.bf16.mxu0 0
        %4295 = vmatmul.mubr.bf16.gmra.mxu0 %v4205
        %v4296 = vpop.f32.mrf.mxu0
        %v4297 = vadd.f32 0.0, %v4296
        %v4298 = vpop.f32.mrf.mxu0
        %v4299 = vpop.f32.mrf.mxu0
        %v4300 = vadd.f32 0.0, %v4299
        %v4301 = vpop.f32.mrf.mxu0
        %4302 = vmatprep.mubr.bf16.mxu0 0
        %4303 = vmatmul.mubr.bf16.gmra.mxu0 %v4208
        %v4304 = vpop.f32.mrf.mxu0
        %v4305 = vadd.f32 0.0, %v4304
        %v4306 = vpop.f32.mrf.mxu0
        %v4307 = vpop.f32.mrf.mxu0
        %v4308 = vadd.f32 0.0, %v4307
        %v4309 = vpop.f32.mrf.mxu0
        %4310 = vmatprep.mubr.bf16.mxu0 0
        %4311 = vmatmul.mubr.bf16.gmra.mxu0 %v4211
        %v4312 = vpop.f32.mrf.mxu0
        %v4313 = vadd.f32 0.0, %v4312
        %v4314 = vpop.f32.mrf.mxu0
        %v4315 = vpop.f32.mrf.mxu0
        %v4316 = vadd.f32 0.0, %v4315
        %v4317 = vpop.f32.mrf.mxu0
        %4318 = vmatprep.mubr.bf16.mxu0 0
        %4319 = vmatmul.mubr.bf16.gmra.mxu0 %v4214
        %v4320 = vpop.f32.mrf.mxu0
        %v4321 = vadd.f32 0.0, %v4320
        %v4322 = vpop.f32.mrf.mxu0
        %v4323 = vpop.f32.mrf.mxu0
        %v4324 = vadd.f32 0.0, %v4323
        %v4325 = vpop.f32.mrf.mxu0
        %4326 = vmatprep.mubr.bf16.mxu0 0
        %4327 = vmatmul.mubr.bf16.gmra.mxu0 %v4217
        %v4328 = vpop.f32.mrf.mxu0
        %v4329 = vadd.f32 0.0, %v4328
        %v4330 = vpop.f32.mrf.mxu0
        %v4331 = vpop.f32.mrf.mxu0
        %v4332 = vadd.f32 0.0, %v4331
        %v4333 = vpop.f32.mrf.mxu0
        %4334 = vmatprep.mubr.bf16.mxu0 0
        %4335 = vmatmul.mubr.bf16.gmra.mxu0 %v4220
        %v4336 = vpop.f32.mrf.mxu0
        %v4337 = vadd.f32 0.0, %v4336
        %v4338 = vpop.f32.mrf.mxu0
        %v4339 = vpop.f32.mrf.mxu0
        %v4340 = vadd.f32 0.0, %v4339
        %v4341 = vpop.f32.mrf.mxu0
        %4342 = vmatprep.mubr.bf16.mxu0 0
        %4343 = vmatmul.mubr.bf16.gmra.mxu0 %v4223
        %v4344 = vpop.f32.mrf.mxu0
        %v4345 = vadd.f32 0.0, %v4344
        %v4346 = vpop.f32.mrf.mxu0
        %v4347 = vpop.f32.mrf.mxu0
        %v4348 = vadd.f32 0.0, %v4347
        %v4349 = vpop.f32.mrf.mxu0
        %4350 = vmatprep.mubr.bf16.mxu0 0
        %4351 = vmatmul.mubr.bf16.gmra.mxu0 %v4226
        %v4352 = vpop.f32.mrf.mxu0
        %v4353 = vadd.f32 0.0, %v4352
        %v4354 = vpop.f32.mrf.mxu0
        %v4355 = vpop.f32.mrf.mxu0
        %v4356 = vadd.f32 0.0, %v4355
        %v4357 = vpop.f32.mrf.mxu0
        %4358 = vmatprep.mubr.bf16.mxu0 0
        %4359 = vmatmul.mubr.bf16.gmra.mxu0 %v4229
        %v4360 = vpop.f32.mrf.mxu0
        %v4361 = vadd.f32 0.0, %v4360
        %v4362 = vpop.f32.mrf.mxu0
        %v4363 = vpop.f32.mrf.mxu0
        %v4364 = vadd.f32 0.0, %v4363
        %v4365 = vpop.f32.mrf.mxu0
        %4366 = vmatprep.mubr.bf16.mxu0 0
        %4367 = vmatmul.mubr.bf16.gmra.mxu0 %v4232
        %v4368 = vpop.f32.mrf.mxu0
        %v4369 = vadd.f32 0.0, %v4368
        %v4370 = vpop.f32.mrf.mxu0
        %v4371 = vpop.f32.mrf.mxu0
        %v4372 = vadd.f32 0.0, %v4371
        %v4373 = vpop.f32.mrf.mxu0
        %4374 = vmatprep.mubr.bf16.mxu0 0
        %4375 = vmatmul.mubr.bf16.gmra.mxu0 %v4235
        %v4376 = vpop.f32.mrf.mxu0
        %v4377 = vadd.f32 0.0, %v4376
        %v4378 = vpop.f32.mrf.mxu0
        %v4379 = vpop.f32.mrf.mxu0
        %v4380 = vadd.f32 0.0, %v4379
        %v4381 = vpop.f32.mrf.mxu0
        %4382 = vmatprep.mubr.bf16.mxu0 0
        %4383 = vmatmul.mubr.bf16.gmra.mxu0 %v4238
        %v4384 = vpop.f32.mrf.mxu0
        %v4385 = vadd.f32 0.0, %v4384
        %v4386 = vpop.f32.mrf.mxu0
        %v4387 = vpop.f32.mrf.mxu0
        %v4388 = vadd.f32 0.0, %v4387
        %v4389 = vpop.f32.mrf.mxu0
        %4390 = vmatprep.mubr.bf16.mxu0 0
        %4391 = vmatmul.mubr.bf16.gmra.mxu0 %v4241
        %v4392 = vpop.f32.mrf.mxu0
        %v4393 = vadd.f32 0.0, %v4392
        %v4394 = vpop.f32.mrf.mxu0
        %v4395 = vpop.f32.mrf.mxu0
        %v4396 = vadd.f32 0.0, %v4395
        %v4397 = vpop.f32.mrf.mxu0
        %4398 = vmatprep.mubr.bf16.mxu0 0
        %4399 = vmatmul.mubr.bf16.gmra.mxu0 %v4244
        %v4400 = vpop.f32.mrf.mxu0
        %v4401 = vadd.f32 0.0, %v4400
        %v4402 = vpop.f32.mrf.mxu0
        %v4403 = vpop.f32.mrf.mxu0
        %v4404 = vadd.f32 0.0, %v4403
        %v4405 = vpop.f32.mrf.mxu0
        %4406 = vdwg.mxu0
        %v4407 = vadd.f32 %v4101, %v4281
        %v4408 = vadd.f32 %v4102, %v4284
        %v4409 = vadd.f32 %v4103, %v4289
        %v4410 = vadd.f32 %v4104, %v4292
        %v4411 = vadd.f32 %v4105, %v4297
        %v4412 = vadd.f32 %v4106, %v4300
        %v4413 = vadd.f32 %v4107, %v4305
        %v4414 = vadd.f32 %v4108, %v4308
        %v4415 = vadd.f32 %v4109, %v4313
        %v4416 = vadd.f32 %v4110, %v4316
        %v4417 = vadd.f32 %v4111, %v4321
        %v4418 = vadd.f32 %v4112, %v4324
        %v4419 = vadd.f32 %v4113, %v4329
        %v4420 = vadd.f32 %v4114, %v4332
        %v4421 = vadd.f32 %v4115, %v4337
        %v4422 = vadd.f32 %v4116, %v4340
        %v4423 = vadd.f32 %v4117, %v4345
        %v4424 = vadd.f32 %v4118, %v4348
        %v4425 = vadd.f32 %v4119, %v4353
        %v4426 = vadd.f32 %v4120, %v4356
        %v4427 = vadd.f32 %v4121, %v4361
        %v4428 = vadd.f32 %v4122, %v4364
        %v4429 = vadd.f32 %v4123, %v4369
        %v4430 = vadd.f32 %v4124, %v4372
        %v4431 = vadd.f32 %v4125, %v4377
        %v4432 = vadd.f32 %v4126, %v4380
        %v4433 = vadd.f32 %v4127, %v4385
        %v4434 = vadd.f32 %v4128, %v4388
        %v4435 = vadd.f32 %v4129, %v4393
        %v4436 = vadd.f32 %v4130, %v4396
        %v4437 = vadd.f32 %v4131, %v4401
        %v4438 = vadd.f32 %v4132, %v4404
        %v4439 = vld [vmem:[%s3247 + $0x1] sm:$0xff]
        %v4440 = vld [vmem:[%s3247 + $0x9] sm:$0xff]
        %v4441 = vld [vmem:[%s3247 + $0x19] sm:$0xff]
        %v4442 = vld [vmem:[%s3247 + $0x21] sm:$0xff]
        %v4443 = vld [vmem:[%s3247 + $0x31] sm:$0xff]
        %v4444 = vld [vmem:[%s3247 + $0x39] sm:$0xff]
        %v4445 = vld [vmem:[%s3247 + $0x49] sm:$0xff]
        %v4446 = vld [vmem:[%s3247 + $0x51] sm:$0xff]
        %v4447 = vld [vmem:[%s3247 + $0x61] sm:$0xff]
        %v4448 = vld [vmem:[%s3247 + $0x69] sm:$0xff]
        %v4449 = vld [vmem:[%s3247 + $0x79] sm:$0xff]
        %v4450 = vld [vmem:[%s3247 + $0x81] sm:$0xff]
        %v4451 = vld [vmem:[%s3247 + $0x91] sm:$0xff]
        %v4452 = vld [vmem:[%s3247 + $0x99] sm:$0xff]
        %v4453 = vld [vmem:[%s3247 + $0xa9] sm:$0xff]
        %v4454 = vld [vmem:[%s3247 + $0xb1] sm:$0xff]
        %v4455 = vld [vmem:[%s3247 + $0xc1] sm:$0xff]
        %v4456 = vld [vmem:[%s3247 + $0xc9] sm:$0xff]
        %v4457 = vld [vmem:[%s3247 + $0xd9] sm:$0xff]
        %v4458 = vld [vmem:[%s3247 + $0xe1] sm:$0xff]
        %v4459 = vld [vmem:[%s3247 + $0xf1] sm:$0xff]
        %v4460 = vld [vmem:[%s3247 + $0xf9] sm:$0xff]
        %v4461 = vld [vmem:[%s3247 + $0x109] sm:$0xff]
        %v4462 = vld [vmem:[%s3247 + $0x111] sm:$0xff]
        %v4463 = vld [vmem:[%s3247 + $0x121] sm:$0xff]
        %v4464 = vld [vmem:[%s3247 + $0x129] sm:$0xff]
        %v4465 = vld [vmem:[%s3247 + $0x139] sm:$0xff]
        %v4466 = vld [vmem:[%s3247 + $0x141] sm:$0xff]
        %v4467 = vld [vmem:[%s3247 + $0x151] sm:$0xff]
        %v4468 = vld [vmem:[%s3247 + $0x159] sm:$0xff]
        %v4469 = vld [vmem:[%s3247 + $0x169] sm:$0xff]
        %v4470 = vld [vmem:[%s3247 + $0x171] sm:$0xff]
        %v4471 = vpack.c.bf16 %v4440, %v4439
        %v4472 = vpack.c.bf16 %v4442, %v4441
        %v4473 = vpack.c.bf16 %v4444, %v4443
        %v4474 = vpack.c.bf16 %v4446, %v4445
        %v4475 = vpack.c.bf16 %v4448, %v4447
        %v4476 = vpack.c.bf16 %v4450, %v4449
        %v4477 = vpack.c.bf16 %v4452, %v4451
        %v4478 = vpack.c.bf16 %v4454, %v4453
        %v4479 = vpack.c.bf16 %v4456, %v4455
        %v4480 = vpack.c.bf16 %v4458, %v4457
        %v4481 = vpack.c.bf16 %v4460, %v4459
        %v4482 = vpack.c.bf16 %v4462, %v4461
        %v4483 = vpack.c.bf16 %v4464, %v4463
        %v4484 = vpack.c.bf16 %v4466, %v4465
        %v4485 = vpack.c.bf16 %v4468, %v4467
        %v4486 = vpack.c.bf16 %v4470, %v4469
        %s4487 = scalar_lea.vmem [#allocation8], 64
        %v4488 = vld [vmem:[%s4487] sm:$0xf]
        %v4489 = vld [vmem:[%s4487 + $0x4] sm:$0xf]
        %v4490 = vld [vmem:[%s4487 + $0x8] sm:$0xf]
        %v4491 = vld [vmem:[%s4487 + $0xc] sm:$0xf]
        %v4496 = vunpack.c.l.b16 %v4488
        %v4497 = vunpack.c.l.b16 %v4489
        %v4498 = vunpack.c.l.b16 %v4490
        %v4499 = vunpack.c.l.b16 %v4491
        %v4500 = vpack.c.b16 %v4497, %v4496
        %v4501 = vpack.c.b16 %v4499, %v4498
        %v4505 = vsel %vm3191, %v4471, 0
        %v4508 = vsel %vm3191, %v4472, 0
        %v4511 = vsel %vm3191, %v4473, 0
        %v4514 = vsel %vm3191, %v4474, 0
        %v4517 = vsel %vm3191, %v4475, 0
        %v4520 = vsel %vm3191, %v4476, 0
        %v4523 = vsel %vm3191, %v4477, 0
        %v4526 = vsel %vm3191, %v4478, 0
        %v4529 = vsel %vm3191, %v4479, 0
        %v4532 = vsel %vm3191, %v4480, 0
        %v4535 = vsel %vm3191, %v4481, 0
        %v4538 = vsel %vm3191, %v4482, 0
        %v4541 = vsel %vm3191, %v4483, 0
        %v4544 = vsel %vm3191, %v4484, 0
        %v4547 = vsel %vm3191, %v4485, 0
        %v4550 = vsel %vm3191, %v4486, 0
        %4552 = vmatprep.subr.bf16.mxu0 0
        %4553 = vmatpush1.bf16.msra.mxu0 0
        %4554 = vmatprep.subr.bf16.mxu0 0
        %4555 = vmatpush1.bf16.msra.mxu0 0
        %4556 = vmatprep.subr.bf16.mxu0 0
        %4557 = vmatpush1.bf16.msra.mxu0 0
        %4558 = vmatprep.subr.bf16.mxu0 0
        %4559 = vmatpush1.bf16.msra.mxu0 0
        %4560 = vmatprep.subr.bf16.mxu0 0
        %4561 = vmatpush1.bf16.msra.mxu0 0
        %4562 = vmatprep.subr.bf16.mxu0 0
        %4563 = vmatpush1.bf16.msra.mxu0 0
        %4564 = vmatprep.subr.bf16.mxu0 0
        %4565 = vmatpush1.bf16.msra.mxu0 %v4501
        %4566 = vmatprep.subr.bf16.mxu0 0
        %4567 = vmatpush1.bf16.msra.mxu0 %v4500
        %4568 = vmatprep.subr.bf16.mxu0 0
        %4569 = vmatpush2.bf16.msra.mxu0 0
        %4570 = vmatprep.subr.bf16.mxu0 0
        %4571 = vmatpush2.bf16.msra.mxu0 0
        %4572 = vmatprep.subr.bf16.mxu0 0
        %4573 = vmatpush2.bf16.msra.mxu0 0
        %4574 = vmatprep.subr.bf16.mxu0 0
        %4575 = vmatpush2.bf16.msra.mxu0 0
        %4576 = vmatprep.subr.bf16.mxu0 0
        %4577 = vmatpush2.bf16.msra.mxu0 0
        %4578 = vmatprep.subr.bf16.mxu0 0
        %4579 = vmatpush2.bf16.msra.mxu0 0
        %4580 = vmatprep.subr.bf16.mxu0 0
        %4581 = vmatpush2.bf16.msra.mxu0 0
        %4582 = vmatprep.subr.bf16.mxu0 0
        %4583 = vmatpush2.bf16.msra.mxu0 0
        %4584 = vmatprep.mubr.bf16.mxu0 0
        %4585 = vmatmul.mubr.bf16.gmra.mxu0 %v4505
        %v4586 = vpop.f32.mrf.mxu0
        %v4587 = vadd.f32 0.0, %v4586
        %v4588 = vpop.f32.mrf.mxu0
        %v4589 = vpop.f32.mrf.mxu0
        %v4590 = vadd.f32 0.0, %v4589
        %v4591 = vpop.f32.mrf.mxu0
        %4592 = vmatprep.mubr.bf16.mxu0 0
        %4593 = vmatmul.mubr.bf16.gmra.mxu0 %v4508
        %v4594 = vpop.f32.mrf.mxu0
        %v4595 = vadd.f32 0.0, %v4594
        %v4596 = vpop.f32.mrf.mxu0
        %v4597 = vpop.f32.mrf.mxu0
        %v4598 = vadd.f32 0.0, %v4597
        %v4599 = vpop.f32.mrf.mxu0
        %4600 = vmatprep.mubr.bf16.mxu0 0
        %4601 = vmatmul.mubr.bf16.gmra.mxu0 %v4511
        %v4602 = vpop.f32.mrf.mxu0
        %v4603 = vadd.f32 0.0, %v4602
        %v4604 = vpop.f32.mrf.mxu0
        %v4605 = vpop.f32.mrf.mxu0
        %v4606 = vadd.f32 0.0, %v4605
        %v4607 = vpop.f32.mrf.mxu0
        %4608 = vmatprep.mubr.bf16.mxu0 0
        %4609 = vmatmul.mubr.bf16.gmra.mxu0 %v4514
        %v4610 = vpop.f32.mrf.mxu0
        %v4611 = vadd.f32 0.0, %v4610
        %v4612 = vpop.f32.mrf.mxu0
        %v4613 = vpop.f32.mrf.mxu0
        %v4614 = vadd.f32 0.0, %v4613
        %v4615 = vpop.f32.mrf.mxu0
        %4616 = vmatprep.mubr.bf16.mxu0 0
        %4617 = vmatmul.mubr.bf16.gmra.mxu0 %v4517
        %v4618 = vpop.f32.mrf.mxu0
        %v4619 = vadd.f32 0.0, %v4618
        %v4620 = vpop.f32.mrf.mxu0
        %v4621 = vpop.f32.mrf.mxu0
        %v4622 = vadd.f32 0.0, %v4621
        %v4623 = vpop.f32.mrf.mxu0
        %4624 = vmatprep.mubr.bf16.mxu0 0
        %4625 = vmatmul.mubr.bf16.gmra.mxu0 %v4520
        %v4626 = vpop.f32.mrf.mxu0
        %v4627 = vadd.f32 0.0, %v4626
        %v4628 = vpop.f32.mrf.mxu0
        %v4629 = vpop.f32.mrf.mxu0
        %v4630 = vadd.f32 0.0, %v4629
        %v4631 = vpop.f32.mrf.mxu0
        %4632 = vmatprep.mubr.bf16.mxu0 0
        %4633 = vmatmul.mubr.bf16.gmra.mxu0 %v4523
        %v4634 = vpop.f32.mrf.mxu0
        %v4635 = vadd.f32 0.0, %v4634
        %v4636 = vpop.f32.mrf.mxu0
        %v4637 = vpop.f32.mrf.mxu0
        %v4638 = vadd.f32 0.0, %v4637
        %v4639 = vpop.f32.mrf.mxu0
        %4640 = vmatprep.mubr.bf16.mxu0 0
        %4641 = vmatmul.mubr.bf16.gmra.mxu0 %v4526
        %v4642 = vpop.f32.mrf.mxu0
        %v4643 = vadd.f32 0.0, %v4642
        %v4644 = vpop.f32.mrf.mxu0
        %v4645 = vpop.f32.mrf.mxu0
        %v4646 = vadd.f32 0.0, %v4645
        %v4647 = vpop.f32.mrf.mxu0
        %4648 = vmatprep.mubr.bf16.mxu0 0
        %4649 = vmatmul.mubr.bf16.gmra.mxu0 %v4529
        %v4650 = vpop.f32.mrf.mxu0
        %v4651 = vadd.f32 0.0, %v4650
        %v4652 = vpop.f32.mrf.mxu0
        %v4653 = vpop.f32.mrf.mxu0
        %v4654 = vadd.f32 0.0, %v4653
        %v4655 = vpop.f32.mrf.mxu0
        %4656 = vmatprep.mubr.bf16.mxu0 0
        %4657 = vmatmul.mubr.bf16.gmra.mxu0 %v4532
        %v4658 = vpop.f32.mrf.mxu0
        %v4659 = vadd.f32 0.0, %v4658
        %v4660 = vpop.f32.mrf.mxu0
        %v4661 = vpop.f32.mrf.mxu0
        %v4662 = vadd.f32 0.0, %v4661
        %v4663 = vpop.f32.mrf.mxu0
        %4664 = vmatprep.mubr.bf16.mxu0 0
        %4665 = vmatmul.mubr.bf16.gmra.mxu0 %v4535
        %v4666 = vpop.f32.mrf.mxu0
        %v4667 = vadd.f32 0.0, %v4666
        %v4668 = vpop.f32.mrf.mxu0
        %v4669 = vpop.f32.mrf.mxu0
        %v4670 = vadd.f32 0.0, %v4669
        %v4671 = vpop.f32.mrf.mxu0
        %4672 = vmatprep.mubr.bf16.mxu0 0
        %4673 = vmatmul.mubr.bf16.gmra.mxu0 %v4538
        %v4674 = vpop.f32.mrf.mxu0
        %v4675 = vadd.f32 0.0, %v4674
        %v4676 = vpop.f32.mrf.mxu0
        %v4677 = vpop.f32.mrf.mxu0
        %v4678 = vadd.f32 0.0, %v4677
        %v4679 = vpop.f32.mrf.mxu0
        %4680 = vmatprep.mubr.bf16.mxu0 0
        %4681 = vmatmul.mubr.bf16.gmra.mxu0 %v4541
        %v4682 = vpop.f32.mrf.mxu0
        %v4683 = vadd.f32 0.0, %v4682
        %v4684 = vpop.f32.mrf.mxu0
        %v4685 = vpop.f32.mrf.mxu0
        %v4686 = vadd.f32 0.0, %v4685
        %v4687 = vpop.f32.mrf.mxu0
        %4688 = vmatprep.mubr.bf16.mxu0 0
        %4689 = vmatmul.mubr.bf16.gmra.mxu0 %v4544
        %v4690 = vpop.f32.mrf.mxu0
        %v4691 = vadd.f32 0.0, %v4690
        %v4692 = vpop.f32.mrf.mxu0
        %v4693 = vpop.f32.mrf.mxu0
        %v4694 = vadd.f32 0.0, %v4693
        %v4695 = vpop.f32.mrf.mxu0
        %4696 = vmatprep.mubr.bf16.mxu0 0
        %4697 = vmatmul.mubr.bf16.gmra.mxu0 %v4547
        %v4698 = vpop.f32.mrf.mxu0
        %v4699 = vadd.f32 0.0, %v4698
        %v4700 = vpop.f32.mrf.mxu0
        %v4701 = vpop.f32.mrf.mxu0
        %v4702 = vadd.f32 0.0, %v4701
        %v4703 = vpop.f32.mrf.mxu0
        %4704 = vmatprep.mubr.bf16.mxu0 0
        %4705 = vmatmul.mubr.bf16.gmra.mxu0 %v4550
        %v4706 = vpop.f32.mrf.mxu0
        %v4707 = vadd.f32 0.0, %v4706
        %v4708 = vpop.f32.mrf.mxu0
        %v4709 = vpop.f32.mrf.mxu0
        %v4710 = vadd.f32 0.0, %v4709
        %v4711 = vpop.f32.mrf.mxu0
        %4712 = vdwg.mxu0
        %v4713 = vadd.f32 %v4407, %v4587
        %v4714 = vadd.f32 %v4408, %v4590
        %v4715 = vadd.f32 %v4409, %v4595
        %v4716 = vadd.f32 %v4410, %v4598
        %v4717 = vadd.f32 %v4411, %v4603
        %v4718 = vadd.f32 %v4412, %v4606
        %v4719 = vadd.f32 %v4413, %v4611
        %v4720 = vadd.f32 %v4414, %v4614
        %v4721 = vadd.f32 %v4415, %v4619
        %v4722 = vadd.f32 %v4416, %v4622
        %v4723 = vadd.f32 %v4417, %v4627
        %v4724 = vadd.f32 %v4418, %v4630
        %v4725 = vadd.f32 %v4419, %v4635
        %v4726 = vadd.f32 %v4420, %v4638
        %v4727 = vadd.f32 %v4421, %v4643
        %v4728 = vadd.f32 %v4422, %v4646
        %v4729 = vadd.f32 %v4423, %v4651
        %v4730 = vadd.f32 %v4424, %v4654
        %v4731 = vadd.f32 %v4425, %v4659
        %v4732 = vadd.f32 %v4426, %v4662
        %v4733 = vadd.f32 %v4427, %v4667
        %v4734 = vadd.f32 %v4428, %v4670
        %v4735 = vadd.f32 %v4429, %v4675
        %v4736 = vadd.f32 %v4430, %v4678
        %v4737 = vadd.f32 %v4431, %v4683
        %v4738 = vadd.f32 %v4432, %v4686
        %v4739 = vadd.f32 %v4433, %v4691
        %v4740 = vadd.f32 %v4434, %v4694
        %v4741 = vadd.f32 %v4435, %v4699
        %v4742 = vadd.f32 %v4436, %v4702
        %v4743 = vadd.f32 %v4437, %v4707
        %v4744 = vadd.f32 %v4438, %v4710
        %v4745 = vld [vmem:[%s3247 + $0x2] sm:$0xff]
        %v4746 = vld [vmem:[%s3247 + $0xa] sm:$0xff]
        %v4747 = vld [vmem:[%s3247 + $0x1a] sm:$0xff]
        %v4748 = vld [vmem:[%s3247 + $0x22] sm:$0xff]
        %v4749 = vld [vmem:[%s3247 + $0x32] sm:$0xff]
        %v4750 = vld [vmem:[%s3247 + $0x3a] sm:$0xff]
        %v4751 = vld [vmem:[%s3247 + $0x4a] sm:$0xff]
        %v4752 = vld [vmem:[%s3247 + $0x52] sm:$0xff]
        %v4753 = vld [vmem:[%s3247 + $0x62] sm:$0xff]
        %v4754 = vld [vmem:[%s3247 + $0x6a] sm:$0xff]
        %v4755 = vld [vmem:[%s3247 + $0x7a] sm:$0xff]
        %v4756 = vld [vmem:[%s3247 + $0x82] sm:$0xff]
        %v4757 = vld [vmem:[%s3247 + $0x92] sm:$0xff]
        %v4758 = vld [vmem:[%s3247 + $0x9a] sm:$0xff]
        %v4759 = vld [vmem:[%s3247 + $0xaa] sm:$0xff]
        %v4760 = vld [vmem:[%s3247 + $0xb2] sm:$0xff]
        %v4761 = vld [vmem:[%s3247 + $0xc2] sm:$0xff]
        %v4762 = vld [vmem:[%s3247 + $0xca] sm:$0xff]
        %v4763 = vld [vmem:[%s3247 + $0xda] sm:$0xff]
        %v4764 = vld [vmem:[%s3247 + $0xe2] sm:$0xff]
        %v4765 = vld [vmem:[%s3247 + $0xf2] sm:$0xff]
        %v4766 = vld [vmem:[%s3247 + $0xfa] sm:$0xff]
        %v4767 = vld [vmem:[%s3247 + $0x10a] sm:$0xff]
        %v4768 = vld [vmem:[%s3247 + $0x112] sm:$0xff]
        %v4769 = vld [vmem:[%s3247 + $0x122] sm:$0xff]
        %v4770 = vld [vmem:[%s3247 + $0x12a] sm:$0xff]
        %v4771 = vld [vmem:[%s3247 + $0x13a] sm:$0xff]
        %v4772 = vld [vmem:[%s3247 + $0x142] sm:$0xff]
        %v4773 = vld [vmem:[%s3247 + $0x152] sm:$0xff]
        %v4774 = vld [vmem:[%s3247 + $0x15a] sm:$0xff]
        %v4775 = vld [vmem:[%s3247 + $0x16a] sm:$0xff]
        %v4776 = vld [vmem:[%s3247 + $0x172] sm:$0xff]
        %v4777 = vpack.c.bf16 %v4746, %v4745
        %v4778 = vpack.c.bf16 %v4748, %v4747
        %v4779 = vpack.c.bf16 %v4750, %v4749
        %v4780 = vpack.c.bf16 %v4752, %v4751
        %v4781 = vpack.c.bf16 %v4754, %v4753
        %v4782 = vpack.c.bf16 %v4756, %v4755
        %v4783 = vpack.c.bf16 %v4758, %v4757
        %v4784 = vpack.c.bf16 %v4760, %v4759
        %v4785 = vpack.c.bf16 %v4762, %v4761
        %v4786 = vpack.c.bf16 %v4764, %v4763
        %v4787 = vpack.c.bf16 %v4766, %v4765
        %v4788 = vpack.c.bf16 %v4768, %v4767
        %v4789 = vpack.c.bf16 %v4770, %v4769
        %v4790 = vpack.c.bf16 %v4772, %v4771
        %v4791 = vpack.c.bf16 %v4774, %v4773
        %v4792 = vpack.c.bf16 %v4776, %v4775
        %s4793 = scalar_lea.vmem [#allocation8], 80
        %v4794 = vld [vmem:[%s4793] sm:$0xf]
        %v4795 = vld [vmem:[%s4793 + $0x4] sm:$0xf]
        %v4796 = vld [vmem:[%s4793 + $0x8] sm:$0xf]
        %v4797 = vld [vmem:[%s4793 + $0xc] sm:$0xf]
        %v4802 = vunpack.c.l.b16 %v4794
        %v4803 = vunpack.c.l.b16 %v4795
        %v4804 = vunpack.c.l.b16 %v4796
        %v4805 = vunpack.c.l.b16 %v4797
        %v4806 = vpack.c.b16 %v4803, %v4802
        %v4807 = vpack.c.b16 %v4805, %v4804
        %v4811 = vsel %vm3191, %v4777, 0
        %v4814 = vsel %vm3191, %v4778, 0
        %v4817 = vsel %vm3191, %v4779, 0
        %v4820 = vsel %vm3191, %v4780, 0
        %v4823 = vsel %vm3191, %v4781, 0
        %v4826 = vsel %vm3191, %v4782, 0
        %v4829 = vsel %vm3191, %v4783, 0
        %v4832 = vsel %vm3191, %v4784, 0
        %v4835 = vsel %vm3191, %v4785, 0
        %v4838 = vsel %vm3191, %v4786, 0
        %v4841 = vsel %vm3191, %v4787, 0
        %v4844 = vsel %vm3191, %v4788, 0
        %v4847 = vsel %vm3191, %v4789, 0
        %v4850 = vsel %vm3191, %v4790, 0
        %v4853 = vsel %vm3191, %v4791, 0
        %v4856 = vsel %vm3191, %v4792, 0
        %4858 = vmatprep.subr.bf16.mxu0 0
        %4859 = vmatpush1.bf16.msra.mxu0 0
        %4860 = vmatprep.subr.bf16.mxu0 0
        %4861 = vmatpush1.bf16.msra.mxu0 0
        %4862 = vmatprep.subr.bf16.mxu0 0
        %4863 = vmatpush1.bf16.msra.mxu0 0
        %4864 = vmatprep.subr.bf16.mxu0 0
        %4865 = vmatpush1.bf16.msra.mxu0 0
        %4866 = vmatprep.subr.bf16.mxu0 0
        %4867 = vmatpush1.bf16.msra.mxu0 0
        %4868 = vmatprep.subr.bf16.mxu0 0
        %4869 = vmatpush1.bf16.msra.mxu0 0
        %4870 = vmatprep.subr.bf16.mxu0 0
        %4871 = vmatpush1.bf16.msra.mxu0 %v4807
        %4872 = vmatprep.subr.bf16.mxu0 0
        %4873 = vmatpush1.bf16.msra.mxu0 %v4806
        %4874 = vmatprep.subr.bf16.mxu0 0
        %4875 = vmatpush2.bf16.msra.mxu0 0
        %4876 = vmatprep.subr.bf16.mxu0 0
        %4877 = vmatpush2.bf16.msra.mxu0 0
        %4878 = vmatprep.subr.bf16.mxu0 0
        %4879 = vmatpush2.bf16.msra.mxu0 0
        %4880 = vmatprep.subr.bf16.mxu0 0
        %4881 = vmatpush2.bf16.msra.mxu0 0
        %4882 = vmatprep.subr.bf16.mxu0 0
        %4883 = vmatpush2.bf16.msra.mxu0 0
        %4884 = vmatprep.subr.bf16.mxu0 0
        %4885 = vmatpush2.bf16.msra.mxu0 0
        %4886 = vmatprep.subr.bf16.mxu0 0
        %4887 = vmatpush2.bf16.msra.mxu0 0
        %4888 = vmatprep.subr.bf16.mxu0 0
        %4889 = vmatpush2.bf16.msra.mxu0 0
        %4890 = vmatprep.mubr.bf16.mxu0 0
        %4891 = vmatmul.mubr.bf16.gmra.mxu0 %v4811
        %v4892 = vpop.f32.mrf.mxu0
        %v4893 = vadd.f32 0.0, %v4892
        %v4894 = vpop.f32.mrf.mxu0
        %v4895 = vpop.f32.mrf.mxu0
        %v4896 = vadd.f32 0.0, %v4895
        %v4897 = vpop.f32.mrf.mxu0
        %4898 = vmatprep.mubr.bf16.mxu0 0
        %4899 = vmatmul.mubr.bf16.gmra.mxu0 %v4814
        %v4900 = vpop.f32.mrf.mxu0
        %v4901 = vadd.f32 0.0, %v4900
        %v4902 = vpop.f32.mrf.mxu0
        %v4903 = vpop.f32.mrf.mxu0
        %v4904 = vadd.f32 0.0, %v4903
        %v4905 = vpop.f32.mrf.mxu0
        %4906 = vmatprep.mubr.bf16.mxu0 0
        %4907 = vmatmul.mubr.bf16.gmra.mxu0 %v4817
        %v4908 = vpop.f32.mrf.mxu0
        %v4909 = vadd.f32 0.0, %v4908
        %v4910 = vpop.f32.mrf.mxu0
        %v4911 = vpop.f32.mrf.mxu0
        %v4912 = vadd.f32 0.0, %v4911
        %v4913 = vpop.f32.mrf.mxu0
        %4914 = vmatprep.mubr.bf16.mxu0 0
        %4915 = vmatmul.mubr.bf16.gmra.mxu0 %v4820
        %v4916 = vpop.f32.mrf.mxu0
        %v4917 = vadd.f32 0.0, %v4916
        %v4918 = vpop.f32.mrf.mxu0
        %v4919 = vpop.f32.mrf.mxu0
        %v4920 = vadd.f32 0.0, %v4919
        %v4921 = vpop.f32.mrf.mxu0
        %4922 = vmatprep.mubr.bf16.mxu0 0
        %4923 = vmatmul.mubr.bf16.gmra.mxu0 %v4823
        %v4924 = vpop.f32.mrf.mxu0
        %v4925 = vadd.f32 0.0, %v4924
        %v4926 = vpop.f32.mrf.mxu0
        %v4927 = vpop.f32.mrf.mxu0
        %v4928 = vadd.f32 0.0, %v4927
        %v4929 = vpop.f32.mrf.mxu0
        %4930 = vmatprep.mubr.bf16.mxu0 0
        %4931 = vmatmul.mubr.bf16.gmra.mxu0 %v4826
        %v4932 = vpop.f32.mrf.mxu0
        %v4933 = vadd.f32 0.0, %v4932
        %v4934 = vpop.f32.mrf.mxu0
        %v4935 = vpop.f32.mrf.mxu0
        %v4936 = vadd.f32 0.0, %v4935
        %v4937 = vpop.f32.mrf.mxu0
        %4938 = vmatprep.mubr.bf16.mxu0 0
        %4939 = vmatmul.mubr.bf16.gmra.mxu0 %v4829
        %v4940 = vpop.f32.mrf.mxu0
        %v4941 = vadd.f32 0.0, %v4940
        %v4942 = vpop.f32.mrf.mxu0
        %v4943 = vpop.f32.mrf.mxu0
        %v4944 = vadd.f32 0.0, %v4943
        %v4945 = vpop.f32.mrf.mxu0
        %4946 = vmatprep.mubr.bf16.mxu0 0
        %4947 = vmatmul.mubr.bf16.gmra.mxu0 %v4832
        %v4948 = vpop.f32.mrf.mxu0
        %v4949 = vadd.f32 0.0, %v4948
        %v4950 = vpop.f32.mrf.mxu0
        %v4951 = vpop.f32.mrf.mxu0
        %v4952 = vadd.f32 0.0, %v4951
        %v4953 = vpop.f32.mrf.mxu0
        %4954 = vmatprep.mubr.bf16.mxu0 0
        %4955 = vmatmul.mubr.bf16.gmra.mxu0 %v4835
        %v4956 = vpop.f32.mrf.mxu0
        %v4957 = vadd.f32 0.0, %v4956
        %v4958 = vpop.f32.mrf.mxu0
        %v4959 = vpop.f32.mrf.mxu0
        %v4960 = vadd.f32 0.0, %v4959
        %v4961 = vpop.f32.mrf.mxu0
        %4962 = vmatprep.mubr.bf16.mxu0 0
        %4963 = vmatmul.mubr.bf16.gmra.mxu0 %v4838
        %v4964 = vpop.f32.mrf.mxu0
        %v4965 = vadd.f32 0.0, %v4964
        %v4966 = vpop.f32.mrf.mxu0
        %v4967 = vpop.f32.mrf.mxu0
        %v4968 = vadd.f32 0.0, %v4967
        %v4969 = vpop.f32.mrf.mxu0
        %4970 = vmatprep.mubr.bf16.mxu0 0
        %4971 = vmatmul.mubr.bf16.gmra.mxu0 %v4841
        %v4972 = vpop.f32.mrf.mxu0
        %v4973 = vadd.f32 0.0, %v4972
        %v4974 = vpop.f32.mrf.mxu0
        %v4975 = vpop.f32.mrf.mxu0
        %v4976 = vadd.f32 0.0, %v4975
        %v4977 = vpop.f32.mrf.mxu0
        %4978 = vmatprep.mubr.bf16.mxu0 0
        %4979 = vmatmul.mubr.bf16.gmra.mxu0 %v4844
        %v4980 = vpop.f32.mrf.mxu0
        %v4981 = vadd.f32 0.0, %v4980
        %v4982 = vpop.f32.mrf.mxu0
        %v4983 = vpop.f32.mrf.mxu0
        %v4984 = vadd.f32 0.0, %v4983
        %v4985 = vpop.f32.mrf.mxu0
        %4986 = vmatprep.mubr.bf16.mxu0 0
        %4987 = vmatmul.mubr.bf16.gmra.mxu0 %v4847
        %v4988 = vpop.f32.mrf.mxu0
        %v4989 = vadd.f32 0.0, %v4988
        %v4990 = vpop.f32.mrf.mxu0
        %v4991 = vpop.f32.mrf.mxu0
        %v4992 = vadd.f32 0.0, %v4991
        %v4993 = vpop.f32.mrf.mxu0
        %4994 = vmatprep.mubr.bf16.mxu0 0
        %4995 = vmatmul.mubr.bf16.gmra.mxu0 %v4850
        %v4996 = vpop.f32.mrf.mxu0
        %v4997 = vadd.f32 0.0, %v4996
        %v4998 = vpop.f32.mrf.mxu0
        %v4999 = vpop.f32.mrf.mxu0
        %v5000 = vadd.f32 0.0, %v4999
        %v5001 = vpop.f32.mrf.mxu0
        %5002 = vmatprep.mubr.bf16.mxu0 0
        %5003 = vmatmul.mubr.bf16.gmra.mxu0 %v4853
        %v5004 = vpop.f32.mrf.mxu0
        %v5005 = vadd.f32 0.0, %v5004
        %v5006 = vpop.f32.mrf.mxu0
        %v5007 = vpop.f32.mrf.mxu0
        %v5008 = vadd.f32 0.0, %v5007
        %v5009 = vpop.f32.mrf.mxu0
        %5010 = vmatprep.mubr.bf16.mxu0 0
        %5011 = vmatmul.mubr.bf16.gmra.mxu0 %v4856
        %v5012 = vpop.f32.mrf.mxu0
        %v5013 = vadd.f32 0.0, %v5012
        %v5014 = vpop.f32.mrf.mxu0
        %v5015 = vpop.f32.mrf.mxu0
        %v5016 = vadd.f32 0.0, %v5015
        %v5017 = vpop.f32.mrf.mxu0
        %5018 = vdwg.mxu0
        %v5019 = vadd.f32 %v4713, %v4893
        %v5020 = vadd.f32 %v4714, %v4896
        %v5021 = vadd.f32 %v4715, %v4901
        %v5022 = vadd.f32 %v4716, %v4904
        %v5023 = vadd.f32 %v4717, %v4909
        %v5024 = vadd.f32 %v4718, %v4912
        %v5025 = vadd.f32 %v4719, %v4917
        %v5026 = vadd.f32 %v4720, %v4920
        %v5027 = vadd.f32 %v4721, %v4925
        %v5028 = vadd.f32 %v4722, %v4928
        %v5029 = vadd.f32 %v4723, %v4933
        %v5030 = vadd.f32 %v4724, %v4936
        %v5031 = vadd.f32 %v4725, %v4941
        %v5032 = vadd.f32 %v4726, %v4944
        %v5033 = vadd.f32 %v4727, %v4949
        %v5034 = vadd.f32 %v4728, %v4952
        %v5035 = vadd.f32 %v4729, %v4957
        %v5036 = vadd.f32 %v4730, %v4960
        %v5037 = vadd.f32 %v4731, %v4965
        %v5038 = vadd.f32 %v4732, %v4968
        %v5039 = vadd.f32 %v4733, %v4973
        %v5040 = vadd.f32 %v4734, %v4976
        %v5041 = vadd.f32 %v4735, %v4981
        %v5042 = vadd.f32 %v4736, %v4984
        %v5043 = vadd.f32 %v4737, %v4989
        %v5044 = vadd.f32 %v4738, %v4992
        %v5045 = vadd.f32 %v4739, %v4997
        %v5046 = vadd.f32 %v4740, %v5000
        %v5047 = vadd.f32 %v4741, %v5005
        %v5048 = vadd.f32 %v4742, %v5008
        %v5049 = vadd.f32 %v4743, %v5013
        %v5050 = vadd.f32 %v4744, %v5016
        %s5051 = scalar_lea.vmem [#allocation3], 48
        %v5052 = vld [vmem:[%s5051] sm:$0xff]
        %v5053 = vld [vmem:[%s5051 + $0x8] sm:$0xff]
        %v5054 = vld [vmem:[%s5051 + $0x18] sm:$0xff]
        %v5055 = vld [vmem:[%s5051 + $0x20] sm:$0xff]
        %v5056 = vld [vmem:[%s5051 + $0x30] sm:$0xff]
        %v5057 = vld [vmem:[%s5051 + $0x38] sm:$0xff]
        %v5058 = vld [vmem:[%s5051 + $0x48] sm:$0xff]
        %v5059 = vld [vmem:[%s5051 + $0x50] sm:$0xff]
        %v5060 = vld [vmem:[%s5051 + $0x60] sm:$0xff]
        %v5061 = vld [vmem:[%s5051 + $0x68] sm:$0xff]
        %v5062 = vld [vmem:[%s5051 + $0x78] sm:$0xff]
        %v5063 = vld [vmem:[%s5051 + $0x80] sm:$0xff]
        %v5064 = vld [vmem:[%s5051 + $0x90] sm:$0xff]
        %v5065 = vld [vmem:[%s5051 + $0x98] sm:$0xff]
        %v5066 = vld [vmem:[%s5051 + $0xa8] sm:$0xff]
        %v5067 = vld [vmem:[%s5051 + $0xb0] sm:$0xff]
        %v5068 = vld [vmem:[%s5051 + $0xc0] sm:$0xff]
        %v5069 = vld [vmem:[%s5051 + $0xc8] sm:$0xff]
        %v5070 = vld [vmem:[%s5051 + $0xd8] sm:$0xff]
        %v5071 = vld [vmem:[%s5051 + $0xe0] sm:$0xff]
        %v5072 = vld [vmem:[%s5051 + $0xf0] sm:$0xff]
        %v5073 = vld [vmem:[%s5051 + $0xf8] sm:$0xff]
        %v5074 = vld [vmem:[%s5051 + $0x108] sm:$0xff]
        %v5075 = vld [vmem:[%s5051 + $0x110] sm:$0xff]
        %v5076 = vld [vmem:[%s5051 + $0x120] sm:$0xff]
        %v5077 = vld [vmem:[%s5051 + $0x128] sm:$0xff]
        %v5078 = vld [vmem:[%s5051 + $0x138] sm:$0xff]
        %v5079 = vld [vmem:[%s5051 + $0x140] sm:$0xff]
        %v5080 = vld [vmem:[%s5051 + $0x150] sm:$0xff]
        %v5081 = vld [vmem:[%s5051 + $0x158] sm:$0xff]
        %v5082 = vld [vmem:[%s5051 + $0x168] sm:$0xff]
        %v5083 = vld [vmem:[%s5051 + $0x170] sm:$0xff]
        %v5084 = vpack.c.bf16 %v5053, %v5052
        %v5085 = vpack.c.bf16 %v5055, %v5054
        %v5086 = vpack.c.bf16 %v5057, %v5056
        %v5087 = vpack.c.bf16 %v5059, %v5058
        %v5088 = vpack.c.bf16 %v5061, %v5060
        %v5089 = vpack.c.bf16 %v5063, %v5062
        %v5090 = vpack.c.bf16 %v5065, %v5064
        %v5091 = vpack.c.bf16 %v5067, %v5066
        %v5092 = vpack.c.bf16 %v5069, %v5068
        %v5093 = vpack.c.bf16 %v5071, %v5070
        %v5094 = vpack.c.bf16 %v5073, %v5072
        %v5095 = vpack.c.bf16 %v5075, %v5074
        %v5096 = vpack.c.bf16 %v5077, %v5076
        %v5097 = vpack.c.bf16 %v5079, %v5078
        %v5098 = vpack.c.bf16 %v5081, %v5080
        %v5099 = vpack.c.bf16 %v5083, %v5082
        %s5100 = scalar_lea.vmem [#allocation8], 96
        %v5101 = vld [vmem:[%s5100] sm:$0xf]
        %v5102 = vld [vmem:[%s5100 + $0x4] sm:$0xf]
        %v5103 = vld [vmem:[%s5100 + $0x8] sm:$0xf]
        %v5104 = vld [vmem:[%s5100 + $0xc] sm:$0xf]
        %v5109 = vunpack.c.l.b16 %v5101
        %v5110 = vunpack.c.l.b16 %v5102
        %v5111 = vunpack.c.l.b16 %v5103
        %v5112 = vunpack.c.l.b16 %v5104
        %v5113 = vpack.c.b16 %v5110, %v5109
        %v5114 = vpack.c.b16 %v5112, %v5111
        %v5118 = vsel %vm3191, %v5084, 0
        %v5121 = vsel %vm3191, %v5085, 0
        %v5124 = vsel %vm3191, %v5086, 0
        %v5127 = vsel %vm3191, %v5087, 0
        %v5130 = vsel %vm3191, %v5088, 0
        %v5133 = vsel %vm3191, %v5089, 0
        %v5136 = vsel %vm3191, %v5090, 0
        %v5139 = vsel %vm3191, %v5091, 0
        %v5142 = vsel %vm3191, %v5092, 0
        %v5145 = vsel %vm3191, %v5093, 0
        %v5148 = vsel %vm3191, %v5094, 0
        %v5151 = vsel %vm3191, %v5095, 0
        %v5154 = vsel %vm3191, %v5096, 0
        %v5157 = vsel %vm3191, %v5097, 0
        %v5160 = vsel %vm3191, %v5098, 0
        %v5163 = vsel %vm3191, %v5099, 0
        %5165 = vmatprep.subr.bf16.mxu0 0
        %5166 = vmatpush1.bf16.msra.mxu0 0
        %5167 = vmatprep.subr.bf16.mxu0 0
        %5168 = vmatpush1.bf16.msra.mxu0 0
        %5169 = vmatprep.subr.bf16.mxu0 0
        %5170 = vmatpush1.bf16.msra.mxu0 0
        %5171 = vmatprep.subr.bf16.mxu0 0
        %5172 = vmatpush1.bf16.msra.mxu0 0
        %5173 = vmatprep.subr.bf16.mxu0 0
        %5174 = vmatpush1.bf16.msra.mxu0 0
        %5175 = vmatprep.subr.bf16.mxu0 0
        %5176 = vmatpush1.bf16.msra.mxu0 0
        %5177 = vmatprep.subr.bf16.mxu0 0
        %5178 = vmatpush1.bf16.msra.mxu0 %v5114
        %5179 = vmatprep.subr.bf16.mxu0 0
        %5180 = vmatpush1.bf16.msra.mxu0 %v5113
        %5181 = vmatprep.subr.bf16.mxu0 0
        %5182 = vmatpush2.bf16.msra.mxu0 0
        %5183 = vmatprep.subr.bf16.mxu0 0
        %5184 = vmatpush2.bf16.msra.mxu0 0
        %5185 = vmatprep.subr.bf16.mxu0 0
        %5186 = vmatpush2.bf16.msra.mxu0 0
        %5187 = vmatprep.subr.bf16.mxu0 0
        %5188 = vmatpush2.bf16.msra.mxu0 0
        %5189 = vmatprep.subr.bf16.mxu0 0
        %5190 = vmatpush2.bf16.msra.mxu0 0
        %5191 = vmatprep.subr.bf16.mxu0 0
        %5192 = vmatpush2.bf16.msra.mxu0 0
        %5193 = vmatprep.subr.bf16.mxu0 0
        %5194 = vmatpush2.bf16.msra.mxu0 0
        %5195 = vmatprep.subr.bf16.mxu0 0
        %5196 = vmatpush2.bf16.msra.mxu0 0
        %5197 = vmatprep.mubr.bf16.mxu0 0
        %5198 = vmatmul.mubr.bf16.gmra.mxu0 %v5118
        %v5199 = vpop.f32.mrf.mxu0
        %v5200 = vadd.f32 0.0, %v5199
        %v5201 = vpop.f32.mrf.mxu0
        %v5202 = vpop.f32.mrf.mxu0
        %v5203 = vadd.f32 0.0, %v5202
        %v5204 = vpop.f32.mrf.mxu0
        %5205 = vmatprep.mubr.bf16.mxu0 0
        %5206 = vmatmul.mubr.bf16.gmra.mxu0 %v5121
        %v5207 = vpop.f32.mrf.mxu0
        %v5208 = vadd.f32 0.0, %v5207
        %v5209 = vpop.f32.mrf.mxu0
        %v5210 = vpop.f32.mrf.mxu0
        %v5211 = vadd.f32 0.0, %v5210
        %v5212 = vpop.f32.mrf.mxu0
        %5213 = vmatprep.mubr.bf16.mxu0 0
        %5214 = vmatmul.mubr.bf16.gmra.mxu0 %v5124
        %v5215 = vpop.f32.mrf.mxu0
        %v5216 = vadd.f32 0.0, %v5215
        %v5217 = vpop.f32.mrf.mxu0
        %v5218 = vpop.f32.mrf.mxu0
        %v5219 = vadd.f32 0.0, %v5218
        %v5220 = vpop.f32.mrf.mxu0
        %5221 = vmatprep.mubr.bf16.mxu0 0
        %5222 = vmatmul.mubr.bf16.gmra.mxu0 %v5127
        %v5223 = vpop.f32.mrf.mxu0
        %v5224 = vadd.f32 0.0, %v5223
        %v5225 = vpop.f32.mrf.mxu0
        %v5226 = vpop.f32.mrf.mxu0
        %v5227 = vadd.f32 0.0, %v5226
        %v5228 = vpop.f32.mrf.mxu0
        %5229 = vmatprep.mubr.bf16.mxu0 0
        %5230 = vmatmul.mubr.bf16.gmra.mxu0 %v5130
        %v5231 = vpop.f32.mrf.mxu0
        %v5232 = vadd.f32 0.0, %v5231
        %v5233 = vpop.f32.mrf.mxu0
        %v5234 = vpop.f32.mrf.mxu0
        %v5235 = vadd.f32 0.0, %v5234
        %v5236 = vpop.f32.mrf.mxu0
        %5237 = vmatprep.mubr.bf16.mxu0 0
        %5238 = vmatmul.mubr.bf16.gmra.mxu0 %v5133
        %v5239 = vpop.f32.mrf.mxu0
        %v5240 = vadd.f32 0.0, %v5239
        %v5241 = vpop.f32.mrf.mxu0
        %v5242 = vpop.f32.mrf.mxu0
        %v5243 = vadd.f32 0.0, %v5242
        %v5244 = vpop.f32.mrf.mxu0
        %5245 = vmatprep.mubr.bf16.mxu0 0
        %5246 = vmatmul.mubr.bf16.gmra.mxu0 %v5136
        %v5247 = vpop.f32.mrf.mxu0
        %v5248 = vadd.f32 0.0, %v5247
        %v5249 = vpop.f32.mrf.mxu0
        %v5250 = vpop.f32.mrf.mxu0
        %v5251 = vadd.f32 0.0, %v5250
        %v5252 = vpop.f32.mrf.mxu0
        %5253 = vmatprep.mubr.bf16.mxu0 0
        %5254 = vmatmul.mubr.bf16.gmra.mxu0 %v5139
        %v5255 = vpop.f32.mrf.mxu0
        %v5256 = vadd.f32 0.0, %v5255
        %v5257 = vpop.f32.mrf.mxu0
        %v5258 = vpop.f32.mrf.mxu0
        %v5259 = vadd.f32 0.0, %v5258
        %v5260 = vpop.f32.mrf.mxu0
        %5261 = vmatprep.mubr.bf16.mxu0 0
        %5262 = vmatmul.mubr.bf16.gmra.mxu0 %v5142
        %v5263 = vpop.f32.mrf.mxu0
        %v5264 = vadd.f32 0.0, %v5263
        %v5265 = vpop.f32.mrf.mxu0
        %v5266 = vpop.f32.mrf.mxu0
        %v5267 = vadd.f32 0.0, %v5266
        %v5268 = vpop.f32.mrf.mxu0
        %5269 = vmatprep.mubr.bf16.mxu0 0
        %5270 = vmatmul.mubr.bf16.gmra.mxu0 %v5145
        %v5271 = vpop.f32.mrf.mxu0
        %v5272 = vadd.f32 0.0, %v5271
        %v5273 = vpop.f32.mrf.mxu0
        %v5274 = vpop.f32.mrf.mxu0
        %v5275 = vadd.f32 0.0, %v5274
        %v5276 = vpop.f32.mrf.mxu0
        %5277 = vmatprep.mubr.bf16.mxu0 0
        %5278 = vmatmul.mubr.bf16.gmra.mxu0 %v5148
        %v5279 = vpop.f32.mrf.mxu0
        %v5280 = vadd.f32 0.0, %v5279
        %v5281 = vpop.f32.mrf.mxu0
        %v5282 = vpop.f32.mrf.mxu0
        %v5283 = vadd.f32 0.0, %v5282
        %v5284 = vpop.f32.mrf.mxu0
        %5285 = vmatprep.mubr.bf16.mxu0 0
        %5286 = vmatmul.mubr.bf16.gmra.mxu0 %v5151
        %v5287 = vpop.f32.mrf.mxu0
        %v5288 = vadd.f32 0.0, %v5287
        %v5289 = vpop.f32.mrf.mxu0
        %v5290 = vpop.f32.mrf.mxu0
        %v5291 = vadd.f32 0.0, %v5290
        %v5292 = vpop.f32.mrf.mxu0
        %5293 = vmatprep.mubr.bf16.mxu0 0
        %5294 = vmatmul.mubr.bf16.gmra.mxu0 %v5154
        %v5295 = vpop.f32.mrf.mxu0
        %v5296 = vadd.f32 0.0, %v5295
        %v5297 = vpop.f32.mrf.mxu0
        %v5298 = vpop.f32.mrf.mxu0
        %v5299 = vadd.f32 0.0, %v5298
        %v5300 = vpop.f32.mrf.mxu0
        %5301 = vmatprep.mubr.bf16.mxu0 0
        %5302 = vmatmul.mubr.bf16.gmra.mxu0 %v5157
        %v5303 = vpop.f32.mrf.mxu0
        %v5304 = vadd.f32 0.0, %v5303
        %v5305 = vpop.f32.mrf.mxu0
        %v5306 = vpop.f32.mrf.mxu0
        %v5307 = vadd.f32 0.0, %v5306
        %v5308 = vpop.f32.mrf.mxu0
        %5309 = vmatprep.mubr.bf16.mxu0 0
        %5310 = vmatmul.mubr.bf16.gmra.mxu0 %v5160
        %v5311 = vpop.f32.mrf.mxu0
        %v5312 = vadd.f32 0.0, %v5311
        %v5313 = vpop.f32.mrf.mxu0
        %v5314 = vpop.f32.mrf.mxu0
        %v5315 = vadd.f32 0.0, %v5314
        %v5316 = vpop.f32.mrf.mxu0
        %5317 = vmatprep.mubr.bf16.mxu0 0
        %5318 = vmatmul.mubr.bf16.gmra.mxu0 %v5163
        %v5319 = vpop.f32.mrf.mxu0
        %v5320 = vadd.f32 0.0, %v5319
        %v5321 = vpop.f32.mrf.mxu0
        %v5322 = vpop.f32.mrf.mxu0
        %v5323 = vadd.f32 0.0, %v5322
        %v5324 = vpop.f32.mrf.mxu0
        %5325 = vdwg.mxu0
        %v5326 = vadd.f32 %v5019, %v5200
        %v5327 = vadd.f32 %v5020, %v5203
        %v5328 = vadd.f32 %v5021, %v5208
        %v5329 = vadd.f32 %v5022, %v5211
        %v5330 = vadd.f32 %v5023, %v5216
        %v5331 = vadd.f32 %v5024, %v5219
        %v5332 = vadd.f32 %v5025, %v5224
        %v5333 = vadd.f32 %v5026, %v5227
        %v5334 = vadd.f32 %v5027, %v5232
        %v5335 = vadd.f32 %v5028, %v5235
        %v5336 = vadd.f32 %v5029, %v5240
        %v5337 = vadd.f32 %v5030, %v5243
        %v5338 = vadd.f32 %v5031, %v5248
        %v5339 = vadd.f32 %v5032, %v5251
        %v5340 = vadd.f32 %v5033, %v5256
        %v5341 = vadd.f32 %v5034, %v5259
        %v5342 = vadd.f32 %v5035, %v5264
        %v5343 = vadd.f32 %v5036, %v5267
        %v5344 = vadd.f32 %v5037, %v5272
        %v5345 = vadd.f32 %v5038, %v5275
        %v5346 = vadd.f32 %v5039, %v5280
        %v5347 = vadd.f32 %v5040, %v5283
        %v5348 = vadd.f32 %v5041, %v5288
        %v5349 = vadd.f32 %v5042, %v5291
        %v5350 = vadd.f32 %v5043, %v5296
        %v5351 = vadd.f32 %v5044, %v5299
        %v5352 = vadd.f32 %v5045, %v5304
        %v5353 = vadd.f32 %v5046, %v5307
        %v5354 = vadd.f32 %v5047, %v5312
        %v5355 = vadd.f32 %v5048, %v5315
        %v5356 = vadd.f32 %v5049, %v5320
        %v5357 = vadd.f32 %v5050, %v5323
        %v5358 = vld [vmem:[%s5051 + $0x1] sm:$0xff]
        %v5359 = vld [vmem:[%s5051 + $0x9] sm:$0xff]
        %v5360 = vld [vmem:[%s5051 + $0x19] sm:$0xff]
        %v5361 = vld [vmem:[%s5051 + $0x21] sm:$0xff]
        %v5362 = vld [vmem:[%s5051 + $0x31] sm:$0xff]
        %v5363 = vld [vmem:[%s5051 + $0x39] sm:$0xff]
        %v5364 = vld [vmem:[%s5051 + $0x49] sm:$0xff]
        %v5365 = vld [vmem:[%s5051 + $0x51] sm:$0xff]
        %v5366 = vld [vmem:[%s5051 + $0x61] sm:$0xff]
        %v5367 = vld [vmem:[%s5051 + $0x69] sm:$0xff]
        %v5368 = vld [vmem:[%s5051 + $0x79] sm:$0xff]
        %v5369 = vld [vmem:[%s5051 + $0x81] sm:$0xff]
        %v5370 = vld [vmem:[%s5051 + $0x91] sm:$0xff]
        %v5371 = vld [vmem:[%s5051 + $0x99] sm:$0xff]
        %v5372 = vld [vmem:[%s5051 + $0xa9] sm:$0xff]
        %v5373 = vld [vmem:[%s5051 + $0xb1] sm:$0xff]
        %v5374 = vld [vmem:[%s5051 + $0xc1] sm:$0xff]
        %v5375 = vld [vmem:[%s5051 + $0xc9] sm:$0xff]
        %v5376 = vld [vmem:[%s5051 + $0xd9] sm:$0xff]
        %v5377 = vld [vmem:[%s5051 + $0xe1] sm:$0xff]
        %v5378 = vld [vmem:[%s5051 + $0xf1] sm:$0xff]
        %v5379 = vld [vmem:[%s5051 + $0xf9] sm:$0xff]
        %v5380 = vld [vmem:[%s5051 + $0x109] sm:$0xff]
        %v5381 = vld [vmem:[%s5051 + $0x111] sm:$0xff]
        %v5382 = vld [vmem:[%s5051 + $0x121] sm:$0xff]
        %v5383 = vld [vmem:[%s5051 + $0x129] sm:$0xff]
        %v5384 = vld [vmem:[%s5051 + $0x139] sm:$0xff]
        %v5385 = vld [vmem:[%s5051 + $0x141] sm:$0xff]
        %v5386 = vld [vmem:[%s5051 + $0x151] sm:$0xff]
        %v5387 = vld [vmem:[%s5051 + $0x159] sm:$0xff]
        %v5388 = vld [vmem:[%s5051 + $0x169] sm:$0xff]
        %v5389 = vld [vmem:[%s5051 + $0x171] sm:$0xff]
        %v5390 = vpack.c.bf16 %v5359, %v5358
        %v5391 = vpack.c.bf16 %v5361, %v5360
        %v5392 = vpack.c.bf16 %v5363, %v5362
        %v5393 = vpack.c.bf16 %v5365, %v5364
        %v5394 = vpack.c.bf16 %v5367, %v5366
        %v5395 = vpack.c.bf16 %v5369, %v5368
        %v5396 = vpack.c.bf16 %v5371, %v5370
        %v5397 = vpack.c.bf16 %v5373, %v5372
        %v5398 = vpack.c.bf16 %v5375, %v5374
        %v5399 = vpack.c.bf16 %v5377, %v5376
        %v5400 = vpack.c.bf16 %v5379, %v5378
        %v5401 = vpack.c.bf16 %v5381, %v5380
        %v5402 = vpack.c.bf16 %v5383, %v5382
        %v5403 = vpack.c.bf16 %v5385, %v5384
        %v5404 = vpack.c.bf16 %v5387, %v5386
        %v5405 = vpack.c.bf16 %v5389, %v5388
        %s5406 = scalar_lea.vmem [#allocation8], 112
        %v5407 = vld [vmem:[%s5406] sm:$0xf]
        %v5408 = vld [vmem:[%s5406 + $0x4] sm:$0xf]
        %v5409 = vld [vmem:[%s5406 + $0x8] sm:$0xf]
        %v5410 = vld [vmem:[%s5406 + $0xc] sm:$0xf]
        %v5415 = vunpack.c.l.b16 %v5407
        %v5416 = vunpack.c.l.b16 %v5408
        %v5417 = vunpack.c.l.b16 %v5409
        %v5418 = vunpack.c.l.b16 %v5410
        %v5419 = vpack.c.b16 %v5416, %v5415
        %v5420 = vpack.c.b16 %v5418, %v5417
        %v5424 = vsel %vm3191, %v5390, 0
        %v5427 = vsel %vm3191, %v5391, 0
        %v5430 = vsel %vm3191, %v5392, 0
        %v5433 = vsel %vm3191, %v5393, 0
        %v5436 = vsel %vm3191, %v5394, 0
        %v5439 = vsel %vm3191, %v5395, 0
        %v5442 = vsel %vm3191, %v5396, 0
        %v5445 = vsel %vm3191, %v5397, 0
        %v5448 = vsel %vm3191, %v5398, 0
        %v5451 = vsel %vm3191, %v5399, 0
        %v5454 = vsel %vm3191, %v5400, 0
        %v5457 = vsel %vm3191, %v5401, 0
        %v5460 = vsel %vm3191, %v5402, 0
        %v5463 = vsel %vm3191, %v5403, 0
        %v5466 = vsel %vm3191, %v5404, 0
        %v5469 = vsel %vm3191, %v5405, 0
        %5471 = vmatprep.subr.bf16.mxu0 0
        %5472 = vmatpush1.bf16.msra.mxu0 0
        %5473 = vmatprep.subr.bf16.mxu0 0
        %5474 = vmatpush1.bf16.msra.mxu0 0
        %5475 = vmatprep.subr.bf16.mxu0 0
        %5476 = vmatpush1.bf16.msra.mxu0 0
        %5477 = vmatprep.subr.bf16.mxu0 0
        %5478 = vmatpush1.bf16.msra.mxu0 0
        %5479 = vmatprep.subr.bf16.mxu0 0
        %5480 = vmatpush1.bf16.msra.mxu0 0
        %5481 = vmatprep.subr.bf16.mxu0 0
        %5482 = vmatpush1.bf16.msra.mxu0 0
        %5483 = vmatprep.subr.bf16.mxu0 0
        %5484 = vmatpush1.bf16.msra.mxu0 %v5420
        %5485 = vmatprep.subr.bf16.mxu0 0
        %5486 = vmatpush1.bf16.msra.mxu0 %v5419
        %5487 = vmatprep.subr.bf16.mxu0 0
        %5488 = vmatpush2.bf16.msra.mxu0 0
        %5489 = vmatprep.subr.bf16.mxu0 0
        %5490 = vmatpush2.bf16.msra.mxu0 0
        %5491 = vmatprep.subr.bf16.mxu0 0
        %5492 = vmatpush2.bf16.msra.mxu0 0
        %5493 = vmatprep.subr.bf16.mxu0 0
        %5494 = vmatpush2.bf16.msra.mxu0 0
        %5495 = vmatprep.subr.bf16.mxu0 0
        %5496 = vmatpush2.bf16.msra.mxu0 0
        %5497 = vmatprep.subr.bf16.mxu0 0
        %5498 = vmatpush2.bf16.msra.mxu0 0
        %5499 = vmatprep.subr.bf16.mxu0 0
        %5500 = vmatpush2.bf16.msra.mxu0 0
        %5501 = vmatprep.subr.bf16.mxu0 0
        %5502 = vmatpush2.bf16.msra.mxu0 0
        %5503 = vmatprep.mubr.bf16.mxu0 0
        %5504 = vmatmul.mubr.bf16.gmra.mxu0 %v5424
        %v5505 = vpop.f32.mrf.mxu0
        %v5506 = vadd.f32 0.0, %v5505
        %v5507 = vpop.f32.mrf.mxu0
        %v5508 = vpop.f32.mrf.mxu0
        %v5509 = vadd.f32 0.0, %v5508
        %v5510 = vpop.f32.mrf.mxu0
        %5511 = vmatprep.mubr.bf16.mxu0 0
        %5512 = vmatmul.mubr.bf16.gmra.mxu0 %v5427
        %v5513 = vpop.f32.mrf.mxu0
        %v5514 = vadd.f32 0.0, %v5513
        %v5515 = vpop.f32.mrf.mxu0
        %v5516 = vpop.f32.mrf.mxu0
        %v5517 = vadd.f32 0.0, %v5516
        %v5518 = vpop.f32.mrf.mxu0
        %5519 = vmatprep.mubr.bf16.mxu0 0
        %5520 = vmatmul.mubr.bf16.gmra.mxu0 %v5430
        %v5521 = vpop.f32.mrf.mxu0
        %v5522 = vadd.f32 0.0, %v5521
        %v5523 = vpop.f32.mrf.mxu0
        %v5524 = vpop.f32.mrf.mxu0
        %v5525 = vadd.f32 0.0, %v5524
        %v5526 = vpop.f32.mrf.mxu0
        %5527 = vmatprep.mubr.bf16.mxu0 0
        %5528 = vmatmul.mubr.bf16.gmra.mxu0 %v5433
        %v5529 = vpop.f32.mrf.mxu0
        %v5530 = vadd.f32 0.0, %v5529
        %v5531 = vpop.f32.mrf.mxu0
        %v5532 = vpop.f32.mrf.mxu0
        %v5533 = vadd.f32 0.0, %v5532
        %v5534 = vpop.f32.mrf.mxu0
        %5535 = vmatprep.mubr.bf16.mxu0 0
        %5536 = vmatmul.mubr.bf16.gmra.mxu0 %v5436
        %v5537 = vpop.f32.mrf.mxu0
        %v5538 = vadd.f32 0.0, %v5537
        %v5539 = vpop.f32.mrf.mxu0
        %v5540 = vpop.f32.mrf.mxu0
        %v5541 = vadd.f32 0.0, %v5540
        %v5542 = vpop.f32.mrf.mxu0
        %5543 = vmatprep.mubr.bf16.mxu0 0
        %5544 = vmatmul.mubr.bf16.gmra.mxu0 %v5439
        %v5545 = vpop.f32.mrf.mxu0
        %v5546 = vadd.f32 0.0, %v5545
        %v5547 = vpop.f32.mrf.mxu0
        %v5548 = vpop.f32.mrf.mxu0
        %v5549 = vadd.f32 0.0, %v5548
        %v5550 = vpop.f32.mrf.mxu0
        %5551 = vmatprep.mubr.bf16.mxu0 0
        %5552 = vmatmul.mubr.bf16.gmra.mxu0 %v5442
        %v5553 = vpop.f32.mrf.mxu0
        %v5554 = vadd.f32 0.0, %v5553
        %v5555 = vpop.f32.mrf.mxu0
        %v5556 = vpop.f32.mrf.mxu0
        %v5557 = vadd.f32 0.0, %v5556
        %v5558 = vpop.f32.mrf.mxu0
        %5559 = vmatprep.mubr.bf16.mxu0 0
        %5560 = vmatmul.mubr.bf16.gmra.mxu0 %v5445
        %v5561 = vpop.f32.mrf.mxu0
        %v5562 = vadd.f32 0.0, %v5561
        %v5563 = vpop.f32.mrf.mxu0
        %v5564 = vpop.f32.mrf.mxu0
        %v5565 = vadd.f32 0.0, %v5564
        %v5566 = vpop.f32.mrf.mxu0
        %5567 = vmatprep.mubr.bf16.mxu0 0
        %5568 = vmatmul.mubr.bf16.gmra.mxu0 %v5448
        %v5569 = vpop.f32.mrf.mxu0
        %v5570 = vadd.f32 0.0, %v5569
        %v5571 = vpop.f32.mrf.mxu0
        %v5572 = vpop.f32.mrf.mxu0
        %v5573 = vadd.f32 0.0, %v5572
        %v5574 = vpop.f32.mrf.mxu0
        %5575 = vmatprep.mubr.bf16.mxu0 0
        %5576 = vmatmul.mubr.bf16.gmra.mxu0 %v5451
        %v5577 = vpop.f32.mrf.mxu0
        %v5578 = vadd.f32 0.0, %v5577
        %v5579 = vpop.f32.mrf.mxu0
        %v5580 = vpop.f32.mrf.mxu0
        %v5581 = vadd.f32 0.0, %v5580
        %v5582 = vpop.f32.mrf.mxu0
        %5583 = vmatprep.mubr.bf16.mxu0 0
        %5584 = vmatmul.mubr.bf16.gmra.mxu0 %v5454
        %v5585 = vpop.f32.mrf.mxu0
        %v5586 = vadd.f32 0.0, %v5585
        %v5587 = vpop.f32.mrf.mxu0
        %v5588 = vpop.f32.mrf.mxu0
        %v5589 = vadd.f32 0.0, %v5588
        %v5590 = vpop.f32.mrf.mxu0
        %5591 = vmatprep.mubr.bf16.mxu0 0
        %5592 = vmatmul.mubr.bf16.gmra.mxu0 %v5457
        %v5593 = vpop.f32.mrf.mxu0
        %v5594 = vadd.f32 0.0, %v5593
        %v5595 = vpop.f32.mrf.mxu0
        %v5596 = vpop.f32.mrf.mxu0
        %v5597 = vadd.f32 0.0, %v5596
        %v5598 = vpop.f32.mrf.mxu0
        %5599 = vmatprep.mubr.bf16.mxu0 0
        %5600 = vmatmul.mubr.bf16.gmra.mxu0 %v5460
        %v5601 = vpop.f32.mrf.mxu0
        %v5602 = vadd.f32 0.0, %v5601
        %v5603 = vpop.f32.mrf.mxu0
        %v5604 = vpop.f32.mrf.mxu0
        %v5605 = vadd.f32 0.0, %v5604
        %v5606 = vpop.f32.mrf.mxu0
        %5607 = vmatprep.mubr.bf16.mxu0 0
        %5608 = vmatmul.mubr.bf16.gmra.mxu0 %v5463
        %v5609 = vpop.f32.mrf.mxu0
        %v5610 = vadd.f32 0.0, %v5609
        %v5611 = vpop.f32.mrf.mxu0
        %v5612 = vpop.f32.mrf.mxu0
        %v5613 = vadd.f32 0.0, %v5612
        %v5614 = vpop.f32.mrf.mxu0
        %5615 = vmatprep.mubr.bf16.mxu0 0
        %5616 = vmatmul.mubr.bf16.gmra.mxu0 %v5466
        %v5617 = vpop.f32.mrf.mxu0
        %v5618 = vadd.f32 0.0, %v5617
        %v5619 = vpop.f32.mrf.mxu0
        %v5620 = vpop.f32.mrf.mxu0
        %v5621 = vadd.f32 0.0, %v5620
        %v5622 = vpop.f32.mrf.mxu0
        %5623 = vmatprep.mubr.bf16.mxu0 0
        %5624 = vmatmul.mubr.bf16.gmra.mxu0 %v5469
        %v5625 = vpop.f32.mrf.mxu0
        %v5626 = vadd.f32 0.0, %v5625
        %v5627 = vpop.f32.mrf.mxu0
        %v5628 = vpop.f32.mrf.mxu0
        %v5629 = vadd.f32 0.0, %v5628
        %v5630 = vpop.f32.mrf.mxu0
        %5631 = vdwg.mxu0
        %v5632 = vadd.f32 %v5326, %v5506
        %v5633 = vadd.f32 %v5327, %v5509
        %v5634 = vadd.f32 %v5328, %v5514
        %v5635 = vadd.f32 %v5329, %v5517
        %v5636 = vadd.f32 %v5330, %v5522
        %v5637 = vadd.f32 %v5331, %v5525
        %v5638 = vadd.f32 %v5332, %v5530
        %v5639 = vadd.f32 %v5333, %v5533
        %v5640 = vadd.f32 %v5334, %v5538
        %v5641 = vadd.f32 %v5335, %v5541
        %v5642 = vadd.f32 %v5336, %v5546
        %v5643 = vadd.f32 %v5337, %v5549
        %v5644 = vadd.f32 %v5338, %v5554
        %v5645 = vadd.f32 %v5339, %v5557
        %v5646 = vadd.f32 %v5340, %v5562
        %v5647 = vadd.f32 %v5341, %v5565
        %v5648 = vadd.f32 %v5342, %v5570
        %v5649 = vadd.f32 %v5343, %v5573
        %v5650 = vadd.f32 %v5344, %v5578
        %v5651 = vadd.f32 %v5345, %v5581
        %v5652 = vadd.f32 %v5346, %v5586
        %v5653 = vadd.f32 %v5347, %v5589
        %v5654 = vadd.f32 %v5348, %v5594
        %v5655 = vadd.f32 %v5349, %v5597
        %v5656 = vadd.f32 %v5350, %v5602
        %v5657 = vadd.f32 %v5351, %v5605
        %v5658 = vadd.f32 %v5352, %v5610
        %v5659 = vadd.f32 %v5353, %v5613
        %v5660 = vadd.f32 %v5354, %v5618
        %v5661 = vadd.f32 %v5355, %v5621
        %v5662 = vadd.f32 %v5356, %v5626
        %v5663 = vadd.f32 %v5357, %v5629
        %v5664 = vld [vmem:[%s5051 + $0x2] sm:$0xff]
        %v5665 = vld [vmem:[%s5051 + $0xa] sm:$0xff]
        %v5666 = vld [vmem:[%s5051 + $0x1a] sm:$0xff]
        %v5667 = vld [vmem:[%s5051 + $0x22] sm:$0xff]
        %v5668 = vld [vmem:[%s5051 + $0x32] sm:$0xff]
        %v5669 = vld [vmem:[%s5051 + $0x3a] sm:$0xff]
        %v5670 = vld [vmem:[%s5051 + $0x4a] sm:$0xff]
        %v5671 = vld [vmem:[%s5051 + $0x52] sm:$0xff]
        %v5672 = vld [vmem:[%s5051 + $0x62] sm:$0xff]
        %v5673 = vld [vmem:[%s5051 + $0x6a] sm:$0xff]
        %v5674 = vld [vmem:[%s5051 + $0x7a] sm:$0xff]
        %v5675 = vld [vmem:[%s5051 + $0x82] sm:$0xff]
        %v5676 = vld [vmem:[%s5051 + $0x92] sm:$0xff]
        %v5677 = vld [vmem:[%s5051 + $0x9a] sm:$0xff]
        %v5678 = vld [vmem:[%s5051 + $0xaa] sm:$0xff]
        %v5679 = vld [vmem:[%s5051 + $0xb2] sm:$0xff]
        %v5680 = vld [vmem:[%s5051 + $0xc2] sm:$0xff]
        %v5681 = vld [vmem:[%s5051 + $0xca] sm:$0xff]
        %v5682 = vld [vmem:[%s5051 + $0xda] sm:$0xff]
        %v5683 = vld [vmem:[%s5051 + $0xe2] sm:$0xff]
        %v5684 = vld [vmem:[%s5051 + $0xf2] sm:$0xff]
        %v5685 = vld [vmem:[%s5051 + $0xfa] sm:$0xff]
        %v5686 = vld [vmem:[%s5051 + $0x10a] sm:$0xff]
        %v5687 = vld [vmem:[%s5051 + $0x112] sm:$0xff]
        %v5688 = vld [vmem:[%s5051 + $0x122] sm:$0xff]
        %v5689 = vld [vmem:[%s5051 + $0x12a] sm:$0xff]
        %v5690 = vld [vmem:[%s5051 + $0x13a] sm:$0xff]
        %v5691 = vld [vmem:[%s5051 + $0x142] sm:$0xff]
        %v5692 = vld [vmem:[%s5051 + $0x152] sm:$0xff]
        %v5693 = vld [vmem:[%s5051 + $0x15a] sm:$0xff]
        %v5694 = vld [vmem:[%s5051 + $0x16a] sm:$0xff]
        %v5695 = vld [vmem:[%s5051 + $0x172] sm:$0xff]
        %v5696 = vpack.c.bf16 %v5665, %v5664
        %v5697 = vpack.c.bf16 %v5667, %v5666
        %v5698 = vpack.c.bf16 %v5669, %v5668
        %v5699 = vpack.c.bf16 %v5671, %v5670
        %v5700 = vpack.c.bf16 %v5673, %v5672
        %v5701 = vpack.c.bf16 %v5675, %v5674
        %v5702 = vpack.c.bf16 %v5677, %v5676
        %v5703 = vpack.c.bf16 %v5679, %v5678
        %v5704 = vpack.c.bf16 %v5681, %v5680
        %v5705 = vpack.c.bf16 %v5683, %v5682
        %v5706 = vpack.c.bf16 %v5685, %v5684
        %v5707 = vpack.c.bf16 %v5687, %v5686
        %v5708 = vpack.c.bf16 %v5689, %v5688
        %v5709 = vpack.c.bf16 %v5691, %v5690
        %v5710 = vpack.c.bf16 %v5693, %v5692
        %v5711 = vpack.c.bf16 %v5695, %v5694
        %s5712 = scalar_lea.vmem [#allocation8], 128
        %v5713 = vld [vmem:[%s5712] sm:$0xf]
        %v5714 = vld [vmem:[%s5712 + $0x4] sm:$0xf]
        %v5715 = vld [vmem:[%s5712 + $0x8] sm:$0xf]
        %v5716 = vld [vmem:[%s5712 + $0xc] sm:$0xf]
        %v5721 = vunpack.c.l.b16 %v5713
        %v5722 = vunpack.c.l.b16 %v5714
        %v5723 = vunpack.c.l.b16 %v5715
        %v5724 = vunpack.c.l.b16 %v5716
        %v5725 = vpack.c.b16 %v5722, %v5721
        %v5726 = vpack.c.b16 %v5724, %v5723
        %v5730 = vsel %vm3191, %v5696, 0
        %v5733 = vsel %vm3191, %v5697, 0
        %v5736 = vsel %vm3191, %v5698, 0
        %v5739 = vsel %vm3191, %v5699, 0
        %v5742 = vsel %vm3191, %v5700, 0
        %v5745 = vsel %vm3191, %v5701, 0
        %v5748 = vsel %vm3191, %v5702, 0
        %v5751 = vsel %vm3191, %v5703, 0
        %v5754 = vsel %vm3191, %v5704, 0
        %v5757 = vsel %vm3191, %v5705, 0
        %v5760 = vsel %vm3191, %v5706, 0
        %v5763 = vsel %vm3191, %v5707, 0
        %v5766 = vsel %vm3191, %v5708, 0
        %v5769 = vsel %vm3191, %v5709, 0
        %v5772 = vsel %vm3191, %v5710, 0
        %v5775 = vsel %vm3191, %v5711, 0
        %5777 = vmatprep.subr.bf16.mxu0 0
        %5778 = vmatpush1.bf16.msra.mxu0 0
        %5779 = vmatprep.subr.bf16.mxu0 0
        %5780 = vmatpush1.bf16.msra.mxu0 0
        %5781 = vmatprep.subr.bf16.mxu0 0
        %5782 = vmatpush1.bf16.msra.mxu0 0
        %5783 = vmatprep.subr.bf16.mxu0 0
        %5784 = vmatpush1.bf16.msra.mxu0 0
        %5785 = vmatprep.subr.bf16.mxu0 0
        %5786 = vmatpush1.bf16.msra.mxu0 0
        %5787 = vmatprep.subr.bf16.mxu0 0
        %5788 = vmatpush1.bf16.msra.mxu0 0
        %5789 = vmatprep.subr.bf16.mxu0 0
        %5790 = vmatpush1.bf16.msra.mxu0 %v5726
        %5791 = vmatprep.subr.bf16.mxu0 0
        %5792 = vmatpush1.bf16.msra.mxu0 %v5725
        %5793 = vmatprep.subr.bf16.mxu0 0
        %5794 = vmatpush2.bf16.msra.mxu0 0
        %5795 = vmatprep.subr.bf16.mxu0 0
        %5796 = vmatpush2.bf16.msra.mxu0 0
        %5797 = vmatprep.subr.bf16.mxu0 0
        %5798 = vmatpush2.bf16.msra.mxu0 0
        %5799 = vmatprep.subr.bf16.mxu0 0
        %5800 = vmatpush2.bf16.msra.mxu0 0
        %5801 = vmatprep.subr.bf16.mxu0 0
        %5802 = vmatpush2.bf16.msra.mxu0 0
        %5803 = vmatprep.subr.bf16.mxu0 0
        %5804 = vmatpush2.bf16.msra.mxu0 0
        %5805 = vmatprep.subr.bf16.mxu0 0
        %5806 = vmatpush2.bf16.msra.mxu0 0
        %5807 = vmatprep.subr.bf16.mxu0 0
        %5808 = vmatpush2.bf16.msra.mxu0 0
        %5809 = vmatprep.mubr.bf16.mxu0 0
        %5810 = vmatmul.mubr.bf16.gmra.mxu0 %v5730
        %v5811 = vpop.f32.mrf.mxu0
        %v5812 = vadd.f32 0.0, %v5811
        %v5813 = vpop.f32.mrf.mxu0
        %v5814 = vpop.f32.mrf.mxu0
        %v5815 = vadd.f32 0.0, %v5814
        %v5816 = vpop.f32.mrf.mxu0
        %5817 = vmatprep.mubr.bf16.mxu0 0
        %5818 = vmatmul.mubr.bf16.gmra.mxu0 %v5733
        %v5819 = vpop.f32.mrf.mxu0
        %v5820 = vadd.f32 0.0, %v5819
        %v5821 = vpop.f32.mrf.mxu0
        %v5822 = vpop.f32.mrf.mxu0
        %v5823 = vadd.f32 0.0, %v5822
        %v5824 = vpop.f32.mrf.mxu0
        %5825 = vmatprep.mubr.bf16.mxu0 0
        %5826 = vmatmul.mubr.bf16.gmra.mxu0 %v5736
        %v5827 = vpop.f32.mrf.mxu0
        %v5828 = vadd.f32 0.0, %v5827
        %v5829 = vpop.f32.mrf.mxu0
        %v5830 = vpop.f32.mrf.mxu0
        %v5831 = vadd.f32 0.0, %v5830
        %v5832 = vpop.f32.mrf.mxu0
        %5833 = vmatprep.mubr.bf16.mxu0 0
        %5834 = vmatmul.mubr.bf16.gmra.mxu0 %v5739
        %v5835 = vpop.f32.mrf.mxu0
        %v5836 = vadd.f32 0.0, %v5835
        %v5837 = vpop.f32.mrf.mxu0
        %v5838 = vpop.f32.mrf.mxu0
        %v5839 = vadd.f32 0.0, %v5838
        %v5840 = vpop.f32.mrf.mxu0
        %5841 = vmatprep.mubr.bf16.mxu0 0
        %5842 = vmatmul.mubr.bf16.gmra.mxu0 %v5742
        %v5843 = vpop.f32.mrf.mxu0
        %v5844 = vadd.f32 0.0, %v5843
        %v5845 = vpop.f32.mrf.mxu0
        %v5846 = vpop.f32.mrf.mxu0
        %v5847 = vadd.f32 0.0, %v5846
        %v5848 = vpop.f32.mrf.mxu0
        %5849 = vmatprep.mubr.bf16.mxu0 0
        %5850 = vmatmul.mubr.bf16.gmra.mxu0 %v5745
        %v5851 = vpop.f32.mrf.mxu0
        %v5852 = vadd.f32 0.0, %v5851
        %v5853 = vpop.f32.mrf.mxu0
        %v5854 = vpop.f32.mrf.mxu0
        %v5855 = vadd.f32 0.0, %v5854
        %v5856 = vpop.f32.mrf.mxu0
        %5857 = vmatprep.mubr.bf16.mxu0 0
        %5858 = vmatmul.mubr.bf16.gmra.mxu0 %v5748
        %v5859 = vpop.f32.mrf.mxu0
        %v5860 = vadd.f32 0.0, %v5859
        %v5861 = vpop.f32.mrf.mxu0
        %v5862 = vpop.f32.mrf.mxu0
        %v5863 = vadd.f32 0.0, %v5862
        %v5864 = vpop.f32.mrf.mxu0
        %5865 = vmatprep.mubr.bf16.mxu0 0
        %5866 = vmatmul.mubr.bf16.gmra.mxu0 %v5751
        %v5867 = vpop.f32.mrf.mxu0
        %v5868 = vadd.f32 0.0, %v5867
        %v5869 = vpop.f32.mrf.mxu0
        %v5870 = vpop.f32.mrf.mxu0
        %v5871 = vadd.f32 0.0, %v5870
        %v5872 = vpop.f32.mrf.mxu0
        %5873 = vmatprep.mubr.bf16.mxu0 0
        %5874 = vmatmul.mubr.bf16.gmra.mxu0 %v5754
        %v5875 = vpop.f32.mrf.mxu0
        %v5876 = vadd.f32 0.0, %v5875
        %v5877 = vpop.f32.mrf.mxu0
        %v5878 = vpop.f32.mrf.mxu0
        %v5879 = vadd.f32 0.0, %v5878
        %v5880 = vpop.f32.mrf.mxu0
        %5881 = vmatprep.mubr.bf16.mxu0 0
        %5882 = vmatmul.mubr.bf16.gmra.mxu0 %v5757
        %v5883 = vpop.f32.mrf.mxu0
        %v5884 = vadd.f32 0.0, %v5883
        %v5885 = vpop.f32.mrf.mxu0
        %v5886 = vpop.f32.mrf.mxu0
        %v5887 = vadd.f32 0.0, %v5886
        %v5888 = vpop.f32.mrf.mxu0
        %5889 = vmatprep.mubr.bf16.mxu0 0
        %5890 = vmatmul.mubr.bf16.gmra.mxu0 %v5760
        %v5891 = vpop.f32.mrf.mxu0
        %v5892 = vadd.f32 0.0, %v5891
        %v5893 = vpop.f32.mrf.mxu0
        %v5894 = vpop.f32.mrf.mxu0
        %v5895 = vadd.f32 0.0, %v5894
        %v5896 = vpop.f32.mrf.mxu0
        %5897 = vmatprep.mubr.bf16.mxu0 0
        %5898 = vmatmul.mubr.bf16.gmra.mxu0 %v5763
        %v5899 = vpop.f32.mrf.mxu0
        %v5900 = vadd.f32 0.0, %v5899
        %v5901 = vpop.f32.mrf.mxu0
        %v5902 = vpop.f32.mrf.mxu0
        %v5903 = vadd.f32 0.0, %v5902
        %v5904 = vpop.f32.mrf.mxu0
        %5905 = vmatprep.mubr.bf16.mxu0 0
        %5906 = vmatmul.mubr.bf16.gmra.mxu0 %v5766
        %v5907 = vpop.f32.mrf.mxu0
        %v5908 = vadd.f32 0.0, %v5907
        %v5909 = vpop.f32.mrf.mxu0
        %v5910 = vpop.f32.mrf.mxu0
        %v5911 = vadd.f32 0.0, %v5910
        %v5912 = vpop.f32.mrf.mxu0
        %5913 = vmatprep.mubr.bf16.mxu0 0
        %5914 = vmatmul.mubr.bf16.gmra.mxu0 %v5769
        %v5915 = vpop.f32.mrf.mxu0
        %v5916 = vadd.f32 0.0, %v5915
        %v5917 = vpop.f32.mrf.mxu0
        %v5918 = vpop.f32.mrf.mxu0
        %v5919 = vadd.f32 0.0, %v5918
        %v5920 = vpop.f32.mrf.mxu0
        %5921 = vmatprep.mubr.bf16.mxu0 0
        %5922 = vmatmul.mubr.bf16.gmra.mxu0 %v5772
        %v5923 = vpop.f32.mrf.mxu0
        %v5924 = vadd.f32 0.0, %v5923
        %v5925 = vpop.f32.mrf.mxu0
        %v5926 = vpop.f32.mrf.mxu0
        %v5927 = vadd.f32 0.0, %v5926
        %v5928 = vpop.f32.mrf.mxu0
        %5929 = vmatprep.mubr.bf16.mxu0 0
        %5930 = vmatmul.mubr.bf16.gmra.mxu0 %v5775
        %v5931 = vpop.f32.mrf.mxu0
        %v5932 = vadd.f32 0.0, %v5931
        %v5933 = vpop.f32.mrf.mxu0
        %v5934 = vpop.f32.mrf.mxu0
        %v5935 = vadd.f32 0.0, %v5934
        %v5936 = vpop.f32.mrf.mxu0
        %5937 = vdwg.mxu0
        %v5938 = vadd.f32 %v5632, %v5812
        %v5939 = vadd.f32 %v5633, %v5815
        %v5940 = vadd.f32 %v5634, %v5820
        %v5941 = vadd.f32 %v5635, %v5823
        %v5942 = vadd.f32 %v5636, %v5828
        %v5943 = vadd.f32 %v5637, %v5831
        %v5944 = vadd.f32 %v5638, %v5836
        %v5945 = vadd.f32 %v5639, %v5839
        %v5946 = vadd.f32 %v5640, %v5844
        %v5947 = vadd.f32 %v5641, %v5847
        %v5948 = vadd.f32 %v5642, %v5852
        %v5949 = vadd.f32 %v5643, %v5855
        %v5950 = vadd.f32 %v5644, %v5860
        %v5951 = vadd.f32 %v5645, %v5863
        %v5952 = vadd.f32 %v5646, %v5868
        %v5953 = vadd.f32 %v5647, %v5871
        %v5954 = vadd.f32 %v5648, %v5876
        %v5955 = vadd.f32 %v5649, %v5879
        %v5956 = vadd.f32 %v5650, %v5884
        %v5957 = vadd.f32 %v5651, %v5887
        %v5958 = vadd.f32 %v5652, %v5892
        %v5959 = vadd.f32 %v5653, %v5895
        %v5960 = vadd.f32 %v5654, %v5900
        %v5961 = vadd.f32 %v5655, %v5903
        %v5962 = vadd.f32 %v5656, %v5908
        %v5963 = vadd.f32 %v5657, %v5911
        %v5964 = vadd.f32 %v5658, %v5916
        %v5965 = vadd.f32 %v5659, %v5919
        %v5966 = vadd.f32 %v5660, %v5924
        %v5967 = vadd.f32 %v5661, %v5927
        %v5968 = vadd.f32 %v5662, %v5932
        %v5969 = vadd.f32 %v5663, %v5935
        %v5970 = vld [vmem:[#allocation9] sm:$0x1]
        %v5972 = vlaneseq
        %v5973 = vshrl.u32 %v5972, 7
        %v5974 = vsub.s32 0, %v5973
        %v5975 = vrot.slane %v5970, %v5974
        %v5977 = vadd.f32 %v5938, %v5975
        %v5978 = vadd.f32 %v5939, %v5975
        %v5979 = vadd.f32 %v5940, %v5975
        %v5980 = vadd.f32 %v5941, %v5975
        %v5981 = vadd.f32 %v5942, %v5975
        %v5982 = vadd.f32 %v5943, %v5975
        %v5983 = vadd.f32 %v5944, %v5975
        %v5984 = vadd.f32 %v5945, %v5975
        %v5985 = vadd.f32 %v5946, %v5975
        %v5986 = vadd.f32 %v5947, %v5975
        %v5987 = vadd.f32 %v5948, %v5975
        %v5988 = vadd.f32 %v5949, %v5975
        %v5989 = vadd.f32 %v5950, %v5975
        %v5990 = vadd.f32 %v5951, %v5975
        %v5991 = vadd.f32 %v5952, %v5975
        %v5992 = vadd.f32 %v5953, %v5975
        %v5993 = vadd.f32 %v5954, %v5975
        %v5994 = vadd.f32 %v5955, %v5975
        %v5995 = vadd.f32 %v5956, %v5975
        %v5996 = vadd.f32 %v5957, %v5975
        %v5997 = vadd.f32 %v5958, %v5975
        %v5998 = vadd.f32 %v5959, %v5975
        %v5999 = vadd.f32 %v5960, %v5975
        %v6000 = vadd.f32 %v5961, %v5975
        %v6001 = vadd.f32 %v5962, %v5975
        %v6002 = vadd.f32 %v5963, %v5975
        %v6003 = vadd.f32 %v5964, %v5975
        %v6004 = vadd.f32 %v5965, %v5975
        %v6005 = vadd.f32 %v5966, %v5975
        %v6006 = vadd.f32 %v5967, %v5975
        %v6007 = vadd.f32 %v5968, %v5975
        %v6008 = vadd.f32 %v5969, %v5975
        %v6009 = vmax.f32 %v5977, 0.0
        %v6010 = vmax.f32 %v5978, 0.0
        %v6011 = vmax.f32 %v5979, 0.0
        %v6012 = vmax.f32 %v5980, 0.0
        %v6013 = vmax.f32 %v5981, 0.0
        %v6014 = vmax.f32 %v5982, 0.0
        %v6015 = vmax.f32 %v5983, 0.0
        %v6016 = vmax.f32 %v5984, 0.0
        %v6017 = vmax.f32 %v5985, 0.0
        %v6018 = vmax.f32 %v5986, 0.0
        %v6019 = vmax.f32 %v5987, 0.0
        %v6020 = vmax.f32 %v5988, 0.0
        %v6021 = vmax.f32 %v5989, 0.0
        %v6022 = vmax.f32 %v5990, 0.0
        %v6023 = vmax.f32 %v5991, 0.0
        %v6024 = vmax.f32 %v5992, 0.0
        %v6025 = vmax.f32 %v5993, 0.0
        %v6026 = vmax.f32 %v5994, 0.0
        %v6027 = vmax.f32 %v5995, 0.0
        %v6028 = vmax.f32 %v5996, 0.0
        %v6029 = vmax.f32 %v5997, 0.0
        %v6030 = vmax.f32 %v5998, 0.0
        %v6031 = vmax.f32 %v5999, 0.0
        %v6032 = vmax.f32 %v6000, 0.0
        %v6033 = vmax.f32 %v6001, 0.0
        %v6034 = vmax.f32 %v6002, 0.0
        %v6035 = vmax.f32 %v6003, 0.0
        %v6036 = vmax.f32 %v6004, 0.0
        %v6037 = vmax.f32 %v6005, 0.0
        %v6038 = vmax.f32 %v6006, 0.0
        %v6039 = vmax.f32 %v6007, 0.0
        %v6040 = vmax.f32 %v6008, 0.0
        %v6041 = vpack.c.bf16 %v6010, %v6009
        %v6042 = vpack.c.bf16 %v6012, %v6011
        %v6043 = vpack.c.bf16 %v6014, %v6013
        %v6044 = vpack.c.bf16 %v6016, %v6015
        %v6045 = vpack.c.bf16 %v6018, %v6017
        %v6046 = vpack.c.bf16 %v6020, %v6019
        %v6047 = vpack.c.bf16 %v6022, %v6021
        %v6048 = vpack.c.bf16 %v6024, %v6023
        %v6049 = vpack.c.bf16 %v6026, %v6025
        %v6050 = vpack.c.bf16 %v6028, %v6027
        %v6051 = vpack.c.bf16 %v6030, %v6029
        %v6052 = vpack.c.bf16 %v6032, %v6031
        %v6053 = vpack.c.bf16 %v6034, %v6033
        %v6054 = vpack.c.bf16 %v6036, %v6035
        %v6055 = vpack.c.bf16 %v6038, %v6037
        %v6056 = vpack.c.bf16 %v6040, %v6039
        %v6057 = vld [vmem:[#allocation11] sm:$0xf]
        %v6058 = vld [vmem:[#allocation11 + $0x4] sm:$0xf]
        %v6059 = vld [vmem:[#allocation11 + $0x8] sm:$0xf]
        %v6060 = vld [vmem:[#allocation11 + $0xc] sm:$0xf]
        %v6061 = vld [vmem:[#allocation12] sm:$0x1]
        %v6063 = vlaneseq
        %v6064 = vshrl.u32 %v6063, 7
        %v6065 = vsub.s32 0, %v6064
        %v6066 = vrot.slane %v6061, %v6065
        %v6072 = vunpack.c.l.b16 %v6057
        %v6073 = vunpack.c.l.b16 %v6058
        %v6074 = vunpack.c.l.b16 %v6059
        %v6075 = vunpack.c.l.b16 %v6060
        %v6076 = vpack.c.b16 %v6073, %v6072
        %v6077 = vpack.c.b16 %v6075, %v6074
        %v6081 = vsel %vm3191, %v6041, 0
        %v6084 = vsel %vm3191, %v6042, 0
        %v6087 = vsel %vm3191, %v6043, 0
        %v6090 = vsel %vm3191, %v6044, 0
        %v6093 = vsel %vm3191, %v6045, 0
        %v6096 = vsel %vm3191, %v6046, 0
        %v6099 = vsel %vm3191, %v6047, 0
        %v6102 = vsel %vm3191, %v6048, 0
        %v6105 = vsel %vm3191, %v6049, 0
        %v6108 = vsel %vm3191, %v6050, 0
        %v6111 = vsel %vm3191, %v6051, 0
        %v6114 = vsel %vm3191, %v6052, 0
        %v6117 = vsel %vm3191, %v6053, 0
        %v6120 = vsel %vm3191, %v6054, 0
        %v6123 = vsel %vm3191, %v6055, 0
        %v6126 = vsel %vm3191, %v6056, 0
        %6128 = vmatprep.subr.bf16.mxu0 0
        %6129 = vmatpush1.bf16.msra.mxu0 0
        %6130 = vmatprep.subr.bf16.mxu0 0
        %6131 = vmatpush1.bf16.msra.mxu0 0
        %6132 = vmatprep.subr.bf16.mxu0 0
        %6133 = vmatpush1.bf16.msra.mxu0 0
        %6134 = vmatprep.subr.bf16.mxu0 0
        %6135 = vmatpush1.bf16.msra.mxu0 0
        %6136 = vmatprep.subr.bf16.mxu0 0
        %6137 = vmatpush1.bf16.msra.mxu0 0
        %6138 = vmatprep.subr.bf16.mxu0 0
        %6139 = vmatpush1.bf16.msra.mxu0 0
        %6140 = vmatprep.subr.bf16.mxu0 0
        %6141 = vmatpush1.bf16.msra.mxu0 %v6077
        %6142 = vmatprep.subr.bf16.mxu0 0
        %6143 = vmatpush1.bf16.msra.mxu0 %v6076
        %6144 = vmatprep.subr.bf16.mxu0 0
        %6145 = vmatpush2.bf16.msra.mxu0 0
        %6146 = vmatprep.subr.bf16.mxu0 0
        %6147 = vmatpush2.bf16.msra.mxu0 0
        %6148 = vmatprep.subr.bf16.mxu0 0
        %6149 = vmatpush2.bf16.msra.mxu0 0
        %6150 = vmatprep.subr.bf16.mxu0 0
        %6151 = vmatpush2.bf16.msra.mxu0 0
        %6152 = vmatprep.subr.bf16.mxu0 0
        %6153 = vmatpush2.bf16.msra.mxu0 0
        %6154 = vmatprep.subr.bf16.mxu0 0
        %6155 = vmatpush2.bf16.msra.mxu0 0
        %6156 = vmatprep.subr.bf16.mxu0 0
        %6157 = vmatpush2.bf16.msra.mxu0 0
        %6158 = vmatprep.subr.bf16.mxu0 0
        %6159 = vmatpush2.bf16.msra.mxu0 0
        %6160 = vmatprep.mubr.bf16.mxu0 0
        %6161 = vmatmul.mubr.bf16.gmra.mxu0 %v6081
        %v6162 = vpop.f32.mrf.mxu0
        %v6163 = vadd.f32 %v6066, %v6162
        %v6164 = vpop.f32.mrf.mxu0
        %v6165 = vpop.f32.mrf.mxu0
        %v6166 = vadd.f32 %v6066, %v6165
        %v6167 = vpop.f32.mrf.mxu0
        %6168 = vmatprep.mubr.bf16.mxu0 0
        %6169 = vmatmul.mubr.bf16.gmra.mxu0 %v6084
        %v6170 = vpop.f32.mrf.mxu0
        %v6171 = vadd.f32 %v6066, %v6170
        %v6172 = vpop.f32.mrf.mxu0
        %v6173 = vpop.f32.mrf.mxu0
        %v6174 = vadd.f32 %v6066, %v6173
        %v6175 = vpop.f32.mrf.mxu0
        %6176 = vmatprep.mubr.bf16.mxu0 0
        %6177 = vmatmul.mubr.bf16.gmra.mxu0 %v6087
        %v6178 = vpop.f32.mrf.mxu0
        %v6179 = vadd.f32 %v6066, %v6178
        %v6180 = vpop.f32.mrf.mxu0
        %v6181 = vpop.f32.mrf.mxu0
        %v6182 = vadd.f32 %v6066, %v6181
        %v6183 = vpop.f32.mrf.mxu0
        %6184 = vmatprep.mubr.bf16.mxu0 0
        %6185 = vmatmul.mubr.bf16.gmra.mxu0 %v6090
        %v6186 = vpop.f32.mrf.mxu0
        %v6187 = vadd.f32 %v6066, %v6186
        %v6188 = vpop.f32.mrf.mxu0
        %v6189 = vpop.f32.mrf.mxu0
        %v6190 = vadd.f32 %v6066, %v6189
        %v6191 = vpop.f32.mrf.mxu0
        %6192 = vmatprep.mubr.bf16.mxu0 0
        %6193 = vmatmul.mubr.bf16.gmra.mxu0 %v6093
        %v6194 = vpop.f32.mrf.mxu0
        %v6195 = vadd.f32 %v6066, %v6194
        %v6196 = vpop.f32.mrf.mxu0
        %v6197 = vpop.f32.mrf.mxu0
        %v6198 = vadd.f32 %v6066, %v6197
        %v6199 = vpop.f32.mrf.mxu0
        %6200 = vmatprep.mubr.bf16.mxu0 0
        %6201 = vmatmul.mubr.bf16.gmra.mxu0 %v6096
        %v6202 = vpop.f32.mrf.mxu0
        %v6203 = vadd.f32 %v6066, %v6202
        %v6204 = vpop.f32.mrf.mxu0
        %v6205 = vpop.f32.mrf.mxu0
        %v6206 = vadd.f32 %v6066, %v6205
        %v6207 = vpop.f32.mrf.mxu0
        %6208 = vmatprep.mubr.bf16.mxu0 0
        %6209 = vmatmul.mubr.bf16.gmra.mxu0 %v6099
        %v6210 = vpop.f32.mrf.mxu0
        %v6211 = vadd.f32 %v6066, %v6210
        %v6212 = vpop.f32.mrf.mxu0
        %v6213 = vpop.f32.mrf.mxu0
        %v6214 = vadd.f32 %v6066, %v6213
        %v6215 = vpop.f32.mrf.mxu0
        %6216 = vmatprep.mubr.bf16.mxu0 0
        %6217 = vmatmul.mubr.bf16.gmra.mxu0 %v6102
        %v6218 = vpop.f32.mrf.mxu0
        %v6219 = vadd.f32 %v6066, %v6218
        %v6220 = vpop.f32.mrf.mxu0
        %v6221 = vpop.f32.mrf.mxu0
        %v6222 = vadd.f32 %v6066, %v6221
        %v6223 = vpop.f32.mrf.mxu0
        %6224 = vmatprep.mubr.bf16.mxu0 0
        %6225 = vmatmul.mubr.bf16.gmra.mxu0 %v6105
        %v6226 = vpop.f32.mrf.mxu0
        %v6227 = vadd.f32 %v6066, %v6226
        %v6228 = vpop.f32.mrf.mxu0
        %v6229 = vpop.f32.mrf.mxu0
        %v6230 = vadd.f32 %v6066, %v6229
        %v6231 = vpop.f32.mrf.mxu0
        %6232 = vmatprep.mubr.bf16.mxu0 0
        %6233 = vmatmul.mubr.bf16.gmra.mxu0 %v6108
        %v6234 = vpop.f32.mrf.mxu0
        %v6235 = vadd.f32 %v6066, %v6234
        %v6236 = vpop.f32.mrf.mxu0
        %v6237 = vpop.f32.mrf.mxu0
        %v6238 = vadd.f32 %v6066, %v6237
        %v6239 = vpop.f32.mrf.mxu0
        %6240 = vmatprep.mubr.bf16.mxu0 0
        %6241 = vmatmul.mubr.bf16.gmra.mxu0 %v6111
        %v6242 = vpop.f32.mrf.mxu0
        %v6243 = vadd.f32 %v6066, %v6242
        %v6244 = vpop.f32.mrf.mxu0
        %v6245 = vpop.f32.mrf.mxu0
        %v6246 = vadd.f32 %v6066, %v6245
        %v6247 = vpop.f32.mrf.mxu0
        %6248 = vmatprep.mubr.bf16.mxu0 0
        %6249 = vmatmul.mubr.bf16.gmra.mxu0 %v6114
        %v6250 = vpop.f32.mrf.mxu0
        %v6251 = vadd.f32 %v6066, %v6250
        %v6252 = vpop.f32.mrf.mxu0
        %v6253 = vpop.f32.mrf.mxu0
        %v6254 = vadd.f32 %v6066, %v6253
        %v6255 = vpop.f32.mrf.mxu0
        %6256 = vmatprep.mubr.bf16.mxu0 0
        %6257 = vmatmul.mubr.bf16.gmra.mxu0 %v6117
        %v6258 = vpop.f32.mrf.mxu0
        %v6259 = vadd.f32 %v6066, %v6258
        %v6260 = vpop.f32.mrf.mxu0
        %v6261 = vpop.f32.mrf.mxu0
        %v6262 = vadd.f32 %v6066, %v6261
        %v6263 = vpop.f32.mrf.mxu0
        %6264 = vmatprep.mubr.bf16.mxu0 0
        %6265 = vmatmul.mubr.bf16.gmra.mxu0 %v6120
        %v6266 = vpop.f32.mrf.mxu0
        %v6267 = vadd.f32 %v6066, %v6266
        %v6268 = vpop.f32.mrf.mxu0
        %v6269 = vpop.f32.mrf.mxu0
        %v6270 = vadd.f32 %v6066, %v6269
        %v6271 = vpop.f32.mrf.mxu0
        %6272 = vmatprep.mubr.bf16.mxu0 0
        %6273 = vmatmul.mubr.bf16.gmra.mxu0 %v6123
        %v6274 = vpop.f32.mrf.mxu0
        %v6275 = vadd.f32 %v6066, %v6274
        %v6276 = vpop.f32.mrf.mxu0
        %v6277 = vpop.f32.mrf.mxu0
        %v6278 = vadd.f32 %v6066, %v6277
        %v6279 = vpop.f32.mrf.mxu0
        %6280 = vmatprep.mubr.bf16.mxu0 0
        %6281 = vmatmul.mubr.bf16.gmra.mxu0 %v6126
        %v6282 = vpop.f32.mrf.mxu0
        %v6283 = vadd.f32 %v6066, %v6282
        %v6284 = vpop.f32.mrf.mxu0
        %v6285 = vpop.f32.mrf.mxu0
        %v6286 = vadd.f32 %v6066, %v6285
        %v6287 = vpop.f32.mrf.mxu0
        %6288 = vdwg.mxu0
        %6289 = vxpose.xlu0.b32.start [1/16] %v6163, 128
        %6290 = vxpose.xlu0.b32.cont [2/16] %v6166, 128
        %6291 = vxpose.xlu0.b32.cont [3/16] %v6171, 128
        %6292 = vxpose.xlu0.b32.cont [4/16] %v6174, 128
        %6293 = vxpose.xlu0.b32.cont [5/16] %v6179, 128
        %6294 = vxpose.xlu0.b32.cont [6/16] %v6182, 128
        %6295 = vxpose.xlu0.b32.cont [7/16] %v6187, 128
        %6296 = vxpose.xlu0.b32.cont [8/16] %v6190, 128
        %6297 = vxpose.xlu0.b32.cont [9/16] %v6195, 128
        %6298 = vxpose.xlu0.b32.cont [10/16] %v6198, 128
        %6299 = vxpose.xlu0.b32.cont [11/16] %v6203, 128
        %6300 = vxpose.xlu0.b32.cont [12/16] %v6206, 128
        %6301 = vxpose.xlu0.b32.cont [13/16] %v6211, 128
        %6302 = vxpose.xlu0.b32.cont [14/16] %v6214, 128
        %6303 = vxpose.xlu0.b32.cont [15/16] %v6219, 128
        %6304 = vxpose.xlu0.b32.end [16/16] %v6222, 128
        %v6305 = vpop.trf.xlu0
        %v6306 = vpop.trf.xlu0
        %v6307 = vpop.trf.xlu0
        %v6308 = vpop.trf.xlu0
        %v6309 = vpop.trf.xlu0
        %v6310 = vpop.trf.xlu0
        %v6311 = vpop.trf.xlu0
        %v6312 = vpop.trf.xlu0
        %v6313 = vpop.trf.xlu0
        %v6314 = vpop.trf.xlu0
        %v6315 = vpop.trf.xlu0
        %v6316 = vpop.trf.xlu0
        %v6317 = vpop.trf.xlu0
        %v6318 = vpop.trf.xlu0
        %v6319 = vpop.trf.xlu0
        %v6320 = vpop.trf.xlu0
        %6321 = vxpose.xlu0.b32.start [1/16] %v6227, 128
        %6322 = vxpose.xlu0.b32.cont [2/16] %v6230, 128
        %6323 = vxpose.xlu0.b32.cont [3/16] %v6235, 128
        %6324 = vxpose.xlu0.b32.cont [4/16] %v6238, 128
        %6325 = vxpose.xlu0.b32.cont [5/16] %v6243, 128
        %6326 = vxpose.xlu0.b32.cont [6/16] %v6246, 128
        %6327 = vxpose.xlu0.b32.cont [7/16] %v6251, 128
        %6328 = vxpose.xlu0.b32.cont [8/16] %v6254, 128
        %6329 = vxpose.xlu0.b32.cont [9/16] %v6259, 128
        %6330 = vxpose.xlu0.b32.cont [10/16] %v6262, 128
        %6331 = vxpose.xlu0.b32.cont [11/16] %v6267, 128
        %6332 = vxpose.xlu0.b32.cont [12/16] %v6270, 128
        %6333 = vxpose.xlu0.b32.cont [13/16] %v6275, 128
        %6334 = vxpose.xlu0.b32.cont [14/16] %v6278, 128
        %6335 = vxpose.xlu0.b32.cont [15/16] %v6283, 128
        %6336 = vxpose.xlu0.b32.end [16/16] %v6286, 128
        %v6337 = vpop.trf.xlu0
        %v6338 = vpop.trf.xlu0
        %v6339 = vpop.trf.xlu0
        %v6340 = vpop.trf.xlu0
        %v6341 = vpop.trf.xlu0
        %v6342 = vpop.trf.xlu0
        %v6343 = vpop.trf.xlu0
        %v6344 = vpop.trf.xlu0
        %v6345 = vpop.trf.xlu0
        %v6346 = vpop.trf.xlu0
        %v6347 = vpop.trf.xlu0
        %v6348 = vpop.trf.xlu0
        %v6349 = vpop.trf.xlu0
        %v6350 = vpop.trf.xlu0
        %v6351 = vpop.trf.xlu0
        %v6352 = vpop.trf.xlu0
        %v6353 = vpack.c.bf16 %v6306, %v6305
        %v6354 = vpack.c.bf16 %v6338, %v6337
        %v6355 = vpack.c.bf16 %v6308, %v6307
        %v6356 = vpack.c.bf16 %v6340, %v6339
        %v6357 = vld [vmem:[%s7] sm:$0xf]
        %v6358 = vld [vmem:[%s7 + $0x4] sm:$0xf]
        %v6359 = vld [vmem:[%s7 + $0x8] sm:$0xf]
        %v6360 = vld [vmem:[%s7 + $0xc] sm:$0xf]
        %v6361 = vld [vmem:[%s7 + $0x10] sm:$0xf]
        %v6362 = vld [vmem:[%s7 + $0x14] sm:$0xf]
        %v6363 = vld [vmem:[%s7 + $0x18] sm:$0xf]
        %v6364 = vld [vmem:[%s7 + $0x1c] sm:$0xf]
        %v6365 = vld [vmem:[%s7 + $0x20] sm:$0xf]
        %v6366 = vld [vmem:[%s7 + $0x24] sm:$0xf]
        %v6367 = vld [vmem:[%s7 + $0x28] sm:$0xf]
        %v6368 = vld [vmem:[%s7 + $0x2c] sm:$0xf]
        %v6369 = vld [vmem:[%s7 + $0x30] sm:$0xf]
        %v6370 = vld [vmem:[%s7 + $0x34] sm:$0xf]
        %v6371 = vld [vmem:[%s7 + $0x38] sm:$0xf]
        %v6372 = vld [vmem:[%s7 + $0x3c] sm:$0xf]
        %v6373 = vld [vmem:[%s7 + $0x40] sm:$0xf]
        %v6374 = vld [vmem:[%s7 + $0x44] sm:$0xf]
        %v6375 = vld [vmem:[%s7 + $0x48] sm:$0xf]
        %v6376 = vld [vmem:[%s7 + $0x4c] sm:$0xf]
        %v6377 = vld [vmem:[%s7 + $0x50] sm:$0xf]
        %v6378 = vld [vmem:[%s7 + $0x54] sm:$0xf]
        %v6379 = vld [vmem:[%s7 + $0x58] sm:$0xf]
        %v6380 = vld [vmem:[%s7 + $0x5c] sm:$0xf]
        %v6381 = vld [vmem:[%s7 + $0x60] sm:$0xf]
        %v6382 = vld [vmem:[%s7 + $0x64] sm:$0xf]
        %v6383 = vld [vmem:[%s7 + $0x68] sm:$0xf]
        %v6384 = vld [vmem:[%s7 + $0x6c] sm:$0xf]
        %v6385 = vld [vmem:[%s7 + $0x70] sm:$0xf]
        %v6386 = vld [vmem:[%s7 + $0x74] sm:$0xf]
        %v6387 = vld [vmem:[%s7 + $0x78] sm:$0xf]
        %v6388 = vld [vmem:[%s7 + $0x7c] sm:$0xf]
        %v6389 = vld [vmem:[%s7 + $0x80] sm:$0xf]
        %v6390 = vld [vmem:[%s7 + $0x84] sm:$0xf]
        %v6391 = vld [vmem:[%s7 + $0x88] sm:$0xf]
        %v6392 = vld [vmem:[%s7 + $0x8c] sm:$0xf]
        %v6393 = vld [vmem:[%s7 + $0x90] sm:$0xf]
        %v6394 = vld [vmem:[%s7 + $0x94] sm:$0xf]
        %v6395 = vld [vmem:[%s7 + $0x98] sm:$0xf]
        %v6396 = vld [vmem:[%s7 + $0x9c] sm:$0xf]
        %v6397 = vld [vmem:[%s7 + $0xa0] sm:$0xf]
        %v6398 = vld [vmem:[%s7 + $0xa4] sm:$0xf]
        %v6399 = vld [vmem:[%s7 + $0xa8] sm:$0xf]
        %v6400 = vld [vmem:[%s7 + $0xac] sm:$0xf]
        %v6401 = vld [vmem:[%s7 + $0xb0] sm:$0xf]
        %v6402 = vld [vmem:[%s7 + $0xb4] sm:$0xf]
        %v6403 = vld [vmem:[%s7 + $0xb8] sm:$0xf]
        %v6404 = vld [vmem:[%s7 + $0xbc] sm:$0xf]
        %v6405 = vld [vmem:[%s7 + $0xc0] sm:$0xf]
        %v6406 = vld [vmem:[%s7 + $0xc4] sm:$0xf]
        %v6407 = vld [vmem:[%s7 + $0xc8] sm:$0xf]
        %v6408 = vld [vmem:[%s7 + $0xcc] sm:$0xf]
        %v6409 = vld [vmem:[%s7 + $0xd0] sm:$0xf]
        %v6410 = vld [vmem:[%s7 + $0xd4] sm:$0xf]
        %v6411 = vld [vmem:[%s7 + $0xd8] sm:$0xf]
        %v6412 = vld [vmem:[%s7 + $0xdc] sm:$0xf]
        %v6413 = vld [vmem:[%s7 + $0xe0] sm:$0xf]
        %v6414 = vld [vmem:[%s7 + $0xe4] sm:$0xf]
        %v6415 = vld [vmem:[%s7 + $0xe8] sm:$0xf]
        %v6416 = vld [vmem:[%s7 + $0xec] sm:$0xf]
        %v6417 = vld [vmem:[%s7 + $0xf0] sm:$0xf]
        %v6418 = vld [vmem:[%s7 + $0xf4] sm:$0xf]
        %v6419 = vld [vmem:[%s7 + $0xf8] sm:$0xf]
        %v6420 = vld [vmem:[%s7 + $0xfc] sm:$0xf]
        %v6421 = vld [vmem:[%s7 + $0x100] sm:$0xf]
        %v6422 = vld [vmem:[%s7 + $0x104] sm:$0xf]
        %v6423 = vld [vmem:[%s7 + $0x108] sm:$0xf]
        %v6424 = vld [vmem:[%s7 + $0x10c] sm:$0xf]
        %v6425 = vld [vmem:[%s7 + $0x110] sm:$0xf]
        %v6426 = vld [vmem:[%s7 + $0x114] sm:$0xf]
        %v6427 = vld [vmem:[%s7 + $0x118] sm:$0xf]
        %v6428 = vld [vmem:[%s7 + $0x11c] sm:$0xf]
        %v6429 = vld [vmem:[%s7 + $0x120] sm:$0xf]
        %v6430 = vld [vmem:[%s7 + $0x124] sm:$0xf]
        %v6431 = vld [vmem:[%s7 + $0x128] sm:$0xf]
        %v6432 = vld [vmem:[%s7 + $0x12c] sm:$0xf]
        %v6433 = vld [vmem:[%s7 + $0x130] sm:$0xf]
        %v6434 = vld [vmem:[%s7 + $0x134] sm:$0xf]
        %v6435 = vld [vmem:[%s7 + $0x138] sm:$0xf]
        %v6436 = vld [vmem:[%s7 + $0x13c] sm:$0xf]
        %v6437 = vld [vmem:[%s7 + $0x140] sm:$0xf]
        %v6438 = vld [vmem:[%s7 + $0x144] sm:$0xf]
        %v6439 = vld [vmem:[%s7 + $0x148] sm:$0xf]
        %v6440 = vld [vmem:[%s7 + $0x14c] sm:$0xf]
        %v6441 = vld [vmem:[%s7 + $0x150] sm:$0xf]
        %v6442 = vld [vmem:[%s7 + $0x154] sm:$0xf]
        %v6443 = vld [vmem:[%s7 + $0x158] sm:$0xf]
        %v6444 = vld [vmem:[%s7 + $0x15c] sm:$0xf]
        %v6445 = vld [vmem:[%s7 + $0x160] sm:$0xf]
        %v6446 = vld [vmem:[%s7 + $0x164] sm:$0xf]
        %v6447 = vld [vmem:[%s7 + $0x168] sm:$0xf]
        %v6448 = vld [vmem:[%s7 + $0x16c] sm:$0xf]
        %v6449 = vld [vmem:[%s7 + $0x170] sm:$0xf]
        %v6450 = vld [vmem:[%s7 + $0x174] sm:$0xf]
        %v6451 = vld [vmem:[%s7 + $0x178] sm:$0xf]
        %v6452 = vld [vmem:[%s7 + $0x17c] sm:$0xf]
        %v6453 = vld [vmem:[%s7 + $0x180] sm:$0xf]
        %v6454 = vld [vmem:[%s7 + $0x184] sm:$0xf]
        %v6455 = vld [vmem:[%s7 + $0x188] sm:$0xf]
        %v6456 = vld [vmem:[%s7 + $0x18c] sm:$0xf]
        %v6457 = vld [vmem:[%s7 + $0x190] sm:$0xf]
        %v6458 = vld [vmem:[%s7 + $0x194] sm:$0xf]
        %v6459 = vld [vmem:[%s7 + $0x198] sm:$0xf]
        %v6460 = vld [vmem:[%s7 + $0x19c] sm:$0xf]
        %v6461 = vld [vmem:[%s7 + $0x1a0] sm:$0xf]
        %v6462 = vld [vmem:[%s7 + $0x1a4] sm:$0xf]
        %v6463 = vld [vmem:[%s7 + $0x1a8] sm:$0xf]
        %v6464 = vld [vmem:[%s7 + $0x1ac] sm:$0xf]
        %v6465 = vld [vmem:[%s7 + $0x1b0] sm:$0xf]
        %v6466 = vld [vmem:[%s7 + $0x1b4] sm:$0xf]
        %v6467 = vld [vmem:[%s7 + $0x1b8] sm:$0xf]
        %v6468 = vld [vmem:[%s7 + $0x1bc] sm:$0xf]
        %v6469 = vld [vmem:[%s7 + $0x1c0] sm:$0xf]
        %v6470 = vld [vmem:[%s7 + $0x1c4] sm:$0xf]
        %v6471 = vld [vmem:[%s7 + $0x1c8] sm:$0xf]
        %v6472 = vld [vmem:[%s7 + $0x1cc] sm:$0xf]
        %v6473 = vld [vmem:[%s7 + $0x1d0] sm:$0xf]
        %v6474 = vld [vmem:[%s7 + $0x1d4] sm:$0xf]
        %v6475 = vld [vmem:[%s7 + $0x1d8] sm:$0xf]
        %v6476 = vld [vmem:[%s7 + $0x1dc] sm:$0xf]
        %v6477 = vld [vmem:[%s7 + $0x1e0] sm:$0xf]
        %v6478 = vld [vmem:[%s7 + $0x1e4] sm:$0xf]
        %v6479 = vld [vmem:[%s7 + $0x1e8] sm:$0xf]
        %v6480 = vld [vmem:[%s7 + $0x1ec] sm:$0xf]
        %v6481 = vld [vmem:[%s7 + $0x1f0] sm:$0xf]
        %v6482 = vld [vmem:[%s7 + $0x1f4] sm:$0xf]
        %v6483 = vld [vmem:[%s7 + $0x1f8] sm:$0xf]
        %v6484 = vld [vmem:[%s7 + $0x1fc] sm:$0xf]
        %v6485 = vld [vmem:[%s8] sm:$0xff]
        %v6486 = vld [vmem:[%s8 + $0x8] sm:$0xff]
        %v6487 = vld [vmem:[%s8 + $0x10] sm:$0xff]
        %v6488 = vld [vmem:[%s8 + $0x18] sm:$0xff]
        %v6489 = vld [vmem:[%s8 + $0x20] sm:$0xff]
        %v6490 = vld [vmem:[%s8 + $0x28] sm:$0xff]
        %v6491 = vld [vmem:[%s8 + $0x30] sm:$0xff]
        %v6492 = vld [vmem:[%s8 + $0x38] sm:$0xff]
        %v6493 = vld [vmem:[%s8 + $0x40] sm:$0xff]
        %v6494 = vld [vmem:[%s8 + $0x48] sm:$0xff]
        %v6495 = vld [vmem:[%s8 + $0x50] sm:$0xff]
        %v6496 = vld [vmem:[%s8 + $0x58] sm:$0xff]
        %v6497 = vld [vmem:[%s8 + $0x60] sm:$0xff]
        %v6498 = vld [vmem:[%s8 + $0x68] sm:$0xff]
        %v6499 = vld [vmem:[%s8 + $0x70] sm:$0xff]
        %v6500 = vld [vmem:[%s8 + $0x78] sm:$0xff]
        %v6501 = vld [vmem:[%s8 + $0x80] sm:$0xff]
        %v6502 = vld [vmem:[%s8 + $0x88] sm:$0xff]
        %v6503 = vld [vmem:[%s8 + $0x90] sm:$0xff]
        %v6504 = vld [vmem:[%s8 + $0x98] sm:$0xff]
        %v6505 = vld [vmem:[%s8 + $0xa0] sm:$0xff]
        %v6506 = vld [vmem:[%s8 + $0xa8] sm:$0xff]
        %v6507 = vld [vmem:[%s8 + $0xb0] sm:$0xff]
        %v6508 = vld [vmem:[%s8 + $0xb8] sm:$0xff]
        %v6509 = vld [vmem:[%s8 + $0xc0] sm:$0xff]
        %v6510 = vld [vmem:[%s8 + $0xc8] sm:$0xff]
        %v6511 = vld [vmem:[%s8 + $0xd0] sm:$0xff]
        %v6512 = vld [vmem:[%s8 + $0xd8] sm:$0xff]
        %v6513 = vld [vmem:[%s8 + $0xe0] sm:$0xff]
        %v6514 = vld [vmem:[%s8 + $0xe8] sm:$0xff]
        %v6515 = vld [vmem:[%s8 + $0xf0] sm:$0xff]
        %v6516 = vld [vmem:[%s8 + $0xf8] sm:$0xff]
        %v6517 = vld [vmem:[%s8 + $0x100] sm:$0xff]
        %v6518 = vld [vmem:[%s8 + $0x108] sm:$0xff]
        %v6519 = vld [vmem:[%s8 + $0x110] sm:$0xff]
        %v6520 = vld [vmem:[%s8 + $0x118] sm:$0xff]
        %v6521 = vld [vmem:[%s8 + $0x120] sm:$0xff]
        %v6522 = vld [vmem:[%s8 + $0x128] sm:$0xff]
        %v6523 = vld [vmem:[%s8 + $0x130] sm:$0xff]
        %v6524 = vld [vmem:[%s8 + $0x138] sm:$0xff]
        %v6525 = vld [vmem:[%s8 + $0x140] sm:$0xff]
        %v6526 = vld [vmem:[%s8 + $0x148] sm:$0xff]
        %v6527 = vld [vmem:[%s8 + $0x150] sm:$0xff]
        %v6528 = vld [vmem:[%s8 + $0x158] sm:$0xff]
        %v6529 = vld [vmem:[%s8 + $0x160] sm:$0xff]
        %v6530 = vld [vmem:[%s8 + $0x168] sm:$0xff]
        %v6531 = vld [vmem:[%s8 + $0x170] sm:$0xff]
        %v6532 = vld [vmem:[%s8 + $0x178] sm:$0xff]
        %v6533 = vld [vmem:[%s8 + $0x180] sm:$0xff]
        %v6534 = vld [vmem:[%s8 + $0x188] sm:$0xff]
        %v6535 = vld [vmem:[%s8 + $0x190] sm:$0xff]
        %v6536 = vld [vmem:[%s8 + $0x198] sm:$0xff]
        %v6537 = vld [vmem:[%s8 + $0x1a0] sm:$0xff]
        %v6538 = vld [vmem:[%s8 + $0x1a8] sm:$0xff]
        %v6539 = vld [vmem:[%s8 + $0x1b0] sm:$0xff]
        %v6540 = vld [vmem:[%s8 + $0x1b8] sm:$0xff]
        %v6541 = vld [vmem:[%s8 + $0x1c0] sm:$0xff]
        %v6542 = vld [vmem:[%s8 + $0x1c8] sm:$0xff]
        %v6543 = vld [vmem:[%s8 + $0x1d0] sm:$0xff]
        %v6544 = vld [vmem:[%s8 + $0x1d8] sm:$0xff]
        %v6545 = vld [vmem:[%s8 + $0x1e0] sm:$0xff]
        %v6546 = vld [vmem:[%s8 + $0x1e8] sm:$0xff]
        %v6547 = vld [vmem:[%s8 + $0x1f0] sm:$0xff]
        %v6548 = vld [vmem:[%s8 + $0x1f8] sm:$0xff]
        %v6549 = vld [vmem:[%s8 + $0x200] sm:$0xff]
        %v6550 = vld [vmem:[%s8 + $0x208] sm:$0xff]
        %v6551 = vld [vmem:[%s8 + $0x210] sm:$0xff]
        %v6552 = vld [vmem:[%s8 + $0x218] sm:$0xff]
        %v6553 = vld [vmem:[%s8 + $0x220] sm:$0xff]
        %v6554 = vld [vmem:[%s8 + $0x228] sm:$0xff]
        %v6555 = vld [vmem:[%s8 + $0x230] sm:$0xff]
        %v6556 = vld [vmem:[%s8 + $0x238] sm:$0xff]
        %v6557 = vld [vmem:[%s8 + $0x240] sm:$0xff]
        %v6558 = vld [vmem:[%s8 + $0x248] sm:$0xff]
        %v6559 = vld [vmem:[%s8 + $0x250] sm:$0xff]
        %v6560 = vld [vmem:[%s8 + $0x258] sm:$0xff]
        %v6561 = vld [vmem:[%s8 + $0x260] sm:$0xff]
        %v6562 = vld [vmem:[%s8 + $0x268] sm:$0xff]
        %v6563 = vld [vmem:[%s8 + $0x270] sm:$0xff]
        %v6564 = vld [vmem:[%s8 + $0x278] sm:$0xff]
        %v6565 = vld [vmem:[%s8 + $0x280] sm:$0xff]
        %v6566 = vld [vmem:[%s8 + $0x288] sm:$0xff]
        %v6567 = vld [vmem:[%s8 + $0x290] sm:$0xff]
        %v6568 = vld [vmem:[%s8 + $0x298] sm:$0xff]
        %v6569 = vld [vmem:[%s8 + $0x2a0] sm:$0xff]
        %v6570 = vld [vmem:[%s8 + $0x2a8] sm:$0xff]
        %v6571 = vld [vmem:[%s8 + $0x2b0] sm:$0xff]
        %v6572 = vld [vmem:[%s8 + $0x2b8] sm:$0xff]
        %v6573 = vld [vmem:[%s8 + $0x2c0] sm:$0xff]
        %v6574 = vld [vmem:[%s8 + $0x2c8] sm:$0xff]
        %v6575 = vld [vmem:[%s8 + $0x2d0] sm:$0xff]
        %v6576 = vld [vmem:[%s8 + $0x2d8] sm:$0xff]
        %v6577 = vld [vmem:[%s8 + $0x2e0] sm:$0xff]
        %v6578 = vld [vmem:[%s8 + $0x2e8] sm:$0xff]
        %v6579 = vld [vmem:[%s8 + $0x2f0] sm:$0xff]
        %v6580 = vld [vmem:[%s8 + $0x2f8] sm:$0xff]
        %v6581 = vld [vmem:[%s8 + $0x300] sm:$0xff]
        %v6582 = vld [vmem:[%s8 + $0x308] sm:$0xff]
        %v6583 = vld [vmem:[%s8 + $0x310] sm:$0xff]
        %v6584 = vld [vmem:[%s8 + $0x318] sm:$0xff]
        %v6585 = vld [vmem:[%s8 + $0x320] sm:$0xff]
        %v6586 = vld [vmem:[%s8 + $0x328] sm:$0xff]
        %v6587 = vld [vmem:[%s8 + $0x330] sm:$0xff]
        %v6588 = vld [vmem:[%s8 + $0x338] sm:$0xff]
        %v6589 = vld [vmem:[%s8 + $0x340] sm:$0xff]
        %v6590 = vld [vmem:[%s8 + $0x348] sm:$0xff]
        %v6591 = vld [vmem:[%s8 + $0x350] sm:$0xff]
        %v6592 = vld [vmem:[%s8 + $0x358] sm:$0xff]
        %v6593 = vld [vmem:[%s8 + $0x360] sm:$0xff]
        %v6594 = vld [vmem:[%s8 + $0x368] sm:$0xff]
        %v6595 = vld [vmem:[%s8 + $0x370] sm:$0xff]
        %v6596 = vld [vmem:[%s8 + $0x378] sm:$0xff]
        %v6597 = vld [vmem:[%s8 + $0x380] sm:$0xff]
        %v6598 = vld [vmem:[%s8 + $0x388] sm:$0xff]
        %v6599 = vld [vmem:[%s8 + $0x390] sm:$0xff]
        %v6600 = vld [vmem:[%s8 + $0x398] sm:$0xff]
        %v6601 = vld [vmem:[%s8 + $0x3a0] sm:$0xff]
        %v6602 = vld [vmem:[%s8 + $0x3a8] sm:$0xff]
        %v6603 = vld [vmem:[%s8 + $0x3b0] sm:$0xff]
        %v6604 = vld [vmem:[%s8 + $0x3b8] sm:$0xff]
        %v6605 = vld [vmem:[%s8 + $0x3c0] sm:$0xff]
        %v6606 = vld [vmem:[%s8 + $0x3c8] sm:$0xff]
        %v6607 = vld [vmem:[%s8 + $0x3d0] sm:$0xff]
        %v6608 = vld [vmem:[%s8 + $0x3d8] sm:$0xff]
        %v6609 = vld [vmem:[%s8 + $0x3e0] sm:$0xff]
        %v6610 = vld [vmem:[%s8 + $0x3e8] sm:$0xff]
        %v6611 = vld [vmem:[%s8 + $0x3f0] sm:$0xff]
        %v6612 = vld [vmem:[%s8 + $0x3f8] sm:$0xff]
        %6614 = vset.pattern.permute.xlu0 0
        %6615 = vperm.xlu0 %6614, %v6485
        %v6616 = vpop.permute.xlu0 %6615
        %6619 = vset.pattern.permute.xlu0 0
        %6620 = vperm.xlu0 %6619, %v6486
        %v6621 = vpop.permute.xlu0 %6620
        %6624 = vset.pattern.permute.xlu0 0
        %6625 = vperm.xlu0 %6624, %v6487
        %v6626 = vpop.permute.xlu0 %6625
        %6629 = vset.pattern.permute.xlu0 0
        %6630 = vperm.xlu0 %6629, %v6488
        %v6631 = vpop.permute.xlu0 %6630
        %6634 = vset.pattern.permute.xlu0 0
        %6635 = vperm.xlu0 %6634, %v6489
        %v6636 = vpop.permute.xlu0 %6635
        %6639 = vset.pattern.permute.xlu0 0
        %6640 = vperm.xlu0 %6639, %v6490
        %v6641 = vpop.permute.xlu0 %6640
        %6644 = vset.pattern.permute.xlu0 0
        %6645 = vperm.xlu0 %6644, %v6491
        %v6646 = vpop.permute.xlu0 %6645
        %6649 = vset.pattern.permute.xlu0 0
        %6650 = vperm.xlu0 %6649, %v6492
        %v6651 = vpop.permute.xlu0 %6650
        %6654 = vset.pattern.permute.xlu0 0
        %6655 = vperm.xlu0 %6654, %v6493
        %v6656 = vpop.permute.xlu0 %6655
        %6659 = vset.pattern.permute.xlu0 0
        %6660 = vperm.xlu0 %6659, %v6494
        %v6661 = vpop.permute.xlu0 %6660
        %6664 = vset.pattern.permute.xlu0 0
        %6665 = vperm.xlu0 %6664, %v6495
        %v6666 = vpop.permute.xlu0 %6665
        %6669 = vset.pattern.permute.xlu0 0
        %6670 = vperm.xlu0 %6669, %v6496
        %v6671 = vpop.permute.xlu0 %6670
        %6674 = vset.pattern.permute.xlu0 0
        %6675 = vperm.xlu0 %6674, %v6497
        %v6676 = vpop.permute.xlu0 %6675
        %6679 = vset.pattern.permute.xlu0 0
        %6680 = vperm.xlu0 %6679, %v6498
        %v6681 = vpop.permute.xlu0 %6680
        %6684 = vset.pattern.permute.xlu0 0
        %6685 = vperm.xlu0 %6684, %v6499
        %v6686 = vpop.permute.xlu0 %6685
        %6689 = vset.pattern.permute.xlu0 0
        %6690 = vperm.xlu0 %6689, %v6500
        %v6691 = vpop.permute.xlu0 %6690
        %6694 = vset.pattern.permute.xlu0 0
        %6695 = vperm.xlu0 %6694, %v6501
        %v6696 = vpop.permute.xlu0 %6695
        %6699 = vset.pattern.permute.xlu0 0
        %6700 = vperm.xlu0 %6699, %v6502
        %v6701 = vpop.permute.xlu0 %6700
        %6704 = vset.pattern.permute.xlu0 0
        %6705 = vperm.xlu0 %6704, %v6503
        %v6706 = vpop.permute.xlu0 %6705
        %6709 = vset.pattern.permute.xlu0 0
        %6710 = vperm.xlu0 %6709, %v6504
        %v6711 = vpop.permute.xlu0 %6710
        %6714 = vset.pattern.permute.xlu0 0
        %6715 = vperm.xlu0 %6714, %v6505
        %v6716 = vpop.permute.xlu0 %6715
        %6719 = vset.pattern.permute.xlu0 0
        %6720 = vperm.xlu0 %6719, %v6506
        %v6721 = vpop.permute.xlu0 %6720
        %6724 = vset.pattern.permute.xlu0 0
        %6725 = vperm.xlu0 %6724, %v6507
        %v6726 = vpop.permute.xlu0 %6725
        %6729 = vset.pattern.permute.xlu0 0
        %6730 = vperm.xlu0 %6729, %v6508
        %v6731 = vpop.permute.xlu0 %6730
        %6734 = vset.pattern.permute.xlu0 0
        %6735 = vperm.xlu0 %6734, %v6509
        %v6736 = vpop.permute.xlu0 %6735
        %6739 = vset.pattern.permute.xlu0 0
        %6740 = vperm.xlu0 %6739, %v6510
        %v6741 = vpop.permute.xlu0 %6740
        %6744 = vset.pattern.permute.xlu0 0
        %6745 = vperm.xlu0 %6744, %v6511
        %v6746 = vpop.permute.xlu0 %6745
        %6749 = vset.pattern.permute.xlu0 0
        %6750 = vperm.xlu0 %6749, %v6512
        %v6751 = vpop.permute.xlu0 %6750
        %6754 = vset.pattern.permute.xlu0 0
        %6755 = vperm.xlu0 %6754, %v6513
        %v6756 = vpop.permute.xlu0 %6755
        %6759 = vset.pattern.permute.xlu0 0
        %6760 = vperm.xlu0 %6759, %v6514
        %v6761 = vpop.permute.xlu0 %6760
        %6764 = vset.pattern.permute.xlu0 0
        %6765 = vperm.xlu0 %6764, %v6515
        %v6766 = vpop.permute.xlu0 %6765
        %6769 = vset.pattern.permute.xlu0 0
        %6770 = vperm.xlu0 %6769, %v6516
        %v6771 = vpop.permute.xlu0 %6770
        %6774 = vset.pattern.permute.xlu0 0
        %6775 = vperm.xlu0 %6774, %v6517
        %v6776 = vpop.permute.xlu0 %6775
        %6779 = vset.pattern.permute.xlu0 0
        %6780 = vperm.xlu0 %6779, %v6518
        %v6781 = vpop.permute.xlu0 %6780
        %6784 = vset.pattern.permute.xlu0 0
        %6785 = vperm.xlu0 %6784, %v6519
        %v6786 = vpop.permute.xlu0 %6785
        %6789 = vset.pattern.permute.xlu0 0
        %6790 = vperm.xlu0 %6789, %v6520
        %v6791 = vpop.permute.xlu0 %6790
        %6794 = vset.pattern.permute.xlu0 0
        %6795 = vperm.xlu0 %6794, %v6521
        %v6796 = vpop.permute.xlu0 %6795
        %6799 = vset.pattern.permute.xlu0 0
        %6800 = vperm.xlu0 %6799, %v6522
        %v6801 = vpop.permute.xlu0 %6800
        %6804 = vset.pattern.permute.xlu0 0
        %6805 = vperm.xlu0 %6804, %v6523
        %v6806 = vpop.permute.xlu0 %6805
        %6809 = vset.pattern.permute.xlu0 0
        %6810 = vperm.xlu0 %6809, %v6524
        %v6811 = vpop.permute.xlu0 %6810
        %6814 = vset.pattern.permute.xlu0 0
        %6815 = vperm.xlu0 %6814, %v6525
        %v6816 = vpop.permute.xlu0 %6815
        %6819 = vset.pattern.permute.xlu0 0
        %6820 = vperm.xlu0 %6819, %v6526
        %v6821 = vpop.permute.xlu0 %6820
        %6824 = vset.pattern.permute.xlu0 0
        %6825 = vperm.xlu0 %6824, %v6527
        %v6826 = vpop.permute.xlu0 %6825
        %6829 = vset.pattern.permute.xlu0 0
        %6830 = vperm.xlu0 %6829, %v6528
        %v6831 = vpop.permute.xlu0 %6830
        %6834 = vset.pattern.permute.xlu0 0
        %6835 = vperm.xlu0 %6834, %v6529
        %v6836 = vpop.permute.xlu0 %6835
        %6839 = vset.pattern.permute.xlu0 0
        %6840 = vperm.xlu0 %6839, %v6530
        %v6841 = vpop.permute.xlu0 %6840
        %6844 = vset.pattern.permute.xlu0 0
        %6845 = vperm.xlu0 %6844, %v6531
        %v6846 = vpop.permute.xlu0 %6845
        %6849 = vset.pattern.permute.xlu0 0
        %6850 = vperm.xlu0 %6849, %v6532
        %v6851 = vpop.permute.xlu0 %6850
        %6854 = vset.pattern.permute.xlu0 0
        %6855 = vperm.xlu0 %6854, %v6533
        %v6856 = vpop.permute.xlu0 %6855
        %6859 = vset.pattern.permute.xlu0 0
        %6860 = vperm.xlu0 %6859, %v6534
        %v6861 = vpop.permute.xlu0 %6860
        %6864 = vset.pattern.permute.xlu0 0
        %6865 = vperm.xlu0 %6864, %v6535
        %v6866 = vpop.permute.xlu0 %6865
        %6869 = vset.pattern.permute.xlu0 0
        %6870 = vperm.xlu0 %6869, %v6536
        %v6871 = vpop.permute.xlu0 %6870
        %6874 = vset.pattern.permute.xlu0 0
        %6875 = vperm.xlu0 %6874, %v6537
        %v6876 = vpop.permute.xlu0 %6875
        %6879 = vset.pattern.permute.xlu0 0
        %6880 = vperm.xlu0 %6879, %v6538
        %v6881 = vpop.permute.xlu0 %6880
        %6884 = vset.pattern.permute.xlu0 0
        %6885 = vperm.xlu0 %6884, %v6539
        %v6886 = vpop.permute.xlu0 %6885
        %6889 = vset.pattern.permute.xlu0 0
        %6890 = vperm.xlu0 %6889, %v6540
        %v6891 = vpop.permute.xlu0 %6890
        %6894 = vset.pattern.permute.xlu0 0
        %6895 = vperm.xlu0 %6894, %v6541
        %v6896 = vpop.permute.xlu0 %6895
        %6899 = vset.pattern.permute.xlu0 0
        %6900 = vperm.xlu0 %6899, %v6542
        %v6901 = vpop.permute.xlu0 %6900
        %6904 = vset.pattern.permute.xlu0 0
        %6905 = vperm.xlu0 %6904, %v6543
        %v6906 = vpop.permute.xlu0 %6905
        %6909 = vset.pattern.permute.xlu0 0
        %6910 = vperm.xlu0 %6909, %v6544
        %v6911 = vpop.permute.xlu0 %6910
        %6914 = vset.pattern.permute.xlu0 0
        %6915 = vperm.xlu0 %6914, %v6545
        %v6916 = vpop.permute.xlu0 %6915
        %6919 = vset.pattern.permute.xlu0 0
        %6920 = vperm.xlu0 %6919, %v6546
        %v6921 = vpop.permute.xlu0 %6920
        %6924 = vset.pattern.permute.xlu0 0
        %6925 = vperm.xlu0 %6924, %v6547
        %v6926 = vpop.permute.xlu0 %6925
        %6929 = vset.pattern.permute.xlu0 0
        %6930 = vperm.xlu0 %6929, %v6548
        %v6931 = vpop.permute.xlu0 %6930
        %6934 = vset.pattern.permute.xlu0 0
        %6935 = vperm.xlu0 %6934, %v6549
        %v6936 = vpop.permute.xlu0 %6935
        %6939 = vset.pattern.permute.xlu0 0
        %6940 = vperm.xlu0 %6939, %v6550
        %v6941 = vpop.permute.xlu0 %6940
        %6944 = vset.pattern.permute.xlu0 0
        %6945 = vperm.xlu0 %6944, %v6551
        %v6946 = vpop.permute.xlu0 %6945
        %6949 = vset.pattern.permute.xlu0 0
        %6950 = vperm.xlu0 %6949, %v6552
        %v6951 = vpop.permute.xlu0 %6950
        %6954 = vset.pattern.permute.xlu0 0
        %6955 = vperm.xlu0 %6954, %v6553
        %v6956 = vpop.permute.xlu0 %6955
        %6959 = vset.pattern.permute.xlu0 0
        %6960 = vperm.xlu0 %6959, %v6554
        %v6961 = vpop.permute.xlu0 %6960
        %6964 = vset.pattern.permute.xlu0 0
        %6965 = vperm.xlu0 %6964, %v6555
        %v6966 = vpop.permute.xlu0 %6965
        %6969 = vset.pattern.permute.xlu0 0
        %6970 = vperm.xlu0 %6969, %v6556
        %v6971 = vpop.permute.xlu0 %6970
        %6974 = vset.pattern.permute.xlu0 0
        %6975 = vperm.xlu0 %6974, %v6557
        %v6976 = vpop.permute.xlu0 %6975
        %6979 = vset.pattern.permute.xlu0 0
        %6980 = vperm.xlu0 %6979, %v6558
        %v6981 = vpop.permute.xlu0 %6980
        %6984 = vset.pattern.permute.xlu0 0
        %6985 = vperm.xlu0 %6984, %v6559
        %v6986 = vpop.permute.xlu0 %6985
        %6989 = vset.pattern.permute.xlu0 0
        %6990 = vperm.xlu0 %6989, %v6560
        %v6991 = vpop.permute.xlu0 %6990
        %6994 = vset.pattern.permute.xlu0 0
        %6995 = vperm.xlu0 %6994, %v6561
        %v6996 = vpop.permute.xlu0 %6995
        %6999 = vset.pattern.permute.xlu0 0
        %7000 = vperm.xlu0 %6999, %v6562
        %v7001 = vpop.permute.xlu0 %7000
        %7004 = vset.pattern.permute.xlu0 0
        %7005 = vperm.xlu0 %7004, %v6563
        %v7006 = vpop.permute.xlu0 %7005
        %7009 = vset.pattern.permute.xlu0 0
        %7010 = vperm.xlu0 %7009, %v6564
        %v7011 = vpop.permute.xlu0 %7010
        %7014 = vset.pattern.permute.xlu0 0
        %7015 = vperm.xlu0 %7014, %v6565
        %v7016 = vpop.permute.xlu0 %7015
        %7019 = vset.pattern.permute.xlu0 0
        %7020 = vperm.xlu0 %7019, %v6566
        %v7021 = vpop.permute.xlu0 %7020
        %7024 = vset.pattern.permute.xlu0 0
        %7025 = vperm.xlu0 %7024, %v6567
        %v7026 = vpop.permute.xlu0 %7025
        %7029 = vset.pattern.permute.xlu0 0
        %7030 = vperm.xlu0 %7029, %v6568
        %v7031 = vpop.permute.xlu0 %7030
        %7034 = vset.pattern.permute.xlu0 0
        %7035 = vperm.xlu0 %7034, %v6569
        %v7036 = vpop.permute.xlu0 %7035
        %7039 = vset.pattern.permute.xlu0 0
        %7040 = vperm.xlu0 %7039, %v6570
        %v7041 = vpop.permute.xlu0 %7040
        %7044 = vset.pattern.permute.xlu0 0
        %7045 = vperm.xlu0 %7044, %v6571
        %v7046 = vpop.permute.xlu0 %7045
        %7049 = vset.pattern.permute.xlu0 0
        %7050 = vperm.xlu0 %7049, %v6572
        %v7051 = vpop.permute.xlu0 %7050
        %7054 = vset.pattern.permute.xlu0 0
        %7055 = vperm.xlu0 %7054, %v6573
        %v7056 = vpop.permute.xlu0 %7055
        %7059 = vset.pattern.permute.xlu0 0
        %7060 = vperm.xlu0 %7059, %v6574
        %v7061 = vpop.permute.xlu0 %7060
        %7064 = vset.pattern.permute.xlu0 0
        %7065 = vperm.xlu0 %7064, %v6575
        %v7066 = vpop.permute.xlu0 %7065
        %7069 = vset.pattern.permute.xlu0 0
        %7070 = vperm.xlu0 %7069, %v6576
        %v7071 = vpop.permute.xlu0 %7070
        %7074 = vset.pattern.permute.xlu0 0
        %7075 = vperm.xlu0 %7074, %v6577
        %v7076 = vpop.permute.xlu0 %7075
        %7079 = vset.pattern.permute.xlu0 0
        %7080 = vperm.xlu0 %7079, %v6578
        %v7081 = vpop.permute.xlu0 %7080
        %7084 = vset.pattern.permute.xlu0 0
        %7085 = vperm.xlu0 %7084, %v6579
        %v7086 = vpop.permute.xlu0 %7085
        %7089 = vset.pattern.permute.xlu0 0
        %7090 = vperm.xlu0 %7089, %v6580
        %v7091 = vpop.permute.xlu0 %7090
        %7094 = vset.pattern.permute.xlu0 0
        %7095 = vperm.xlu0 %7094, %v6581
        %v7096 = vpop.permute.xlu0 %7095
        %7099 = vset.pattern.permute.xlu0 0
        %7100 = vperm.xlu0 %7099, %v6582
        %v7101 = vpop.permute.xlu0 %7100
        %7104 = vset.pattern.permute.xlu0 0
        %7105 = vperm.xlu0 %7104, %v6583
        %v7106 = vpop.permute.xlu0 %7105
        %7109 = vset.pattern.permute.xlu0 0
        %7110 = vperm.xlu0 %7109, %v6584
        %v7111 = vpop.permute.xlu0 %7110
        %7114 = vset.pattern.permute.xlu0 0
        %7115 = vperm.xlu0 %7114, %v6585
        %v7116 = vpop.permute.xlu0 %7115
        %7119 = vset.pattern.permute.xlu0 0
        %7120 = vperm.xlu0 %7119, %v6586
        %v7121 = vpop.permute.xlu0 %7120
        %7124 = vset.pattern.permute.xlu0 0
        %7125 = vperm.xlu0 %7124, %v6587
        %v7126 = vpop.permute.xlu0 %7125
        %7129 = vset.pattern.permute.xlu0 0
        %7130 = vperm.xlu0 %7129, %v6588
        %v7131 = vpop.permute.xlu0 %7130
        %7134 = vset.pattern.permute.xlu0 0
        %7135 = vperm.xlu0 %7134, %v6589
        %v7136 = vpop.permute.xlu0 %7135
        %7139 = vset.pattern.permute.xlu0 0
        %7140 = vperm.xlu0 %7139, %v6590
        %v7141 = vpop.permute.xlu0 %7140
        %7144 = vset.pattern.permute.xlu0 0
        %7145 = vperm.xlu0 %7144, %v6591
        %v7146 = vpop.permute.xlu0 %7145
        %7149 = vset.pattern.permute.xlu0 0
        %7150 = vperm.xlu0 %7149, %v6592
        %v7151 = vpop.permute.xlu0 %7150
        %7154 = vset.pattern.permute.xlu0 0
        %7155 = vperm.xlu0 %7154, %v6593
        %v7156 = vpop.permute.xlu0 %7155
        %7159 = vset.pattern.permute.xlu0 0
        %7160 = vperm.xlu0 %7159, %v6594
        %v7161 = vpop.permute.xlu0 %7160
        %7164 = vset.pattern.permute.xlu0 0
        %7165 = vperm.xlu0 %7164, %v6595
        %v7166 = vpop.permute.xlu0 %7165
        %7169 = vset.pattern.permute.xlu0 0
        %7170 = vperm.xlu0 %7169, %v6596
        %v7171 = vpop.permute.xlu0 %7170
        %7174 = vset.pattern.permute.xlu0 0
        %7175 = vperm.xlu0 %7174, %v6597
        %v7176 = vpop.permute.xlu0 %7175
        %7179 = vset.pattern.permute.xlu0 0
        %7180 = vperm.xlu0 %7179, %v6598
        %v7181 = vpop.permute.xlu0 %7180
        %7184 = vset.pattern.permute.xlu0 0
        %7185 = vperm.xlu0 %7184, %v6599
        %v7186 = vpop.permute.xlu0 %7185
        %7189 = vset.pattern.permute.xlu0 0
        %7190 = vperm.xlu0 %7189, %v6600
        %v7191 = vpop.permute.xlu0 %7190
        %7194 = vset.pattern.permute.xlu0 0
        %7195 = vperm.xlu0 %7194, %v6601
        %v7196 = vpop.permute.xlu0 %7195
        %7199 = vset.pattern.permute.xlu0 0
        %7200 = vperm.xlu0 %7199, %v6602
        %v7201 = vpop.permute.xlu0 %7200
        %7204 = vset.pattern.permute.xlu0 0
        %7205 = vperm.xlu0 %7204, %v6603
        %v7206 = vpop.permute.xlu0 %7205
        %7209 = vset.pattern.permute.xlu0 0
        %7210 = vperm.xlu0 %7209, %v6604
        %v7211 = vpop.permute.xlu0 %7210
        %7214 = vset.pattern.permute.xlu0 0
        %7215 = vperm.xlu0 %7214, %v6605
        %v7216 = vpop.permute.xlu0 %7215
        %7219 = vset.pattern.permute.xlu0 0
        %7220 = vperm.xlu0 %7219, %v6606
        %v7221 = vpop.permute.xlu0 %7220
        %7224 = vset.pattern.permute.xlu0 0
        %7225 = vperm.xlu0 %7224, %v6607
        %v7226 = vpop.permute.xlu0 %7225
        %7229 = vset.pattern.permute.xlu0 0
        %7230 = vperm.xlu0 %7229, %v6608
        %v7231 = vpop.permute.xlu0 %7230
        %7234 = vset.pattern.permute.xlu0 0
        %7235 = vperm.xlu0 %7234, %v6609
        %v7236 = vpop.permute.xlu0 %7235
        %7239 = vset.pattern.permute.xlu0 0
        %7240 = vperm.xlu0 %7239, %v6610
        %v7241 = vpop.permute.xlu0 %7240
        %7244 = vset.pattern.permute.xlu0 0
        %7245 = vperm.xlu0 %7244, %v6611
        %v7246 = vpop.permute.xlu0 %7245
        %7249 = vset.pattern.permute.xlu0 0
        %7250 = vperm.xlu0 %7249, %v6612
        %v7251 = vpop.permute.xlu0 %7250
        %v7381 = vunpack.c.l.b16 %v6357
        %v7382 = vunpack.c.l.b16 %v6358
        %v7383 = vunpack.c.l.b16 %v6359
        %v7384 = vunpack.c.l.b16 %v6360
        %v7385 = vunpack.c.l.b16 %v6361
        %v7386 = vunpack.c.l.b16 %v6362
        %v7387 = vunpack.c.l.b16 %v6363
        %v7388 = vunpack.c.l.b16 %v6364
        %v7389 = vunpack.c.l.b16 %v6365
        %v7390 = vunpack.c.l.b16 %v6366
        %v7391 = vunpack.c.l.b16 %v6367
        %v7392 = vunpack.c.l.b16 %v6368
        %v7393 = vunpack.c.l.b16 %v6369
        %v7394 = vunpack.c.l.b16 %v6370
        %v7395 = vunpack.c.l.b16 %v6371
        %v7396 = vunpack.c.l.b16 %v6372
        %v7397 = vunpack.c.l.b16 %v6373
        %v7398 = vunpack.c.l.b16 %v6374
        %v7399 = vunpack.c.l.b16 %v6375
        %v7400 = vunpack.c.l.b16 %v6376
        %v7401 = vunpack.c.l.b16 %v6377
        %v7402 = vunpack.c.l.b16 %v6378
        %v7403 = vunpack.c.l.b16 %v6379
        %v7404 = vunpack.c.l.b16 %v6380
        %v7405 = vunpack.c.l.b16 %v6381
        %v7406 = vunpack.c.l.b16 %v6382
        %v7407 = vunpack.c.l.b16 %v6383
        %v7408 = vunpack.c.l.b16 %v6384
        %v7409 = vunpack.c.l.b16 %v6385
        %v7410 = vunpack.c.l.b16 %v6386
        %v7411 = vunpack.c.l.b16 %v6387
        %v7412 = vunpack.c.l.b16 %v6388
        %v7413 = vunpack.c.l.b16 %v6389
        %v7414 = vunpack.c.l.b16 %v6390
        %v7415 = vunpack.c.l.b16 %v6391
        %v7416 = vunpack.c.l.b16 %v6392
        %v7417 = vunpack.c.l.b16 %v6393
        %v7418 = vunpack.c.l.b16 %v6394
        %v7419 = vunpack.c.l.b16 %v6395
        %v7420 = vunpack.c.l.b16 %v6396
        %v7421 = vunpack.c.l.b16 %v6397
        %v7422 = vunpack.c.l.b16 %v6398
        %v7423 = vunpack.c.l.b16 %v6399
        %v7424 = vunpack.c.l.b16 %v6400
        %v7425 = vunpack.c.l.b16 %v6401
        %v7426 = vunpack.c.l.b16 %v6402
        %v7427 = vunpack.c.l.b16 %v6403
        %v7428 = vunpack.c.l.b16 %v6404
        %v7429 = vunpack.c.l.b16 %v6405
        %v7430 = vunpack.c.l.b16 %v6406
        %v7431 = vunpack.c.l.b16 %v6407
        %v7432 = vunpack.c.l.b16 %v6408
        %v7433 = vunpack.c.l.b16 %v6409
        %v7434 = vunpack.c.l.b16 %v6410
        %v7435 = vunpack.c.l.b16 %v6411
        %v7436 = vunpack.c.l.b16 %v6412
        %v7437 = vunpack.c.l.b16 %v6413
        %v7438 = vunpack.c.l.b16 %v6414
        %v7439 = vunpack.c.l.b16 %v6415
        %v7440 = vunpack.c.l.b16 %v6416
        %v7441 = vunpack.c.l.b16 %v6417
        %v7442 = vunpack.c.l.b16 %v6418
        %v7443 = vunpack.c.l.b16 %v6419
        %v7444 = vunpack.c.l.b16 %v6420
        %v7445 = vunpack.c.l.b16 %v6421
        %v7446 = vunpack.c.l.b16 %v6422
        %v7447 = vunpack.c.l.b16 %v6423
        %v7448 = vunpack.c.l.b16 %v6424
        %v7449 = vunpack.c.l.b16 %v6425
        %v7450 = vunpack.c.l.b16 %v6426
        %v7451 = vunpack.c.l.b16 %v6427
        %v7452 = vunpack.c.l.b16 %v6428
        %v7453 = vunpack.c.l.b16 %v6429
        %v7454 = vunpack.c.l.b16 %v6430
        %v7455 = vunpack.c.l.b16 %v6431
        %v7456 = vunpack.c.l.b16 %v6432
        %v7457 = vunpack.c.l.b16 %v6433
        %v7458 = vunpack.c.l.b16 %v6434
        %v7459 = vunpack.c.l.b16 %v6435
        %v7460 = vunpack.c.l.b16 %v6436
        %v7461 = vunpack.c.l.b16 %v6437
        %v7462 = vunpack.c.l.b16 %v6438
        %v7463 = vunpack.c.l.b16 %v6439
        %v7464 = vunpack.c.l.b16 %v6440
        %v7465 = vunpack.c.l.b16 %v6441
        %v7466 = vunpack.c.l.b16 %v6442
        %v7467 = vunpack.c.l.b16 %v6443
        %v7468 = vunpack.c.l.b16 %v6444
        %v7469 = vunpack.c.l.b16 %v6445
        %v7470 = vunpack.c.l.b16 %v6446
        %v7471 = vunpack.c.l.b16 %v6447
        %v7472 = vunpack.c.l.b16 %v6448
        %v7473 = vunpack.c.l.b16 %v6449
        %v7474 = vunpack.c.l.b16 %v6450
        %v7475 = vunpack.c.l.b16 %v6451
        %v7476 = vunpack.c.l.b16 %v6452
        %v7477 = vunpack.c.l.b16 %v6453
        %v7478 = vunpack.c.l.b16 %v6454
        %v7479 = vunpack.c.l.b16 %v6455
        %v7480 = vunpack.c.l.b16 %v6456
        %v7481 = vunpack.c.l.b16 %v6457
        %v7482 = vunpack.c.l.b16 %v6458
        %v7483 = vunpack.c.l.b16 %v6459
        %v7484 = vunpack.c.l.b16 %v6460
        %v7485 = vunpack.c.l.b16 %v6461
        %v7486 = vunpack.c.l.b16 %v6462
        %v7487 = vunpack.c.l.b16 %v6463
        %v7488 = vunpack.c.l.b16 %v6464
        %v7489 = vunpack.c.l.b16 %v6465
        %v7490 = vunpack.c.l.b16 %v6466
        %v7491 = vunpack.c.l.b16 %v6467
        %v7492 = vunpack.c.l.b16 %v6468
        %v7493 = vunpack.c.l.b16 %v6469
        %v7494 = vunpack.c.l.b16 %v6470
        %v7495 = vunpack.c.l.b16 %v6471
        %v7496 = vunpack.c.l.b16 %v6472
        %v7497 = vunpack.c.l.b16 %v6473
        %v7498 = vunpack.c.l.b16 %v6474
        %v7499 = vunpack.c.l.b16 %v6475
        %v7500 = vunpack.c.l.b16 %v6476
        %v7501 = vunpack.c.l.b16 %v6477
        %v7502 = vunpack.c.l.b16 %v6478
        %v7503 = vunpack.c.l.b16 %v6479
        %v7504 = vunpack.c.l.b16 %v6480
        %v7505 = vunpack.c.l.b16 %v6481
        %v7506 = vunpack.c.l.b16 %v6482
        %v7507 = vunpack.c.l.b16 %v6483
        %v7508 = vunpack.c.l.b16 %v6484
        %v7509 = vpack.c.b16 %v7382, %v7381
        %v7510 = vpack.c.b16 %v7384, %v7383
        %v7511 = vpack.c.b16 %v7386, %v7385
        %v7512 = vpack.c.b16 %v7388, %v7387
        %v7513 = vpack.c.b16 %v7390, %v7389
        %v7514 = vpack.c.b16 %v7392, %v7391
        %v7515 = vpack.c.b16 %v7394, %v7393
        %v7516 = vpack.c.b16 %v7396, %v7395
        %v7517 = vpack.c.b16 %v7398, %v7397
        %v7518 = vpack.c.b16 %v7400, %v7399
        %v7519 = vpack.c.b16 %v7402, %v7401
        %v7520 = vpack.c.b16 %v7404, %v7403
        %v7521 = vpack.c.b16 %v7406, %v7405
        %v7522 = vpack.c.b16 %v7408, %v7407
        %v7523 = vpack.c.b16 %v7410, %v7409
        %v7524 = vpack.c.b16 %v7412, %v7411
        %v7525 = vpack.c.b16 %v7414, %v7413
        %v7526 = vpack.c.b16 %v7416, %v7415
        %v7527 = vpack.c.b16 %v7418, %v7417
        %v7528 = vpack.c.b16 %v7420, %v7419
        %v7529 = vpack.c.b16 %v7422, %v7421
        %v7530 = vpack.c.b16 %v7424, %v7423
        %v7531 = vpack.c.b16 %v7426, %v7425
        %v7532 = vpack.c.b16 %v7428, %v7427
        %v7533 = vpack.c.b16 %v7430, %v7429
        %v7534 = vpack.c.b16 %v7432, %v7431
        %v7535 = vpack.c.b16 %v7434, %v7433
        %v7536 = vpack.c.b16 %v7436, %v7435
        %v7537 = vpack.c.b16 %v7438, %v7437
        %v7538 = vpack.c.b16 %v7440, %v7439
        %v7539 = vpack.c.b16 %v7442, %v7441
        %v7540 = vpack.c.b16 %v7444, %v7443
        %v7541 = vpack.c.b16 %v7446, %v7445
        %v7542 = vpack.c.b16 %v7448, %v7447
        %v7543 = vpack.c.b16 %v7450, %v7449
        %v7544 = vpack.c.b16 %v7452, %v7451
        %v7545 = vpack.c.b16 %v7454, %v7453
        %v7546 = vpack.c.b16 %v7456, %v7455
        %v7547 = vpack.c.b16 %v7458, %v7457
        %v7548 = vpack.c.b16 %v7460, %v7459
        %v7549 = vpack.c.b16 %v7462, %v7461
        %v7550 = vpack.c.b16 %v7464, %v7463
        %v7551 = vpack.c.b16 %v7466, %v7465
        %v7552 = vpack.c.b16 %v7468, %v7467
        %v7553 = vpack.c.b16 %v7470, %v7469
        %v7554 = vpack.c.b16 %v7472, %v7471
        %v7555 = vpack.c.b16 %v7474, %v7473
        %v7556 = vpack.c.b16 %v7476, %v7475
        %v7557 = vpack.c.b16 %v7478, %v7477
        %v7558 = vpack.c.b16 %v7480, %v7479
        %v7559 = vpack.c.b16 %v7482, %v7481
        %v7560 = vpack.c.b16 %v7484, %v7483
        %v7561 = vpack.c.b16 %v7486, %v7485
        %v7562 = vpack.c.b16 %v7488, %v7487
        %v7563 = vpack.c.b16 %v7490, %v7489
        %v7564 = vpack.c.b16 %v7492, %v7491
        %v7565 = vpack.c.b16 %v7494, %v7493
        %v7566 = vpack.c.b16 %v7496, %v7495
        %v7567 = vpack.c.b16 %v7498, %v7497
        %v7568 = vpack.c.b16 %v7500, %v7499
        %v7569 = vpack.c.b16 %v7502, %v7501
        %v7570 = vpack.c.b16 %v7504, %v7503
        %v7571 = vpack.c.b16 %v7506, %v7505
        %v7572 = vpack.c.b16 %v7508, %v7507
        %v7574 = vsel %vm3191, %v7509, 0
        %v7577 = vsel %vm3191, %v7510, 0
        %v7580 = vsel %vm3191, %v7511, 0
        %v7583 = vsel %vm3191, %v7512, 0
        %v7586 = vsel %vm3191, %v7513, 0
        %v7589 = vsel %vm3191, %v7514, 0
        %v7592 = vsel %vm3191, %v7515, 0
        %v7595 = vsel %vm3191, %v7516, 0
        %v7598 = vsel %vm3191, %v7517, 0
        %v7601 = vsel %vm3191, %v7518, 0
        %v7604 = vsel %vm3191, %v7519, 0
        %v7607 = vsel %vm3191, %v7520, 0
        %v7610 = vsel %vm3191, %v7521, 0
        %v7613 = vsel %vm3191, %v7522, 0
        %v7616 = vsel %vm3191, %v7523, 0
        %v7619 = vsel %vm3191, %v7524, 0
        %v7622 = vsel %vm3191, %v7525, 0
        %v7625 = vsel %vm3191, %v7526, 0
        %v7628 = vsel %vm3191, %v7527, 0
        %v7631 = vsel %vm3191, %v7528, 0
        %v7634 = vsel %vm3191, %v7529, 0
        %v7637 = vsel %vm3191, %v7530, 0
        %v7640 = vsel %vm3191, %v7531, 0
        %v7643 = vsel %vm3191, %v7532, 0
        %v7646 = vsel %vm3191, %v7533, 0
        %v7649 = vsel %vm3191, %v7534, 0
        %v7652 = vsel %vm3191, %v7535, 0
        %v7655 = vsel %vm3191, %v7536, 0
        %v7658 = vsel %vm3191, %v7537, 0
        %v7661 = vsel %vm3191, %v7538, 0
        %v7664 = vsel %vm3191, %v7539, 0
        %v7667 = vsel %vm3191, %v7540, 0
        %v7670 = vsel %vm3191, %v7541, 0
        %v7673 = vsel %vm3191, %v7542, 0
        %v7676 = vsel %vm3191, %v7543, 0
        %v7679 = vsel %vm3191, %v7544, 0
        %v7682 = vsel %vm3191, %v7545, 0
        %v7685 = vsel %vm3191, %v7546, 0
        %v7688 = vsel %vm3191, %v7547, 0
        %v7691 = vsel %vm3191, %v7548, 0
        %v7694 = vsel %vm3191, %v7549, 0
        %v7697 = vsel %vm3191, %v7550, 0
        %v7700 = vsel %vm3191, %v7551, 0
        %v7703 = vsel %vm3191, %v7552, 0
        %v7706 = vsel %vm3191, %v7553, 0
        %v7709 = vsel %vm3191, %v7554, 0
        %v7712 = vsel %vm3191, %v7555, 0
        %v7715 = vsel %vm3191, %v7556, 0
        %v7718 = vsel %vm3191, %v7557, 0
        %v7721 = vsel %vm3191, %v7558, 0
        %v7724 = vsel %vm3191, %v7559, 0
        %v7727 = vsel %vm3191, %v7560, 0
        %v7730 = vsel %vm3191, %v7561, 0
        %v7733 = vsel %vm3191, %v7562, 0
        %v7736 = vsel %vm3191, %v7563, 0
        %v7739 = vsel %vm3191, %v7564, 0
        %v7742 = vsel %vm3191, %v7565, 0
        %v7745 = vsel %vm3191, %v7566, 0
        %v7748 = vsel %vm3191, %v7567, 0
        %v7751 = vsel %vm3191, %v7568, 0
        %v7754 = vsel %vm3191, %v7569, 0
        %v7757 = vsel %vm3191, %v7570, 0
        %v7760 = vsel %vm3191, %v7571, 0
        %v7763 = vsel %vm3191, %v7572, 0
        %7765 = vmatprep.subr.bf16.mxu0 0
        %7766 = vmatpush1.bf16.msra.mxu0 0
        %7767 = vmatprep.subr.bf16.mxu0 0
        %7768 = vmatpush1.bf16.msra.mxu0 0
        %7769 = vmatprep.subr.bf16.mxu0 0
        %7770 = vmatpush1.bf16.msra.mxu0 0
        %7771 = vmatprep.subr.bf16.mxu0 0
        %7772 = vmatpush1.bf16.msra.mxu0 0
        %7773 = vmatprep.subr.bf16.mxu0 0
        %7774 = vmatpush1.bf16.msra.mxu0 0
        %7775 = vmatprep.subr.bf16.mxu0 0
        %7776 = vmatpush1.bf16.msra.mxu0 0
        %7777 = vmatprep.subr.bf16.mxu0 %v6356
        %7778 = vmatpush1.bf16.msra.mxu0 %v6355
        %7779 = vmatprep.subr.bf16.mxu0 %v6354
        %7780 = vmatpush1.bf16.msra.mxu0 %v6353
        %7781 = vmatprep.subr.bf16.mxu0 0
        %7782 = vmatpush2.bf16.msra.mxu0 0
        %7783 = vmatprep.subr.bf16.mxu0 0
        %7784 = vmatpush2.bf16.msra.mxu0 0
        %7785 = vmatprep.subr.bf16.mxu0 0
        %7786 = vmatpush2.bf16.msra.mxu0 0
        %7787 = vmatprep.subr.bf16.mxu0 0
        %7788 = vmatpush2.bf16.msra.mxu0 0
        %7789 = vmatprep.subr.bf16.mxu0 0
        %7790 = vmatpush2.bf16.msra.mxu0 0
        %7791 = vmatprep.subr.bf16.mxu0 0
        %7792 = vmatpush2.bf16.msra.mxu0 0
        %7793 = vmatprep.subr.bf16.mxu0 0
        %7794 = vmatpush2.bf16.msra.mxu0 0
        %7795 = vmatprep.subr.bf16.mxu0 0
        %7796 = vmatpush2.bf16.msra.mxu0 0
        %7797 = vmatprep.mubr.bf16.mxu0 0
        %7798 = vmatmul.mubr.bf16.gmra.mxu0 %v7574
        %v7799 = vpop.f32.mrf.mxu0
        %v7800 = vadd.f32 %v6616, %v7799
        %v7801 = vpop.f32.mrf.mxu0
        %v7802 = vadd.f32 %v6616, %v7801
        %v7803 = vpop.f32.mrf.mxu0
        %v7804 = vadd.f32 %v6621, %v7803
        %v7805 = vpop.f32.mrf.mxu0
        %v7806 = vadd.f32 %v6621, %v7805
        %7807 = vmatprep.mubr.bf16.mxu0 0
        %7808 = vmatmul.mubr.bf16.gmra.mxu0 %v7577
        %v7809 = vpop.f32.mrf.mxu0
        %v7810 = vadd.f32 %v6626, %v7809
        %v7811 = vpop.f32.mrf.mxu0
        %v7812 = vadd.f32 %v6626, %v7811
        %v7813 = vpop.f32.mrf.mxu0
        %v7814 = vadd.f32 %v6631, %v7813
        %v7815 = vpop.f32.mrf.mxu0
        %v7816 = vadd.f32 %v6631, %v7815
        %7817 = vmatprep.mubr.bf16.mxu0 0
        %7818 = vmatmul.mubr.bf16.gmra.mxu0 %v7580
        %v7819 = vpop.f32.mrf.mxu0
        %v7820 = vadd.f32 %v6636, %v7819
        %v7821 = vpop.f32.mrf.mxu0
        %v7822 = vadd.f32 %v6636, %v7821
        %v7823 = vpop.f32.mrf.mxu0
        %v7824 = vadd.f32 %v6641, %v7823
        %v7825 = vpop.f32.mrf.mxu0
        %v7826 = vadd.f32 %v6641, %v7825
        %7827 = vmatprep.mubr.bf16.mxu0 0
        %7828 = vmatmul.mubr.bf16.gmra.mxu0 %v7583
        %v7829 = vpop.f32.mrf.mxu0
        %v7830 = vadd.f32 %v6646, %v7829
        %v7831 = vpop.f32.mrf.mxu0
        %v7832 = vadd.f32 %v6646, %v7831
        %v7833 = vpop.f32.mrf.mxu0
        %v7834 = vadd.f32 %v6651, %v7833
        %v7835 = vpop.f32.mrf.mxu0
        %v7836 = vadd.f32 %v6651, %v7835
        %7837 = vmatprep.mubr.bf16.mxu0 0
        %7838 = vmatmul.mubr.bf16.gmra.mxu0 %v7586
        %v7839 = vpop.f32.mrf.mxu0
        %v7840 = vadd.f32 %v6656, %v7839
        %v7841 = vpop.f32.mrf.mxu0
        %v7842 = vadd.f32 %v6656, %v7841
        %v7843 = vpop.f32.mrf.mxu0
        %v7844 = vadd.f32 %v6661, %v7843
        %v7845 = vpop.f32.mrf.mxu0
        %v7846 = vadd.f32 %v6661, %v7845
        %7847 = vmatprep.mubr.bf16.mxu0 0
        %7848 = vmatmul.mubr.bf16.gmra.mxu0 %v7589
        %v7849 = vpop.f32.mrf.mxu0
        %v7850 = vadd.f32 %v6666, %v7849
        %v7851 = vpop.f32.mrf.mxu0
        %v7852 = vadd.f32 %v6666, %v7851
        %v7853 = vpop.f32.mrf.mxu0
        %v7854 = vadd.f32 %v6671, %v7853
        %v7855 = vpop.f32.mrf.mxu0
        %v7856 = vadd.f32 %v6671, %v7855
        %7857 = vmatprep.mubr.bf16.mxu0 0
        %7858 = vmatmul.mubr.bf16.gmra.mxu0 %v7592
        %v7859 = vpop.f32.mrf.mxu0
        %v7860 = vadd.f32 %v6676, %v7859
        %v7861 = vpop.f32.mrf.mxu0
        %v7862 = vadd.f32 %v6676, %v7861
        %v7863 = vpop.f32.mrf.mxu0
        %v7864 = vadd.f32 %v6681, %v7863
        %v7865 = vpop.f32.mrf.mxu0
        %v7866 = vadd.f32 %v6681, %v7865
        %7867 = vmatprep.mubr.bf16.mxu0 0
        %7868 = vmatmul.mubr.bf16.gmra.mxu0 %v7595
        %v7869 = vpop.f32.mrf.mxu0
        %v7870 = vadd.f32 %v6686, %v7869
        %v7871 = vpop.f32.mrf.mxu0
        %v7872 = vadd.f32 %v6686, %v7871
        %v7873 = vpop.f32.mrf.mxu0
        %v7874 = vadd.f32 %v6691, %v7873
        %v7875 = vpop.f32.mrf.mxu0
        %v7876 = vadd.f32 %v6691, %v7875
        %7877 = vmatprep.mubr.bf16.mxu0 0
        %7878 = vmatmul.mubr.bf16.gmra.mxu0 %v7598
        %v7879 = vpop.f32.mrf.mxu0
        %v7880 = vadd.f32 %v6696, %v7879
        %v7881 = vpop.f32.mrf.mxu0
        %v7882 = vadd.f32 %v6696, %v7881
        %v7883 = vpop.f32.mrf.mxu0
        %v7884 = vadd.f32 %v6701, %v7883
        %v7885 = vpop.f32.mrf.mxu0
        %v7886 = vadd.f32 %v6701, %v7885
        %7887 = vmatprep.mubr.bf16.mxu0 0
        %7888 = vmatmul.mubr.bf16.gmra.mxu0 %v7601
        %v7889 = vpop.f32.mrf.mxu0
        %v7890 = vadd.f32 %v6706, %v7889
        %v7891 = vpop.f32.mrf.mxu0
        %v7892 = vadd.f32 %v6706, %v7891
        %v7893 = vpop.f32.mrf.mxu0
        %v7894 = vadd.f32 %v6711, %v7893
        %v7895 = vpop.f32.mrf.mxu0
        %v7896 = vadd.f32 %v6711, %v7895
        %7897 = vmatprep.mubr.bf16.mxu0 0
        %7898 = vmatmul.mubr.bf16.gmra.mxu0 %v7604
        %v7899 = vpop.f32.mrf.mxu0
        %v7900 = vadd.f32 %v6716, %v7899
        %v7901 = vpop.f32.mrf.mxu0
        %v7902 = vadd.f32 %v6716, %v7901
        %v7903 = vpop.f32.mrf.mxu0
        %v7904 = vadd.f32 %v6721, %v7903
        %v7905 = vpop.f32.mrf.mxu0
        %v7906 = vadd.f32 %v6721, %v7905
        %7907 = vmatprep.mubr.bf16.mxu0 0
        %7908 = vmatmul.mubr.bf16.gmra.mxu0 %v7607
        %v7909 = vpop.f32.mrf.mxu0
        %v7910 = vadd.f32 %v6726, %v7909
        %v7911 = vpop.f32.mrf.mxu0
        %v7912 = vadd.f32 %v6726, %v7911
        %v7913 = vpop.f32.mrf.mxu0
        %v7914 = vadd.f32 %v6731, %v7913
        %v7915 = vpop.f32.mrf.mxu0
        %v7916 = vadd.f32 %v6731, %v7915
        %7917 = vmatprep.mubr.bf16.mxu0 0
        %7918 = vmatmul.mubr.bf16.gmra.mxu0 %v7610
        %v7919 = vpop.f32.mrf.mxu0
        %v7920 = vadd.f32 %v6736, %v7919
        %v7921 = vpop.f32.mrf.mxu0
        %v7922 = vadd.f32 %v6736, %v7921
        %v7923 = vpop.f32.mrf.mxu0
        %v7924 = vadd.f32 %v6741, %v7923
        %v7925 = vpop.f32.mrf.mxu0
        %v7926 = vadd.f32 %v6741, %v7925
        %7927 = vmatprep.mubr.bf16.mxu0 0
        %7928 = vmatmul.mubr.bf16.gmra.mxu0 %v7613
        %v7929 = vpop.f32.mrf.mxu0
        %v7930 = vadd.f32 %v6746, %v7929
        %v7931 = vpop.f32.mrf.mxu0
        %v7932 = vadd.f32 %v6746, %v7931
        %v7933 = vpop.f32.mrf.mxu0
        %v7934 = vadd.f32 %v6751, %v7933
        %v7935 = vpop.f32.mrf.mxu0
        %v7936 = vadd.f32 %v6751, %v7935
        %7937 = vmatprep.mubr.bf16.mxu0 0
        %7938 = vmatmul.mubr.bf16.gmra.mxu0 %v7616
        %v7939 = vpop.f32.mrf.mxu0
        %v7940 = vadd.f32 %v6756, %v7939
        %v7941 = vpop.f32.mrf.mxu0
        %v7942 = vadd.f32 %v6756, %v7941
        %v7943 = vpop.f32.mrf.mxu0
        %v7944 = vadd.f32 %v6761, %v7943
        %v7945 = vpop.f32.mrf.mxu0
        %v7946 = vadd.f32 %v6761, %v7945
        %7947 = vmatprep.mubr.bf16.mxu0 0
        %7948 = vmatmul.mubr.bf16.gmra.mxu0 %v7619
        %v7949 = vpop.f32.mrf.mxu0
        %v7950 = vadd.f32 %v6766, %v7949
        %v7951 = vpop.f32.mrf.mxu0
        %v7952 = vadd.f32 %v6766, %v7951
        %v7953 = vpop.f32.mrf.mxu0
        %v7954 = vadd.f32 %v6771, %v7953
        %v7955 = vpop.f32.mrf.mxu0
        %v7956 = vadd.f32 %v6771, %v7955
        %7957 = vmatprep.mubr.bf16.mxu0 0
        %7958 = vmatmul.mubr.bf16.gmra.mxu0 %v7622
        %v7959 = vpop.f32.mrf.mxu0
        %v7960 = vadd.f32 %v6776, %v7959
        %v7961 = vpop.f32.mrf.mxu0
        %v7962 = vadd.f32 %v6776, %v7961
        %v7963 = vpop.f32.mrf.mxu0
        %v7964 = vadd.f32 %v6781, %v7963
        %v7965 = vpop.f32.mrf.mxu0
        %v7966 = vadd.f32 %v6781, %v7965
        %7967 = vmatprep.mubr.bf16.mxu0 0
        %7968 = vmatmul.mubr.bf16.gmra.mxu0 %v7625
        %v7969 = vpop.f32.mrf.mxu0
        %v7970 = vadd.f32 %v6786, %v7969
        %v7971 = vpop.f32.mrf.mxu0
        %v7972 = vadd.f32 %v6786, %v7971
        %v7973 = vpop.f32.mrf.mxu0
        %v7974 = vadd.f32 %v6791, %v7973
        %v7975 = vpop.f32.mrf.mxu0
        %v7976 = vadd.f32 %v6791, %v7975
        %7977 = vmatprep.mubr.bf16.mxu0 0
        %7978 = vmatmul.mubr.bf16.gmra.mxu0 %v7628
        %v7979 = vpop.f32.mrf.mxu0
        %v7980 = vadd.f32 %v6796, %v7979
        %v7981 = vpop.f32.mrf.mxu0
        %v7982 = vadd.f32 %v6796, %v7981
        %v7983 = vpop.f32.mrf.mxu0
        %v7984 = vadd.f32 %v6801, %v7983
        %v7985 = vpop.f32.mrf.mxu0
        %v7986 = vadd.f32 %v6801, %v7985
        %7987 = vmatprep.mubr.bf16.mxu0 0
        %7988 = vmatmul.mubr.bf16.gmra.mxu0 %v7631
        %v7989 = vpop.f32.mrf.mxu0
        %v7990 = vadd.f32 %v6806, %v7989
        %v7991 = vpop.f32.mrf.mxu0
        %v7992 = vadd.f32 %v6806, %v7991
        %v7993 = vpop.f32.mrf.mxu0
        %v7994 = vadd.f32 %v6811, %v7993
        %v7995 = vpop.f32.mrf.mxu0
        %v7996 = vadd.f32 %v6811, %v7995
        %7997 = vmatprep.mubr.bf16.mxu0 0
        %7998 = vmatmul.mubr.bf16.gmra.mxu0 %v7634
        %v7999 = vpop.f32.mrf.mxu0
        %v8000 = vadd.f32 %v6816, %v7999
        %v8001 = vpop.f32.mrf.mxu0
        %v8002 = vadd.f32 %v6816, %v8001
        %v8003 = vpop.f32.mrf.mxu0
        %v8004 = vadd.f32 %v6821, %v8003
        %v8005 = vpop.f32.mrf.mxu0
        %v8006 = vadd.f32 %v6821, %v8005
        %8007 = vmatprep.mubr.bf16.mxu0 0
        %8008 = vmatmul.mubr.bf16.gmra.mxu0 %v7637
        %v8009 = vpop.f32.mrf.mxu0
        %v8010 = vadd.f32 %v6826, %v8009
        %v8011 = vpop.f32.mrf.mxu0
        %v8012 = vadd.f32 %v6826, %v8011
        %v8013 = vpop.f32.mrf.mxu0
        %v8014 = vadd.f32 %v6831, %v8013
        %v8015 = vpop.f32.mrf.mxu0
        %v8016 = vadd.f32 %v6831, %v8015
        %8017 = vmatprep.mubr.bf16.mxu0 0
        %8018 = vmatmul.mubr.bf16.gmra.mxu0 %v7640
        %v8019 = vpop.f32.mrf.mxu0
        %v8020 = vadd.f32 %v6836, %v8019
        %v8021 = vpop.f32.mrf.mxu0
        %v8022 = vadd.f32 %v6836, %v8021
        %v8023 = vpop.f32.mrf.mxu0
        %v8024 = vadd.f32 %v6841, %v8023
        %v8025 = vpop.f32.mrf.mxu0
        %v8026 = vadd.f32 %v6841, %v8025
        %8027 = vmatprep.mubr.bf16.mxu0 0
        %8028 = vmatmul.mubr.bf16.gmra.mxu0 %v7643
        %v8029 = vpop.f32.mrf.mxu0
        %v8030 = vadd.f32 %v6846, %v8029
        %v8031 = vpop.f32.mrf.mxu0
        %v8032 = vadd.f32 %v6846, %v8031
        %v8033 = vpop.f32.mrf.mxu0
        %v8034 = vadd.f32 %v6851, %v8033
        %v8035 = vpop.f32.mrf.mxu0
        %v8036 = vadd.f32 %v6851, %v8035
        %8037 = vmatprep.mubr.bf16.mxu0 0
        %8038 = vmatmul.mubr.bf16.gmra.mxu0 %v7646
        %v8039 = vpop.f32.mrf.mxu0
        %v8040 = vadd.f32 %v6856, %v8039
        %v8041 = vpop.f32.mrf.mxu0
        %v8042 = vadd.f32 %v6856, %v8041
        %v8043 = vpop.f32.mrf.mxu0
        %v8044 = vadd.f32 %v6861, %v8043
        %v8045 = vpop.f32.mrf.mxu0
        %v8046 = vadd.f32 %v6861, %v8045
        %8047 = vmatprep.mubr.bf16.mxu0 0
        %8048 = vmatmul.mubr.bf16.gmra.mxu0 %v7649
        %v8049 = vpop.f32.mrf.mxu0
        %v8050 = vadd.f32 %v6866, %v8049
        %v8051 = vpop.f32.mrf.mxu0
        %v8052 = vadd.f32 %v6866, %v8051
        %v8053 = vpop.f32.mrf.mxu0
        %v8054 = vadd.f32 %v6871, %v8053
        %v8055 = vpop.f32.mrf.mxu0
        %v8056 = vadd.f32 %v6871, %v8055
        %8057 = vmatprep.mubr.bf16.mxu0 0
        %8058 = vmatmul.mubr.bf16.gmra.mxu0 %v7652
        %v8059 = vpop.f32.mrf.mxu0
        %v8060 = vadd.f32 %v6876, %v8059
        %v8061 = vpop.f32.mrf.mxu0
        %v8062 = vadd.f32 %v6876, %v8061
        %v8063 = vpop.f32.mrf.mxu0
        %v8064 = vadd.f32 %v6881, %v8063
        %v8065 = vpop.f32.mrf.mxu0
        %v8066 = vadd.f32 %v6881, %v8065
        %8067 = vmatprep.mubr.bf16.mxu0 0
        %8068 = vmatmul.mubr.bf16.gmra.mxu0 %v7655
        %v8069 = vpop.f32.mrf.mxu0
        %v8070 = vadd.f32 %v6886, %v8069
        %v8071 = vpop.f32.mrf.mxu0
        %v8072 = vadd.f32 %v6886, %v8071
        %v8073 = vpop.f32.mrf.mxu0
        %v8074 = vadd.f32 %v6891, %v8073
        %v8075 = vpop.f32.mrf.mxu0
        %v8076 = vadd.f32 %v6891, %v8075
        %8077 = vmatprep.mubr.bf16.mxu0 0
        %8078 = vmatmul.mubr.bf16.gmra.mxu0 %v7658
        %v8079 = vpop.f32.mrf.mxu0
        %v8080 = vadd.f32 %v6896, %v8079
        %v8081 = vpop.f32.mrf.mxu0
        %v8082 = vadd.f32 %v6896, %v8081
        %v8083 = vpop.f32.mrf.mxu0
        %v8084 = vadd.f32 %v6901, %v8083
        %v8085 = vpop.f32.mrf.mxu0
        %v8086 = vadd.f32 %v6901, %v8085
        %8087 = vmatprep.mubr.bf16.mxu0 0
        %8088 = vmatmul.mubr.bf16.gmra.mxu0 %v7661
        %v8089 = vpop.f32.mrf.mxu0
        %v8090 = vadd.f32 %v6906, %v8089
        %v8091 = vpop.f32.mrf.mxu0
        %v8092 = vadd.f32 %v6906, %v8091
        %v8093 = vpop.f32.mrf.mxu0
        %v8094 = vadd.f32 %v6911, %v8093
        %v8095 = vpop.f32.mrf.mxu0
        %v8096 = vadd.f32 %v6911, %v8095
        %8097 = vmatprep.mubr.bf16.mxu0 0
        %8098 = vmatmul.mubr.bf16.gmra.mxu0 %v7664
        %v8099 = vpop.f32.mrf.mxu0
        %v8100 = vadd.f32 %v6916, %v8099
        %v8101 = vpop.f32.mrf.mxu0
        %v8102 = vadd.f32 %v6916, %v8101
        %v8103 = vpop.f32.mrf.mxu0
        %v8104 = vadd.f32 %v6921, %v8103
        %v8105 = vpop.f32.mrf.mxu0
        %v8106 = vadd.f32 %v6921, %v8105
        %8107 = vmatprep.mubr.bf16.mxu0 0
        %8108 = vmatmul.mubr.bf16.gmra.mxu0 %v7667
        %v8109 = vpop.f32.mrf.mxu0
        %v8110 = vadd.f32 %v6926, %v8109
        %v8111 = vpop.f32.mrf.mxu0
        %v8112 = vadd.f32 %v6926, %v8111
        %v8113 = vpop.f32.mrf.mxu0
        %v8114 = vadd.f32 %v6931, %v8113
        %v8115 = vpop.f32.mrf.mxu0
        %v8116 = vadd.f32 %v6931, %v8115
        %8117 = vmatprep.mubr.bf16.mxu0 0
        %8118 = vmatmul.mubr.bf16.gmra.mxu0 %v7670
        %v8119 = vpop.f32.mrf.mxu0
        %v8120 = vadd.f32 %v6936, %v8119
        %v8121 = vpop.f32.mrf.mxu0
        %v8122 = vadd.f32 %v6936, %v8121
        %v8123 = vpop.f32.mrf.mxu0
        %v8124 = vadd.f32 %v6941, %v8123
        %v8125 = vpop.f32.mrf.mxu0
        %v8126 = vadd.f32 %v6941, %v8125
        %8127 = vmatprep.mubr.bf16.mxu0 0
        %8128 = vmatmul.mubr.bf16.gmra.mxu0 %v7673
        %v8129 = vpop.f32.mrf.mxu0
        %v8130 = vadd.f32 %v6946, %v8129
        %v8131 = vpop.f32.mrf.mxu0
        %v8132 = vadd.f32 %v6946, %v8131
        %v8133 = vpop.f32.mrf.mxu0
        %v8134 = vadd.f32 %v6951, %v8133
        %v8135 = vpop.f32.mrf.mxu0
        %v8136 = vadd.f32 %v6951, %v8135
        %8137 = vmatprep.mubr.bf16.mxu0 0
        %8138 = vmatmul.mubr.bf16.gmra.mxu0 %v7676
        %v8139 = vpop.f32.mrf.mxu0
        %v8140 = vadd.f32 %v6956, %v8139
        %v8141 = vpop.f32.mrf.mxu0
        %v8142 = vadd.f32 %v6956, %v8141
        %v8143 = vpop.f32.mrf.mxu0
        %v8144 = vadd.f32 %v6961, %v8143
        %v8145 = vpop.f32.mrf.mxu0
        %v8146 = vadd.f32 %v6961, %v8145
        %8147 = vmatprep.mubr.bf16.mxu0 0
        %8148 = vmatmul.mubr.bf16.gmra.mxu0 %v7679
        %v8149 = vpop.f32.mrf.mxu0
        %v8150 = vadd.f32 %v6966, %v8149
        %v8151 = vpop.f32.mrf.mxu0
        %v8152 = vadd.f32 %v6966, %v8151
        %v8153 = vpop.f32.mrf.mxu0
        %v8154 = vadd.f32 %v6971, %v8153
        %v8155 = vpop.f32.mrf.mxu0
        %v8156 = vadd.f32 %v6971, %v8155
        %8157 = vmatprep.mubr.bf16.mxu0 0
        %8158 = vmatmul.mubr.bf16.gmra.mxu0 %v7682
        %v8159 = vpop.f32.mrf.mxu0
        %v8160 = vadd.f32 %v6976, %v8159
        %v8161 = vpop.f32.mrf.mxu0
        %v8162 = vadd.f32 %v6976, %v8161
        %v8163 = vpop.f32.mrf.mxu0
        %v8164 = vadd.f32 %v6981, %v8163
        %v8165 = vpop.f32.mrf.mxu0
        %v8166 = vadd.f32 %v6981, %v8165
        %8167 = vmatprep.mubr.bf16.mxu0 0
        %8168 = vmatmul.mubr.bf16.gmra.mxu0 %v7685
        %v8169 = vpop.f32.mrf.mxu0
        %v8170 = vadd.f32 %v6986, %v8169
        %v8171 = vpop.f32.mrf.mxu0
        %v8172 = vadd.f32 %v6986, %v8171
        %v8173 = vpop.f32.mrf.mxu0
        %v8174 = vadd.f32 %v6991, %v8173
        %v8175 = vpop.f32.mrf.mxu0
        %v8176 = vadd.f32 %v6991, %v8175
        %8177 = vmatprep.mubr.bf16.mxu0 0
        %8178 = vmatmul.mubr.bf16.gmra.mxu0 %v7688
        %v8179 = vpop.f32.mrf.mxu0
        %v8180 = vadd.f32 %v6996, %v8179
        %v8181 = vpop.f32.mrf.mxu0
        %v8182 = vadd.f32 %v6996, %v8181
        %v8183 = vpop.f32.mrf.mxu0
        %v8184 = vadd.f32 %v7001, %v8183
        %v8185 = vpop.f32.mrf.mxu0
        %v8186 = vadd.f32 %v7001, %v8185
        %8187 = vmatprep.mubr.bf16.mxu0 0
        %8188 = vmatmul.mubr.bf16.gmra.mxu0 %v7691
        %v8189 = vpop.f32.mrf.mxu0
        %v8190 = vadd.f32 %v7006, %v8189
        %v8191 = vpop.f32.mrf.mxu0
        %v8192 = vadd.f32 %v7006, %v8191
        %v8193 = vpop.f32.mrf.mxu0
        %v8194 = vadd.f32 %v7011, %v8193
        %v8195 = vpop.f32.mrf.mxu0
        %v8196 = vadd.f32 %v7011, %v8195
        %8197 = vmatprep.mubr.bf16.mxu0 0
        %8198 = vmatmul.mubr.bf16.gmra.mxu0 %v7694
        %v8199 = vpop.f32.mrf.mxu0
        %v8200 = vadd.f32 %v7016, %v8199
        %v8201 = vpop.f32.mrf.mxu0
        %v8202 = vadd.f32 %v7016, %v8201
        %v8203 = vpop.f32.mrf.mxu0
        %v8204 = vadd.f32 %v7021, %v8203
        %v8205 = vpop.f32.mrf.mxu0
        %v8206 = vadd.f32 %v7021, %v8205
        %8207 = vmatprep.mubr.bf16.mxu0 0
        %8208 = vmatmul.mubr.bf16.gmra.mxu0 %v7697
        %v8209 = vpop.f32.mrf.mxu0
        %v8210 = vadd.f32 %v7026, %v8209
        %v8211 = vpop.f32.mrf.mxu0
        %v8212 = vadd.f32 %v7026, %v8211
        %v8213 = vpop.f32.mrf.mxu0
        %v8214 = vadd.f32 %v7031, %v8213
        %v8215 = vpop.f32.mrf.mxu0
        %v8216 = vadd.f32 %v7031, %v8215
        %8217 = vmatprep.mubr.bf16.mxu0 0
        %8218 = vmatmul.mubr.bf16.gmra.mxu0 %v7700
        %v8219 = vpop.f32.mrf.mxu0
        %v8220 = vadd.f32 %v7036, %v8219
        %v8221 = vpop.f32.mrf.mxu0
        %v8222 = vadd.f32 %v7036, %v8221
        %v8223 = vpop.f32.mrf.mxu0
        %v8224 = vadd.f32 %v7041, %v8223
        %v8225 = vpop.f32.mrf.mxu0
        %v8226 = vadd.f32 %v7041, %v8225
        %8227 = vmatprep.mubr.bf16.mxu0 0
        %8228 = vmatmul.mubr.bf16.gmra.mxu0 %v7703
        %v8229 = vpop.f32.mrf.mxu0
        %v8230 = vadd.f32 %v7046, %v8229
        %v8231 = vpop.f32.mrf.mxu0
        %v8232 = vadd.f32 %v7046, %v8231
        %v8233 = vpop.f32.mrf.mxu0
        %v8234 = vadd.f32 %v7051, %v8233
        %v8235 = vpop.f32.mrf.mxu0
        %v8236 = vadd.f32 %v7051, %v8235
        %8237 = vmatprep.mubr.bf16.mxu0 0
        %8238 = vmatmul.mubr.bf16.gmra.mxu0 %v7706
        %v8239 = vpop.f32.mrf.mxu0
        %v8240 = vadd.f32 %v7056, %v8239
        %v8241 = vpop.f32.mrf.mxu0
        %v8242 = vadd.f32 %v7056, %v8241
        %v8243 = vpop.f32.mrf.mxu0
        %v8244 = vadd.f32 %v7061, %v8243
        %v8245 = vpop.f32.mrf.mxu0
        %v8246 = vadd.f32 %v7061, %v8245
        %8247 = vmatprep.mubr.bf16.mxu0 0
        %8248 = vmatmul.mubr.bf16.gmra.mxu0 %v7709
        %v8249 = vpop.f32.mrf.mxu0
        %v8250 = vadd.f32 %v7066, %v8249
        %v8251 = vpop.f32.mrf.mxu0
        %v8252 = vadd.f32 %v7066, %v8251
        %v8253 = vpop.f32.mrf.mxu0
        %v8254 = vadd.f32 %v7071, %v8253
        %v8255 = vpop.f32.mrf.mxu0
        %v8256 = vadd.f32 %v7071, %v8255
        %8257 = vmatprep.mubr.bf16.mxu0 0
        %8258 = vmatmul.mubr.bf16.gmra.mxu0 %v7712
        %v8259 = vpop.f32.mrf.mxu0
        %v8260 = vadd.f32 %v7076, %v8259
        %v8261 = vpop.f32.mrf.mxu0
        %v8262 = vadd.f32 %v7076, %v8261
        %v8263 = vpop.f32.mrf.mxu0
        %v8264 = vadd.f32 %v7081, %v8263
        %v8265 = vpop.f32.mrf.mxu0
        %v8266 = vadd.f32 %v7081, %v8265
        %8267 = vmatprep.mubr.bf16.mxu0 0
        %8268 = vmatmul.mubr.bf16.gmra.mxu0 %v7715
        %v8269 = vpop.f32.mrf.mxu0
        %v8270 = vadd.f32 %v7086, %v8269
        %v8271 = vpop.f32.mrf.mxu0
        %v8272 = vadd.f32 %v7086, %v8271
        %v8273 = vpop.f32.mrf.mxu0
        %v8274 = vadd.f32 %v7091, %v8273
        %v8275 = vpop.f32.mrf.mxu0
        %v8276 = vadd.f32 %v7091, %v8275
        %8277 = vmatprep.mubr.bf16.mxu0 0
        %8278 = vmatmul.mubr.bf16.gmra.mxu0 %v7718
        %v8279 = vpop.f32.mrf.mxu0
        %v8280 = vadd.f32 %v7096, %v8279
        %v8281 = vpop.f32.mrf.mxu0
        %v8282 = vadd.f32 %v7096, %v8281
        %v8283 = vpop.f32.mrf.mxu0
        %v8284 = vadd.f32 %v7101, %v8283
        %v8285 = vpop.f32.mrf.mxu0
        %v8286 = vadd.f32 %v7101, %v8285
        %8287 = vmatprep.mubr.bf16.mxu0 0
        %8288 = vmatmul.mubr.bf16.gmra.mxu0 %v7721
        %v8289 = vpop.f32.mrf.mxu0
        %v8290 = vadd.f32 %v7106, %v8289
        %v8291 = vpop.f32.mrf.mxu0
        %v8292 = vadd.f32 %v7106, %v8291
        %v8293 = vpop.f32.mrf.mxu0
        %v8294 = vadd.f32 %v7111, %v8293
        %v8295 = vpop.f32.mrf.mxu0
        %v8296 = vadd.f32 %v7111, %v8295
        %8297 = vmatprep.mubr.bf16.mxu0 0
        %8298 = vmatmul.mubr.bf16.gmra.mxu0 %v7724
        %v8299 = vpop.f32.mrf.mxu0
        %v8300 = vadd.f32 %v7116, %v8299
        %v8301 = vpop.f32.mrf.mxu0
        %v8302 = vadd.f32 %v7116, %v8301
        %v8303 = vpop.f32.mrf.mxu0
        %v8304 = vadd.f32 %v7121, %v8303
        %v8305 = vpop.f32.mrf.mxu0
        %v8306 = vadd.f32 %v7121, %v8305
        %8307 = vmatprep.mubr.bf16.mxu0 0
        %8308 = vmatmul.mubr.bf16.gmra.mxu0 %v7727
        %v8309 = vpop.f32.mrf.mxu0
        %v8310 = vadd.f32 %v7126, %v8309
        %v8311 = vpop.f32.mrf.mxu0
        %v8312 = vadd.f32 %v7126, %v8311
        %v8313 = vpop.f32.mrf.mxu0
        %v8314 = vadd.f32 %v7131, %v8313
        %v8315 = vpop.f32.mrf.mxu0
        %v8316 = vadd.f32 %v7131, %v8315
        %8317 = vmatprep.mubr.bf16.mxu0 0
        %8318 = vmatmul.mubr.bf16.gmra.mxu0 %v7730
        %v8319 = vpop.f32.mrf.mxu0
        %v8320 = vadd.f32 %v7136, %v8319
        %v8321 = vpop.f32.mrf.mxu0
        %v8322 = vadd.f32 %v7136, %v8321
        %v8323 = vpop.f32.mrf.mxu0
        %v8324 = vadd.f32 %v7141, %v8323
        %v8325 = vpop.f32.mrf.mxu0
        %v8326 = vadd.f32 %v7141, %v8325
        %8327 = vmatprep.mubr.bf16.mxu0 0
        %8328 = vmatmul.mubr.bf16.gmra.mxu0 %v7733
        %v8329 = vpop.f32.mrf.mxu0
        %v8330 = vadd.f32 %v7146, %v8329
        %v8331 = vpop.f32.mrf.mxu0
        %v8332 = vadd.f32 %v7146, %v8331
        %v8333 = vpop.f32.mrf.mxu0
        %v8334 = vadd.f32 %v7151, %v8333
        %v8335 = vpop.f32.mrf.mxu0
        %v8336 = vadd.f32 %v7151, %v8335
        %8337 = vmatprep.mubr.bf16.mxu0 0
        %8338 = vmatmul.mubr.bf16.gmra.mxu0 %v7736
        %v8339 = vpop.f32.mrf.mxu0
        %v8340 = vadd.f32 %v7156, %v8339
        %v8341 = vpop.f32.mrf.mxu0
        %v8342 = vadd.f32 %v7156, %v8341
        %v8343 = vpop.f32.mrf.mxu0
        %v8344 = vadd.f32 %v7161, %v8343
        %v8345 = vpop.f32.mrf.mxu0
        %v8346 = vadd.f32 %v7161, %v8345
        %8347 = vmatprep.mubr.bf16.mxu0 0
        %8348 = vmatmul.mubr.bf16.gmra.mxu0 %v7739
        %v8349 = vpop.f32.mrf.mxu0
        %v8350 = vadd.f32 %v7166, %v8349
        %v8351 = vpop.f32.mrf.mxu0
        %v8352 = vadd.f32 %v7166, %v8351
        %v8353 = vpop.f32.mrf.mxu0
        %v8354 = vadd.f32 %v7171, %v8353
        %v8355 = vpop.f32.mrf.mxu0
        %v8356 = vadd.f32 %v7171, %v8355
        %8357 = vmatprep.mubr.bf16.mxu0 0
        %8358 = vmatmul.mubr.bf16.gmra.mxu0 %v7742
        %v8359 = vpop.f32.mrf.mxu0
        %v8360 = vadd.f32 %v7176, %v8359
        %v8361 = vpop.f32.mrf.mxu0
        %v8362 = vadd.f32 %v7176, %v8361
        %v8363 = vpop.f32.mrf.mxu0
        %v8364 = vadd.f32 %v7181, %v8363
        %v8365 = vpop.f32.mrf.mxu0
        %v8366 = vadd.f32 %v7181, %v8365
        %8367 = vmatprep.mubr.bf16.mxu0 0
        %8368 = vmatmul.mubr.bf16.gmra.mxu0 %v7745
        %v8369 = vpop.f32.mrf.mxu0
        %v8370 = vadd.f32 %v7186, %v8369
        %v8371 = vpop.f32.mrf.mxu0
        %v8372 = vadd.f32 %v7186, %v8371
        %v8373 = vpop.f32.mrf.mxu0
        %v8374 = vadd.f32 %v7191, %v8373
        %v8375 = vpop.f32.mrf.mxu0
        %v8376 = vadd.f32 %v7191, %v8375
        %8377 = vmatprep.mubr.bf16.mxu0 0
        %8378 = vmatmul.mubr.bf16.gmra.mxu0 %v7748
        %v8379 = vpop.f32.mrf.mxu0
        %v8380 = vadd.f32 %v7196, %v8379
        %v8381 = vpop.f32.mrf.mxu0
        %v8382 = vadd.f32 %v7196, %v8381
        %v8383 = vpop.f32.mrf.mxu0
        %v8384 = vadd.f32 %v7201, %v8383
        %v8385 = vpop.f32.mrf.mxu0
        %v8386 = vadd.f32 %v7201, %v8385
        %8387 = vmatprep.mubr.bf16.mxu0 0
        %8388 = vmatmul.mubr.bf16.gmra.mxu0 %v7751
        %v8389 = vpop.f32.mrf.mxu0
        %v8390 = vadd.f32 %v7206, %v8389
        %v8391 = vpop.f32.mrf.mxu0
        %v8392 = vadd.f32 %v7206, %v8391
        %v8393 = vpop.f32.mrf.mxu0
        %v8394 = vadd.f32 %v7211, %v8393
        %v8395 = vpop.f32.mrf.mxu0
        %v8396 = vadd.f32 %v7211, %v8395
        %8397 = vmatprep.mubr.bf16.mxu0 0
        %8398 = vmatmul.mubr.bf16.gmra.mxu0 %v7754
        %v8399 = vpop.f32.mrf.mxu0
        %v8400 = vadd.f32 %v7216, %v8399
        %v8401 = vpop.f32.mrf.mxu0
        %v8402 = vadd.f32 %v7216, %v8401
        %v8403 = vpop.f32.mrf.mxu0
        %v8404 = vadd.f32 %v7221, %v8403
        %v8405 = vpop.f32.mrf.mxu0
        %v8406 = vadd.f32 %v7221, %v8405
        %8407 = vmatprep.mubr.bf16.mxu0 0
        %8408 = vmatmul.mubr.bf16.gmra.mxu0 %v7757
        %v8409 = vpop.f32.mrf.mxu0
        %v8410 = vadd.f32 %v7226, %v8409
        %v8411 = vpop.f32.mrf.mxu0
        %v8412 = vadd.f32 %v7226, %v8411
        %v8413 = vpop.f32.mrf.mxu0
        %v8414 = vadd.f32 %v7231, %v8413
        %v8415 = vpop.f32.mrf.mxu0
        %v8416 = vadd.f32 %v7231, %v8415
        %8417 = vmatprep.mubr.bf16.mxu0 0
        %8418 = vmatmul.mubr.bf16.gmra.mxu0 %v7760
        %v8419 = vpop.f32.mrf.mxu0
        %v8420 = vadd.f32 %v7236, %v8419
        %v8421 = vpop.f32.mrf.mxu0
        %v8422 = vadd.f32 %v7236, %v8421
        %v8423 = vpop.f32.mrf.mxu0
        %v8424 = vadd.f32 %v7241, %v8423
        %v8425 = vpop.f32.mrf.mxu0
        %v8426 = vadd.f32 %v7241, %v8425
        %8427 = vmatprep.mubr.bf16.mxu0 0
        %8428 = vmatmul.mubr.bf16.gmra.mxu0 %v7763
        %v8429 = vpop.f32.mrf.mxu0
        %v8430 = vadd.f32 %v7246, %v8429
        %v8431 = vpop.f32.mrf.mxu0
        %v8432 = vadd.f32 %v7246, %v8431
        %v8433 = vpop.f32.mrf.mxu0
        %v8434 = vadd.f32 %v7251, %v8433
        %v8435 = vpop.f32.mrf.mxu0
        %v8436 = vadd.f32 %v7251, %v8435
        %8437 = vdwg.mxu0
        %8438 = vst [vmem:[%s414] sm:$0xff] %v7800
        %8439 = vst [vmem:[%s414 + $0x8] sm:$0xff] %v7802
        %8440 = vst [vmem:[%s414 + $0x10] sm:$0xff] %v7804
        %8441 = vst [vmem:[%s414 + $0x18] sm:$0xff] %v7806
        %8442 = vst [vmem:[%s414 + $0x20] sm:$0xff] %v7810
        %8443 = vst [vmem:[%s414 + $0x28] sm:$0xff] %v7812
        %8444 = vst [vmem:[%s414 + $0x30] sm:$0xff] %v7814
        %8445 = vst [vmem:[%s414 + $0x38] sm:$0xff] %v7816
        %8446 = vst [vmem:[%s414 + $0x40] sm:$0xff] %v7820
        %8447 = vst [vmem:[%s414 + $0x48] sm:$0xff] %v7822
        %8448 = vst [vmem:[%s414 + $0x50] sm:$0xff] %v7824
        %8449 = vst [vmem:[%s414 + $0x58] sm:$0xff] %v7826
        %8450 = vst [vmem:[%s414 + $0x60] sm:$0xff] %v7830
        %8451 = vst [vmem:[%s414 + $0x68] sm:$0xff] %v7832
        %8452 = vst [vmem:[%s414 + $0x70] sm:$0xff] %v7834
        %8453 = vst [vmem:[%s414 + $0x78] sm:$0xff] %v7836
        %8454 = vst [vmem:[%s414 + $0x80] sm:$0xff] %v7840
        %8455 = vst [vmem:[%s414 + $0x88] sm:$0xff] %v7842
        %8456 = vst [vmem:[%s414 + $0x90] sm:$0xff] %v7844
        %8457 = vst [vmem:[%s414 + $0x98] sm:$0xff] %v7846
        %8458 = vst [vmem:[%s414 + $0xa0] sm:$0xff] %v7850
        %8459 = vst [vmem:[%s414 + $0xa8] sm:$0xff] %v7852
        %8460 = vst [vmem:[%s414 + $0xb0] sm:$0xff] %v7854
        %8461 = vst [vmem:[%s414 + $0xb8] sm:$0xff] %v7856
        %8462 = vst [vmem:[%s414 + $0xc0] sm:$0xff] %v7860
        %8463 = vst [vmem:[%s414 + $0xc8] sm:$0xff] %v7862
        %8464 = vst [vmem:[%s414 + $0xd0] sm:$0xff] %v7864
        %8465 = vst [vmem:[%s414 + $0xd8] sm:$0xff] %v7866
        %8466 = vst [vmem:[%s414 + $0xe0] sm:$0xff] %v7870
        %8467 = vst [vmem:[%s414 + $0xe8] sm:$0xff] %v7872
        %8468 = vst [vmem:[%s414 + $0xf0] sm:$0xff] %v7874
        %8469 = vst [vmem:[%s414 + $0xf8] sm:$0xff] %v7876
        %8470 = vst [vmem:[%s414 + $0x100] sm:$0xff] %v7880
        %8471 = vst [vmem:[%s414 + $0x108] sm:$0xff] %v7882
        %8472 = vst [vmem:[%s414 + $0x110] sm:$0xff] %v7884
        %8473 = vst [vmem:[%s414 + $0x118] sm:$0xff] %v7886
        %8474 = vst [vmem:[%s414 + $0x120] sm:$0xff] %v7890
        %8475 = vst [vmem:[%s414 + $0x128] sm:$0xff] %v7892
        %8476 = vst [vmem:[%s414 + $0x130] sm:$0xff] %v7894
        %8477 = vst [vmem:[%s414 + $0x138] sm:$0xff] %v7896
        %8478 = vst [vmem:[%s414 + $0x140] sm:$0xff] %v7900
        %8479 = vst [vmem:[%s414 + $0x148] sm:$0xff] %v7902
        %8480 = vst [vmem:[%s414 + $0x150] sm:$0xff] %v7904
        %8481 = vst [vmem:[%s414 + $0x158] sm:$0xff] %v7906
        %8482 = vst [vmem:[%s414 + $0x160] sm:$0xff] %v7910
        %8483 = vst [vmem:[%s414 + $0x168] sm:$0xff] %v7912
        %8484 = vst [vmem:[%s414 + $0x170] sm:$0xff] %v7914
        %8485 = vst [vmem:[%s414 + $0x178] sm:$0xff] %v7916
        %8486 = vst [vmem:[%s414 + $0x180] sm:$0xff] %v7920
        %8487 = vst [vmem:[%s414 + $0x188] sm:$0xff] %v7922
        %8488 = vst [vmem:[%s414 + $0x190] sm:$0xff] %v7924
        %8489 = vst [vmem:[%s414 + $0x198] sm:$0xff] %v7926
        %8490 = vst [vmem:[%s414 + $0x1a0] sm:$0xff] %v7930
        %8491 = vst [vmem:[%s414 + $0x1a8] sm:$0xff] %v7932
        %8492 = vst [vmem:[%s414 + $0x1b0] sm:$0xff] %v7934
        %8493 = vst [vmem:[%s414 + $0x1b8] sm:$0xff] %v7936
        %8494 = vst [vmem:[%s414 + $0x1c0] sm:$0xff] %v7940
        %8495 = vst [vmem:[%s414 + $0x1c8] sm:$0xff] %v7942
        %8496 = vst [vmem:[%s414 + $0x1d0] sm:$0xff] %v7944
        %8497 = vst [vmem:[%s414 + $0x1d8] sm:$0xff] %v7946
        %8498 = vst [vmem:[%s414 + $0x1e0] sm:$0xff] %v7950
        %8499 = vst [vmem:[%s414 + $0x1e8] sm:$0xff] %v7952
        %8500 = vst [vmem:[%s414 + $0x1f0] sm:$0xff] %v7954
        %8501 = vst [vmem:[%s414 + $0x1f8] sm:$0xff] %v7956
        %8502 = vst [vmem:[%s414 + $0x200] sm:$0xff] %v7960
        %8503 = vst [vmem:[%s414 + $0x208] sm:$0xff] %v7962
        %8504 = vst [vmem:[%s414 + $0x210] sm:$0xff] %v7964
        %8505 = vst [vmem:[%s414 + $0x218] sm:$0xff] %v7966
        %8506 = vst [vmem:[%s414 + $0x220] sm:$0xff] %v7970
        %8507 = vst [vmem:[%s414 + $0x228] sm:$0xff] %v7972
        %8508 = vst [vmem:[%s414 + $0x230] sm:$0xff] %v7974
        %8509 = vst [vmem:[%s414 + $0x238] sm:$0xff] %v7976
        %8510 = vst [vmem:[%s414 + $0x240] sm:$0xff] %v7980
        %8511 = vst [vmem:[%s414 + $0x248] sm:$0xff] %v7982
        %8512 = vst [vmem:[%s414 + $0x250] sm:$0xff] %v7984
        %8513 = vst [vmem:[%s414 + $0x258] sm:$0xff] %v7986
        %8514 = vst [vmem:[%s414 + $0x260] sm:$0xff] %v7990
        %8515 = vst [vmem:[%s414 + $0x268] sm:$0xff] %v7992
        %8516 = vst [vmem:[%s414 + $0x270] sm:$0xff] %v7994
        %8517 = vst [vmem:[%s414 + $0x278] sm:$0xff] %v7996
        %8518 = vst [vmem:[%s414 + $0x280] sm:$0xff] %v8000
        %8519 = vst [vmem:[%s414 + $0x288] sm:$0xff] %v8002
        %8520 = vst [vmem:[%s414 + $0x290] sm:$0xff] %v8004
        %8521 = vst [vmem:[%s414 + $0x298] sm:$0xff] %v8006
        %8522 = vst [vmem:[%s414 + $0x2a0] sm:$0xff] %v8010
        %8523 = vst [vmem:[%s414 + $0x2a8] sm:$0xff] %v8012
        %8524 = vst [vmem:[%s414 + $0x2b0] sm:$0xff] %v8014
        %8525 = vst [vmem:[%s414 + $0x2b8] sm:$0xff] %v8016
        %8526 = vst [vmem:[%s414 + $0x2c0] sm:$0xff] %v8020
        %8527 = vst [vmem:[%s414 + $0x2c8] sm:$0xff] %v8022
        %8528 = vst [vmem:[%s414 + $0x2d0] sm:$0xff] %v8024
        %8529 = vst [vmem:[%s414 + $0x2d8] sm:$0xff] %v8026
        %8530 = vst [vmem:[%s414 + $0x2e0] sm:$0xff] %v8030
        %8531 = vst [vmem:[%s414 + $0x2e8] sm:$0xff] %v8032
        %8532 = vst [vmem:[%s414 + $0x2f0] sm:$0xff] %v8034
        %8533 = vst [vmem:[%s414 + $0x2f8] sm:$0xff] %v8036
        %8534 = vst [vmem:[%s414 + $0x300] sm:$0xff] %v8040
        %8535 = vst [vmem:[%s414 + $0x308] sm:$0xff] %v8042
        %8536 = vst [vmem:[%s414 + $0x310] sm:$0xff] %v8044
        %8537 = vst [vmem:[%s414 + $0x318] sm:$0xff] %v8046
        %8538 = vst [vmem:[%s414 + $0x320] sm:$0xff] %v8050
        %8539 = vst [vmem:[%s414 + $0x328] sm:$0xff] %v8052
        %8540 = vst [vmem:[%s414 + $0x330] sm:$0xff] %v8054
        %8541 = vst [vmem:[%s414 + $0x338] sm:$0xff] %v8056
        %8542 = vst [vmem:[%s414 + $0x340] sm:$0xff] %v8060
        %8543 = vst [vmem:[%s414 + $0x348] sm:$0xff] %v8062
        %8544 = vst [vmem:[%s414 + $0x350] sm:$0xff] %v8064
        %8545 = vst [vmem:[%s414 + $0x358] sm:$0xff] %v8066
        %8546 = vst [vmem:[%s414 + $0x360] sm:$0xff] %v8070
        %8547 = vst [vmem:[%s414 + $0x368] sm:$0xff] %v8072
        %8548 = vst [vmem:[%s414 + $0x370] sm:$0xff] %v8074
        %8549 = vst [vmem:[%s414 + $0x378] sm:$0xff] %v8076
        %8550 = vst [vmem:[%s414 + $0x380] sm:$0xff] %v8080
        %8551 = vst [vmem:[%s414 + $0x388] sm:$0xff] %v8082
        %8552 = vst [vmem:[%s414 + $0x390] sm:$0xff] %v8084
        %8553 = vst [vmem:[%s414 + $0x398] sm:$0xff] %v8086
        %8554 = vst [vmem:[%s414 + $0x3a0] sm:$0xff] %v8090
        %8555 = vst [vmem:[%s414 + $0x3a8] sm:$0xff] %v8092
        %8556 = vst [vmem:[%s414 + $0x3b0] sm:$0xff] %v8094
        %8557 = vst [vmem:[%s414 + $0x3b8] sm:$0xff] %v8096
        %8558 = vst [vmem:[%s414 + $0x3c0] sm:$0xff] %v8100
        %8559 = vst [vmem:[%s414 + $0x3c8] sm:$0xff] %v8102
        %8560 = vst [vmem:[%s414 + $0x3d0] sm:$0xff] %v8104
        %8561 = vst [vmem:[%s414 + $0x3d8] sm:$0xff] %v8106
        %8562 = vst [vmem:[%s414 + $0x3e0] sm:$0xff] %v8110
        %8563 = vst [vmem:[%s414 + $0x3e8] sm:$0xff] %v8112
        %8564 = vst [vmem:[%s414 + $0x3f0] sm:$0xff] %v8114
        %8565 = vst [vmem:[%s414 + $0x3f8] sm:$0xff] %v8116
        %8566 = vst [vmem:[%s414 + $0x400] sm:$0xff] %v8120
        %8567 = vst [vmem:[%s414 + $0x408] sm:$0xff] %v8122
        %8568 = vst [vmem:[%s414 + $0x410] sm:$0xff] %v8124
        %8569 = vst [vmem:[%s414 + $0x418] sm:$0xff] %v8126
        %8570 = vst [vmem:[%s414 + $0x420] sm:$0xff] %v8130
        %8571 = vst [vmem:[%s414 + $0x428] sm:$0xff] %v8132
        %8572 = vst [vmem:[%s414 + $0x430] sm:$0xff] %v8134
        %8573 = vst [vmem:[%s414 + $0x438] sm:$0xff] %v8136
        %8574 = vst [vmem:[%s414 + $0x440] sm:$0xff] %v8140
        %8575 = vst [vmem:[%s414 + $0x448] sm:$0xff] %v8142
        %8576 = vst [vmem:[%s414 + $0x450] sm:$0xff] %v8144
        %8577 = vst [vmem:[%s414 + $0x458] sm:$0xff] %v8146
        %8578 = vst [vmem:[%s414 + $0x460] sm:$0xff] %v8150
        %8579 = vst [vmem:[%s414 + $0x468] sm:$0xff] %v8152
        %8580 = vst [vmem:[%s414 + $0x470] sm:$0xff] %v8154
        %8581 = vst [vmem:[%s414 + $0x478] sm:$0xff] %v8156
        %8582 = vst [vmem:[%s414 + $0x480] sm:$0xff] %v8160
        %8583 = vst [vmem:[%s414 + $0x488] sm:$0xff] %v8162
        %8584 = vst [vmem:[%s414 + $0x490] sm:$0xff] %v8164
        %8585 = vst [vmem:[%s414 + $0x498] sm:$0xff] %v8166
        %8586 = vst [vmem:[%s414 + $0x4a0] sm:$0xff] %v8170
        %8587 = vst [vmem:[%s414 + $0x4a8] sm:$0xff] %v8172
        %8588 = vst [vmem:[%s414 + $0x4b0] sm:$0xff] %v8174
        %8589 = vst [vmem:[%s414 + $0x4b8] sm:$0xff] %v8176
        %8590 = vst [vmem:[%s414 + $0x4c0] sm:$0xff] %v8180
        %8591 = vst [vmem:[%s414 + $0x4c8] sm:$0xff] %v8182
        %8592 = vst [vmem:[%s414 + $0x4d0] sm:$0xff] %v8184
        %8593 = vst [vmem:[%s414 + $0x4d8] sm:$0xff] %v8186
        %8594 = vst [vmem:[%s414 + $0x4e0] sm:$0xff] %v8190
        %8595 = vst [vmem:[%s414 + $0x4e8] sm:$0xff] %v8192
        %8596 = vst [vmem:[%s414 + $0x4f0] sm:$0xff] %v8194
        %8597 = vst [vmem:[%s414 + $0x4f8] sm:$0xff] %v8196
        %8598 = vst [vmem:[%s414 + $0x500] sm:$0xff] %v8200
        %8599 = vst [vmem:[%s414 + $0x508] sm:$0xff] %v8202
        %8600 = vst [vmem:[%s414 + $0x510] sm:$0xff] %v8204
        %8601 = vst [vmem:[%s414 + $0x518] sm:$0xff] %v8206
        %8602 = vst [vmem:[%s414 + $0x520] sm:$0xff] %v8210
        %8603 = vst [vmem:[%s414 + $0x528] sm:$0xff] %v8212
        %8604 = vst [vmem:[%s414 + $0x530] sm:$0xff] %v8214
        %8605 = vst [vmem:[%s414 + $0x538] sm:$0xff] %v8216
        %8606 = vst [vmem:[%s414 + $0x540] sm:$0xff] %v8220
        %8607 = vst [vmem:[%s414 + $0x548] sm:$0xff] %v8222
        %8608 = vst [vmem:[%s414 + $0x550] sm:$0xff] %v8224
        %8609 = vst [vmem:[%s414 + $0x558] sm:$0xff] %v8226
        %8610 = vst [vmem:[%s414 + $0x560] sm:$0xff] %v8230
        %8611 = vst [vmem:[%s414 + $0x568] sm:$0xff] %v8232
        %8612 = vst [vmem:[%s414 + $0x570] sm:$0xff] %v8234
        %8613 = vst [vmem:[%s414 + $0x578] sm:$0xff] %v8236
        %8614 = vst [vmem:[%s414 + $0x580] sm:$0xff] %v8240
        %8615 = vst [vmem:[%s414 + $0x588] sm:$0xff] %v8242
        %8616 = vst [vmem:[%s414 + $0x590] sm:$0xff] %v8244
        %8617 = vst [vmem:[%s414 + $0x598] sm:$0xff] %v8246
        %8618 = vst [vmem:[%s414 + $0x5a0] sm:$0xff] %v8250
        %8619 = vst [vmem:[%s414 + $0x5a8] sm:$0xff] %v8252
        %8620 = vst [vmem:[%s414 + $0x5b0] sm:$0xff] %v8254
        %8621 = vst [vmem:[%s414 + $0x5b8] sm:$0xff] %v8256
        %8622 = vst [vmem:[%s414 + $0x5c0] sm:$0xff] %v8260
        %8623 = vst [vmem:[%s414 + $0x5c8] sm:$0xff] %v8262
        %8624 = vst [vmem:[%s414 + $0x5d0] sm:$0xff] %v8264
        %8625 = vst [vmem:[%s414 + $0x5d8] sm:$0xff] %v8266
        %8626 = vst [vmem:[%s414 + $0x5e0] sm:$0xff] %v8270
        %8627 = vst [vmem:[%s414 + $0x5e8] sm:$0xff] %v8272
        %8628 = vst [vmem:[%s414 + $0x5f0] sm:$0xff] %v8274
        %8629 = vst [vmem:[%s414 + $0x5f8] sm:$0xff] %v8276
        %8630 = vst [vmem:[%s414 + $0x600] sm:$0xff] %v8280
        %8631 = vst [vmem:[%s414 + $0x608] sm:$0xff] %v8282
        %8632 = vst [vmem:[%s414 + $0x610] sm:$0xff] %v8284
        %8633 = vst [vmem:[%s414 + $0x618] sm:$0xff] %v8286
        %8634 = vst [vmem:[%s414 + $0x620] sm:$0xff] %v8290
        %8635 = vst [vmem:[%s414 + $0x628] sm:$0xff] %v8292
        %8636 = vst [vmem:[%s414 + $0x630] sm:$0xff] %v8294
        %8637 = vst [vmem:[%s414 + $0x638] sm:$0xff] %v8296
        %8638 = vst [vmem:[%s414 + $0x640] sm:$0xff] %v8300
        %8639 = vst [vmem:[%s414 + $0x648] sm:$0xff] %v8302
        %8640 = vst [vmem:[%s414 + $0x650] sm:$0xff] %v8304
        %8641 = vst [vmem:[%s414 + $0x658] sm:$0xff] %v8306
        %8642 = vst [vmem:[%s414 + $0x660] sm:$0xff] %v8310
        %8643 = vst [vmem:[%s414 + $0x668] sm:$0xff] %v8312
        %8644 = vst [vmem:[%s414 + $0x670] sm:$0xff] %v8314
        %8645 = vst [vmem:[%s414 + $0x678] sm:$0xff] %v8316
        %8646 = vst [vmem:[%s414 + $0x680] sm:$0xff] %v8320
        %8647 = vst [vmem:[%s414 + $0x688] sm:$0xff] %v8322
        %8648 = vst [vmem:[%s414 + $0x690] sm:$0xff] %v8324
        %8649 = vst [vmem:[%s414 + $0x698] sm:$0xff] %v8326
        %8650 = vst [vmem:[%s414 + $0x6a0] sm:$0xff] %v8330
        %8651 = vst [vmem:[%s414 + $0x6a8] sm:$0xff] %v8332
        %8652 = vst [vmem:[%s414 + $0x6b0] sm:$0xff] %v8334
        %8653 = vst [vmem:[%s414 + $0x6b8] sm:$0xff] %v8336
        %8654 = vst [vmem:[%s414 + $0x6c0] sm:$0xff] %v8340
        %8655 = vst [vmem:[%s414 + $0x6c8] sm:$0xff] %v8342
        %8656 = vst [vmem:[%s414 + $0x6d0] sm:$0xff] %v8344
        %8657 = vst [vmem:[%s414 + $0x6d8] sm:$0xff] %v8346
        %8658 = vst [vmem:[%s414 + $0x6e0] sm:$0xff] %v8350
        %8659 = vst [vmem:[%s414 + $0x6e8] sm:$0xff] %v8352
        %8660 = vst [vmem:[%s414 + $0x6f0] sm:$0xff] %v8354
        %8661 = vst [vmem:[%s414 + $0x6f8] sm:$0xff] %v8356
        %8662 = vst [vmem:[%s414 + $0x700] sm:$0xff] %v8360
        %8663 = vst [vmem:[%s414 + $0x708] sm:$0xff] %v8362
        %8664 = vst [vmem:[%s414 + $0x710] sm:$0xff] %v8364
        %8665 = vst [vmem:[%s414 + $0x718] sm:$0xff] %v8366
        %8666 = vst [vmem:[%s414 + $0x720] sm:$0xff] %v8370
        %8667 = vst [vmem:[%s414 + $0x728] sm:$0xff] %v8372
        %8668 = vst [vmem:[%s414 + $0x730] sm:$0xff] %v8374
        %8669 = vst [vmem:[%s414 + $0x738] sm:$0xff] %v8376
        %8670 = vst [vmem:[%s414 + $0x740] sm:$0xff] %v8380
        %8671 = vst [vmem:[%s414 + $0x748] sm:$0xff] %v8382
        %8672 = vst [vmem:[%s414 + $0x750] sm:$0xff] %v8384
        %8673 = vst [vmem:[%s414 + $0x758] sm:$0xff] %v8386
        %8674 = vst [vmem:[%s414 + $0x760] sm:$0xff] %v8390
        %8675 = vst [vmem:[%s414 + $0x768] sm:$0xff] %v8392
        %8676 = vst [vmem:[%s414 + $0x770] sm:$0xff] %v8394
        %8677 = vst [vmem:[%s414 + $0x778] sm:$0xff] %v8396
        %8678 = vst [vmem:[%s414 + $0x780] sm:$0xff] %v8400
        %8679 = vst [vmem:[%s414 + $0x788] sm:$0xff] %v8402
        %8680 = vst [vmem:[%s414 + $0x790] sm:$0xff] %v8404
        %8681 = vst [vmem:[%s414 + $0x798] sm:$0xff] %v8406
        %8682 = vst [vmem:[%s414 + $0x7a0] sm:$0xff] %v8410
        %8683 = vst [vmem:[%s414 + $0x7a8] sm:$0xff] %v8412
        %8684 = vst [vmem:[%s414 + $0x7b0] sm:$0xff] %v8414
        %8685 = vst [vmem:[%s414 + $0x7b8] sm:$0xff] %v8416
        %8686 = vst [vmem:[%s414 + $0x7c0] sm:$0xff] %v8420
        %8687 = vst [vmem:[%s414 + $0x7c8] sm:$0xff] %v8422
        %8688 = vst [vmem:[%s414 + $0x7d0] sm:$0xff] %v8424
        %8689 = vst [vmem:[%s414 + $0x7d8] sm:$0xff] %v8426
        %8690 = vst [vmem:[%s414 + $0x7e0] sm:$0xff] %v8430
        %8691 = vst [vmem:[%s414 + $0x7e8] sm:$0xff] %v8432
        %8692 = vst [vmem:[%s414 + $0x7f0] sm:$0xff] %v8434
        %8693 = vst [vmem:[%s414 + $0x7f8] sm:$0xff] %v8436
        %p8694 = scmp.lt.s32.totalorder %s24, 1
        %s8695 = scalar_select %p8694, %s24, 1
        %s8696 = smul.addr %s8695, 256
        %s8697 = smul.addr %s8696, 8
        %s8698 = scalar_lea.vmem %s9, %s8697
        // Predicated region
        $region81: #{vae_sampler_forward.1} parent=55 // pred_check
          %p8699 = pneg %p236
        $region82: #{vae_sampler_forward.1} parent=55 // pred_check_branch
          %8701 = sbr.rel (%p8699) target = $region84
        $region83: #{vae_sampler_forward.1} parent=55 // pred_region
          _
        $region84: #{vae_sampler_forward.1} parent=55 // pred_fallthru
          _
      $region56: #{vae_sampler_forward.1} parent=5 // pred_fallthru
        _
      %p8702 = scmp.le.s32.totalorder 2, %s19
      // Predicated region
      $region85: #{vae_sampler_forward.1} parent=5 // pred_check
        %p8703 = pneg %p8702
      $region86: #{vae_sampler_forward.1} parent=5 // pred_check_branch
        %8705 = sbr.rel (%p8703) target = $region88
      $region87: #{vae_sampler_forward.1} parent=5 // pred_region
        %s8706 = ssub.s32 %s19, 2
        // Predicated region
        $region89: #{vae_sampler_forward.1} parent=87 // pred_check
          %p8707 = pneg %p242
        $region90: #{vae_sampler_forward.1} parent=87 // pred_check_branch
          %8709 = sbr.rel (%p8707) target = $region92
        $region91: #{vae_sampler_forward.1} parent=87 // pred_region
          %p8710 = scmp.lt.s32.totalorder %s25, 1
          %s8711 = scalar_select %p8710, %s25, 1
          %s8712 = smul.addr %s8711, 256
          %s8713 = smul.addr %s8712, 8
          %s8714 = scalar_lea.vmem %s9, %s8713
        $region92: #{vae_sampler_forward.1} parent=87 // pred_fallthru
          _
      $region88: #{vae_sampler_forward.1} parent=5 // pred_fallthru
        _
    $region6: #{vae_sampler_forward.1} parent=1 // loop_footer
      %s23 = sadd.s32 1, %s19
    $region7: #{vae_sampler_forward.1} parent=1 // loop_footer_branch
      %18 = sbr.rel target = $region3
    $region8: #{vae_sampler_forward.1} parent=1 // loop_exit
      _
    %8715 = vsyncpa [#allocation5], 1
    %s8716 = scalar_lea.sflag [#allocation5], 1
    %8717 = vsyncpa %s8716, 1
    %8718 = vsyncpa [#allocation7], 1
    %8719 = vsyncpa [#allocation10], 1
    %8720 = vsyncpa [#allocation13], 1

</llo_original>
